<compile_context>
chip_gen: v7x
topology: tpu7x:2x2x1
jax: 0.10.0
libtpu: 0.0.40
codegen_flags: <defaults>
</compile_context>

<pallas_src>
import jax
import jax.numpy as jnp
from jax import lax
from jax.experimental import pallas as pl
from jax.experimental.pallas import tpu as pltpu


def _round_up(x, m):
    return ((x + m - 1) // m) * m


# ---------------------------------------------------------------------------
# Fused forward kernel (one grid step == one block of B samples)
# ---------------------------------------------------------------------------

def _lenet_fused_kernel(x_ref, w1b_ref, b1_ref, w2b_ref, b2_ref,
                        wfc1_ref, bfc1_ref, wfc2_ref, bfc2_ref, o_ref):
    b = x_ref.shape[0]
    x = x_ref[...]                                    # (B, 28, 28) bf16

    # conv1: Conv2d(1, 10, 5) as 5 banded MXU matmuls over the whole block.
    # Output lanes = j*10 + co.  (B,24,28)->(B*24,28) reshape is layout-free
    # since 24 rows per sample fill whole 8-sublane tiles.
    y1 = jnp.dot(x[:, 0:24, :].reshape(b * 24, 28), w1b_ref[0],
                 preferred_element_type=jnp.float32)
    for ki in range(1, 5):
        y1 = y1 + jnp.dot(x[:, ki:ki + 24, :].reshape(b * 24, 28), w1b_ref[ki],
                          preferred_element_type=jnp.float32)
    y1 = (y1 + b1_ref[...]).reshape(b, 12, 2, 240)    # (B, 12, 2, 240) f32

    # 2x2 maxpool + ReLU (relu(maxpool(x)) == maxpool(relu(x))), pure VPU work.
    yr = jnp.maximum(y1[:, :, 0, :], y1[:, :, 1, :])  # pool over output rows
    a1 = jnp.maximum(jnp.maximum(yr[:, :, 0:230], yr[:, :, 10:240]), 0.0)
    a1 = a1.astype(jnp.bfloat16)
    # a1: (B, 12, 230); valid lanes are l = 20*j2 + cin (cin < 10).  The other
    # lanes hold finite garbage that conv2's banded weights multiply by zero.

    # conv2: Conv2d(10, 20, 5); Dropout2d == identity at inference.
    # Output lanes = jo*20 + co.
    y2 = jnp.dot(a1[:, 0:8, :].reshape(b * 8, 230), w2b_ref[0],
                 preferred_element_type=jnp.float32)
    for ki in range(1, 5):
        y2 = y2 + jnp.dot(a1[:, ki:ki + 8, :].reshape(b * 8, 230), w2b_ref[ki],
                          preferred_element_type=jnp.float32)
    y2 = (y2 + b2_ref[...]).reshape(b, 4, 2, 160)     # (B, 4, 2, 160) f32

    y2r = jnp.maximum(y2[:, :, 0, :], y2[:, :, 1, :])
    a2 = jnp.maximum(jnp.maximum(y2r[:, :, 0:140], y2r[:, :, 20:160]), 0.0)
    a2 = a2.astype(jnp.bfloat16)
    # a2: (B, 4, 140); valid lanes are l = 40*j4 + co (co < 20).

    # fc1: Linear(320, 50) + ReLU.  Contraction over the 4 pooled rows (io) is
    # 4 batched matmuls; the (jo, co) part of the contraction lives in the lanes.
    h = jnp.dot(a2[:, 0, :], wfc1_ref[0], preferred_element_type=jnp.float32)
    for io in range(1, 4):
        h = h + jnp.dot(a2[:, io, :], wfc1_ref[io],
                        preferred_element_type=jnp.float32)
    h = jnp.maximum(h + bfc1_ref[...], 0.0)           # (B, 64); lanes >= 50 stay 0
    # F.dropout(training=False) == identity.

    # fc2: Linear(50, 10) + fused log_softmax epilogue.
    logits = jnp.dot(h.astype(jnp.bfloat16), wfc2_ref[...],
                     preferred_element_type=jnp.float32) + bfc2_ref[...]
    m = jnp.max(logits, axis=-1, keepdims=True)
    s = logits - m
    lse = jnp.log(jnp.sum(jnp.exp(s), axis=-1, keepdims=True))
    o_ref[...] = s - lse                              # (B, 10) f32


# ---------------------------------------------------------------------------
# One-time parameter packing (pure data movement, outside the hot path)
# ---------------------------------------------------------------------------

def prepare_params(params):
    f32 = jnp.float32
    bf16 = jnp.bfloat16

    # conv1 banded weights: one (28, 240) matrix per kernel row ki.
    #   y1[i, j*10+co] = sum_ki sum_c x[i+ki, c] * w1b[ki][c, j*10+co]
    #                  = sum_ki sum_kj x[i+ki, j+kj] * w1[co, 0, ki, kj]
    w1 = params["w1"].astype(f32)[:, 0]               # (10, 5, 5)  [co, ki, kj]
    c = jnp.arange(28)[:, None]
    col = jnp.arange(240)[None, :]
    j, co = col // 10, col % 10
    kj = c - j
    valid = (kj >= 0) & (kj <= 4)
    kj_c = jnp.clip(kj, 0, 4)
    w1b = jnp.stack(
        [jnp.where(valid, w1[:, ki, :][co, kj_c], 0.0) for ki in range(5)], axis=0)
    b1r = jnp.tile(params["b1"].astype(f32), 24).reshape(1, 240)

    # conv2 banded weights over the pooled conv1 layout (lane l = 20*j2 + cin).
    w2 = params["w2"].astype(f32)                     # (20, 10, 5, 5) [co, cin, ki, kj]
    l = jnp.arange(230)[:, None]
    col = jnp.arange(160)[None, :]
    j2, cin = l // 20, l % 20
    jo, co = col // 20, col % 20
    kj = j2 - jo
    valid = (cin <= 9) & (kj >= 0) & (kj <= 4)
    cin_c = jnp.clip(cin, 0, 9)
    kj_c = jnp.clip(kj, 0, 4)
    w2b = jnp.stack(
        [jnp.where(valid, w2[:, :, ki, :][co, cin_c, kj_c], 0.0) for ki in range(5)],
        axis=0)
    b2r = jnp.tile(params["b2"].astype(f32), 8).reshape(1, 160)

    # fc1 weights per pooled row io (lane l = 40*j4 + co; PyTorch flatten order is
    # co*16 + io*4 + j4).  Output lanes padded 50 -> 64 with zero columns.
    w4 = params["fc1_w"].astype(f32).reshape(50, 20, 4, 4)   # [f, co, io, j4]
    l = jnp.arange(140)[:, None]
    f = jnp.arange(64)[None, :]
    j4, co = l // 40, l % 40
    valid = (co <= 19) & (f <= 49)
    co_c = jnp.clip(co, 0, 19)
    f_c = jnp.clip(f, 0, 49)
    wfc1 = jnp.stack(
        [jnp.where(valid, w4[:, :, io, :][f_c, co_c, j4], 0.0) for io in range(4)],
        axis=0)
    bfc1 = jnp.concatenate(
        [params["fc1_b"].astype(f32), jnp.zeros((14,), f32)]).reshape(1, 64)

    # fc2: contraction rows padded 50 -> 64 with zeros (padded h lanes are 0 anyway).
    wfc2 = jnp.concatenate(
        [params["fc2_w"].astype(f32).T, jnp.zeros((14, 10), f32)], axis=0)  # (64, 10)
    bfc2 = params["fc2_b"].astype(f32).reshape(1, 10)

    # Weights go to bf16 (MXU native input width); biases stay f32 (added to the
    # f32 accumulators).
    return {"w1b": w1b.astype(bf16), "b1r": b1r,
            "w2b": w2b.astype(bf16), "b2r": b2r,
            "wfc1": wfc1.astype(bf16), "bfc1": bfc1,
            "wfc2": wfc2.astype(bf16), "bfc2": bfc2}


# ---------------------------------------------------------------------------
# Forward wrapper (single pallas_call; grid over batch blocks of B samples)
# ---------------------------------------------------------------------------

def lenet_forward(packed, x_nchw, *, block_batch=128):
    n = x_nchw.shape[0]
    assert x_nchw.shape[1:] == (1, 28, 28), "LeNet expects (N, 1, 28, 28) inputs"

    # Per-step batch block B: multiple of 8, capped so the per-step footprint
    # (~65 KB/sample of f32 intermediates + ~1 MiB packed bf16 weights) stays
    # well under the scoped-VMEM limit on all of v5e/v6e/v7x.
    b = min(_round_up(block_batch, 8), _round_up(n, 8))
    n_pad = _round_up(n, b)

    x3 = x_nchw.astype(jnp.bfloat16).reshape(n, 28, 28)
    if n_pad != n:
        x3 = jnp.concatenate(
            [x3, jnp.zeros((n_pad - n, 28, 28), jnp.bfloat16)], axis=0)

    grid_spec = pltpu.PrefetchScalarGridSpec(
        num_scalar_prefetch=0,
        grid=(n_pad // b,),
        in_specs=[
            pl.BlockSpec((b, 28, 28), lambda i: (i, 0, 0)),      # x, B samples/step
            pl.BlockSpec((5, 28, 240), lambda i: (0, 0, 0)),     # conv1 banded W
            pl.BlockSpec((1, 240), lambda i: (0, 0)),            # conv1 bias row
            pl.BlockSpec((5, 230, 160), lambda i: (0, 0, 0)),    # conv2 banded W
            pl.BlockSpec((1, 160), lambda i: (0, 0)),            # conv2 bias row
            pl.BlockSpec((4, 140, 64), lambda i: (0, 0, 0)),     # fc1 banded W
            pl.BlockSpec((1, 64), lambda i: (0, 0)),             # fc1 bias row
            pl.BlockSpec((64, 10), lambda i: (0, 0)),            # fc2 W (K padded)
            pl.BlockSpec((1, 10), lambda i: (0, 0)),             # fc2 bias row
        ],
        out_specs=pl.BlockSpec((b, 10), lambda i: (i, 0)),
    )
    out = pl.pallas_call(
        _lenet_fused_kernel,
        out_shape=jax.ShapeDtypeStruct((n_pad, 10), jnp.float32),
        grid_spec=grid_spec,
        compiler_params=pltpu.CompilerParams(
            dimension_semantics=("parallel",),
            vmem_limit_bytes=32 * 1024 * 1024),
    )(x3, packed["w1b"], packed["b1r"], packed["w2b"], packed["b2r"],
      packed["wfc1"], packed["bfc1"], packed["wfc2"], packed["bfc2"])
    return out[:n]


# ---------------------------------------------------------------------------
# Pure-JAX reference (f32, HIGHEST precision) + init
# ---------------------------------------------------------------------------

def _maxpool2_nchw(y):
    n, c, h, w = y.shape
    return y.reshape(n, c, h // 2, 2, w // 2, 2).max(axis=(3, 5))


def lenet_reference(params, x_nchw):
    dn = ("NCHW", "OIHW", "NCHW")
    hp = lax.Precision.HIGHEST
    y = lax.conv_general_dilated(x_nchw.astype(jnp.float32), params["w1"], (1, 1),
                                 "VALID", dimension_numbers=dn, precision=hp)
    y = jnp.maximum(_maxpool2_nchw(y + params["b1"][None, :, None, None]), 0.0)
    y = lax.conv_general_dilated(y, params["w2"], (1, 1),
                                 "VALID", dimension_numbers=dn, precision=hp)
    y = jnp.maximum(_maxpool2_nchw(y + params["b2"][None, :, None, None]), 0.0)
    y = y.reshape(y.shape[0], -1)                                        # (N, 320)
    y = jnp.maximum(jnp.dot(y, params["fc1_w"].T, precision=hp) + params["fc1_b"], 0.0)
    y = jnp.dot(y, params["fc2_w"].T, precision=hp) + params["fc2_b"]
    return jax.nn.log_softmax(y, axis=-1)


def init_params(key):
    ks = jax.random.split(key, 8)

    def u(k, shape, fan_in):
        bound = 1.0 / (float(fan_in) ** 0.5)
        return jax.random.uniform(k, shape, jnp.float32, -bound, bound)

    return {
        "w1": u(ks[0], (10, 1, 5, 5), 25),
        "b1": u(ks[1], (10,), 25),
        "w2": u(ks[2], (20, 10, 5, 5), 250),
        "b2": u(ks[3], (20,), 250),
        "fc1_w": u(ks[4], (50, 320), 320),
        "fc1_b": u(ks[5], (50,), 320),
        "fc2_w": u(ks[6], (10, 50), 50),
        "fc2_b": u(ks[7], (10,), 50),
    }


if __name__ == "__main__":
    key = jax.random.PRNGKey(0)
    kp, kx = jax.random.split(key)
    params = init_params(kp)
    packed = prepare_params(params)

    fwd = jax.jit(lenet_forward, static_argnames=("block_batch",))

    # Kernel runs bf16 MXU inputs with f32 accumulation; the reference runs f32 at
    # HIGHEST precision, so a ~3e-2 tolerance covers the dtype gap (any packing /
    # layout bug would produce O(1) errors).
    tol = dict(rtol=3e-2, atol=3e-2)

    # 1) Small batch (n=2 padded up to one block of 8 samples).
    x = jax.random.normal(kx, (2, 1, 28, 28), dtype=jnp.float32)
    out = jax.block_until_ready(fwd(packed, x))
    assert out.shape == (2, 10) and out.dtype == jnp.float32
    ref = lenet_reference(params, x)
    assert jnp.allclose(out, ref, **tol), (out, ref)

    # 2) Multi-step grid (n=20 with block_batch=8 -> 3 grid steps + tail padding).
    x2 = jax.random.normal(jax.random.PRNGKey(1), (20, 1, 28, 28), dtype=jnp.float32)
    out2 = jax.block_until_ready(fwd(packed, x2, block_batch=8))
    assert out2.shape == (20, 10)
    ref2 = lenet_reference(params, x2)
    assert jnp.allclose(out2, ref2, **tol), (out2, ref2)

    print("KERNEL_OK")
</pallas_src>

<mosaic_0001>
module attributes {stable_mosaic.version = 11 : i64} {
  func.func @_lenet_fused_kernel(%arg0: i32, %arg1: memref<8x28x28xbf16, #tpu.memory_space<vmem>>, %arg2: memref<5x28x240xbf16, #tpu.memory_space<vmem>>, %arg3: memref<1x240xf32, #tpu.memory_space<vmem>>, %arg4: memref<5x230x160xbf16, #tpu.memory_space<vmem>>, %arg5: memref<1x160xf32, #tpu.memory_space<vmem>>, %arg6: memref<4x140x64xbf16, #tpu.memory_space<vmem>>, %arg7: memref<1x64xf32, #tpu.memory_space<vmem>>, %arg8: memref<64x10xbf16, #tpu.memory_space<vmem>>, %arg9: memref<1x10xf32, #tpu.memory_space<vmem>>, %arg10: memref<8x10xf32, #tpu.memory_space<vmem>>) attributes {dimension_semantics = [#tpu.dimension_semantics<parallel>], iteration_bounds = array<i64: 1>, scalar_prefetch = 0 : i64, scratch_operands = 0 : i64, tpu.core_type = #tpu.core_type<tc>, window_params = [{transform_indices = @transform_0, window_bounds = array<i64: 8, 28, 28>}, {pipeline_mode = #tpu.pipeline_mode<synchronous>, transform_indices = @transform_1, window_bounds = array<i64: 5, 28, 240>}, {pipeline_mode = #tpu.pipeline_mode<synchronous>, transform_indices = @transform_2, window_bounds = array<i64: 1, 240>}, {pipeline_mode = #tpu.pipeline_mode<synchronous>, transform_indices = @transform_3, window_bounds = array<i64: 5, 230, 160>}, {pipeline_mode = #tpu.pipeline_mode<synchronous>, transform_indices = @transform_4, window_bounds = array<i64: 1, 160>}, {pipeline_mode = #tpu.pipeline_mode<synchronous>, transform_indices = @transform_5, window_bounds = array<i64: 4, 140, 64>}, {pipeline_mode = #tpu.pipeline_mode<synchronous>, transform_indices = @transform_6, window_bounds = array<i64: 1, 64>}, {pipeline_mode = #tpu.pipeline_mode<synchronous>, transform_indices = @transform_7, window_bounds = array<i64: 64, 10>}, {pipeline_mode = #tpu.pipeline_mode<synchronous>, transform_indices = @transform_8, window_bounds = array<i64: 1, 10>}, {transform_indices = @transform_9, window_bounds = array<i64: 8, 10>}]} {
    %c0 = arith.constant 0 : index
    %c0_0 = arith.constant 0 : index
    %c0_1 = arith.constant 0 : index
    %0 = vector.load %arg1[%c0, %c0_0, %c0_1] : memref<8x28x28xbf16, #tpu.memory_space<vmem>>, vector<8x28x28xbf16>
    %1 = vector.extract_strided_slice %0 {offsets = [0, 0, 0], sizes = [8, 24, 28], strides = [1, 1, 1]} : vector<8x28x28xbf16> to vector<8x24x28xbf16>
    %2 = vector.shape_cast %1 : vector<8x24x28xbf16> to vector<192x28xbf16>
    %c0_2 = arith.constant 0 : index
    %c0_3 = arith.constant 0 : index
    %c0_4 = arith.constant 0 : index
    %3 = vector.load %arg2[%c0_2, %c0_3, %c0_4] : memref<5x28x240xbf16, #tpu.memory_space<vmem>>, vector<1x28x240xbf16>
    %4 = vector.shape_cast %3 : vector<1x28x240xbf16> to vector<28x240xbf16>
    %cst = arith.constant dense<0.000000e+00> : vector<192x240xf32>
    %5 = tpu.matmul %2, %4, %cst {dimension_numbers = #tpu.dot_dimension_numbers<[1], [0], [0], [1], [0, 0, 1, 1], [], []>} : vector<192x28xbf16>, vector<28x240xbf16>, vector<192x240xf32> -> vector<192x240xf32>
    %6 = vector.extract_strided_slice %0 {offsets = [0, 1, 0], sizes = [8, 24, 28], strides = [1, 1, 1]} : vector<8x28x28xbf16> to vector<8x24x28xbf16>
    %7 = vector.shape_cast %6 : vector<8x24x28xbf16> to vector<192x28xbf16>
    %c1 = arith.constant 1 : index
    %c0_5 = arith.constant 0 : index
    %c0_6 = arith.constant 0 : index
    %8 = vector.load %arg2[%c1, %c0_5, %c0_6] : memref<5x28x240xbf16, #tpu.memory_space<vmem>>, vector<1x28x240xbf16>
    %9 = vector.shape_cast %8 : vector<1x28x240xbf16> to vector<28x240xbf16>
    %cst_7 = arith.constant dense<0.000000e+00> : vector<192x240xf32>
    %10 = tpu.matmul %7, %9, %cst_7 {dimension_numbers = #tpu.dot_dimension_numbers<[1], [0], [0], [1], [0, 0, 1, 1], [], []>} : vector<192x28xbf16>, vector<28x240xbf16>, vector<192x240xf32> -> vector<192x240xf32>
    %11 = arith.addf %5, %10 : vector<192x240xf32>
    %12 = vector.extract_strided_slice %0 {offsets = [0, 2, 0], sizes = [8, 24, 28], strides = [1, 1, 1]} : vector<8x28x28xbf16> to vector<8x24x28xbf16>
    %13 = vector.shape_cast %12 : vector<8x24x28xbf16> to vector<192x28xbf16>
    %c2 = arith.constant 2 : index
    %c0_8 = arith.constant 0 : index
    %c0_9 = arith.constant 0 : index
    %14 = vector.load %arg2[%c2, %c0_8, %c0_9] : memref<5x28x240xbf16, #tpu.memory_space<vmem>>, vector<1x28x240xbf16>
    %15 = vector.shape_cast %14 : vector<1x28x240xbf16> to vector<28x240xbf16>
    %cst_10 = arith.constant dense<0.000000e+00> : vector<192x240xf32>
    %16 = tpu.matmul %13, %15, %cst_10 {dimension_numbers = #tpu.dot_dimension_numbers<[1], [0], [0], [1], [0, 0, 1, 1], [], []>} : vector<192x28xbf16>, vector<28x240xbf16>, vector<192x240xf32> -> vector<192x240xf32>
    %17 = arith.addf %11, %16 : vector<192x240xf32>
    %18 = vector.extract_strided_slice %0 {offsets = [0, 3, 0], sizes = [8, 24, 28], strides = [1, 1, 1]} : vector<8x28x28xbf16> to vector<8x24x28xbf16>
    %19 = vector.shape_cast %18 : vector<8x24x28xbf16> to vector<192x28xbf16>
    %c3 = arith.constant 3 : index
    %c0_11 = arith.constant 0 : index
    %c0_12 = arith.constant 0 : index
    %20 = vector.load %arg2[%c3, %c0_11, %c0_12] : memref<5x28x240xbf16, #tpu.memory_space<vmem>>, vector<1x28x240xbf16>
    %21 = vector.shape_cast %20 : vector<1x28x240xbf16> to vector<28x240xbf16>
    %cst_13 = arith.constant dense<0.000000e+00> : vector<192x240xf32>
    %22 = tpu.matmul %19, %21, %cst_13 {dimension_numbers = #tpu.dot_dimension_numbers<[1], [0], [0], [1], [0, 0, 1, 1], [], []>} : vector<192x28xbf16>, vector<28x240xbf16>, vector<192x240xf32> -> vector<192x240xf32>
    %23 = arith.addf %17, %22 : vector<192x240xf32>
    %24 = vector.extract_strided_slice %0 {offsets = [0, 4, 0], sizes = [8, 24, 28], strides = [1, 1, 1]} : vector<8x28x28xbf16> to vector<8x24x28xbf16>
    %25 = vector.shape_cast %24 : vector<8x24x28xbf16> to vector<192x28xbf16>
    %c4 = arith.constant 4 : index
    %c0_14 = arith.constant 0 : index
    %c0_15 = arith.constant 0 : index
    %26 = vector.load %arg2[%c4, %c0_14, %c0_15] : memref<5x28x240xbf16, #tpu.memory_space<vmem>>, vector<1x28x240xbf16>
    %27 = vector.shape_cast %26 : vector<1x28x240xbf16> to vector<28x240xbf16>
    %cst_16 = arith.constant dense<0.000000e+00> : vector<192x240xf32>
    %28 = tpu.matmul %25, %27, %cst_16 {dimension_numbers = #tpu.dot_dimension_numbers<[1], [0], [0], [1], [0, 0, 1, 1], [], []>} : vector<192x28xbf16>, vector<28x240xbf16>, vector<192x240xf32> -> vector<192x240xf32>
    %29 = arith.addf %23, %28 : vector<192x240xf32>
    %c0_17 = arith.constant 0 : index
    %c0_18 = arith.constant 0 : index
    %30 = vector.load %arg3[%c0_17, %c0_18] : memref<1x240xf32, #tpu.memory_space<vmem>>, vector<1x240xf32>
    %31 = vector.broadcast %30 : vector<1x240xf32> to vector<192x240xf32>
    %32 = arith.addf %29, %31 : vector<192x240xf32>
    %33 = vector.shape_cast %32 : vector<192x240xf32> to vector<8x12x2x240xf32>
    %34 = vector.extract_strided_slice %33 {offsets = [0, 0, 0, 0], sizes = [8, 12, 1, 240], strides = [1, 1, 1, 1]} : vector<8x12x2x240xf32> to vector<8x12x1x240xf32>
    %35 = vector.shape_cast %34 : vector<8x12x1x240xf32> to vector<8x12x240xf32>
    %36 = vector.extract_strided_slice %33 {offsets = [0, 0, 1, 0], sizes = [8, 12, 1, 240], strides = [1, 1, 1, 1]} : vector<8x12x2x240xf32> to vector<8x12x1x240xf32>
    %37 = vector.shape_cast %36 : vector<8x12x1x240xf32> to vector<8x12x240xf32>
    %38 = arith.maximumf %35, %37 : vector<8x12x240xf32>
    %39 = vector.extract_strided_slice %38 {offsets = [0, 0, 0], sizes = [8, 12, 230], strides = [1, 1, 1]} : vector<8x12x240xf32> to vector<8x12x230xf32>
    %40 = vector.extract_strided_slice %38 {offsets = [0, 0, 10], sizes = [8, 12, 230], strides = [1, 1, 1]} : vector<8x12x240xf32> to vector<8x12x230xf32>
    %41 = arith.maximumf %39, %40 : vector<8x12x230xf32>
    %cst_19 = arith.constant 0.000000e+00 : f32
    %42 = vector.broadcast %cst_19 : f32 to vector<8x12x230xf32>
    %43 = arith.maximumf %41, %42 : vector<8x12x230xf32>
    %44 = arith.truncf %43 : vector<8x12x230xf32> to vector<8x12x230xbf16>
    %45 = vector.extract_strided_slice %44 {offsets = [0, 0, 0], sizes = [8, 8, 230], strides = [1, 1, 1]} : vector<8x12x230xbf16> to vector<8x8x230xbf16>
    %46 = vector.shape_cast %45 : vector<8x8x230xbf16> to vector<64x230xbf16>
    %c0_20 = arith.constant 0 : index
    %c0_21 = arith.constant 0 : index
    %c0_22 = arith.constant 0 : index
    %47 = vector.load %arg4[%c0_20, %c0_21, %c0_22] : memref<5x230x160xbf16, #tpu.memory_space<vmem>>, vector<1x230x160xbf16>
    %48 = vector.shape_cast %47 : vector<1x230x160xbf16> to vector<230x160xbf16>
    %cst_23 = arith.constant dense<0.000000e+00> : vector<64x160xf32>
    %49 = tpu.matmul %46, %48, %cst_23 {dimension_numbers = #tpu.dot_dimension_numbers<[1], [0], [0], [1], [0, 0, 1, 1], [], []>} : vector<64x230xbf16>, vector<230x160xbf16>, vector<64x160xf32> -> vector<64x160xf32>
    %50 = vector.extract_strided_slice %44 {offsets = [0, 1, 0], sizes = [8, 8, 230], strides = [1, 1, 1]} : vector<8x12x230xbf16> to vector<8x8x230xbf16>
    %51 = vector.shape_cast %50 : vector<8x8x230xbf16> to vector<64x230xbf16>
    %c1_24 = arith.constant 1 : index
    %c0_25 = arith.constant 0 : index
    %c0_26 = arith.constant 0 : index
    %52 = vector.load %arg4[%c1_24, %c0_25, %c0_26] : memref<5x230x160xbf16, #tpu.memory_space<vmem>>, vector<1x230x160xbf16>
    %53 = vector.shape_cast %52 : vector<1x230x160xbf16> to vector<230x160xbf16>
    %cst_27 = arith.constant dense<0.000000e+00> : vector<64x160xf32>
    %54 = tpu.matmul %51, %53, %cst_27 {dimension_numbers = #tpu.dot_dimension_numbers<[1], [0], [0], [1], [0, 0, 1, 1], [], []>} : vector<64x230xbf16>, vector<230x160xbf16>, vector<64x160xf32> -> vector<64x160xf32>
    %55 = arith.addf %49, %54 : vector<64x160xf32>
    %56 = vector.extract_strided_slice %44 {offsets = [0, 2, 0], sizes = [8, 8, 230], strides = [1, 1, 1]} : vector<8x12x230xbf16> to vector<8x8x230xbf16>
    %57 = vector.shape_cast %56 : vector<8x8x230xbf16> to vector<64x230xbf16>
    %c2_28 = arith.constant 2 : index
    %c0_29 = arith.constant 0 : index
    %c0_30 = arith.constant 0 : index
    %58 = vector.load %arg4[%c2_28, %c0_29, %c0_30] : memref<5x230x160xbf16, #tpu.memory_space<vmem>>, vector<1x230x160xbf16>
    %59 = vector.shape_cast %58 : vector<1x230x160xbf16> to vector<230x160xbf16>
    %cst_31 = arith.constant dense<0.000000e+00> : vector<64x160xf32>
    %60 = tpu.matmul %57, %59, %cst_31 {dimension_numbers = #tpu.dot_dimension_numbers<[1], [0], [0], [1], [0, 0, 1, 1], [], []>} : vector<64x230xbf16>, vector<230x160xbf16>, vector<64x160xf32> -> vector<64x160xf32>
    %61 = arith.addf %55, %60 : vector<64x160xf32>
    %62 = vector.extract_strided_slice %44 {offsets = [0, 3, 0], sizes = [8, 8, 230], strides = [1, 1, 1]} : vector<8x12x230xbf16> to vector<8x8x230xbf16>
    %63 = vector.shape_cast %62 : vector<8x8x230xbf16> to vector<64x230xbf16>
    %c3_32 = arith.constant 3 : index
    %c0_33 = arith.constant 0 : index
    %c0_34 = arith.constant 0 : index
    %64 = vector.load %arg4[%c3_32, %c0_33, %c0_34] : memref<5x230x160xbf16, #tpu.memory_space<vmem>>, vector<1x230x160xbf16>
    %65 = vector.shape_cast %64 : vector<1x230x160xbf16> to vector<230x160xbf16>
    %cst_35 = arith.constant dense<0.000000e+00> : vector<64x160xf32>
    %66 = tpu.matmul %63, %65, %cst_35 {dimension_numbers = #tpu.dot_dimension_numbers<[1], [0], [0], [1], [0, 0, 1, 1], [], []>} : vector<64x230xbf16>, vector<230x160xbf16>, vector<64x160xf32> -> vector<64x160xf32>
    %67 = arith.addf %61, %66 : vector<64x160xf32>
    %68 = vector.extract_strided_slice %44 {offsets = [0, 4, 0], sizes = [8, 8, 230], strides = [1, 1, 1]} : vector<8x12x230xbf16> to vector<8x8x230xbf16>
    %69 = vector.shape_cast %68 : vector<8x8x230xbf16> to vector<64x230xbf16>
    %c4_36 = arith.constant 4 : index
    %c0_37 = arith.constant 0 : index
    %c0_38 = arith.constant 0 : index
    %70 = vector.load %arg4[%c4_36, %c0_37, %c0_38] : memref<5x230x160xbf16, #tpu.memory_space<vmem>>, vector<1x230x160xbf16>
    %71 = vector.shape_cast %70 : vector<1x230x160xbf16> to vector<230x160xbf16>
    %cst_39 = arith.constant dense<0.000000e+00> : vector<64x160xf32>
    %72 = tpu.matmul %69, %71, %cst_39 {dimension_numbers = #tpu.dot_dimension_numbers<[1], [0], [0], [1], [0, 0, 1, 1], [], []>} : vector<64x230xbf16>, vector<230x160xbf16>, vector<64x160xf32> -> vector<64x160xf32>
    %73 = arith.addf %67, %72 : vector<64x160xf32>
    %c0_40 = arith.constant 0 : index
    %c0_41 = arith.constant 0 : index
    %74 = vector.load %arg5[%c0_40, %c0_41] : memref<1x160xf32, #tpu.memory_space<vmem>>, vector<1x160xf32>
    %75 = vector.broadcast %74 : vector<1x160xf32> to vector<64x160xf32>
    %76 = arith.addf %73, %75 : vector<64x160xf32>
    %77 = vector.shape_cast %76 : vector<64x160xf32> to vector<8x4x2x160xf32>
    %78 = vector.extract_strided_slice %77 {offsets = [0, 0, 0, 0], sizes = [8, 4, 1, 160], strides = [1, 1, 1, 1]} : vector<8x4x2x160xf32> to vector<8x4x1x160xf32>
    %79 = vector.shape_cast %78 : vector<8x4x1x160xf32> to vector<8x4x160xf32>
    %80 = vector.extract_strided_slice %77 {offsets = [0, 0, 1, 0], sizes = [8, 4, 1, 160], strides = [1, 1, 1, 1]} : vector<8x4x2x160xf32> to vector<8x4x1x160xf32>
    %81 = vector.shape_cast %80 : vector<8x4x1x160xf32> to vector<8x4x160xf32>
    %82 = arith.maximumf %79, %81 : vector<8x4x160xf32>
    %83 = vector.extract_strided_slice %82 {offsets = [0, 0, 0], sizes = [8, 4, 140], strides = [1, 1, 1]} : vector<8x4x160xf32> to vector<8x4x140xf32>
    %84 = vector.extract_strided_slice %82 {offsets = [0, 0, 20], sizes = [8, 4, 140], strides = [1, 1, 1]} : vector<8x4x160xf32> to vector<8x4x140xf32>
    %85 = arith.maximumf %83, %84 : vector<8x4x140xf32>
    %cst_42 = arith.constant 0.000000e+00 : f32
    %86 = vector.broadcast %cst_42 : f32 to vector<8x4x140xf32>
    %87 = arith.maximumf %85, %86 : vector<8x4x140xf32>
    %88 = arith.truncf %87 : vector<8x4x140xf32> to vector<8x4x140xbf16>
    %89 = vector.extract_strided_slice %88 {offsets = [0, 0, 0], sizes = [8, 1, 140], strides = [1, 1, 1]} : vector<8x4x140xbf16> to vector<8x1x140xbf16>
    %90 = vector.shape_cast %89 : vector<8x1x140xbf16> to vector<8x140xbf16>
    %c0_43 = arith.constant 0 : index
    %c0_44 = arith.constant 0 : index
    %c0_45 = arith.constant 0 : index
    %91 = vector.load %arg6[%c0_43, %c0_44, %c0_45] : memref<4x140x64xbf16, #tpu.memory_space<vmem>>, vector<1x140x64xbf16>
    %92 = vector.shape_cast %91 : vector<1x140x64xbf16> to vector<140x64xbf16>
    %cst_46 = arith.constant dense<0.000000e+00> : vector<8x64xf32>
    %93 = tpu.matmul %90, %92, %cst_46 {dimension_numbers = #tpu.dot_dimension_numbers<[1], [0], [0], [1], [0, 0, 1, 1], [], []>} : vector<8x140xbf16>, vector<140x64xbf16>, vector<8x64xf32> -> vector<8x64xf32>
    %94 = vector.extract_strided_slice %88 {offsets = [0, 1, 0], sizes = [8, 1, 140], strides = [1, 1, 1]} : vector<8x4x140xbf16> to vector<8x1x140xbf16>
    %95 = vector.shape_cast %94 : vector<8x1x140xbf16> to vector<8x140xbf16>
    %c1_47 = arith.constant 1 : index
    %c0_48 = arith.constant 0 : index
    %c0_49 = arith.constant 0 : index
    %96 = vector.load %arg6[%c1_47, %c0_48, %c0_49] : memref<4x140x64xbf16, #tpu.memory_space<vmem>>, vector<1x140x64xbf16>
    %97 = vector.shape_cast %96 : vector<1x140x64xbf16> to vector<140x64xbf16>
    %cst_50 = arith.constant dense<0.000000e+00> : vector<8x64xf32>
    %98 = tpu.matmul %95, %97, %cst_50 {dimension_numbers = #tpu.dot_dimension_numbers<[1], [0], [0], [1], [0, 0, 1, 1], [], []>} : vector<8x140xbf16>, vector<140x64xbf16>, vector<8x64xf32> -> vector<8x64xf32>
    %99 = arith.addf %93, %98 : vector<8x64xf32>
    %100 = vector.extract_strided_slice %88 {offsets = [0, 2, 0], sizes = [8, 1, 140], strides = [1, 1, 1]} : vector<8x4x140xbf16> to vector<8x1x140xbf16>
    %101 = vector.shape_cast %100 : vector<8x1x140xbf16> to vector<8x140xbf16>
    %c2_51 = arith.constant 2 : index
    %c0_52 = arith.constant 0 : index
    %c0_53 = arith.constant 0 : index
    %102 = vector.load %arg6[%c2_51, %c0_52, %c0_53] : memref<4x140x64xbf16, #tpu.memory_space<vmem>>, vector<1x140x64xbf16>
    %103 = vector.shape_cast %102 : vector<1x140x64xbf16> to vector<140x64xbf16>
    %cst_54 = arith.constant dense<0.000000e+00> : vector<8x64xf32>
    %104 = tpu.matmul %101, %103, %cst_54 {dimension_numbers = #tpu.dot_dimension_numbers<[1], [0], [0], [1], [0, 0, 1, 1], [], []>} : vector<8x140xbf16>, vector<140x64xbf16>, vector<8x64xf32> -> vector<8x64xf32>
    %105 = arith.addf %99, %104 : vector<8x64xf32>
    %106 = vector.extract_strided_slice %88 {offsets = [0, 3, 0], sizes = [8, 1, 140], strides = [1, 1, 1]} : vector<8x4x140xbf16> to vector<8x1x140xbf16>
    %107 = vector.shape_cast %106 : vector<8x1x140xbf16> to vector<8x140xbf16>
    %c3_55 = arith.constant 3 : index
    %c0_56 = arith.constant 0 : index
    %c0_57 = arith.constant 0 : index
    %108 = vector.load %arg6[%c3_55, %c0_56, %c0_57] : memref<4x140x64xbf16, #tpu.memory_space<vmem>>, vector<1x140x64xbf16>
    %109 = vector.shape_cast %108 : vector<1x140x64xbf16> to vector<140x64xbf16>
    %cst_58 = arith.constant dense<0.000000e+00> : vector<8x64xf32>
    %110 = tpu.matmul %107, %109, %cst_58 {dimension_numbers = #tpu.dot_dimension_numbers<[1], [0], [0], [1], [0, 0, 1, 1], [], []>} : vector<8x140xbf16>, vector<140x64xbf16>, vector<8x64xf32> -> vector<8x64xf32>
    %111 = arith.addf %105, %110 : vector<8x64xf32>
    %c0_59 = arith.constant 0 : index
    %c0_60 = arith.constant 0 : index
    %112 = vector.load %arg7[%c0_59, %c0_60] : memref<1x64xf32, #tpu.memory_space<vmem>>, vector<1x64xf32>
    %113 = vector.broadcast %112 : vector<1x64xf32> to vector<8x64xf32>
    %114 = arith.addf %111, %113 : vector<8x64xf32>
    %cst_61 = arith.constant 0.000000e+00 : f32
    %115 = vector.broadcast %cst_61 : f32 to vector<8x64xf32>
    %116 = arith.maximumf %114, %115 : vector<8x64xf32>
    %117 = arith.truncf %116 : vector<8x64xf32> to vector<8x64xbf16>
    %c0_62 = arith.constant 0 : index
    %c0_63 = arith.constant 0 : index
    %118 = vector.load %arg8[%c0_62, %c0_63] : memref<64x10xbf16, #tpu.memory_space<vmem>>, vector<64x10xbf16>
    %cst_64 = arith.constant dense<0.000000e+00> : vector<8x10xf32>
    %119 = tpu.matmul %117, %118, %cst_64 {dimension_numbers = #tpu.dot_dimension_numbers<[1], [0], [0], [1], [0, 0, 1, 1], [], []>} : vector<8x64xbf16>, vector<64x10xbf16>, vector<8x10xf32> -> vector<8x10xf32>
    %c0_65 = arith.constant 0 : index
    %c0_66 = arith.constant 0 : index
    %120 = vector.load %arg9[%c0_65, %c0_66] : memref<1x10xf32, #tpu.memory_space<vmem>>, vector<1x10xf32>
    %121 = vector.broadcast %120 : vector<1x10xf32> to vector<8x10xf32>
    %122 = arith.addf %119, %121 : vector<8x10xf32>
    %cst_67 = arith.constant dense<0xFF800000> : vector<8xf32>
    %123 = vector.multi_reduction <maximumf>, %122, %cst_67 [1] : vector<8x10xf32> to vector<8xf32>
    %124 = vector.shape_cast %123 : vector<8xf32> to vector<8x1xf32>
    %125 = vector.broadcast %124 : vector<8x1xf32> to vector<8x10xf32>
    %126 = arith.subf %122, %125 : vector<8x10xf32>
    %127 = math.exp %126 : vector<8x10xf32>
    %cst_68 = arith.constant dense<0.000000e+00> : vector<8xf32>
    %128 = vector.multi_reduction <add>, %127, %cst_68 [1] : vector<8x10xf32> to vector<8xf32>
    %129 = vector.shape_cast %128 : vector<8xf32> to vector<8x1xf32>
    %130 = math.log %129 : vector<8x1xf32>
    %131 = vector.broadcast %130 : vector<8x1xf32> to vector<8x10xf32>
    %132 = arith.subf %126, %131 : vector<8x10xf32>
    %c0_69 = arith.constant 0 : index
    %c0_70 = arith.constant 0 : index
    %133 = vector.load %arg10[%c0_69, %c0_70] : memref<8x10xf32, #tpu.memory_space<vmem>>, vector<8x10xf32>
    tpu.vector_store %arg10[%c0_69, %c0_70], %132 {strides = array<i32>} : memref<8x10xf32, #tpu.memory_space<vmem>>, vector<8x10xf32>,
    return
  }
  func.func @transform_0(%arg0: i32) -> (i32, i32, i32) {
    %c0_i32 = arith.constant 0 : i32
    %c0_i32_0 = arith.constant 0 : i32
    %c0_i32_1 = arith.constant 0 : i32
    return %arg0, %c0_i32, %c0_i32_0 : i32, i32, i32
  }
  func.func @transform_1(%arg0: i32) -> (i32, i32, i32) {
    %c0_i32 = arith.constant 0 : i32
    %c0_i32_0 = arith.constant 0 : i32
    %c0_i32_1 = arith.constant 0 : i32
    %c0_i32_2 = arith.constant 0 : i32
    return %c0_i32, %c0_i32_0, %c0_i32_1 : i32, i32, i32
  }
  func.func @transform_2(%arg0: i32) -> (i32, i32) {
    %c0_i32 = arith.constant 0 : i32
    %c0_i32_0 = arith.constant 0 : i32
    %c0_i32_1 = arith.constant 0 : i32
    return %c0_i32, %c0_i32_0 : i32, i32
  }
  func.func @transform_3(%arg0: i32) -> (i32, i32, i32) {
    %c0_i32 = arith.constant 0 : i32
    %c0_i32_0 = arith.constant 0 : i32
    %c0_i32_1 = arith.constant 0 : i32
    %c0_i32_2 = arith.constant 0 : i32
    return %c0_i32, %c0_i32_0, %c0_i32_1 : i32, i32, i32
  }
  func.func @transform_4(%arg0: i32) -> (i32, i32) {
    %c0_i32 = arith.constant 0 : i32
    %c0_i32_0 = arith.constant 0 : i32
    %c0_i32_1 = arith.constant 0 : i32
    return %c0_i32, %c0_i32_0 : i32, i32
  }
  func.func @transform_5(%arg0: i32) -> (i32, i32, i32) {
    %c0_i32 = arith.constant 0 : i32
    %c0_i32_0 = arith.constant 0 : i32
    %c0_i32_1 = arith.constant 0 : i32
    %c0_i32_2 = arith.constant 0 : i32
    return %c0_i32, %c0_i32_0, %c0_i32_1 : i32, i32, i32
  }
  func.func @transform_6(%arg0: i32) -> (i32, i32) {
    %c0_i32 = arith.constant 0 : i32
    %c0_i32_0 = arith.constant 0 : i32
    %c0_i32_1 = arith.constant 0 : i32
    return %c0_i32, %c0_i32_0 : i32, i32
  }
  func.func @transform_7(%arg0: i32) -> (i32, i32) {
    %c0_i32 = arith.constant 0 : i32
    %c0_i32_0 = arith.constant 0 : i32
    %c0_i32_1 = arith.constant 0 : i32
    return %c0_i32, %c0_i32_0 : i32, i32
  }
  func.func @transform_8(%arg0: i32) -> (i32, i32) {
    %c0_i32 = arith.constant 0 : i32
    %c0_i32_0 = arith.constant 0 : i32
    %c0_i32_1 = arith.constant 0 : i32
    return %c0_i32, %c0_i32_0 : i32, i32
  }
  func.func @transform_9(%arg0: i32) -> (i32, i32) {
    %c0_i32 = arith.constant 0 : i32
    %c0_i32_0 = arith.constant 0 : i32
    return %arg0, %c0_i32 : i32, i32
  }
}

</mosaic_0001>

<llo_original>
// kernel: lenet_forward.1
$region0: #{lenet_forward.1}
  #allocation0 [shape = 'u32[]', space=smem, size = 0x4, offset = 0x4, fixed_abs, tag = 'smem constant byte address 0x4 - core index']
  #allocation1 [shape = 'u32[144,128]{1,0:T(1,128)}', space=vmem, size = 0x12000, scoped, tag = 'internal scratch']
  %s0 = inlined_call_operand.vmem [shape: bf16[8,28,28], index: 0, kind: input, shape index: {}]
  %s1 = inlined_call_operand.vmem [shape: bf16[5,28,240], index: 1, kind: input, shape index: {}]
  %s2 = inlined_call_operand.vmem [shape: f32[1,240], index: 2, kind: input, shape index: {}]
  %s3 = inlined_call_operand.vmem [shape: bf16[5,230,160], index: 3, kind: input, shape index: {}]
  %s4 = inlined_call_operand.vmem [shape: f32[1,160], index: 4, kind: input, shape index: {}]
  %s5 = inlined_call_operand.vmem [shape: bf16[4,140,64], index: 5, kind: input, shape index: {}]
  %s6 = inlined_call_operand.vmem [shape: f32[1,64], index: 6, kind: input, shape index: {}]
  %s7 = inlined_call_operand.vmem [shape: bf16[64,10], index: 7, kind: input, shape index: {}]
  %s8 = inlined_call_operand.vmem [shape: f32[1,10], index: 8, kind: input, shape index: {}]
  %s9 = inlined_call_operand.vmem [shape: f32[8,10], index: 9, kind: output, shape index: {}]
  %s10 = sld [smem:[#allocation0]]
  $region46: #{lenet_forward.1} parent=0
    _
  %s12 = ssub.s32 1, %s10
  %s13 = scalar_select 0, %s12, %s10
  // Predicated region
  $region2: #{lenet_forward.1} parent=0 // pred_check
    _
  $region3: #{lenet_forward.1} parent=0 // pred_check_branch
    %15 = sbr.rel (0) target = $region5
  $region4: #{lenet_forward.1} parent=0 // pred_region
    _
  $region5: #{lenet_forward.1} parent=0 // pred_fallthru
    _
  // Predicated region
  $region6: #{lenet_forward.1} parent=0 // pred_check
    _
  $region7: #{lenet_forward.1} parent=0 // pred_check_branch
    %17 = sbr.rel (0) target = $region9
  $region8: #{lenet_forward.1} parent=0 // pred_region
    _
  $region9: #{lenet_forward.1} parent=0 // pred_fallthru
    _
  // Predicated region
  $region10: #{lenet_forward.1} parent=0 // pred_check
    _
  $region11: #{lenet_forward.1} parent=0 // pred_check_branch
    %19 = sbr.rel (0) target = $region13
  $region12: #{lenet_forward.1} parent=0 // pred_region
    _
  $region13: #{lenet_forward.1} parent=0 // pred_fallthru
    _
  // Predicated region
  $region14: #{lenet_forward.1} parent=0 // pred_check
    _
  $region15: #{lenet_forward.1} parent=0 // pred_check_branch
    %21 = sbr.rel (0) target = $region17
  $region16: #{lenet_forward.1} parent=0 // pred_region
    _
  $region17: #{lenet_forward.1} parent=0 // pred_fallthru
    _
  // Predicated region
  $region18: #{lenet_forward.1} parent=0 // pred_check
    _
  $region19: #{lenet_forward.1} parent=0 // pred_check_branch
    %23 = sbr.rel (0) target = $region21
  $region20: #{lenet_forward.1} parent=0 // pred_region
    _
  $region21: #{lenet_forward.1} parent=0 // pred_fallthru
    _
  // Predicated region
  $region22: #{lenet_forward.1} parent=0 // pred_check
    _
  $region23: #{lenet_forward.1} parent=0 // pred_check_branch
    %25 = sbr.rel (0) target = $region25
  $region24: #{lenet_forward.1} parent=0 // pred_region
    _
  $region25: #{lenet_forward.1} parent=0 // pred_fallthru
    _
  // Predicated region
  $region26: #{lenet_forward.1} parent=0 // pred_check
    _
  $region27: #{lenet_forward.1} parent=0 // pred_check_branch
    %27 = sbr.rel (0) target = $region29
  $region28: #{lenet_forward.1} parent=0 // pred_region
    _
  $region29: #{lenet_forward.1} parent=0 // pred_fallthru
    _
  // Predicated region
  $region30: #{lenet_forward.1} parent=0 // pred_check
    _
  $region31: #{lenet_forward.1} parent=0 // pred_check_branch
    %29 = sbr.rel (0) target = $region33
  $region32: #{lenet_forward.1} parent=0 // pred_region
    _
  $region33: #{lenet_forward.1} parent=0 // pred_fallthru
    _
  // Predicated region
  $region34: #{lenet_forward.1} parent=0 // pred_check
    _
  $region35: #{lenet_forward.1} parent=0 // pred_check_branch
    %31 = sbr.rel (0) target = $region37
  $region36: #{lenet_forward.1} parent=0 // pred_region
    _
  $region37: #{lenet_forward.1} parent=0 // pred_fallthru
    _
  %v33 = vld [vmem:[%s0] sm:$0xf]
  %v34 = vld [vmem:[%s0 + $0x4] sm:$0xf]
  %v35 = vld [vmem:[%s0 + $0x8] sm:$0xf]
  %v36 = vld [vmem:[%s0 + $0xc] sm:$0x3]
  %v37 = vld [vmem:[%s0 + $0x10] sm:$0xf]
  %v38 = vld [vmem:[%s0 + $0x14] sm:$0xf]
  %v39 = vld [vmem:[%s0 + $0x18] sm:$0xf]
  %v40 = vld [vmem:[%s0 + $0x1c] sm:$0x3]
  %v41 = vld [vmem:[%s0 + $0x20] sm:$0xf]
  %v42 = vld [vmem:[%s0 + $0x24] sm:$0xf]
  %v43 = vld [vmem:[%s0 + $0x28] sm:$0xf]
  %v44 = vld [vmem:[%s0 + $0x2c] sm:$0x3]
  %v45 = vld [vmem:[%s0 + $0x30] sm:$0xf]
  %v46 = vld [vmem:[%s0 + $0x34] sm:$0xf]
  %v47 = vld [vmem:[%s0 + $0x38] sm:$0xf]
  %v48 = vld [vmem:[%s0 + $0x3c] sm:$0x3]
  %v49 = vld [vmem:[%s0 + $0x40] sm:$0xf]
  %v50 = vld [vmem:[%s0 + $0x44] sm:$0xf]
  %v51 = vld [vmem:[%s0 + $0x48] sm:$0xf]
  %v52 = vld [vmem:[%s0 + $0x4c] sm:$0x3]
  %v53 = vld [vmem:[%s0 + $0x50] sm:$0xf]
  %v54 = vld [vmem:[%s0 + $0x54] sm:$0xf]
  %v55 = vld [vmem:[%s0 + $0x58] sm:$0xf]
  %v56 = vld [vmem:[%s0 + $0x5c] sm:$0x3]
  %v57 = vld [vmem:[%s0 + $0x60] sm:$0xf]
  %v58 = vld [vmem:[%s0 + $0x64] sm:$0xf]
  %v59 = vld [vmem:[%s0 + $0x68] sm:$0xf]
  %v60 = vld [vmem:[%s0 + $0x6c] sm:$0x3]
  %v61 = vld [vmem:[%s0 + $0x70] sm:$0xf]
  %v62 = vld [vmem:[%s0 + $0x74] sm:$0xf]
  %v63 = vld [vmem:[%s0 + $0x78] sm:$0xf]
  %v64 = vld [vmem:[%s0 + $0x7c] sm:$0x3]
  %v65 = vld [vmem:[%s1] sm:$0xff]
  %v66 = vld [vmem:[%s1 + $0x8] sm:$0xff]
  %v67 = vld [vmem:[%s1 + $0x10] sm:$0xff]
  %v68 = vld [vmem:[%s1 + $0x18] sm:$0x33]
  %vm69 = vsmask.f32 3328
  %vm70 = vsmask.f32 7440
  %vm71 = vmor %vm69, %vm70
  %v73 = vshrl.u32 %v33, 16
  %v75 = vrot.slane %v73, 4
  %v76 = vshll.u32 %v33, 16
  %v78 = vrot.slane %v76, 5
  %v79 = vor.u32 %v75, %v78
  %v80 = vrot.slane %v79, 4
  %v82 = vshll.u32 %v34, 16
  %v84 = vrot.slane %v82, 5
  %v85 = vsel %vm71, %v80, %v84
  %v86 = vshrl.u32 %v34, 16
  %v88 = vrot.slane %v86, 4
  %v89 = vor.u32 %v88, %v84
  %v90 = vrot.slane %v89, 4
  %v92 = vshll.u32 %v35, 16
  %v94 = vrot.slane %v92, 5
  %v95 = vsel %vm71, %v90, %v94
  %v96 = vshrl.u32 %v35, 16
  %v98 = vrot.slane %v96, 4
  %v99 = vor.u32 %v98, %v94
  %v100 = vrot.slane %v99, 4
  %v102 = vshll.u32 %v36, 16
  %v104 = vrot.slane %v102, 5
  %v105 = vsel %vm71, %v100, %v104
  %v107 = vshrl.u32 %v37, 16
  %v109 = vrot.slane %v107, 4
  %v110 = vshll.u32 %v37, 16
  %v112 = vrot.slane %v110, 5
  %v113 = vor.u32 %v109, %v112
  %v114 = vrot.slane %v113, 4
  %v116 = vshll.u32 %v38, 16
  %v118 = vrot.slane %v116, 5
  %v119 = vsel %vm71, %v114, %v118
  %v120 = vshrl.u32 %v38, 16
  %v122 = vrot.slane %v120, 4
  %v123 = vor.u32 %v122, %v118
  %v124 = vrot.slane %v123, 4
  %v126 = vshll.u32 %v39, 16
  %v128 = vrot.slane %v126, 5
  %v129 = vsel %vm71, %v124, %v128
  %v130 = vshrl.u32 %v39, 16
  %v132 = vrot.slane %v130, 4
  %v133 = vor.u32 %v132, %v128
  %v134 = vrot.slane %v133, 4
  %v136 = vshll.u32 %v40, 16
  %v138 = vrot.slane %v136, 5
  %v139 = vsel %vm71, %v134, %v138
  %v141 = vshrl.u32 %v41, 16
  %v143 = vrot.slane %v141, 4
  %v144 = vshll.u32 %v41, 16
  %v146 = vrot.slane %v144, 5
  %v147 = vor.u32 %v143, %v146
  %v148 = vrot.slane %v147, 4
  %v150 = vshll.u32 %v42, 16
  %v152 = vrot.slane %v150, 5
  %v153 = vsel %vm71, %v148, %v152
  %v154 = vshrl.u32 %v42, 16
  %v156 = vrot.slane %v154, 4
  %v157 = vor.u32 %v156, %v152
  %v158 = vrot.slane %v157, 4
  %v160 = vshll.u32 %v43, 16
  %v162 = vrot.slane %v160, 5
  %v163 = vsel %vm71, %v158, %v162
  %v164 = vshrl.u32 %v43, 16
  %v166 = vrot.slane %v164, 4
  %v167 = vor.u32 %v166, %v162
  %v168 = vrot.slane %v167, 4
  %v170 = vshll.u32 %v44, 16
  %v172 = vrot.slane %v170, 5
  %v173 = vsel %vm71, %v168, %v172
  %v175 = vshrl.u32 %v45, 16
  %v177 = vrot.slane %v175, 4
  %v178 = vshll.u32 %v45, 16
  %v180 = vrot.slane %v178, 5
  %v181 = vor.u32 %v177, %v180
  %v182 = vrot.slane %v181, 4
  %v184 = vshll.u32 %v46, 16
  %v186 = vrot.slane %v184, 5
  %v187 = vsel %vm71, %v182, %v186
  %v188 = vshrl.u32 %v46, 16
  %v190 = vrot.slane %v188, 4
  %v191 = vor.u32 %v190, %v186
  %v192 = vrot.slane %v191, 4
  %v194 = vshll.u32 %v47, 16
  %v196 = vrot.slane %v194, 5
  %v197 = vsel %vm71, %v192, %v196
  %v198 = vshrl.u32 %v47, 16
  %v200 = vrot.slane %v198, 4
  %v201 = vor.u32 %v200, %v196
  %v202 = vrot.slane %v201, 4
  %v204 = vshll.u32 %v48, 16
  %v206 = vrot.slane %v204, 5
  %v207 = vsel %vm71, %v202, %v206
  %v209 = vshrl.u32 %v49, 16
  %v211 = vrot.slane %v209, 4
  %v212 = vshll.u32 %v49, 16
  %v214 = vrot.slane %v212, 5
  %v215 = vor.u32 %v211, %v214
  %v216 = vrot.slane %v215, 4
  %v218 = vshll.u32 %v50, 16
  %v220 = vrot.slane %v218, 5
  %v221 = vsel %vm71, %v216, %v220
  %v222 = vshrl.u32 %v50, 16
  %v224 = vrot.slane %v222, 4
  %v225 = vor.u32 %v224, %v220
  %v226 = vrot.slane %v225, 4
  %v228 = vshll.u32 %v51, 16
  %v230 = vrot.slane %v228, 5
  %v231 = vsel %vm71, %v226, %v230
  %v232 = vshrl.u32 %v51, 16
  %v234 = vrot.slane %v232, 4
  %v235 = vor.u32 %v234, %v230
  %v236 = vrot.slane %v235, 4
  %v238 = vshll.u32 %v52, 16
  %v240 = vrot.slane %v238, 5
  %v241 = vsel %vm71, %v236, %v240
  %v243 = vshrl.u32 %v53, 16
  %v245 = vrot.slane %v243, 4
  %v246 = vshll.u32 %v53, 16
  %v248 = vrot.slane %v246, 5
  %v249 = vor.u32 %v245, %v248
  %v250 = vrot.slane %v249, 4
  %v252 = vshll.u32 %v54, 16
  %v254 = vrot.slane %v252, 5
  %v255 = vsel %vm71, %v250, %v254
  %v256 = vshrl.u32 %v54, 16
  %v258 = vrot.slane %v256, 4
  %v259 = vor.u32 %v258, %v254
  %v260 = vrot.slane %v259, 4
  %v262 = vshll.u32 %v55, 16
  %v264 = vrot.slane %v262, 5
  %v265 = vsel %vm71, %v260, %v264
  %v266 = vshrl.u32 %v55, 16
  %v268 = vrot.slane %v266, 4
  %v269 = vor.u32 %v268, %v264
  %v270 = vrot.slane %v269, 4
  %v272 = vshll.u32 %v56, 16
  %v274 = vrot.slane %v272, 5
  %v275 = vsel %vm71, %v270, %v274
  %v277 = vshrl.u32 %v57, 16
  %v279 = vrot.slane %v277, 4
  %v280 = vshll.u32 %v57, 16
  %v282 = vrot.slane %v280, 5
  %v283 = vor.u32 %v279, %v282
  %v284 = vrot.slane %v283, 4
  %v286 = vshll.u32 %v58, 16
  %v288 = vrot.slane %v286, 5
  %v289 = vsel %vm71, %v284, %v288
  %v290 = vshrl.u32 %v58, 16
  %v292 = vrot.slane %v290, 4
  %v293 = vor.u32 %v292, %v288
  %v294 = vrot.slane %v293, 4
  %v296 = vshll.u32 %v59, 16
  %v298 = vrot.slane %v296, 5
  %v299 = vsel %vm71, %v294, %v298
  %v300 = vshrl.u32 %v59, 16
  %v302 = vrot.slane %v300, 4
  %v303 = vor.u32 %v302, %v298
  %v304 = vrot.slane %v303, 4
  %v306 = vshll.u32 %v60, 16
  %v308 = vrot.slane %v306, 5
  %v309 = vsel %vm71, %v304, %v308
  %v311 = vshrl.u32 %v61, 16
  %v313 = vrot.slane %v311, 4
  %v314 = vshll.u32 %v61, 16
  %v316 = vrot.slane %v314, 5
  %v317 = vor.u32 %v313, %v316
  %v318 = vrot.slane %v317, 4
  %v320 = vshll.u32 %v62, 16
  %v322 = vrot.slane %v320, 5
  %v323 = vsel %vm71, %v318, %v322
  %v324 = vshrl.u32 %v62, 16
  %v326 = vrot.slane %v324, 4
  %v327 = vor.u32 %v326, %v322
  %v328 = vrot.slane %v327, 4
  %v330 = vshll.u32 %v63, 16
  %v332 = vrot.slane %v330, 5
  %v333 = vsel %vm71, %v328, %v332
  %v334 = vshrl.u32 %v63, 16
  %v336 = vrot.slane %v334, 4
  %v337 = vor.u32 %v336, %v332
  %v338 = vrot.slane %v337, 4
  %v340 = vshll.u32 %v64, 16
  %v342 = vrot.slane %v340, 5
  %v343 = vsel %vm71, %v338, %v342
  %s344 = scalar_lea.vmem %s1, 32
  %v345 = vld [vmem:[%s344] sm:$0xff]
  %v346 = vld [vmem:[%s344 + $0x8] sm:$0xff]
  %v347 = vld [vmem:[%s344 + $0x10] sm:$0xff]
  %v348 = vld [vmem:[%s344 + $0x18] sm:$0x33]
  %v349 = vunpack.c.l.b16 %v85
  %v350 = vunpack.c.l.b16 %v95
  %v351 = vunpack.c.l.b16 %v105
  %v352 = vunpack.c.l.b16 %v119
  %v353 = vunpack.c.l.b16 %v129
  %v354 = vunpack.c.l.b16 %v139
  %v355 = vunpack.c.l.b16 %v153
  %v356 = vunpack.c.l.b16 %v163
  %v357 = vunpack.c.l.b16 %v173
  %v358 = vunpack.c.l.b16 %v187
  %v359 = vunpack.c.l.b16 %v197
  %v360 = vunpack.c.l.b16 %v207
  %v361 = vunpack.c.l.b16 %v221
  %v362 = vunpack.c.l.b16 %v231
  %v363 = vunpack.c.l.b16 %v241
  %v364 = vunpack.c.l.b16 %v255
  %v365 = vunpack.c.l.b16 %v265
  %v366 = vunpack.c.l.b16 %v275
  %v367 = vunpack.c.l.b16 %v289
  %v368 = vunpack.c.l.b16 %v299
  %v369 = vunpack.c.l.b16 %v309
  %v370 = vunpack.c.l.b16 %v323
  %v371 = vunpack.c.l.b16 %v333
  %v372 = vunpack.c.l.b16 %v343
  %v373 = vpack.c.b16 %v350, %v349
  %v374 = vpack.c.b16 %v352, %v351
  %v375 = vpack.c.b16 %v354, %v353
  %v376 = vpack.c.b16 %v356, %v355
  %v377 = vpack.c.b16 %v358, %v357
  %v378 = vpack.c.b16 %v360, %v359
  %v379 = vpack.c.b16 %v362, %v361
  %v380 = vpack.c.b16 %v364, %v363
  %v381 = vpack.c.b16 %v366, %v365
  %v382 = vpack.c.b16 %v368, %v367
  %v383 = vpack.c.b16 %v370, %v369
  %v384 = vpack.c.b16 %v372, %v371
  %v389 = vunpack.c.l.b16 %v345
  %v390 = vunpack.c.h.b16 %v345
  %v391 = vunpack.c.l.b16 %v346
  %v392 = vunpack.c.h.b16 %v346
  %v393 = vunpack.c.l.b16 %v347
  %v394 = vunpack.c.h.b16 %v347
  %v395 = vunpack.c.l.b16 %v348
  %v396 = vunpack.c.h.b16 %v348
  %v397 = vpack.c.b16 %v391, %v389
  %v398 = vpack.c.b16 %v392, %v390
  %v399 = vpack.c.b16 %v395, %v393
  %v400 = vpack.c.b16 %v396, %v394
  %vm403 = vcmask 228352
  %v405 = vsel %vm403, %v373, 0
  %v408 = vsel %vm403, %v374, 0
  %v411 = vsel %vm403, %v375, 0
  %v414 = vsel %vm403, %v376, 0
  %v417 = vsel %vm403, %v377, 0
  %v420 = vsel %vm403, %v378, 0
  %v423 = vsel %vm403, %v379, 0
  %v426 = vsel %vm403, %v380, 0
  %v429 = vsel %vm403, %v381, 0
  %v432 = vsel %vm403, %v382, 0
  %v435 = vsel %vm403, %v383, 0
  %v438 = vsel %vm403, %v384, 0
  %vm440 = vcmask 1045504
  %v442 = vsel %vm440, %v399, 0
  %v445 = vsel %vm440, %v400, 0
  %447 = vmatprep.subr.bf16.mxu0 %v398
  %448 = vmatpush1.bf16.msra.mxu0 %v397
  %449 = vmatprep.subr.bf16.mxu0 %v445
  %450 = vmatpush1.bf16.msra.mxu0 %v442
  %451 = vmatprep.subr.bf16.mxu0 0
  %452 = vmatpush1.bf16.msra.mxu0 0
  %453 = vmatprep.subr.bf16.mxu0 0
  %454 = vmatpush1.bf16.msra.mxu0 0
  %455 = vmatprep.subr.bf16.mxu0 0
  %456 = vmatpush1.bf16.msra.mxu0 0
  %457 = vmatprep.subr.bf16.mxu0 0
  %458 = vmatpush1.bf16.msra.mxu0 0
  %459 = vmatprep.subr.bf16.mxu0 0
  %460 = vmatpush1.bf16.msra.mxu0 0
  %461 = vmatprep.subr.bf16.mxu0 0
  %462 = vmatpush1.bf16.msra.mxu0 0
  %463 = vmatprep.subr.bf16.mxu0 0
  %464 = vmatpush1.bf16.msra.mxu0 0
  %465 = vmatprep.subr.bf16.mxu0 0
  %466 = vmatpush1.bf16.msra.mxu0 0
  %467 = vmatprep.subr.bf16.mxu0 0
  %468 = vmatpush1.bf16.msra.mxu0 0
  %469 = vmatprep.subr.bf16.mxu0 0
  %470 = vmatpush1.bf16.msra.mxu0 0
  %471 = vmatprep.subr.bf16.mxu0 0
  %472 = vmatpush1.bf16.msra.mxu0 0
  %473 = vmatprep.subr.bf16.mxu0 0
  %474 = vmatpush1.bf16.msra.mxu0 0
  %475 = vmatprep.subr.bf16.mxu0 0
  %476 = vmatpush1.bf16.msra.mxu0 0
  %477 = vmatprep.subr.bf16.mxu0 0
  %478 = vmatpush1.bf16.msra.mxu0 0
  %479 = vmatprep.mubr.bf16.mxu0 0
  %480 = vmatmul.mubr.bf16.gmra.mrb[0].mxu0 %v405
  %v481 = vpop.f32.mrb[0].mxu0
  %v482 = vadd.f32 0.0, %v481
  %v483 = vpop.f32.mrb[0].mxu0
  %v484 = vadd.f32 0.0, %v483
  %v485 = vpop.f32.mrb[0].mxu0
  %v486 = vadd.f32 0.0, %v485
  %v487 = vpop.f32.mrb[0].mxu0
  %v488 = vadd.f32 0.0, %v487
  %489 = vmatprep.mubr.bf16.mxu0 0
  %490 = vmatmul.mubr.bf16.gmra.mrb[0].mxu0 %v408
  %v491 = vpop.f32.mrb[0].mxu0
  %v492 = vadd.f32 0.0, %v491
  %v493 = vpop.f32.mrb[0].mxu0
  %v494 = vadd.f32 0.0, %v493
  %v495 = vpop.f32.mrb[0].mxu0
  %v496 = vadd.f32 0.0, %v495
  %v497 = vpop.f32.mrb[0].mxu0
  %v498 = vadd.f32 0.0, %v497
  %499 = vmatprep.mubr.bf16.mxu0 0
  %500 = vmatmul.mubr.bf16.gmra.mrb[0].mxu0 %v411
  %v501 = vpop.f32.mrb[0].mxu0
  %v502 = vadd.f32 0.0, %v501
  %v503 = vpop.f32.mrb[0].mxu0
  %v504 = vadd.f32 0.0, %v503
  %v505 = vpop.f32.mrb[0].mxu0
  %v506 = vadd.f32 0.0, %v505
  %v507 = vpop.f32.mrb[0].mxu0
  %v508 = vadd.f32 0.0, %v507
  %509 = vmatprep.mubr.bf16.mxu0 0
  %510 = vmatmul.mubr.bf16.gmra.mrb[0].mxu0 %v414
  %v511 = vpop.f32.mrb[0].mxu0
  %v512 = vadd.f32 0.0, %v511
  %v513 = vpop.f32.mrb[0].mxu0
  %v514 = vadd.f32 0.0, %v513
  %v515 = vpop.f32.mrb[0].mxu0
  %v516 = vadd.f32 0.0, %v515
  %v517 = vpop.f32.mrb[0].mxu0
  %v518 = vadd.f32 0.0, %v517
  %519 = vmatprep.mubr.bf16.mxu0 0
  %520 = vmatmul.mubr.bf16.gmra.mrb[0].mxu0 %v417
  %v521 = vpop.f32.mrb[0].mxu0
  %v522 = vadd.f32 0.0, %v521
  %v523 = vpop.f32.mrb[0].mxu0
  %v524 = vadd.f32 0.0, %v523
  %v525 = vpop.f32.mrb[0].mxu0
  %v526 = vadd.f32 0.0, %v525
  %v527 = vpop.f32.mrb[0].mxu0
  %v528 = vadd.f32 0.0, %v527
  %529 = vmatprep.mubr.bf16.mxu0 0
  %530 = vmatmul.mubr.bf16.gmra.mrb[0].mxu0 %v420
  %v531 = vpop.f32.mrb[0].mxu0
  %v532 = vadd.f32 0.0, %v531
  %v533 = vpop.f32.mrb[0].mxu0
  %v534 = vadd.f32 0.0, %v533
  %v535 = vpop.f32.mrb[0].mxu0
  %v536 = vadd.f32 0.0, %v535
  %v537 = vpop.f32.mrb[0].mxu0
  %v538 = vadd.f32 0.0, %v537
  %539 = vmatprep.mubr.bf16.mxu0 0
  %540 = vmatmul.mubr.bf16.gmra.mrb[0].mxu0 %v423
  %v541 = vpop.f32.mrb[0].mxu0
  %v542 = vadd.f32 0.0, %v541
  %v543 = vpop.f32.mrb[0].mxu0
  %v544 = vadd.f32 0.0, %v543
  %v545 = vpop.f32.mrb[0].mxu0
  %v546 = vadd.f32 0.0, %v545
  %v547 = vpop.f32.mrb[0].mxu0
  %v548 = vadd.f32 0.0, %v547
  %549 = vmatprep.mubr.bf16.mxu0 0
  %550 = vmatmul.mubr.bf16.gmra.mrb[0].mxu0 %v426
  %v551 = vpop.f32.mrb[0].mxu0
  %v552 = vadd.f32 0.0, %v551
  %v553 = vpop.f32.mrb[0].mxu0
  %v554 = vadd.f32 0.0, %v553
  %v555 = vpop.f32.mrb[0].mxu0
  %v556 = vadd.f32 0.0, %v555
  %v557 = vpop.f32.mrb[0].mxu0
  %v558 = vadd.f32 0.0, %v557
  %559 = vmatprep.mubr.bf16.mxu0 0
  %560 = vmatmul.mubr.bf16.gmra.mrb[0].mxu0 %v429
  %v561 = vpop.f32.mrb[0].mxu0
  %v562 = vadd.f32 0.0, %v561
  %v563 = vpop.f32.mrb[0].mxu0
  %v564 = vadd.f32 0.0, %v563
  %v565 = vpop.f32.mrb[0].mxu0
  %v566 = vadd.f32 0.0, %v565
  %v567 = vpop.f32.mrb[0].mxu0
  %v568 = vadd.f32 0.0, %v567
  %569 = vmatprep.mubr.bf16.mxu0 0
  %570 = vmatmul.mubr.bf16.gmra.mrb[0].mxu0 %v432
  %v571 = vpop.f32.mrb[0].mxu0
  %v572 = vadd.f32 0.0, %v571
  %v573 = vpop.f32.mrb[0].mxu0
  %v574 = vadd.f32 0.0, %v573
  %v575 = vpop.f32.mrb[0].mxu0
  %v576 = vadd.f32 0.0, %v575
  %v577 = vpop.f32.mrb[0].mxu0
  %v578 = vadd.f32 0.0, %v577
  %579 = vmatprep.mubr.bf16.mxu0 0
  %580 = vmatmul.mubr.bf16.gmra.mrb[0].mxu0 %v435
  %v581 = vpop.f32.mrb[0].mxu0
  %v582 = vadd.f32 0.0, %v581
  %v583 = vpop.f32.mrb[0].mxu0
  %v584 = vadd.f32 0.0, %v583
  %v585 = vpop.f32.mrb[0].mxu0
  %v586 = vadd.f32 0.0, %v585
  %v587 = vpop.f32.mrb[0].mxu0
  %v588 = vadd.f32 0.0, %v587
  %589 = vmatprep.mubr.bf16.mxu0 0
  %590 = vmatmul.mubr.bf16.gmra.mrb[0].mxu0 %v438
  %v591 = vpop.f32.mrb[0].mxu0
  %v592 = vadd.f32 0.0, %v591
  %v593 = vpop.f32.mrb[0].mxu0
  %v594 = vadd.f32 0.0, %v593
  %v595 = vpop.f32.mrb[0].mxu0
  %v596 = vadd.f32 0.0, %v595
  %v597 = vpop.f32.mrb[0].mxu0
  %v598 = vadd.f32 0.0, %v597
  %599 = vdwg.mxu0
  %v624 = vunpack.c.l.b16 %v33
  %v625 = vunpack.c.l.b16 %v34
  %v626 = vunpack.c.l.b16 %v35
  %v627 = vunpack.c.l.b16 %v37
  %v628 = vunpack.c.l.b16 %v38
  %v629 = vunpack.c.l.b16 %v39
  %v630 = vunpack.c.l.b16 %v41
  %v631 = vunpack.c.l.b16 %v42
  %v632 = vunpack.c.l.b16 %v43
  %v633 = vunpack.c.l.b16 %v45
  %v634 = vunpack.c.l.b16 %v46
  %v635 = vunpack.c.l.b16 %v47
  %v636 = vunpack.c.l.b16 %v49
  %v637 = vunpack.c.l.b16 %v50
  %v638 = vunpack.c.l.b16 %v51
  %v639 = vunpack.c.l.b16 %v53
  %v640 = vunpack.c.l.b16 %v54
  %v641 = vunpack.c.l.b16 %v55
  %v642 = vunpack.c.l.b16 %v57
  %v643 = vunpack.c.l.b16 %v58
  %v644 = vunpack.c.l.b16 %v59
  %v645 = vunpack.c.l.b16 %v61
  %v646 = vunpack.c.l.b16 %v62
  %v647 = vunpack.c.l.b16 %v63
  %v648 = vpack.c.b16 %v625, %v624
  %v649 = vpack.c.b16 %v627, %v626
  %v650 = vpack.c.b16 %v629, %v628
  %v651 = vpack.c.b16 %v631, %v630
  %v652 = vpack.c.b16 %v633, %v632
  %v653 = vpack.c.b16 %v635, %v634
  %v654 = vpack.c.b16 %v637, %v636
  %v655 = vpack.c.b16 %v639, %v638
  %v656 = vpack.c.b16 %v641, %v640
  %v657 = vpack.c.b16 %v643, %v642
  %v658 = vpack.c.b16 %v645, %v644
  %v659 = vpack.c.b16 %v647, %v646
  %v664 = vunpack.c.l.b16 %v65
  %v665 = vunpack.c.h.b16 %v65
  %v666 = vunpack.c.l.b16 %v66
  %v667 = vunpack.c.h.b16 %v66
  %v668 = vunpack.c.l.b16 %v67
  %v669 = vunpack.c.h.b16 %v67
  %v670 = vunpack.c.l.b16 %v68
  %v671 = vunpack.c.h.b16 %v68
  %v672 = vpack.c.b16 %v666, %v664
  %v673 = vpack.c.b16 %v667, %v665
  %v674 = vpack.c.b16 %v670, %v668
  %v675 = vpack.c.b16 %v671, %v669
  %v679 = vsel %vm403, %v648, 0
  %v682 = vsel %vm403, %v649, 0
  %v685 = vsel %vm403, %v650, 0
  %v688 = vsel %vm403, %v651, 0
  %v691 = vsel %vm403, %v652, 0
  %v694 = vsel %vm403, %v653, 0
  %v697 = vsel %vm403, %v654, 0
  %v700 = vsel %vm403, %v655, 0
  %v703 = vsel %vm403, %v656, 0
  %v706 = vsel %vm403, %v657, 0
  %v709 = vsel %vm403, %v658, 0
  %v712 = vsel %vm403, %v659, 0
  %v715 = vsel %vm440, %v674, 0
  %v718 = vsel %vm440, %v675, 0
  %720 = vmatprep.subr.bf16.mxu0 %v673
  %721 = vmatpush1.bf16.msra.mxu0 %v672
  %722 = vmatprep.subr.bf16.mxu0 %v718
  %723 = vmatpush1.bf16.msra.mxu0 %v715
  %724 = vmatprep.subr.bf16.mxu0 0
  %725 = vmatpush1.bf16.msra.mxu0 0
  %726 = vmatprep.subr.bf16.mxu0 0
  %727 = vmatpush1.bf16.msra.mxu0 0
  %728 = vmatprep.subr.bf16.mxu0 0
  %729 = vmatpush1.bf16.msra.mxu0 0
  %730 = vmatprep.subr.bf16.mxu0 0
  %731 = vmatpush1.bf16.msra.mxu0 0
  %732 = vmatprep.subr.bf16.mxu0 0
  %733 = vmatpush1.bf16.msra.mxu0 0
  %734 = vmatprep.subr.bf16.mxu0 0
  %735 = vmatpush1.bf16.msra.mxu0 0
  %736 = vmatprep.subr.bf16.mxu0 0
  %737 = vmatpush1.bf16.msra.mxu0 0
  %738 = vmatprep.subr.bf16.mxu0 0
  %739 = vmatpush1.bf16.msra.mxu0 0
  %740 = vmatprep.subr.bf16.mxu0 0
  %741 = vmatpush1.bf16.msra.mxu0 0
  %742 = vmatprep.subr.bf16.mxu0 0
  %743 = vmatpush1.bf16.msra.mxu0 0
  %744 = vmatprep.subr.bf16.mxu0 0
  %745 = vmatpush1.bf16.msra.mxu0 0
  %746 = vmatprep.subr.bf16.mxu0 0
  %747 = vmatpush1.bf16.msra.mxu0 0
  %748 = vmatprep.subr.bf16.mxu0 0
  %749 = vmatpush1.bf16.msra.mxu0 0
  %750 = vmatprep.subr.bf16.mxu0 0
  %751 = vmatpush1.bf16.msra.mxu0 0
  %752 = vmatprep.mubr.bf16.mxu0 0
  %753 = vmatmul.mubr.bf16.gmra.mrb[0].mxu0 %v679
  %v754 = vpop.f32.mrb[0].mxu0
  %v755 = vadd.f32 %v482, %v754
  %v756 = vpop.f32.mrb[0].mxu0
  %v757 = vadd.f32 %v484, %v756
  %v758 = vpop.f32.mrb[0].mxu0
  %v759 = vadd.f32 %v486, %v758
  %v760 = vpop.f32.mrb[0].mxu0
  %v761 = vadd.f32 %v488, %v760
  %762 = vmatprep.mubr.bf16.mxu0 0
  %763 = vmatmul.mubr.bf16.gmra.mrb[0].mxu0 %v682
  %v764 = vpop.f32.mrb[0].mxu0
  %v765 = vadd.f32 %v492, %v764
  %v766 = vpop.f32.mrb[0].mxu0
  %v767 = vadd.f32 %v494, %v766
  %v768 = vpop.f32.mrb[0].mxu0
  %v769 = vadd.f32 %v496, %v768
  %v770 = vpop.f32.mrb[0].mxu0
  %v771 = vadd.f32 %v498, %v770
  %772 = vmatprep.mubr.bf16.mxu0 0
  %773 = vmatmul.mubr.bf16.gmra.mrb[0].mxu0 %v685
  %v774 = vpop.f32.mrb[0].mxu0
  %v775 = vadd.f32 %v502, %v774
  %v776 = vpop.f32.mrb[0].mxu0
  %v777 = vadd.f32 %v504, %v776
  %v778 = vpop.f32.mrb[0].mxu0
  %v779 = vadd.f32 %v506, %v778
  %v780 = vpop.f32.mrb[0].mxu0
  %v781 = vadd.f32 %v508, %v780
  %782 = vmatprep.mubr.bf16.mxu0 0
  %783 = vmatmul.mubr.bf16.gmra.mrb[0].mxu0 %v688
  %v784 = vpop.f32.mrb[0].mxu0
  %v785 = vadd.f32 %v512, %v784
  %v786 = vpop.f32.mrb[0].mxu0
  %v787 = vadd.f32 %v514, %v786
  %v788 = vpop.f32.mrb[0].mxu0
  %v789 = vadd.f32 %v516, %v788
  %v790 = vpop.f32.mrb[0].mxu0
  %v791 = vadd.f32 %v518, %v790
  %792 = vmatprep.mubr.bf16.mxu0 0
  %793 = vmatmul.mubr.bf16.gmra.mrb[0].mxu0 %v691
  %v794 = vpop.f32.mrb[0].mxu0
  %v795 = vadd.f32 %v522, %v794
  %v796 = vpop.f32.mrb[0].mxu0
  %v797 = vadd.f32 %v524, %v796
  %v798 = vpop.f32.mrb[0].mxu0
  %v799 = vadd.f32 %v526, %v798
  %v800 = vpop.f32.mrb[0].mxu0
  %v801 = vadd.f32 %v528, %v800
  %802 = vmatprep.mubr.bf16.mxu0 0
  %803 = vmatmul.mubr.bf16.gmra.mrb[0].mxu0 %v694
  %v804 = vpop.f32.mrb[0].mxu0
  %v805 = vadd.f32 %v532, %v804
  %v806 = vpop.f32.mrb[0].mxu0
  %v807 = vadd.f32 %v534, %v806
  %v808 = vpop.f32.mrb[0].mxu0
  %v809 = vadd.f32 %v536, %v808
  %v810 = vpop.f32.mrb[0].mxu0
  %v811 = vadd.f32 %v538, %v810
  %812 = vmatprep.mubr.bf16.mxu0 0
  %813 = vmatmul.mubr.bf16.gmra.mrb[0].mxu0 %v697
  %v814 = vpop.f32.mrb[0].mxu0
  %v815 = vadd.f32 %v542, %v814
  %v816 = vpop.f32.mrb[0].mxu0
  %v817 = vadd.f32 %v544, %v816
  %v818 = vpop.f32.mrb[0].mxu0
  %v819 = vadd.f32 %v546, %v818
  %v820 = vpop.f32.mrb[0].mxu0
  %v821 = vadd.f32 %v548, %v820
  %822 = vmatprep.mubr.bf16.mxu0 0
  %823 = vmatmul.mubr.bf16.gmra.mrb[0].mxu0 %v700
  %v824 = vpop.f32.mrb[0].mxu0
  %v825 = vadd.f32 %v552, %v824
  %v826 = vpop.f32.mrb[0].mxu0
  %v827 = vadd.f32 %v554, %v826
  %v828 = vpop.f32.mrb[0].mxu0
  %v829 = vadd.f32 %v556, %v828
  %v830 = vpop.f32.mrb[0].mxu0
  %v831 = vadd.f32 %v558, %v830
  %832 = vmatprep.mubr.bf16.mxu0 0
  %833 = vmatmul.mubr.bf16.gmra.mrb[0].mxu0 %v703
  %v834 = vpop.f32.mrb[0].mxu0
  %v835 = vadd.f32 %v562, %v834
  %v836 = vpop.f32.mrb[0].mxu0
  %v837 = vadd.f32 %v564, %v836
  %v838 = vpop.f32.mrb[0].mxu0
  %v839 = vadd.f32 %v566, %v838
  %v840 = vpop.f32.mrb[0].mxu0
  %v841 = vadd.f32 %v568, %v840
  %842 = vmatprep.mubr.bf16.mxu0 0
  %843 = vmatmul.mubr.bf16.gmra.mrb[0].mxu0 %v706
  %v844 = vpop.f32.mrb[0].mxu0
  %v845 = vadd.f32 %v572, %v844
  %v846 = vpop.f32.mrb[0].mxu0
  %v847 = vadd.f32 %v574, %v846
  %v848 = vpop.f32.mrb[0].mxu0
  %v849 = vadd.f32 %v576, %v848
  %v850 = vpop.f32.mrb[0].mxu0
  %v851 = vadd.f32 %v578, %v850
  %852 = vmatprep.mubr.bf16.mxu0 0
  %853 = vmatmul.mubr.bf16.gmra.mrb[0].mxu0 %v709
  %v854 = vpop.f32.mrb[0].mxu0
  %v855 = vadd.f32 %v582, %v854
  %v856 = vpop.f32.mrb[0].mxu0
  %v857 = vadd.f32 %v584, %v856
  %v858 = vpop.f32.mrb[0].mxu0
  %v859 = vadd.f32 %v586, %v858
  %v860 = vpop.f32.mrb[0].mxu0
  %v861 = vadd.f32 %v588, %v860
  %862 = vmatprep.mubr.bf16.mxu0 0
  %863 = vmatmul.mubr.bf16.gmra.mrb[0].mxu0 %v712
  %v864 = vpop.f32.mrb[0].mxu0
  %v865 = vadd.f32 %v592, %v864
  %v866 = vpop.f32.mrb[0].mxu0
  %v867 = vadd.f32 %v594, %v866
  %v868 = vpop.f32.mrb[0].mxu0
  %v869 = vadd.f32 %v596, %v868
  %v870 = vpop.f32.mrb[0].mxu0
  %v871 = vadd.f32 %v598, %v870
  %872 = vdwg.mxu0
  %vm881 = vcmask 1042432
  %vm882 = vcmask 1046532
  %vm883 = vmor %vm881, %vm882
  %v884 = vrot.slane %v33, 5
  %v885 = vrot.slane %v884, 4
  %v886 = vrot.slane %v34, 5
  %v887 = vsel %vm883, %v885, %v886
  %v888 = vrot.slane %v886, 4
  %v889 = vrot.slane %v35, 5
  %v890 = vsel %vm883, %v888, %v889
  %v891 = vrot.slane %v889, 4
  %v892 = vrot.slane %v36, 5
  %v893 = vsel %vm883, %v891, %v892
  %v894 = vrot.slane %v37, 5
  %v895 = vrot.slane %v894, 4
  %v896 = vrot.slane %v38, 5
  %v897 = vsel %vm883, %v895, %v896
  %v898 = vrot.slane %v896, 4
  %v899 = vrot.slane %v39, 5
  %v900 = vsel %vm883, %v898, %v899
  %v901 = vrot.slane %v899, 4
  %v902 = vrot.slane %v40, 5
  %v903 = vsel %vm883, %v901, %v902
  %v904 = vrot.slane %v41, 5
  %v905 = vrot.slane %v904, 4
  %v906 = vrot.slane %v42, 5
  %v907 = vsel %vm883, %v905, %v906
  %v908 = vrot.slane %v906, 4
  %v909 = vrot.slane %v43, 5
  %v910 = vsel %vm883, %v908, %v909
  %v911 = vrot.slane %v909, 4
  %v912 = vrot.slane %v44, 5
  %v913 = vsel %vm883, %v911, %v912
  %v914 = vrot.slane %v45, 5
  %v915 = vrot.slane %v914, 4
  %v916 = vrot.slane %v46, 5
  %v917 = vsel %vm883, %v915, %v916
  %v918 = vrot.slane %v916, 4
  %v919 = vrot.slane %v47, 5
  %v920 = vsel %vm883, %v918, %v919
  %v921 = vrot.slane %v919, 4
  %v922 = vrot.slane %v48, 5
  %v923 = vsel %vm883, %v921, %v922
  %v924 = vrot.slane %v49, 5
  %v925 = vrot.slane %v924, 4
  %v926 = vrot.slane %v50, 5
  %v927 = vsel %vm883, %v925, %v926
  %v928 = vrot.slane %v926, 4
  %v929 = vrot.slane %v51, 5
  %v930 = vsel %vm883, %v928, %v929
  %v931 = vrot.slane %v929, 4
  %v932 = vrot.slane %v52, 5
  %v933 = vsel %vm883, %v931, %v932
  %v934 = vrot.slane %v53, 5
  %v935 = vrot.slane %v934, 4
  %v936 = vrot.slane %v54, 5
  %v937 = vsel %vm883, %v935, %v936
  %v938 = vrot.slane %v936, 4
  %v939 = vrot.slane %v55, 5
  %v940 = vsel %vm883, %v938, %v939
  %v941 = vrot.slane %v939, 4
  %v942 = vrot.slane %v56, 5
  %v943 = vsel %vm883, %v941, %v942
  %v944 = vrot.slane %v57, 5
  %v945 = vrot.slane %v944, 4
  %v946 = vrot.slane %v58, 5
  %v947 = vsel %vm883, %v945, %v946
  %v948 = vrot.slane %v946, 4
  %v949 = vrot.slane %v59, 5
  %v950 = vsel %vm883, %v948, %v949
  %v951 = vrot.slane %v949, 4
  %v952 = vrot.slane %v60, 5
  %v953 = vsel %vm883, %v951, %v952
  %v954 = vrot.slane %v61, 5
  %v955 = vrot.slane %v954, 4
  %v956 = vrot.slane %v62, 5
  %v957 = vsel %vm883, %v955, %v956
  %v958 = vrot.slane %v956, 4
  %v959 = vrot.slane %v63, 5
  %v960 = vsel %vm883, %v958, %v959
  %v961 = vrot.slane %v959, 4
  %v962 = vrot.slane %v64, 5
  %v963 = vsel %vm883, %v961, %v962
  %s964 = scalar_lea.vmem %s1, 64
  %v965 = vld [vmem:[%s964] sm:$0xff]
  %v966 = vld [vmem:[%s964 + $0x8] sm:$0xff]
  %v967 = vld [vmem:[%s964 + $0x10] sm:$0xff]
  %v968 = vld [vmem:[%s964 + $0x18] sm:$0x33]
  %v969 = vunpack.c.l.b16 %v887
  %v970 = vunpack.c.l.b16 %v890
  %v971 = vunpack.c.l.b16 %v893
  %v972 = vunpack.c.l.b16 %v897
  %v973 = vunpack.c.l.b16 %v900
  %v974 = vunpack.c.l.b16 %v903
  %v975 = vunpack.c.l.b16 %v907
  %v976 = vunpack.c.l.b16 %v910
  %v977 = vunpack.c.l.b16 %v913
  %v978 = vunpack.c.l.b16 %v917
  %v979 = vunpack.c.l.b16 %v920
  %v980 = vunpack.c.l.b16 %v923
  %v981 = vunpack.c.l.b16 %v927
  %v982 = vunpack.c.l.b16 %v930
  %v983 = vunpack.c.l.b16 %v933
  %v984 = vunpack.c.l.b16 %v937
  %v985 = vunpack.c.l.b16 %v940
  %v986 = vunpack.c.l.b16 %v943
  %v987 = vunpack.c.l.b16 %v947
  %v988 = vunpack.c.l.b16 %v950
  %v989 = vunpack.c.l.b16 %v953
  %v990 = vunpack.c.l.b16 %v957
  %v991 = vunpack.c.l.b16 %v960
  %v992 = vunpack.c.l.b16 %v963
  %v993 = vpack.c.b16 %v970, %v969
  %v994 = vpack.c.b16 %v972, %v971
  %v995 = vpack.c.b16 %v974, %v973
  %v996 = vpack.c.b16 %v976, %v975
  %v997 = vpack.c.b16 %v978, %v977
  %v998 = vpack.c.b16 %v980, %v979
  %v999 = vpack.c.b16 %v982, %v981
  %v1000 = vpack.c.b16 %v984, %v983
  %v1001 = vpack.c.b16 %v986, %v985
  %v1002 = vpack.c.b16 %v988, %v987
  %v1003 = vpack.c.b16 %v990, %v989
  %v1004 = vpack.c.b16 %v992, %v991
  %v1009 = vunpack.c.l.b16 %v965
  %v1010 = vunpack.c.h.b16 %v965
  %v1011 = vunpack.c.l.b16 %v966
  %v1012 = vunpack.c.h.b16 %v966
  %v1013 = vunpack.c.l.b16 %v967
  %v1014 = vunpack.c.h.b16 %v967
  %v1015 = vunpack.c.l.b16 %v968
  %v1016 = vunpack.c.h.b16 %v968
  %v1017 = vpack.c.b16 %v1011, %v1009
  %v1018 = vpack.c.b16 %v1012, %v1010
  %v1019 = vpack.c.b16 %v1015, %v1013
  %v1020 = vpack.c.b16 %v1016, %v1014
  %v1024 = vsel %vm403, %v993, 0
  %v1027 = vsel %vm403, %v994, 0
  %v1030 = vsel %vm403, %v995, 0
  %v1033 = vsel %vm403, %v996, 0
  %v1036 = vsel %vm403, %v997, 0
  %v1039 = vsel %vm403, %v998, 0
  %v1042 = vsel %vm403, %v999, 0
  %v1045 = vsel %vm403, %v1000, 0
  %v1048 = vsel %vm403, %v1001, 0
  %v1051 = vsel %vm403, %v1002, 0
  %v1054 = vsel %vm403, %v1003, 0
  %v1057 = vsel %vm403, %v1004, 0
  %v1060 = vsel %vm440, %v1019, 0
  %v1063 = vsel %vm440, %v1020, 0
  %1065 = vmatprep.subr.bf16.mxu0 %v1018
  %1066 = vmatpush1.bf16.msra.mxu0 %v1017
  %1067 = vmatprep.subr.bf16.mxu0 %v1063
  %1068 = vmatpush1.bf16.msra.mxu0 %v1060
  %1069 = vmatprep.subr.bf16.mxu0 0
  %1070 = vmatpush1.bf16.msra.mxu0 0
  %1071 = vmatprep.subr.bf16.mxu0 0
  %1072 = vmatpush1.bf16.msra.mxu0 0
  %1073 = vmatprep.subr.bf16.mxu0 0
  %1074 = vmatpush1.bf16.msra.mxu0 0
  %1075 = vmatprep.subr.bf16.mxu0 0
  %1076 = vmatpush1.bf16.msra.mxu0 0
  %1077 = vmatprep.subr.bf16.mxu0 0
  %1078 = vmatpush1.bf16.msra.mxu0 0
  %1079 = vmatprep.subr.bf16.mxu0 0
  %1080 = vmatpush1.bf16.msra.mxu0 0
  %1081 = vmatprep.subr.bf16.mxu0 0
  %1082 = vmatpush1.bf16.msra.mxu0 0
  %1083 = vmatprep.subr.bf16.mxu0 0
  %1084 = vmatpush1.bf16.msra.mxu0 0
  %1085 = vmatprep.subr.bf16.mxu0 0
  %1086 = vmatpush1.bf16.msra.mxu0 0
  %1087 = vmatprep.subr.bf16.mxu0 0
  %1088 = vmatpush1.bf16.msra.mxu0 0
  %1089 = vmatprep.subr.bf16.mxu0 0
  %1090 = vmatpush1.bf16.msra.mxu0 0
  %1091 = vmatprep.subr.bf16.mxu0 0
  %1092 = vmatpush1.bf16.msra.mxu0 0
  %1093 = vmatprep.subr.bf16.mxu0 0
  %1094 = vmatpush1.bf16.msra.mxu0 0
  %1095 = vmatprep.subr.bf16.mxu0 0
  %1096 = vmatpush1.bf16.msra.mxu0 0
  %1097 = vmatprep.mubr.bf16.mxu0 0
  %1098 = vmatmul.mubr.bf16.gmra.mrb[0].mxu0 %v1024
  %v1099 = vpop.f32.mrb[0].mxu0
  %v1100 = vadd.f32 0.0, %v1099
  %v1101 = vpop.f32.mrb[0].mxu0
  %v1102 = vadd.f32 0.0, %v1101
  %v1103 = vpop.f32.mrb[0].mxu0
  %v1104 = vadd.f32 0.0, %v1103
  %v1105 = vpop.f32.mrb[0].mxu0
  %v1106 = vadd.f32 0.0, %v1105
  %1107 = vmatprep.mubr.bf16.mxu0 0
  %1108 = vmatmul.mubr.bf16.gmra.mrb[0].mxu0 %v1027
  %v1109 = vpop.f32.mrb[0].mxu0
  %v1110 = vadd.f32 0.0, %v1109
  %v1111 = vpop.f32.mrb[0].mxu0
  %v1112 = vadd.f32 0.0, %v1111
  %v1113 = vpop.f32.mrb[0].mxu0
  %v1114 = vadd.f32 0.0, %v1113
  %v1115 = vpop.f32.mrb[0].mxu0
  %v1116 = vadd.f32 0.0, %v1115
  %1117 = vmatprep.mubr.bf16.mxu0 0
  %1118 = vmatmul.mubr.bf16.gmra.mrb[0].mxu0 %v1030
  %v1119 = vpop.f32.mrb[0].mxu0
  %v1120 = vadd.f32 0.0, %v1119
  %v1121 = vpop.f32.mrb[0].mxu0
  %v1122 = vadd.f32 0.0, %v1121
  %v1123 = vpop.f32.mrb[0].mxu0
  %v1124 = vadd.f32 0.0, %v1123
  %v1125 = vpop.f32.mrb[0].mxu0
  %v1126 = vadd.f32 0.0, %v1125
  %1127 = vmatprep.mubr.bf16.mxu0 0
  %1128 = vmatmul.mubr.bf16.gmra.mrb[0].mxu0 %v1033
  %v1129 = vpop.f32.mrb[0].mxu0
  %v1130 = vadd.f32 0.0, %v1129
  %v1131 = vpop.f32.mrb[0].mxu0
  %v1132 = vadd.f32 0.0, %v1131
  %v1133 = vpop.f32.mrb[0].mxu0
  %v1134 = vadd.f32 0.0, %v1133
  %v1135 = vpop.f32.mrb[0].mxu0
  %v1136 = vadd.f32 0.0, %v1135
  %1137 = vmatprep.mubr.bf16.mxu0 0
  %1138 = vmatmul.mubr.bf16.gmra.mrb[0].mxu0 %v1036
  %v1139 = vpop.f32.mrb[0].mxu0
  %v1140 = vadd.f32 0.0, %v1139
  %v1141 = vpop.f32.mrb[0].mxu0
  %v1142 = vadd.f32 0.0, %v1141
  %v1143 = vpop.f32.mrb[0].mxu0
  %v1144 = vadd.f32 0.0, %v1143
  %v1145 = vpop.f32.mrb[0].mxu0
  %v1146 = vadd.f32 0.0, %v1145
  %1147 = vmatprep.mubr.bf16.mxu0 0
  %1148 = vmatmul.mubr.bf16.gmra.mrb[0].mxu0 %v1039
  %v1149 = vpop.f32.mrb[0].mxu0
  %v1150 = vadd.f32 0.0, %v1149
  %v1151 = vpop.f32.mrb[0].mxu0
  %v1152 = vadd.f32 0.0, %v1151
  %v1153 = vpop.f32.mrb[0].mxu0
  %v1154 = vadd.f32 0.0, %v1153
  %v1155 = vpop.f32.mrb[0].mxu0
  %v1156 = vadd.f32 0.0, %v1155
  %1157 = vmatprep.mubr.bf16.mxu0 0
  %1158 = vmatmul.mubr.bf16.gmra.mrb[0].mxu0 %v1042
  %v1159 = vpop.f32.mrb[0].mxu0
  %v1160 = vadd.f32 0.0, %v1159
  %v1161 = vpop.f32.mrb[0].mxu0
  %v1162 = vadd.f32 0.0, %v1161
  %v1163 = vpop.f32.mrb[0].mxu0
  %v1164 = vadd.f32 0.0, %v1163
  %v1165 = vpop.f32.mrb[0].mxu0
  %v1166 = vadd.f32 0.0, %v1165
  %1167 = vmatprep.mubr.bf16.mxu0 0
  %1168 = vmatmul.mubr.bf16.gmra.mrb[0].mxu0 %v1045
  %v1169 = vpop.f32.mrb[0].mxu0
  %v1170 = vadd.f32 0.0, %v1169
  %v1171 = vpop.f32.mrb[0].mxu0
  %v1172 = vadd.f32 0.0, %v1171
  %v1173 = vpop.f32.mrb[0].mxu0
  %v1174 = vadd.f32 0.0, %v1173
  %v1175 = vpop.f32.mrb[0].mxu0
  %v1176 = vadd.f32 0.0, %v1175
  %1177 = vmatprep.mubr.bf16.mxu0 0
  %1178 = vmatmul.mubr.bf16.gmra.mrb[0].mxu0 %v1048
  %v1179 = vpop.f32.mrb[0].mxu0
  %v1180 = vadd.f32 0.0, %v1179
  %v1181 = vpop.f32.mrb[0].mxu0
  %v1182 = vadd.f32 0.0, %v1181
  %v1183 = vpop.f32.mrb[0].mxu0
  %v1184 = vadd.f32 0.0, %v1183
  %v1185 = vpop.f32.mrb[0].mxu0
  %v1186 = vadd.f32 0.0, %v1185
  %1187 = vmatprep.mubr.bf16.mxu0 0
  %1188 = vmatmul.mubr.bf16.gmra.mrb[0].mxu0 %v1051
  %v1189 = vpop.f32.mrb[0].mxu0
  %v1190 = vadd.f32 0.0, %v1189
  %v1191 = vpop.f32.mrb[0].mxu0
  %v1192 = vadd.f32 0.0, %v1191
  %v1193 = vpop.f32.mrb[0].mxu0
  %v1194 = vadd.f32 0.0, %v1193
  %v1195 = vpop.f32.mrb[0].mxu0
  %v1196 = vadd.f32 0.0, %v1195
  %1197 = vmatprep.mubr.bf16.mxu0 0
  %1198 = vmatmul.mubr.bf16.gmra.mrb[0].mxu0 %v1054
  %v1199 = vpop.f32.mrb[0].mxu0
  %v1200 = vadd.f32 0.0, %v1199
  %v1201 = vpop.f32.mrb[0].mxu0
  %v1202 = vadd.f32 0.0, %v1201
  %v1203 = vpop.f32.mrb[0].mxu0
  %v1204 = vadd.f32 0.0, %v1203
  %v1205 = vpop.f32.mrb[0].mxu0
  %v1206 = vadd.f32 0.0, %v1205
  %1207 = vmatprep.mubr.bf16.mxu0 0
  %1208 = vmatmul.mubr.bf16.gmra.mrb[0].mxu0 %v1057
  %v1209 = vpop.f32.mrb[0].mxu0
  %v1210 = vadd.f32 0.0, %v1209
  %v1211 = vpop.f32.mrb[0].mxu0
  %v1212 = vadd.f32 0.0, %v1211
  %v1213 = vpop.f32.mrb[0].mxu0
  %v1214 = vadd.f32 0.0, %v1213
  %v1215 = vpop.f32.mrb[0].mxu0
  %v1216 = vadd.f32 0.0, %v1215
  %1217 = vdwg.mxu0
  %v1218 = vadd.f32 %v755, %v1100
  %v1219 = vadd.f32 %v757, %v1102
  %v1220 = vadd.f32 %v759, %v1104
  %v1221 = vadd.f32 %v761, %v1106
  %v1222 = vadd.f32 %v765, %v1110
  %v1223 = vadd.f32 %v767, %v1112
  %v1224 = vadd.f32 %v769, %v1114
  %v1225 = vadd.f32 %v771, %v1116
  %v1226 = vadd.f32 %v775, %v1120
  %v1227 = vadd.f32 %v777, %v1122
  %v1228 = vadd.f32 %v779, %v1124
  %v1229 = vadd.f32 %v781, %v1126
  %v1230 = vadd.f32 %v785, %v1130
  %v1231 = vadd.f32 %v787, %v1132
  %v1232 = vadd.f32 %v789, %v1134
  %v1233 = vadd.f32 %v791, %v1136
  %v1234 = vadd.f32 %v795, %v1140
  %v1235 = vadd.f32 %v797, %v1142
  %v1236 = vadd.f32 %v799, %v1144
  %v1237 = vadd.f32 %v801, %v1146
  %v1238 = vadd.f32 %v805, %v1150
  %v1239 = vadd.f32 %v807, %v1152
  %v1240 = vadd.f32 %v809, %v1154
  %v1241 = vadd.f32 %v811, %v1156
  %v1242 = vadd.f32 %v815, %v1160
  %v1243 = vadd.f32 %v817, %v1162
  %v1244 = vadd.f32 %v819, %v1164
  %v1245 = vadd.f32 %v821, %v1166
  %v1246 = vadd.f32 %v825, %v1170
  %v1247 = vadd.f32 %v827, %v1172
  %v1248 = vadd.f32 %v829, %v1174
  %v1249 = vadd.f32 %v831, %v1176
  %v1250 = vadd.f32 %v835, %v1180
  %v1251 = vadd.f32 %v837, %v1182
  %v1252 = vadd.f32 %v839, %v1184
  %v1253 = vadd.f32 %v841, %v1186
  %v1254 = vadd.f32 %v845, %v1190
  %v1255 = vadd.f32 %v847, %v1192
  %v1256 = vadd.f32 %v849, %v1194
  %v1257 = vadd.f32 %v851, %v1196
  %v1258 = vadd.f32 %v855, %v1200
  %v1259 = vadd.f32 %v857, %v1202
  %v1260 = vadd.f32 %v859, %v1204
  %v1261 = vadd.f32 %v861, %v1206
  %v1262 = vadd.f32 %v865, %v1210
  %v1263 = vadd.f32 %v867, %v1212
  %v1264 = vadd.f32 %v869, %v1214
  %v1265 = vadd.f32 %v871, %v1216
  %vm1266 = vsmask.f32 2304
  %vm1267 = vsmask.f32 6416
  %vm1268 = vmor %vm1266, %vm1267
  %v1269 = vrot.slane %v73, 5
  %v1270 = vrot.slane %v76, 6
  %v1271 = vor.u32 %v1269, %v1270
  %v1272 = vrot.slane %v1271, 4
  %v1273 = vrot.slane %v86, 5
  %v1274 = vrot.slane %v82, 6
  %v1275 = vor.u32 %v1273, %v1274
  %v1276 = vsel %vm1268, %v1272, %v1275
  %v1277 = vrot.slane %v1275, 4
  %v1278 = vrot.slane %v96, 5
  %v1279 = vrot.slane %v92, 6
  %v1280 = vor.u32 %v1278, %v1279
  %v1281 = vsel %vm1268, %v1277, %v1280
  %v1282 = vrot.slane %v1280, 4
  %v1283 = vshrl.u32 %v36, 16
  %v1285 = vrot.slane %v1283, 5
  %v1286 = vrot.slane %v102, 6
  %v1287 = vor.u32 %v1285, %v1286
  %v1288 = vsel %vm1268, %v1282, %v1287
  %v1289 = vrot.slane %v107, 5
  %v1290 = vrot.slane %v110, 6
  %v1291 = vor.u32 %v1289, %v1290
  %v1292 = vrot.slane %v1291, 4
  %v1293 = vrot.slane %v120, 5
  %v1294 = vrot.slane %v116, 6
  %v1295 = vor.u32 %v1293, %v1294
  %v1296 = vsel %vm1268, %v1292, %v1295
  %v1297 = vrot.slane %v1295, 4
  %v1298 = vrot.slane %v130, 5
  %v1299 = vrot.slane %v126, 6
  %v1300 = vor.u32 %v1298, %v1299
  %v1301 = vsel %vm1268, %v1297, %v1300
  %v1302 = vrot.slane %v1300, 4
  %v1303 = vshrl.u32 %v40, 16
  %v1305 = vrot.slane %v1303, 5
  %v1306 = vrot.slane %v136, 6
  %v1307 = vor.u32 %v1305, %v1306
  %v1308 = vsel %vm1268, %v1302, %v1307
  %v1309 = vrot.slane %v141, 5
  %v1310 = vrot.slane %v144, 6
  %v1311 = vor.u32 %v1309, %v1310
  %v1312 = vrot.slane %v1311, 4
  %v1313 = vrot.slane %v154, 5
  %v1314 = vrot.slane %v150, 6
  %v1315 = vor.u32 %v1313, %v1314
  %v1316 = vsel %vm1268, %v1312, %v1315
  %v1317 = vrot.slane %v1315, 4
  %v1318 = vrot.slane %v164, 5
  %v1319 = vrot.slane %v160, 6
  %v1320 = vor.u32 %v1318, %v1319
  %v1321 = vsel %vm1268, %v1317, %v1320
  %v1322 = vrot.slane %v1320, 4
  %v1323 = vshrl.u32 %v44, 16
  %v1325 = vrot.slane %v1323, 5
  %v1326 = vrot.slane %v170, 6
  %v1327 = vor.u32 %v1325, %v1326
  %v1328 = vsel %vm1268, %v1322, %v1327
  %v1329 = vrot.slane %v175, 5
  %v1330 = vrot.slane %v178, 6
  %v1331 = vor.u32 %v1329, %v1330
  %v1332 = vrot.slane %v1331, 4
  %v1333 = vrot.slane %v188, 5
  %v1334 = vrot.slane %v184, 6
  %v1335 = vor.u32 %v1333, %v1334
  %v1336 = vsel %vm1268, %v1332, %v1335
  %v1337 = vrot.slane %v1335, 4
  %v1338 = vrot.slane %v198, 5
  %v1339 = vrot.slane %v194, 6
  %v1340 = vor.u32 %v1338, %v1339
  %v1341 = vsel %vm1268, %v1337, %v1340
  %v1342 = vrot.slane %v1340, 4
  %v1343 = vshrl.u32 %v48, 16
  %v1345 = vrot.slane %v1343, 5
  %v1346 = vrot.slane %v204, 6
  %v1347 = vor.u32 %v1345, %v1346
  %v1348 = vsel %vm1268, %v1342, %v1347
  %v1349 = vrot.slane %v209, 5
  %v1350 = vrot.slane %v212, 6
  %v1351 = vor.u32 %v1349, %v1350
  %v1352 = vrot.slane %v1351, 4
  %v1353 = vrot.slane %v222, 5
  %v1354 = vrot.slane %v218, 6
  %v1355 = vor.u32 %v1353, %v1354
  %v1356 = vsel %vm1268, %v1352, %v1355
  %v1357 = vrot.slane %v1355, 4
  %v1358 = vrot.slane %v232, 5
  %v1359 = vrot.slane %v228, 6
  %v1360 = vor.u32 %v1358, %v1359
  %v1361 = vsel %vm1268, %v1357, %v1360
  %v1362 = vrot.slane %v1360, 4
  %v1363 = vshrl.u32 %v52, 16
  %v1365 = vrot.slane %v1363, 5
  %v1366 = vrot.slane %v238, 6
  %v1367 = vor.u32 %v1365, %v1366
  %v1368 = vsel %vm1268, %v1362, %v1367
  %v1369 = vrot.slane %v243, 5
  %v1370 = vrot.slane %v246, 6
  %v1371 = vor.u32 %v1369, %v1370
  %v1372 = vrot.slane %v1371, 4
  %v1373 = vrot.slane %v256, 5
  %v1374 = vrot.slane %v252, 6
  %v1375 = vor.u32 %v1373, %v1374
  %v1376 = vsel %vm1268, %v1372, %v1375
  %v1377 = vrot.slane %v1375, 4
  %v1378 = vrot.slane %v266, 5
  %v1379 = vrot.slane %v262, 6
  %v1380 = vor.u32 %v1378, %v1379
  %v1381 = vsel %vm1268, %v1377, %v1380
  %v1382 = vrot.slane %v1380, 4
  %v1383 = vshrl.u32 %v56, 16
  %v1385 = vrot.slane %v1383, 5
  %v1386 = vrot.slane %v272, 6
  %v1387 = vor.u32 %v1385, %v1386
  %v1388 = vsel %vm1268, %v1382, %v1387
  %v1389 = vrot.slane %v277, 5
  %v1390 = vrot.slane %v280, 6
  %v1391 = vor.u32 %v1389, %v1390
  %v1392 = vrot.slane %v1391, 4
  %v1393 = vrot.slane %v290, 5
  %v1394 = vrot.slane %v286, 6
  %v1395 = vor.u32 %v1393, %v1394
  %v1396 = vsel %vm1268, %v1392, %v1395
  %v1397 = vrot.slane %v1395, 4
  %v1398 = vrot.slane %v300, 5
  %v1399 = vrot.slane %v296, 6
  %v1400 = vor.u32 %v1398, %v1399
  %v1401 = vsel %vm1268, %v1397, %v1400
  %v1402 = vrot.slane %v1400, 4
  %v1403 = vshrl.u32 %v60, 16
  %v1405 = vrot.slane %v1403, 5
  %v1406 = vrot.slane %v306, 6
  %v1407 = vor.u32 %v1405, %v1406
  %v1408 = vsel %vm1268, %v1402, %v1407
  %v1409 = vrot.slane %v311, 5
  %v1410 = vrot.slane %v314, 6
  %v1411 = vor.u32 %v1409, %v1410
  %v1412 = vrot.slane %v1411, 4
  %v1413 = vrot.slane %v324, 5
  %v1414 = vrot.slane %v320, 6
  %v1415 = vor.u32 %v1413, %v1414
  %v1416 = vsel %vm1268, %v1412, %v1415
  %v1417 = vrot.slane %v1415, 4
  %v1418 = vrot.slane %v334, 5
  %v1419 = vrot.slane %v330, 6
  %v1420 = vor.u32 %v1418, %v1419
  %v1421 = vsel %vm1268, %v1417, %v1420
  %v1422 = vrot.slane %v1420, 4
  %v1423 = vshrl.u32 %v64, 16
  %v1425 = vrot.slane %v1423, 5
  %v1426 = vrot.slane %v340, 6
  %v1427 = vor.u32 %v1425, %v1426
  %v1428 = vsel %vm1268, %v1422, %v1427
  %s1429 = scalar_lea.vmem %s1, 96
  %v1430 = vld [vmem:[%s1429] sm:$0xff]
  %v1431 = vld [vmem:[%s1429 + $0x8] sm:$0xff]
  %v1432 = vld [vmem:[%s1429 + $0x10] sm:$0xff]
  %v1433 = vld [vmem:[%s1429 + $0x18] sm:$0x33]
  %v1434 = vunpack.c.l.b16 %v1276
  %v1435 = vunpack.c.l.b16 %v1281
  %v1436 = vunpack.c.l.b16 %v1288
  %v1437 = vunpack.c.l.b16 %v1296
  %v1438 = vunpack.c.l.b16 %v1301
  %v1439 = vunpack.c.l.b16 %v1308
  %v1440 = vunpack.c.l.b16 %v1316
  %v1441 = vunpack.c.l.b16 %v1321
  %v1442 = vunpack.c.l.b16 %v1328
  %v1443 = vunpack.c.l.b16 %v1336
  %v1444 = vunpack.c.l.b16 %v1341
  %v1445 = vunpack.c.l.b16 %v1348
  %v1446 = vunpack.c.l.b16 %v1356
  %v1447 = vunpack.c.l.b16 %v1361
  %v1448 = vunpack.c.l.b16 %v1368
  %v1449 = vunpack.c.l.b16 %v1376
  %v1450 = vunpack.c.l.b16 %v1381
  %v1451 = vunpack.c.l.b16 %v1388
  %v1452 = vunpack.c.l.b16 %v1396
  %v1453 = vunpack.c.l.b16 %v1401
  %v1454 = vunpack.c.l.b16 %v1408
  %v1455 = vunpack.c.l.b16 %v1416
  %v1456 = vunpack.c.l.b16 %v1421
  %v1457 = vunpack.c.l.b16 %v1428
  %v1458 = vpack.c.b16 %v1435, %v1434
  %v1459 = vpack.c.b16 %v1437, %v1436
  %v1460 = vpack.c.b16 %v1439, %v1438
  %v1461 = vpack.c.b16 %v1441, %v1440
  %v1462 = vpack.c.b16 %v1443, %v1442
  %v1463 = vpack.c.b16 %v1445, %v1444
  %v1464 = vpack.c.b16 %v1447, %v1446
  %v1465 = vpack.c.b16 %v1449, %v1448
  %v1466 = vpack.c.b16 %v1451, %v1450
  %v1467 = vpack.c.b16 %v1453, %v1452
  %v1468 = vpack.c.b16 %v1455, %v1454
  %v1469 = vpack.c.b16 %v1457, %v1456
  %v1474 = vunpack.c.l.b16 %v1430
  %v1475 = vunpack.c.h.b16 %v1430
  %v1476 = vunpack.c.l.b16 %v1431
  %v1477 = vunpack.c.h.b16 %v1431
  %v1478 = vunpack.c.l.b16 %v1432
  %v1479 = vunpack.c.h.b16 %v1432
  %v1480 = vunpack.c.l.b16 %v1433
  %v1481 = vunpack.c.h.b16 %v1433
  %v1482 = vpack.c.b16 %v1476, %v1474
  %v1483 = vpack.c.b16 %v1477, %v1475
  %v1484 = vpack.c.b16 %v1480, %v1478
  %v1485 = vpack.c.b16 %v1481, %v1479
  %v1489 = vsel %vm403, %v1458, 0
  %v1492 = vsel %vm403, %v1459, 0
  %v1495 = vsel %vm403, %v1460, 0
  %v1498 = vsel %vm403, %v1461, 0
  %v1501 = vsel %vm403, %v1462, 0
  %v1504 = vsel %vm403, %v1463, 0
  %v1507 = vsel %vm403, %v1464, 0
  %v1510 = vsel %vm403, %v1465, 0
  %v1513 = vsel %vm403, %v1466, 0
  %v1516 = vsel %vm403, %v1467, 0
  %v1519 = vsel %vm403, %v1468, 0
  %v1522 = vsel %vm403, %v1469, 0
  %v1525 = vsel %vm440, %v1484, 0
  %v1528 = vsel %vm440, %v1485, 0
  %1530 = vmatprep.subr.bf16.mxu0 %v1483
  %1531 = vmatpush1.bf16.msra.mxu0 %v1482
  %1532 = vmatprep.subr.bf16.mxu0 %v1528
  %1533 = vmatpush1.bf16.msra.mxu0 %v1525
  %1534 = vmatprep.subr.bf16.mxu0 0
  %1535 = vmatpush1.bf16.msra.mxu0 0
  %1536 = vmatprep.subr.bf16.mxu0 0
  %1537 = vmatpush1.bf16.msra.mxu0 0
  %1538 = vmatprep.subr.bf16.mxu0 0
  %1539 = vmatpush1.bf16.msra.mxu0 0
  %1540 = vmatprep.subr.bf16.mxu0 0
  %1541 = vmatpush1.bf16.msra.mxu0 0
  %1542 = vmatprep.subr.bf16.mxu0 0
  %1543 = vmatpush1.bf16.msra.mxu0 0
  %1544 = vmatprep.subr.bf16.mxu0 0
  %1545 = vmatpush1.bf16.msra.mxu0 0
  %1546 = vmatprep.subr.bf16.mxu0 0
  %1547 = vmatpush1.bf16.msra.mxu0 0
  %1548 = vmatprep.subr.bf16.mxu0 0
  %1549 = vmatpush1.bf16.msra.mxu0 0
  %1550 = vmatprep.subr.bf16.mxu0 0
  %1551 = vmatpush1.bf16.msra.mxu0 0
  %1552 = vmatprep.subr.bf16.mxu0 0
  %1553 = vmatpush1.bf16.msra.mxu0 0
  %1554 = vmatprep.subr.bf16.mxu0 0
  %1555 = vmatpush1.bf16.msra.mxu0 0
  %1556 = vmatprep.subr.bf16.mxu0 0
  %1557 = vmatpush1.bf16.msra.mxu0 0
  %1558 = vmatprep.subr.bf16.mxu0 0
  %1559 = vmatpush1.bf16.msra.mxu0 0
  %1560 = vmatprep.subr.bf16.mxu0 0
  %1561 = vmatpush1.bf16.msra.mxu0 0
  %1562 = vmatprep.mubr.bf16.mxu0 0
  %1563 = vmatmul.mubr.bf16.gmra.mrb[0].mxu0 %v1489
  %v1564 = vpop.f32.mrb[0].mxu0
  %v1565 = vadd.f32 0.0, %v1564
  %v1566 = vpop.f32.mrb[0].mxu0
  %v1567 = vadd.f32 0.0, %v1566
  %v1568 = vpop.f32.mrb[0].mxu0
  %v1569 = vadd.f32 0.0, %v1568
  %v1570 = vpop.f32.mrb[0].mxu0
  %v1571 = vadd.f32 0.0, %v1570
  %1572 = vmatprep.mubr.bf16.mxu0 0
  %1573 = vmatmul.mubr.bf16.gmra.mrb[0].mxu0 %v1492
  %v1574 = vpop.f32.mrb[0].mxu0
  %v1575 = vadd.f32 0.0, %v1574
  %v1576 = vpop.f32.mrb[0].mxu0
  %v1577 = vadd.f32 0.0, %v1576
  %v1578 = vpop.f32.mrb[0].mxu0
  %v1579 = vadd.f32 0.0, %v1578
  %v1580 = vpop.f32.mrb[0].mxu0
  %v1581 = vadd.f32 0.0, %v1580
  %1582 = vmatprep.mubr.bf16.mxu0 0
  %1583 = vmatmul.mubr.bf16.gmra.mrb[0].mxu0 %v1495
  %v1584 = vpop.f32.mrb[0].mxu0
  %v1585 = vadd.f32 0.0, %v1584
  %v1586 = vpop.f32.mrb[0].mxu0
  %v1587 = vadd.f32 0.0, %v1586
  %v1588 = vpop.f32.mrb[0].mxu0
  %v1589 = vadd.f32 0.0, %v1588
  %v1590 = vpop.f32.mrb[0].mxu0
  %v1591 = vadd.f32 0.0, %v1590
  %1592 = vmatprep.mubr.bf16.mxu0 0
  %1593 = vmatmul.mubr.bf16.gmra.mrb[0].mxu0 %v1498
  %v1594 = vpop.f32.mrb[0].mxu0
  %v1595 = vadd.f32 0.0, %v1594
  %v1596 = vpop.f32.mrb[0].mxu0
  %v1597 = vadd.f32 0.0, %v1596
  %v1598 = vpop.f32.mrb[0].mxu0
  %v1599 = vadd.f32 0.0, %v1598
  %v1600 = vpop.f32.mrb[0].mxu0
  %v1601 = vadd.f32 0.0, %v1600
  %1602 = vmatprep.mubr.bf16.mxu0 0
  %1603 = vmatmul.mubr.bf16.gmra.mrb[0].mxu0 %v1501
  %v1604 = vpop.f32.mrb[0].mxu0
  %v1605 = vadd.f32 0.0, %v1604
  %v1606 = vpop.f32.mrb[0].mxu0
  %v1607 = vadd.f32 0.0, %v1606
  %v1608 = vpop.f32.mrb[0].mxu0
  %v1609 = vadd.f32 0.0, %v1608
  %v1610 = vpop.f32.mrb[0].mxu0
  %v1611 = vadd.f32 0.0, %v1610
  %1612 = vmatprep.mubr.bf16.mxu0 0
  %1613 = vmatmul.mubr.bf16.gmra.mrb[0].mxu0 %v1504
  %v1614 = vpop.f32.mrb[0].mxu0
  %v1615 = vadd.f32 0.0, %v1614
  %v1616 = vpop.f32.mrb[0].mxu0
  %v1617 = vadd.f32 0.0, %v1616
  %v1618 = vpop.f32.mrb[0].mxu0
  %v1619 = vadd.f32 0.0, %v1618
  %v1620 = vpop.f32.mrb[0].mxu0
  %v1621 = vadd.f32 0.0, %v1620
  %1622 = vmatprep.mubr.bf16.mxu0 0
  %1623 = vmatmul.mubr.bf16.gmra.mrb[0].mxu0 %v1507
  %v1624 = vpop.f32.mrb[0].mxu0
  %v1625 = vadd.f32 0.0, %v1624
  %v1626 = vpop.f32.mrb[0].mxu0
  %v1627 = vadd.f32 0.0, %v1626
  %v1628 = vpop.f32.mrb[0].mxu0
  %v1629 = vadd.f32 0.0, %v1628
  %v1630 = vpop.f32.mrb[0].mxu0
  %v1631 = vadd.f32 0.0, %v1630
  %1632 = vmatprep.mubr.bf16.mxu0 0
  %1633 = vmatmul.mubr.bf16.gmra.mrb[0].mxu0 %v1510
  %v1634 = vpop.f32.mrb[0].mxu0
  %v1635 = vadd.f32 0.0, %v1634
  %v1636 = vpop.f32.mrb[0].mxu0
  %v1637 = vadd.f32 0.0, %v1636
  %v1638 = vpop.f32.mrb[0].mxu0
  %v1639 = vadd.f32 0.0, %v1638
  %v1640 = vpop.f32.mrb[0].mxu0
  %v1641 = vadd.f32 0.0, %v1640
  %1642 = vmatprep.mubr.bf16.mxu0 0
  %1643 = vmatmul.mubr.bf16.gmra.mrb[0].mxu0 %v1513
  %v1644 = vpop.f32.mrb[0].mxu0
  %v1645 = vadd.f32 0.0, %v1644
  %v1646 = vpop.f32.mrb[0].mxu0
  %v1647 = vadd.f32 0.0, %v1646
  %v1648 = vpop.f32.mrb[0].mxu0
  %v1649 = vadd.f32 0.0, %v1648
  %v1650 = vpop.f32.mrb[0].mxu0
  %v1651 = vadd.f32 0.0, %v1650
  %1652 = vmatprep.mubr.bf16.mxu0 0
  %1653 = vmatmul.mubr.bf16.gmra.mrb[0].mxu0 %v1516
  %v1654 = vpop.f32.mrb[0].mxu0
  %v1655 = vadd.f32 0.0, %v1654
  %v1656 = vpop.f32.mrb[0].mxu0
  %v1657 = vadd.f32 0.0, %v1656
  %v1658 = vpop.f32.mrb[0].mxu0
  %v1659 = vadd.f32 0.0, %v1658
  %v1660 = vpop.f32.mrb[0].mxu0
  %v1661 = vadd.f32 0.0, %v1660
  %1662 = vmatprep.mubr.bf16.mxu0 0
  %1663 = vmatmul.mubr.bf16.gmra.mrb[0].mxu0 %v1519
  %v1664 = vpop.f32.mrb[0].mxu0
  %v1665 = vadd.f32 0.0, %v1664
  %v1666 = vpop.f32.mrb[0].mxu0
  %v1667 = vadd.f32 0.0, %v1666
  %v1668 = vpop.f32.mrb[0].mxu0
  %v1669 = vadd.f32 0.0, %v1668
  %v1670 = vpop.f32.mrb[0].mxu0
  %v1671 = vadd.f32 0.0, %v1670
  %1672 = vmatprep.mubr.bf16.mxu0 0
  %1673 = vmatmul.mubr.bf16.gmra.mrb[0].mxu0 %v1522
  %v1674 = vpop.f32.mrb[0].mxu0
  %v1675 = vadd.f32 0.0, %v1674
  %v1676 = vpop.f32.mrb[0].mxu0
  %v1677 = vadd.f32 0.0, %v1676
  %v1678 = vpop.f32.mrb[0].mxu0
  %v1679 = vadd.f32 0.0, %v1678
  %v1680 = vpop.f32.mrb[0].mxu0
  %v1681 = vadd.f32 0.0, %v1680
  %1682 = vdwg.mxu0
  %v1683 = vadd.f32 %v1218, %v1565
  %v1684 = vadd.f32 %v1219, %v1567
  %v1685 = vadd.f32 %v1220, %v1569
  %v1686 = vadd.f32 %v1221, %v1571
  %v1687 = vadd.f32 %v1222, %v1575
  %v1688 = vadd.f32 %v1223, %v1577
  %v1689 = vadd.f32 %v1224, %v1579
  %v1690 = vadd.f32 %v1225, %v1581
  %v1691 = vadd.f32 %v1226, %v1585
  %v1692 = vadd.f32 %v1227, %v1587
  %v1693 = vadd.f32 %v1228, %v1589
  %v1694 = vadd.f32 %v1229, %v1591
  %v1695 = vadd.f32 %v1230, %v1595
  %v1696 = vadd.f32 %v1231, %v1597
  %v1697 = vadd.f32 %v1232, %v1599
  %v1698 = vadd.f32 %v1233, %v1601
  %v1699 = vadd.f32 %v1234, %v1605
  %v1700 = vadd.f32 %v1235, %v1607
  %v1701 = vadd.f32 %v1236, %v1609
  %v1702 = vadd.f32 %v1237, %v1611
  %v1703 = vadd.f32 %v1238, %v1615
  %v1704 = vadd.f32 %v1239, %v1617
  %v1705 = vadd.f32 %v1240, %v1619
  %v1706 = vadd.f32 %v1241, %v1621
  %v1707 = vadd.f32 %v1242, %v1625
  %v1708 = vadd.f32 %v1243, %v1627
  %v1709 = vadd.f32 %v1244, %v1629
  %v1710 = vadd.f32 %v1245, %v1631
  %v1711 = vadd.f32 %v1246, %v1635
  %v1712 = vadd.f32 %v1247, %v1637
  %v1713 = vadd.f32 %v1248, %v1639
  %v1714 = vadd.f32 %v1249, %v1641
  %v1715 = vadd.f32 %v1250, %v1645
  %v1716 = vadd.f32 %v1251, %v1647
  %v1717 = vadd.f32 %v1252, %v1649
  %v1718 = vadd.f32 %v1253, %v1651
  %v1719 = vadd.f32 %v1254, %v1655
  %v1720 = vadd.f32 %v1255, %v1657
  %v1721 = vadd.f32 %v1256, %v1659
  %v1722 = vadd.f32 %v1257, %v1661
  %v1723 = vadd.f32 %v1258, %v1665
  %v1724 = vadd.f32 %v1259, %v1667
  %v1725 = vadd.f32 %v1260, %v1669
  %v1726 = vadd.f32 %v1261, %v1671
  %v1727 = vadd.f32 %v1262, %v1675
  %v1728 = vadd.f32 %v1263, %v1677
  %v1729 = vadd.f32 %v1264, %v1679
  %v1730 = vadd.f32 %v1265, %v1681
  %vm1731 = vcmask 1041408
  %vm1732 = vcmask 1045508
  %vm1733 = vmor %vm1731, %vm1732
  %v1734 = vrot.slane %v33, 6
  %v1735 = vrot.slane %v1734, 4
  %v1736 = vrot.slane %v34, 6
  %v1737 = vsel %vm1733, %v1735, %v1736
  %v1738 = vrot.slane %v1736, 4
  %v1739 = vrot.slane %v35, 6
  %v1740 = vsel %vm1733, %v1738, %v1739
  %v1741 = vrot.slane %v1739, 4
  %v1742 = vrot.slane %v36, 6
  %v1743 = vsel %vm1733, %v1741, %v1742
  %v1744 = vrot.slane %v37, 6
  %v1745 = vrot.slane %v1744, 4
  %v1746 = vrot.slane %v38, 6
  %v1747 = vsel %vm1733, %v1745, %v1746
  %v1748 = vrot.slane %v1746, 4
  %v1749 = vrot.slane %v39, 6
  %v1750 = vsel %vm1733, %v1748, %v1749
  %v1751 = vrot.slane %v1749, 4
  %v1752 = vrot.slane %v40, 6
  %v1753 = vsel %vm1733, %v1751, %v1752
  %v1754 = vrot.slane %v41, 6
  %v1755 = vrot.slane %v1754, 4
  %v1756 = vrot.slane %v42, 6
  %v1757 = vsel %vm1733, %v1755, %v1756
  %v1758 = vrot.slane %v1756, 4
  %v1759 = vrot.slane %v43, 6
  %v1760 = vsel %vm1733, %v1758, %v1759
  %v1761 = vrot.slane %v1759, 4
  %v1762 = vrot.slane %v44, 6
  %v1763 = vsel %vm1733, %v1761, %v1762
  %v1764 = vrot.slane %v45, 6
  %v1765 = vrot.slane %v1764, 4
  %v1766 = vrot.slane %v46, 6
  %v1767 = vsel %vm1733, %v1765, %v1766
  %v1768 = vrot.slane %v1766, 4
  %v1769 = vrot.slane %v47, 6
  %v1770 = vsel %vm1733, %v1768, %v1769
  %v1771 = vrot.slane %v1769, 4
  %v1772 = vrot.slane %v48, 6
  %v1773 = vsel %vm1733, %v1771, %v1772
  %v1774 = vrot.slane %v49, 6
  %v1775 = vrot.slane %v1774, 4
  %v1776 = vrot.slane %v50, 6
  %v1777 = vsel %vm1733, %v1775, %v1776
  %v1778 = vrot.slane %v1776, 4
  %v1779 = vrot.slane %v51, 6
  %v1780 = vsel %vm1733, %v1778, %v1779
  %v1781 = vrot.slane %v1779, 4
  %v1782 = vrot.slane %v52, 6
  %v1783 = vsel %vm1733, %v1781, %v1782
  %v1784 = vrot.slane %v53, 6
  %v1785 = vrot.slane %v1784, 4
  %v1786 = vrot.slane %v54, 6
  %v1787 = vsel %vm1733, %v1785, %v1786
  %v1788 = vrot.slane %v1786, 4
  %v1789 = vrot.slane %v55, 6
  %v1790 = vsel %vm1733, %v1788, %v1789
  %v1791 = vrot.slane %v1789, 4
  %v1792 = vrot.slane %v56, 6
  %v1793 = vsel %vm1733, %v1791, %v1792
  %v1794 = vrot.slane %v57, 6
  %v1795 = vrot.slane %v1794, 4
  %v1796 = vrot.slane %v58, 6
  %v1797 = vsel %vm1733, %v1795, %v1796
  %v1798 = vrot.slane %v1796, 4
  %v1799 = vrot.slane %v59, 6
  %v1800 = vsel %vm1733, %v1798, %v1799
  %v1801 = vrot.slane %v1799, 4
  %v1802 = vrot.slane %v60, 6
  %v1803 = vsel %vm1733, %v1801, %v1802
  %v1804 = vrot.slane %v61, 6
  %v1805 = vrot.slane %v1804, 4
  %v1806 = vrot.slane %v62, 6
  %v1807 = vsel %vm1733, %v1805, %v1806
  %v1808 = vrot.slane %v1806, 4
  %v1809 = vrot.slane %v63, 6
  %v1810 = vsel %vm1733, %v1808, %v1809
  %v1811 = vrot.slane %v1809, 4
  %v1812 = vrot.slane %v64, 6
  %v1813 = vsel %vm1733, %v1811, %v1812
  %s1814 = scalar_lea.vmem %s1, 128
  %v1815 = vld [vmem:[%s1814] sm:$0xff]
  %v1816 = vld [vmem:[%s1814 + $0x8] sm:$0xff]
  %v1817 = vld [vmem:[%s1814 + $0x10] sm:$0xff]
  %v1818 = vld [vmem:[%s1814 + $0x18] sm:$0x33]
  %v1819 = vunpack.c.l.b16 %v1737
  %v1820 = vunpack.c.l.b16 %v1740
  %v1821 = vunpack.c.l.b16 %v1743
  %v1822 = vunpack.c.l.b16 %v1747
  %v1823 = vunpack.c.l.b16 %v1750
  %v1824 = vunpack.c.l.b16 %v1753
  %v1825 = vunpack.c.l.b16 %v1757
  %v1826 = vunpack.c.l.b16 %v1760
  %v1827 = vunpack.c.l.b16 %v1763
  %v1828 = vunpack.c.l.b16 %v1767
  %v1829 = vunpack.c.l.b16 %v1770
  %v1830 = vunpack.c.l.b16 %v1773
  %v1831 = vunpack.c.l.b16 %v1777
  %v1832 = vunpack.c.l.b16 %v1780
  %v1833 = vunpack.c.l.b16 %v1783
  %v1834 = vunpack.c.l.b16 %v1787
  %v1835 = vunpack.c.l.b16 %v1790
  %v1836 = vunpack.c.l.b16 %v1793
  %v1837 = vunpack.c.l.b16 %v1797
  %v1838 = vunpack.c.l.b16 %v1800
  %v1839 = vunpack.c.l.b16 %v1803
  %v1840 = vunpack.c.l.b16 %v1807
  %v1841 = vunpack.c.l.b16 %v1810
  %v1842 = vunpack.c.l.b16 %v1813
  %v1843 = vpack.c.b16 %v1820, %v1819
  %v1844 = vpack.c.b16 %v1822, %v1821
  %v1845 = vpack.c.b16 %v1824, %v1823
  %v1846 = vpack.c.b16 %v1826, %v1825
  %v1847 = vpack.c.b16 %v1828, %v1827
  %v1848 = vpack.c.b16 %v1830, %v1829
  %v1849 = vpack.c.b16 %v1832, %v1831
  %v1850 = vpack.c.b16 %v1834, %v1833
  %v1851 = vpack.c.b16 %v1836, %v1835
  %v1852 = vpack.c.b16 %v1838, %v1837
  %v1853 = vpack.c.b16 %v1840, %v1839
  %v1854 = vpack.c.b16 %v1842, %v1841
  %v1859 = vunpack.c.l.b16 %v1815
  %v1860 = vunpack.c.h.b16 %v1815
  %v1861 = vunpack.c.l.b16 %v1816
  %v1862 = vunpack.c.h.b16 %v1816
  %v1863 = vunpack.c.l.b16 %v1817
  %v1864 = vunpack.c.h.b16 %v1817
  %v1865 = vunpack.c.l.b16 %v1818
  %v1866 = vunpack.c.h.b16 %v1818
  %v1867 = vpack.c.b16 %v1861, %v1859
  %v1868 = vpack.c.b16 %v1862, %v1860
  %v1869 = vpack.c.b16 %v1865, %v1863
  %v1870 = vpack.c.b16 %v1866, %v1864
  %v1874 = vsel %vm403, %v1843, 0
  %v1877 = vsel %vm403, %v1844, 0
  %v1880 = vsel %vm403, %v1845, 0
  %v1883 = vsel %vm403, %v1846, 0
  %v1886 = vsel %vm403, %v1847, 0
  %v1889 = vsel %vm403, %v1848, 0
  %v1892 = vsel %vm403, %v1849, 0
  %v1895 = vsel %vm403, %v1850, 0
  %v1898 = vsel %vm403, %v1851, 0
  %v1901 = vsel %vm403, %v1852, 0
  %v1904 = vsel %vm403, %v1853, 0
  %v1907 = vsel %vm403, %v1854, 0
  %v1910 = vsel %vm440, %v1869, 0
  %v1913 = vsel %vm440, %v1870, 0
  %1915 = vmatprep.subr.bf16.mxu0 %v1868
  %1916 = vmatpush1.bf16.msra.mxu0 %v1867
  %1917 = vmatprep.subr.bf16.mxu0 %v1913
  %1918 = vmatpush1.bf16.msra.mxu0 %v1910
  %1919 = vmatprep.subr.bf16.mxu0 0
  %1920 = vmatpush1.bf16.msra.mxu0 0
  %1921 = vmatprep.subr.bf16.mxu0 0
  %1922 = vmatpush1.bf16.msra.mxu0 0
  %1923 = vmatprep.subr.bf16.mxu0 0
  %1924 = vmatpush1.bf16.msra.mxu0 0
  %1925 = vmatprep.subr.bf16.mxu0 0
  %1926 = vmatpush1.bf16.msra.mxu0 0
  %1927 = vmatprep.subr.bf16.mxu0 0
  %1928 = vmatpush1.bf16.msra.mxu0 0
  %1929 = vmatprep.subr.bf16.mxu0 0
  %1930 = vmatpush1.bf16.msra.mxu0 0
  %1931 = vmatprep.subr.bf16.mxu0 0
  %1932 = vmatpush1.bf16.msra.mxu0 0
  %1933 = vmatprep.subr.bf16.mxu0 0
  %1934 = vmatpush1.bf16.msra.mxu0 0
  %1935 = vmatprep.subr.bf16.mxu0 0
  %1936 = vmatpush1.bf16.msra.mxu0 0
  %1937 = vmatprep.subr.bf16.mxu0 0
  %1938 = vmatpush1.bf16.msra.mxu0 0
  %1939 = vmatprep.subr.bf16.mxu0 0
  %1940 = vmatpush1.bf16.msra.mxu0 0
  %1941 = vmatprep.subr.bf16.mxu0 0
  %1942 = vmatpush1.bf16.msra.mxu0 0
  %1943 = vmatprep.subr.bf16.mxu0 0
  %1944 = vmatpush1.bf16.msra.mxu0 0
  %1945 = vmatprep.subr.bf16.mxu0 0
  %1946 = vmatpush1.bf16.msra.mxu0 0
  %1947 = vmatprep.mubr.bf16.mxu0 0
  %1948 = vmatmul.mubr.bf16.gmra.mrb[0].mxu0 %v1874
  %v1949 = vpop.f32.mrb[0].mxu0
  %v1950 = vadd.f32 0.0, %v1949
  %v1951 = vpop.f32.mrb[0].mxu0
  %v1952 = vadd.f32 0.0, %v1951
  %v1953 = vpop.f32.mrb[0].mxu0
  %v1954 = vadd.f32 0.0, %v1953
  %v1955 = vpop.f32.mrb[0].mxu0
  %v1956 = vadd.f32 0.0, %v1955
  %1957 = vmatprep.mubr.bf16.mxu0 0
  %1958 = vmatmul.mubr.bf16.gmra.mrb[0].mxu0 %v1877
  %v1959 = vpop.f32.mrb[0].mxu0
  %v1960 = vadd.f32 0.0, %v1959
  %v1961 = vpop.f32.mrb[0].mxu0
  %v1962 = vadd.f32 0.0, %v1961
  %v1963 = vpop.f32.mrb[0].mxu0
  %v1964 = vadd.f32 0.0, %v1963
  %v1965 = vpop.f32.mrb[0].mxu0
  %v1966 = vadd.f32 0.0, %v1965
  %1967 = vmatprep.mubr.bf16.mxu0 0
  %1968 = vmatmul.mubr.bf16.gmra.mrb[0].mxu0 %v1880
  %v1969 = vpop.f32.mrb[0].mxu0
  %v1970 = vadd.f32 0.0, %v1969
  %v1971 = vpop.f32.mrb[0].mxu0
  %v1972 = vadd.f32 0.0, %v1971
  %v1973 = vpop.f32.mrb[0].mxu0
  %v1974 = vadd.f32 0.0, %v1973
  %v1975 = vpop.f32.mrb[0].mxu0
  %v1976 = vadd.f32 0.0, %v1975
  %1977 = vmatprep.mubr.bf16.mxu0 0
  %1978 = vmatmul.mubr.bf16.gmra.mrb[0].mxu0 %v1883
  %v1979 = vpop.f32.mrb[0].mxu0
  %v1980 = vadd.f32 0.0, %v1979
  %v1981 = vpop.f32.mrb[0].mxu0
  %v1982 = vadd.f32 0.0, %v1981
  %v1983 = vpop.f32.mrb[0].mxu0
  %v1984 = vadd.f32 0.0, %v1983
  %v1985 = vpop.f32.mrb[0].mxu0
  %v1986 = vadd.f32 0.0, %v1985
  %1987 = vmatprep.mubr.bf16.mxu0 0
  %1988 = vmatmul.mubr.bf16.gmra.mrb[0].mxu0 %v1886
  %v1989 = vpop.f32.mrb[0].mxu0
  %v1990 = vadd.f32 0.0, %v1989
  %v1991 = vpop.f32.mrb[0].mxu0
  %v1992 = vadd.f32 0.0, %v1991
  %v1993 = vpop.f32.mrb[0].mxu0
  %v1994 = vadd.f32 0.0, %v1993
  %v1995 = vpop.f32.mrb[0].mxu0
  %v1996 = vadd.f32 0.0, %v1995
  %1997 = vmatprep.mubr.bf16.mxu0 0
  %1998 = vmatmul.mubr.bf16.gmra.mrb[0].mxu0 %v1889
  %v1999 = vpop.f32.mrb[0].mxu0
  %v2000 = vadd.f32 0.0, %v1999
  %v2001 = vpop.f32.mrb[0].mxu0
  %v2002 = vadd.f32 0.0, %v2001
  %v2003 = vpop.f32.mrb[0].mxu0
  %v2004 = vadd.f32 0.0, %v2003
  %v2005 = vpop.f32.mrb[0].mxu0
  %v2006 = vadd.f32 0.0, %v2005
  %2007 = vmatprep.mubr.bf16.mxu0 0
  %2008 = vmatmul.mubr.bf16.gmra.mrb[0].mxu0 %v1892
  %v2009 = vpop.f32.mrb[0].mxu0
  %v2010 = vadd.f32 0.0, %v2009
  %v2011 = vpop.f32.mrb[0].mxu0
  %v2012 = vadd.f32 0.0, %v2011
  %v2013 = vpop.f32.mrb[0].mxu0
  %v2014 = vadd.f32 0.0, %v2013
  %v2015 = vpop.f32.mrb[0].mxu0
  %v2016 = vadd.f32 0.0, %v2015
  %2017 = vmatprep.mubr.bf16.mxu0 0
  %2018 = vmatmul.mubr.bf16.gmra.mrb[0].mxu0 %v1895
  %v2019 = vpop.f32.mrb[0].mxu0
  %v2020 = vadd.f32 0.0, %v2019
  %v2021 = vpop.f32.mrb[0].mxu0
  %v2022 = vadd.f32 0.0, %v2021
  %v2023 = vpop.f32.mrb[0].mxu0
  %v2024 = vadd.f32 0.0, %v2023
  %v2025 = vpop.f32.mrb[0].mxu0
  %v2026 = vadd.f32 0.0, %v2025
  %2027 = vmatprep.mubr.bf16.mxu0 0
  %2028 = vmatmul.mubr.bf16.gmra.mrb[0].mxu0 %v1898
  %v2029 = vpop.f32.mrb[0].mxu0
  %v2030 = vadd.f32 0.0, %v2029
  %v2031 = vpop.f32.mrb[0].mxu0
  %v2032 = vadd.f32 0.0, %v2031
  %v2033 = vpop.f32.mrb[0].mxu0
  %v2034 = vadd.f32 0.0, %v2033
  %v2035 = vpop.f32.mrb[0].mxu0
  %v2036 = vadd.f32 0.0, %v2035
  %2037 = vmatprep.mubr.bf16.mxu0 0
  %2038 = vmatmul.mubr.bf16.gmra.mrb[0].mxu0 %v1901
  %v2039 = vpop.f32.mrb[0].mxu0
  %v2040 = vadd.f32 0.0, %v2039
  %v2041 = vpop.f32.mrb[0].mxu0
  %v2042 = vadd.f32 0.0, %v2041
  %v2043 = vpop.f32.mrb[0].mxu0
  %v2044 = vadd.f32 0.0, %v2043
  %v2045 = vpop.f32.mrb[0].mxu0
  %v2046 = vadd.f32 0.0, %v2045
  %2047 = vmatprep.mubr.bf16.mxu0 0
  %2048 = vmatmul.mubr.bf16.gmra.mrb[0].mxu0 %v1904
  %v2049 = vpop.f32.mrb[0].mxu0
  %v2050 = vadd.f32 0.0, %v2049
  %v2051 = vpop.f32.mrb[0].mxu0
  %v2052 = vadd.f32 0.0, %v2051
  %v2053 = vpop.f32.mrb[0].mxu0
  %v2054 = vadd.f32 0.0, %v2053
  %v2055 = vpop.f32.mrb[0].mxu0
  %v2056 = vadd.f32 0.0, %v2055
  %2057 = vmatprep.mubr.bf16.mxu0 0
  %2058 = vmatmul.mubr.bf16.gmra.mrb[0].mxu0 %v1907
  %v2059 = vpop.f32.mrb[0].mxu0
  %v2060 = vadd.f32 0.0, %v2059
  %v2061 = vpop.f32.mrb[0].mxu0
  %v2062 = vadd.f32 0.0, %v2061
  %v2063 = vpop.f32.mrb[0].mxu0
  %v2064 = vadd.f32 0.0, %v2063
  %v2065 = vpop.f32.mrb[0].mxu0
  %v2066 = vadd.f32 0.0, %v2065
  %2067 = vdwg.mxu0
  %v2068 = vadd.f32 %v1683, %v1950
  %v2069 = vadd.f32 %v1684, %v1952
  %v2070 = vadd.f32 %v1685, %v1954
  %v2071 = vadd.f32 %v1686, %v1956
  %v2072 = vadd.f32 %v1687, %v1960
  %v2073 = vadd.f32 %v1688, %v1962
  %v2074 = vadd.f32 %v1689, %v1964
  %v2075 = vadd.f32 %v1690, %v1966
  %v2076 = vadd.f32 %v1691, %v1970
  %v2077 = vadd.f32 %v1692, %v1972
  %v2078 = vadd.f32 %v1693, %v1974
  %v2079 = vadd.f32 %v1694, %v1976
  %v2080 = vadd.f32 %v1695, %v1980
  %v2081 = vadd.f32 %v1696, %v1982
  %v2082 = vadd.f32 %v1697, %v1984
  %v2083 = vadd.f32 %v1698, %v1986
  %v2084 = vadd.f32 %v1699, %v1990
  %v2085 = vadd.f32 %v1700, %v1992
  %v2086 = vadd.f32 %v1701, %v1994
  %v2087 = vadd.f32 %v1702, %v1996
  %v2088 = vadd.f32 %v1703, %v2000
  %v2089 = vadd.f32 %v1704, %v2002
  %v2090 = vadd.f32 %v1705, %v2004
  %v2091 = vadd.f32 %v1706, %v2006
  %v2092 = vadd.f32 %v1707, %v2010
  %v2093 = vadd.f32 %v1708, %v2012
  %v2094 = vadd.f32 %v1709, %v2014
  %v2095 = vadd.f32 %v1710, %v2016
  %v2096 = vadd.f32 %v1711, %v2020
  %v2097 = vadd.f32 %v1712, %v2022
  %v2098 = vadd.f32 %v1713, %v2024
  %v2099 = vadd.f32 %v1714, %v2026
  %v2100 = vadd.f32 %v1715, %v2030
  %v2101 = vadd.f32 %v1716, %v2032
  %v2102 = vadd.f32 %v1717, %v2034
  %v2103 = vadd.f32 %v1718, %v2036
  %v2104 = vadd.f32 %v1719, %v2040
  %v2105 = vadd.f32 %v1720, %v2042
  %v2106 = vadd.f32 %v1721, %v2044
  %v2107 = vadd.f32 %v1722, %v2046
  %v2108 = vadd.f32 %v1723, %v2050
  %v2109 = vadd.f32 %v1724, %v2052
  %v2110 = vadd.f32 %v1725, %v2054
  %v2111 = vadd.f32 %v1726, %v2056
  %v2112 = vadd.f32 %v1727, %v2060
  %v2113 = vadd.f32 %v1728, %v2062
  %v2114 = vadd.f32 %v1729, %v2064
  %v2115 = vadd.f32 %v1730, %v2066
  %v2116 = vld [vmem:[%s2] sm:$0x3]
  %v2118 = vlaneseq
  %v2119 = vshrl.u32 %v2118, 7
  %v2120 = vsub.s32 0, %v2119
  %v2121 = vrot.slane %v2116, %v2120
  %v2122 = vlaneseq
  %v2123 = vshrl.u32 %v2122, 7
  %v2124 = vsub.s32 1, %v2123
  %v2125 = vrot.slane %v2116, %v2124
  %v2128 = vadd.f32 %v2068, %v2121
  %v2129 = vadd.f32 %v2069, %v2125
  %v2130 = vadd.f32 %v2070, %v2121
  %v2131 = vadd.f32 %v2071, %v2125
  %v2132 = vadd.f32 %v2072, %v2121
  %v2133 = vadd.f32 %v2073, %v2125
  %v2134 = vadd.f32 %v2074, %v2121
  %v2135 = vadd.f32 %v2075, %v2125
  %v2136 = vadd.f32 %v2076, %v2121
  %v2137 = vadd.f32 %v2077, %v2125
  %v2138 = vadd.f32 %v2078, %v2121
  %v2139 = vadd.f32 %v2079, %v2125
  %v2140 = vadd.f32 %v2080, %v2121
  %v2141 = vadd.f32 %v2081, %v2125
  %v2142 = vadd.f32 %v2082, %v2121
  %v2143 = vadd.f32 %v2083, %v2125
  %v2144 = vadd.f32 %v2084, %v2121
  %v2145 = vadd.f32 %v2085, %v2125
  %v2146 = vadd.f32 %v2086, %v2121
  %v2147 = vadd.f32 %v2087, %v2125
  %v2148 = vadd.f32 %v2088, %v2121
  %v2149 = vadd.f32 %v2089, %v2125
  %v2150 = vadd.f32 %v2090, %v2121
  %v2151 = vadd.f32 %v2091, %v2125
  %v2152 = vadd.f32 %v2092, %v2121
  %v2153 = vadd.f32 %v2093, %v2125
  %v2154 = vadd.f32 %v2094, %v2121
  %v2155 = vadd.f32 %v2095, %v2125
  %v2156 = vadd.f32 %v2096, %v2121
  %v2157 = vadd.f32 %v2097, %v2125
  %v2158 = vadd.f32 %v2098, %v2121
  %v2159 = vadd.f32 %v2099, %v2125
  %v2160 = vadd.f32 %v2100, %v2121
  %v2161 = vadd.f32 %v2101, %v2125
  %v2162 = vadd.f32 %v2102, %v2121
  %v2163 = vadd.f32 %v2103, %v2125
  %v2164 = vadd.f32 %v2104, %v2121
  %v2165 = vadd.f32 %v2105, %v2125
  %v2166 = vadd.f32 %v2106, %v2121
  %v2167 = vadd.f32 %v2107, %v2125
  %v2168 = vadd.f32 %v2108, %v2121
  %v2169 = vadd.f32 %v2109, %v2125
  %v2170 = vadd.f32 %v2110, %v2121
  %v2171 = vadd.f32 %v2111, %v2125
  %v2172 = vadd.f32 %v2112, %v2121
  %v2173 = vadd.f32 %v2113, %v2125
  %v2174 = vadd.f32 %v2114, %v2121
  %v2175 = vadd.f32 %v2115, %v2125
  %v2224 = vcombine.low %v2128, %v2129
  %v2225 = vcombine.high %v2128, %v2129
  %v2227 = vunpack.c.l.s4 1983009808
  %v2228 = vunpack.c.0.s8 %v2227
  %v2229 = vlaneseq
  %v2230 = vshrl.u32 %v2229, 7
  %v2231 = vsub.s32 %v2228, %v2230
  %v2232 = vrot.slane %v2224, %v2231
  %v2234 = vunpack.c.l.s4 1983009808
  %v2235 = vunpack.c.0.s8 %v2234
  %v2236 = vlaneseq
  %v2237 = vshrl.u32 %v2236, 7
  %v2238 = vsub.s32 %v2235, %v2237
  %v2239 = vrot.slane %v2225, %v2238
  %v2240 = vcombine.high %v2232, %v2232
  %v2241 = vcombine.high %v2239, %v2239
  %v2242 = vcombine.low %v2130, %v2131
  %v2243 = vcombine.high %v2130, %v2131
  %v2245 = vunpack.c.l.s4 1983009808
  %v2246 = vunpack.c.0.s8 %v2245
  %v2247 = vlaneseq
  %v2248 = vshrl.u32 %v2247, 7
  %v2249 = vsub.s32 %v2246, %v2248
  %v2250 = vrot.slane %v2242, %v2249
  %v2252 = vunpack.c.l.s4 1983009808
  %v2253 = vunpack.c.0.s8 %v2252
  %v2254 = vlaneseq
  %v2255 = vshrl.u32 %v2254, 7
  %v2256 = vsub.s32 %v2253, %v2255
  %v2257 = vrot.slane %v2243, %v2256
  %v2258 = vcombine.high %v2250, %v2250
  %v2259 = vcombine.high %v2257, %v2257
  %v2260 = vcombine.low %v2132, %v2133
  %v2261 = vcombine.high %v2132, %v2133
  %v2263 = vunpack.c.l.s4 1983009808
  %v2264 = vunpack.c.0.s8 %v2263
  %v2265 = vlaneseq
  %v2266 = vshrl.u32 %v2265, 7
  %v2267 = vsub.s32 %v2264, %v2266
  %v2268 = vrot.slane %v2260, %v2267
  %v2270 = vunpack.c.l.s4 1983009808
  %v2271 = vunpack.c.0.s8 %v2270
  %v2272 = vlaneseq
  %v2273 = vshrl.u32 %v2272, 7
  %v2274 = vsub.s32 %v2271, %v2273
  %v2275 = vrot.slane %v2261, %v2274
  %v2276 = vcombine.high %v2268, %v2268
  %v2277 = vcombine.high %v2275, %v2275
  %v2278 = vcombine.low %v2134, %v2135
  %v2279 = vcombine.high %v2134, %v2135
  %v2281 = vunpack.c.l.s4 1983009808
  %v2282 = vunpack.c.0.s8 %v2281
  %v2283 = vlaneseq
  %v2284 = vshrl.u32 %v2283, 7
  %v2285 = vsub.s32 %v2282, %v2284
  %v2286 = vrot.slane %v2278, %v2285
  %v2288 = vunpack.c.l.s4 1983009808
  %v2289 = vunpack.c.0.s8 %v2288
  %v2290 = vlaneseq
  %v2291 = vshrl.u32 %v2290, 7
  %v2292 = vsub.s32 %v2289, %v2291
  %v2293 = vrot.slane %v2279, %v2292
  %v2294 = vcombine.high %v2286, %v2286
  %v2295 = vcombine.high %v2293, %v2293
  %v2296 = vcombine.low %v2136, %v2137
  %v2297 = vcombine.high %v2136, %v2137
  %v2299 = vunpack.c.l.s4 1983009808
  %v2300 = vunpack.c.0.s8 %v2299
  %v2301 = vlaneseq
  %v2302 = vshrl.u32 %v2301, 7
  %v2303 = vsub.s32 %v2300, %v2302
  %v2304 = vrot.slane %v2296, %v2303
  %v2306 = vunpack.c.l.s4 1983009808
  %v2307 = vunpack.c.0.s8 %v2306
  %v2308 = vlaneseq
  %v2309 = vshrl.u32 %v2308, 7
  %v2310 = vsub.s32 %v2307, %v2309
  %v2311 = vrot.slane %v2297, %v2310
  %v2312 = vcombine.high %v2304, %v2304
  %v2313 = vcombine.high %v2311, %v2311
  %v2314 = vcombine.low %v2138, %v2139
  %v2315 = vcombine.high %v2138, %v2139
  %v2317 = vunpack.c.l.s4 1983009808
  %v2318 = vunpack.c.0.s8 %v2317
  %v2319 = vlaneseq
  %v2320 = vshrl.u32 %v2319, 7
  %v2321 = vsub.s32 %v2318, %v2320
  %v2322 = vrot.slane %v2314, %v2321
  %v2324 = vunpack.c.l.s4 1983009808
  %v2325 = vunpack.c.0.s8 %v2324
  %v2326 = vlaneseq
  %v2327 = vshrl.u32 %v2326, 7
  %v2328 = vsub.s32 %v2325, %v2327
  %v2329 = vrot.slane %v2315, %v2328
  %v2330 = vcombine.high %v2322, %v2322
  %v2331 = vcombine.high %v2329, %v2329
  %v2332 = vcombine.low %v2140, %v2141
  %v2333 = vcombine.high %v2140, %v2141
  %v2335 = vunpack.c.l.s4 1983009808
  %v2336 = vunpack.c.0.s8 %v2335
  %v2337 = vlaneseq
  %v2338 = vshrl.u32 %v2337, 7
  %v2339 = vsub.s32 %v2336, %v2338
  %v2340 = vrot.slane %v2332, %v2339
  %v2342 = vunpack.c.l.s4 1983009808
  %v2343 = vunpack.c.0.s8 %v2342
  %v2344 = vlaneseq
  %v2345 = vshrl.u32 %v2344, 7
  %v2346 = vsub.s32 %v2343, %v2345
  %v2347 = vrot.slane %v2333, %v2346
  %v2348 = vcombine.high %v2340, %v2340
  %v2349 = vcombine.high %v2347, %v2347
  %v2350 = vcombine.low %v2142, %v2143
  %v2351 = vcombine.high %v2142, %v2143
  %v2353 = vunpack.c.l.s4 1983009808
  %v2354 = vunpack.c.0.s8 %v2353
  %v2355 = vlaneseq
  %v2356 = vshrl.u32 %v2355, 7
  %v2357 = vsub.s32 %v2354, %v2356
  %v2358 = vrot.slane %v2350, %v2357
  %v2360 = vunpack.c.l.s4 1983009808
  %v2361 = vunpack.c.0.s8 %v2360
  %v2362 = vlaneseq
  %v2363 = vshrl.u32 %v2362, 7
  %v2364 = vsub.s32 %v2361, %v2363
  %v2365 = vrot.slane %v2351, %v2364
  %v2366 = vcombine.high %v2358, %v2358
  %v2367 = vcombine.high %v2365, %v2365
  %v2368 = vcombine.low %v2144, %v2145
  %v2369 = vcombine.high %v2144, %v2145
  %v2371 = vunpack.c.l.s4 1983009808
  %v2372 = vunpack.c.0.s8 %v2371
  %v2373 = vlaneseq
  %v2374 = vshrl.u32 %v2373, 7
  %v2375 = vsub.s32 %v2372, %v2374
  %v2376 = vrot.slane %v2368, %v2375
  %v2378 = vunpack.c.l.s4 1983009808
  %v2379 = vunpack.c.0.s8 %v2378
  %v2380 = vlaneseq
  %v2381 = vshrl.u32 %v2380, 7
  %v2382 = vsub.s32 %v2379, %v2381
  %v2383 = vrot.slane %v2369, %v2382
  %v2384 = vcombine.high %v2376, %v2376
  %v2385 = vcombine.high %v2383, %v2383
  %v2386 = vcombine.low %v2146, %v2147
  %v2387 = vcombine.high %v2146, %v2147
  %v2389 = vunpack.c.l.s4 1983009808
  %v2390 = vunpack.c.0.s8 %v2389
  %v2391 = vlaneseq
  %v2392 = vshrl.u32 %v2391, 7
  %v2393 = vsub.s32 %v2390, %v2392
  %v2394 = vrot.slane %v2386, %v2393
  %v2396 = vunpack.c.l.s4 1983009808
  %v2397 = vunpack.c.0.s8 %v2396
  %v2398 = vlaneseq
  %v2399 = vshrl.u32 %v2398, 7
  %v2400 = vsub.s32 %v2397, %v2399
  %v2401 = vrot.slane %v2387, %v2400
  %v2402 = vcombine.high %v2394, %v2394
  %v2403 = vcombine.high %v2401, %v2401
  %v2404 = vcombine.low %v2148, %v2149
  %v2405 = vcombine.high %v2148, %v2149
  %v2407 = vunpack.c.l.s4 1983009808
  %v2408 = vunpack.c.0.s8 %v2407
  %v2409 = vlaneseq
  %v2410 = vshrl.u32 %v2409, 7
  %v2411 = vsub.s32 %v2408, %v2410
  %v2412 = vrot.slane %v2404, %v2411
  %v2414 = vunpack.c.l.s4 1983009808
  %v2415 = vunpack.c.0.s8 %v2414
  %v2416 = vlaneseq
  %v2417 = vshrl.u32 %v2416, 7
  %v2418 = vsub.s32 %v2415, %v2417
  %v2419 = vrot.slane %v2405, %v2418
  %v2420 = vcombine.high %v2412, %v2412
  %v2421 = vcombine.high %v2419, %v2419
  %v2422 = vcombine.low %v2150, %v2151
  %v2423 = vcombine.high %v2150, %v2151
  %v2425 = vunpack.c.l.s4 1983009808
  %v2426 = vunpack.c.0.s8 %v2425
  %v2427 = vlaneseq
  %v2428 = vshrl.u32 %v2427, 7
  %v2429 = vsub.s32 %v2426, %v2428
  %v2430 = vrot.slane %v2422, %v2429
  %v2432 = vunpack.c.l.s4 1983009808
  %v2433 = vunpack.c.0.s8 %v2432
  %v2434 = vlaneseq
  %v2435 = vshrl.u32 %v2434, 7
  %v2436 = vsub.s32 %v2433, %v2435
  %v2437 = vrot.slane %v2423, %v2436
  %v2438 = vcombine.high %v2430, %v2430
  %v2439 = vcombine.high %v2437, %v2437
  %v2440 = vcombine.low %v2152, %v2153
  %v2441 = vcombine.high %v2152, %v2153
  %v2443 = vunpack.c.l.s4 1983009808
  %v2444 = vunpack.c.0.s8 %v2443
  %v2445 = vlaneseq
  %v2446 = vshrl.u32 %v2445, 7
  %v2447 = vsub.s32 %v2444, %v2446
  %v2448 = vrot.slane %v2440, %v2447
  %v2450 = vunpack.c.l.s4 1983009808
  %v2451 = vunpack.c.0.s8 %v2450
  %v2452 = vlaneseq
  %v2453 = vshrl.u32 %v2452, 7
  %v2454 = vsub.s32 %v2451, %v2453
  %v2455 = vrot.slane %v2441, %v2454
  %v2456 = vcombine.high %v2448, %v2448
  %v2457 = vcombine.high %v2455, %v2455
  %v2458 = vcombine.low %v2154, %v2155
  %v2459 = vcombine.high %v2154, %v2155
  %v2461 = vunpack.c.l.s4 1983009808
  %v2462 = vunpack.c.0.s8 %v2461
  %v2463 = vlaneseq
  %v2464 = vshrl.u32 %v2463, 7
  %v2465 = vsub.s32 %v2462, %v2464
  %v2466 = vrot.slane %v2458, %v2465
  %v2468 = vunpack.c.l.s4 1983009808
  %v2469 = vunpack.c.0.s8 %v2468
  %v2470 = vlaneseq
  %v2471 = vshrl.u32 %v2470, 7
  %v2472 = vsub.s32 %v2469, %v2471
  %v2473 = vrot.slane %v2459, %v2472
  %v2474 = vcombine.high %v2466, %v2466
  %v2475 = vcombine.high %v2473, %v2473
  %v2476 = vcombine.low %v2156, %v2157
  %v2477 = vcombine.high %v2156, %v2157
  %v2479 = vunpack.c.l.s4 1983009808
  %v2480 = vunpack.c.0.s8 %v2479
  %v2481 = vlaneseq
  %v2482 = vshrl.u32 %v2481, 7
  %v2483 = vsub.s32 %v2480, %v2482
  %v2484 = vrot.slane %v2476, %v2483
  %v2486 = vunpack.c.l.s4 1983009808
  %v2487 = vunpack.c.0.s8 %v2486
  %v2488 = vlaneseq
  %v2489 = vshrl.u32 %v2488, 7
  %v2490 = vsub.s32 %v2487, %v2489
  %v2491 = vrot.slane %v2477, %v2490
  %v2492 = vcombine.high %v2484, %v2484
  %v2493 = vcombine.high %v2491, %v2491
  %v2494 = vcombine.low %v2158, %v2159
  %v2495 = vcombine.high %v2158, %v2159
  %v2497 = vunpack.c.l.s4 1983009808
  %v2498 = vunpack.c.0.s8 %v2497
  %v2499 = vlaneseq
  %v2500 = vshrl.u32 %v2499, 7
  %v2501 = vsub.s32 %v2498, %v2500
  %v2502 = vrot.slane %v2494, %v2501
  %v2504 = vunpack.c.l.s4 1983009808
  %v2505 = vunpack.c.0.s8 %v2504
  %v2506 = vlaneseq
  %v2507 = vshrl.u32 %v2506, 7
  %v2508 = vsub.s32 %v2505, %v2507
  %v2509 = vrot.slane %v2495, %v2508
  %v2510 = vcombine.high %v2502, %v2502
  %v2511 = vcombine.high %v2509, %v2509
  %v2512 = vcombine.low %v2160, %v2161
  %v2513 = vcombine.high %v2160, %v2161
  %v2515 = vunpack.c.l.s4 1983009808
  %v2516 = vunpack.c.0.s8 %v2515
  %v2517 = vlaneseq
  %v2518 = vshrl.u32 %v2517, 7
  %v2519 = vsub.s32 %v2516, %v2518
  %v2520 = vrot.slane %v2512, %v2519
  %v2522 = vunpack.c.l.s4 1983009808
  %v2523 = vunpack.c.0.s8 %v2522
  %v2524 = vlaneseq
  %v2525 = vshrl.u32 %v2524, 7
  %v2526 = vsub.s32 %v2523, %v2525
  %v2527 = vrot.slane %v2513, %v2526
  %v2528 = vcombine.high %v2520, %v2520
  %v2529 = vcombine.high %v2527, %v2527
  %v2530 = vcombine.low %v2162, %v2163
  %v2531 = vcombine.high %v2162, %v2163
  %v2533 = vunpack.c.l.s4 1983009808
  %v2534 = vunpack.c.0.s8 %v2533
  %v2535 = vlaneseq
  %v2536 = vshrl.u32 %v2535, 7
  %v2537 = vsub.s32 %v2534, %v2536
  %v2538 = vrot.slane %v2530, %v2537
  %v2540 = vunpack.c.l.s4 1983009808
  %v2541 = vunpack.c.0.s8 %v2540
  %v2542 = vlaneseq
  %v2543 = vshrl.u32 %v2542, 7
  %v2544 = vsub.s32 %v2541, %v2543
  %v2545 = vrot.slane %v2531, %v2544
  %v2546 = vcombine.high %v2538, %v2538
  %v2547 = vcombine.high %v2545, %v2545
  %v2548 = vcombine.low %v2164, %v2165
  %v2549 = vcombine.high %v2164, %v2165
  %v2551 = vunpack.c.l.s4 1983009808
  %v2552 = vunpack.c.0.s8 %v2551
  %v2553 = vlaneseq
  %v2554 = vshrl.u32 %v2553, 7
  %v2555 = vsub.s32 %v2552, %v2554
  %v2556 = vrot.slane %v2548, %v2555
  %v2558 = vunpack.c.l.s4 1983009808
  %v2559 = vunpack.c.0.s8 %v2558
  %v2560 = vlaneseq
  %v2561 = vshrl.u32 %v2560, 7
  %v2562 = vsub.s32 %v2559, %v2561
  %v2563 = vrot.slane %v2549, %v2562
  %v2564 = vcombine.high %v2556, %v2556
  %v2565 = vcombine.high %v2563, %v2563
  %v2566 = vcombine.low %v2166, %v2167
  %v2567 = vcombine.high %v2166, %v2167
  %v2569 = vunpack.c.l.s4 1983009808
  %v2570 = vunpack.c.0.s8 %v2569
  %v2571 = vlaneseq
  %v2572 = vshrl.u32 %v2571, 7
  %v2573 = vsub.s32 %v2570, %v2572
  %v2574 = vrot.slane %v2566, %v2573
  %v2576 = vunpack.c.l.s4 1983009808
  %v2577 = vunpack.c.0.s8 %v2576
  %v2578 = vlaneseq
  %v2579 = vshrl.u32 %v2578, 7
  %v2580 = vsub.s32 %v2577, %v2579
  %v2581 = vrot.slane %v2567, %v2580
  %v2582 = vcombine.high %v2574, %v2574
  %v2583 = vcombine.high %v2581, %v2581
  %v2584 = vcombine.low %v2168, %v2169
  %v2585 = vcombine.high %v2168, %v2169
  %v2587 = vunpack.c.l.s4 1983009808
  %v2588 = vunpack.c.0.s8 %v2587
  %v2589 = vlaneseq
  %v2590 = vshrl.u32 %v2589, 7
  %v2591 = vsub.s32 %v2588, %v2590
  %v2592 = vrot.slane %v2584, %v2591
  %v2594 = vunpack.c.l.s4 1983009808
  %v2595 = vunpack.c.0.s8 %v2594
  %v2596 = vlaneseq
  %v2597 = vshrl.u32 %v2596, 7
  %v2598 = vsub.s32 %v2595, %v2597
  %v2599 = vrot.slane %v2585, %v2598
  %v2600 = vcombine.high %v2592, %v2592
  %v2601 = vcombine.high %v2599, %v2599
  %v2602 = vcombine.low %v2170, %v2171
  %v2603 = vcombine.high %v2170, %v2171
  %v2605 = vunpack.c.l.s4 1983009808
  %v2606 = vunpack.c.0.s8 %v2605
  %v2607 = vlaneseq
  %v2608 = vshrl.u32 %v2607, 7
  %v2609 = vsub.s32 %v2606, %v2608
  %v2610 = vrot.slane %v2602, %v2609
  %v2612 = vunpack.c.l.s4 1983009808
  %v2613 = vunpack.c.0.s8 %v2612
  %v2614 = vlaneseq
  %v2615 = vshrl.u32 %v2614, 7
  %v2616 = vsub.s32 %v2613, %v2615
  %v2617 = vrot.slane %v2603, %v2616
  %v2618 = vcombine.high %v2610, %v2610
  %v2619 = vcombine.high %v2617, %v2617
  %v2620 = vcombine.low %v2172, %v2173
  %v2621 = vcombine.high %v2172, %v2173
  %v2623 = vunpack.c.l.s4 1983009808
  %v2624 = vunpack.c.0.s8 %v2623
  %v2625 = vlaneseq
  %v2626 = vshrl.u32 %v2625, 7
  %v2627 = vsub.s32 %v2624, %v2626
  %v2628 = vrot.slane %v2620, %v2627
  %v2630 = vunpack.c.l.s4 1983009808
  %v2631 = vunpack.c.0.s8 %v2630
  %v2632 = vlaneseq
  %v2633 = vshrl.u32 %v2632, 7
  %v2634 = vsub.s32 %v2631, %v2633
  %v2635 = vrot.slane %v2621, %v2634
  %v2636 = vcombine.high %v2628, %v2628
  %v2637 = vcombine.high %v2635, %v2635
  %v2638 = vcombine.low %v2174, %v2175
  %v2639 = vcombine.high %v2174, %v2175
  %v2641 = vunpack.c.l.s4 1983009808
  %v2642 = vunpack.c.0.s8 %v2641
  %v2643 = vlaneseq
  %v2644 = vshrl.u32 %v2643, 7
  %v2645 = vsub.s32 %v2642, %v2644
  %v2646 = vrot.slane %v2638, %v2645
  %v2648 = vunpack.c.l.s4 1983009808
  %v2649 = vunpack.c.0.s8 %v2648
  %v2650 = vlaneseq
  %v2651 = vshrl.u32 %v2650, 7
  %v2652 = vsub.s32 %v2649, %v2651
  %v2653 = vrot.slane %v2639, %v2652
  %v2654 = vcombine.high %v2646, %v2646
  %v2655 = vcombine.high %v2653, %v2653
  %v2752 = vrot.slane %v2232, 7
  %v2753 = vrot.slane %v2752, 2
  %v2754 = vrot.slane %v2240, 7
  %v2755 = vrot.slane %v2754, 2
  %v2756 = vrot.slane %v2239, 7
  %v2757 = vrot.slane %v2756, 2
  %v2758 = vrot.slane %v2241, 7
  %v2759 = vrot.slane %v2758, 2
  %v2760 = vrot.slane %v2250, 7
  %v2761 = vrot.slane %v2760, 2
  %v2762 = vrot.slane %v2258, 7
  %v2763 = vrot.slane %v2762, 2
  %v2764 = vrot.slane %v2257, 7
  %v2765 = vrot.slane %v2764, 2
  %v2766 = vrot.slane %v2259, 7
  %v2767 = vrot.slane %v2766, 2
  %v2768 = vrot.slane %v2268, 7
  %v2769 = vrot.slane %v2768, 2
  %v2770 = vrot.slane %v2276, 7
  %v2771 = vrot.slane %v2770, 2
  %v2772 = vrot.slane %v2275, 7
  %v2773 = vrot.slane %v2772, 2
  %v2774 = vrot.slane %v2277, 7
  %v2775 = vrot.slane %v2774, 2
  %v2776 = vrot.slane %v2286, 7
  %v2777 = vrot.slane %v2776, 2
  %v2778 = vrot.slane %v2294, 7
  %v2779 = vrot.slane %v2778, 2
  %v2780 = vrot.slane %v2293, 7
  %v2781 = vrot.slane %v2780, 2
  %v2782 = vrot.slane %v2295, 7
  %v2783 = vrot.slane %v2782, 2
  %v2784 = vrot.slane %v2304, 7
  %v2785 = vrot.slane %v2784, 2
  %v2786 = vrot.slane %v2312, 7
  %v2787 = vrot.slane %v2786, 2
  %v2788 = vrot.slane %v2311, 7
  %v2789 = vrot.slane %v2788, 2
  %v2790 = vrot.slane %v2313, 7
  %v2791 = vrot.slane %v2790, 2
  %v2792 = vrot.slane %v2322, 7
  %v2793 = vrot.slane %v2792, 2
  %v2794 = vrot.slane %v2330, 7
  %v2795 = vrot.slane %v2794, 2
  %v2796 = vrot.slane %v2329, 7
  %v2797 = vrot.slane %v2796, 2
  %v2798 = vrot.slane %v2331, 7
  %v2799 = vrot.slane %v2798, 2
  %v2800 = vrot.slane %v2340, 7
  %v2801 = vrot.slane %v2800, 2
  %v2802 = vrot.slane %v2348, 7
  %v2803 = vrot.slane %v2802, 2
  %v2804 = vrot.slane %v2347, 7
  %v2805 = vrot.slane %v2804, 2
  %v2806 = vrot.slane %v2349, 7
  %v2807 = vrot.slane %v2806, 2
  %v2808 = vrot.slane %v2358, 7
  %v2809 = vrot.slane %v2808, 2
  %v2810 = vrot.slane %v2366, 7
  %v2811 = vrot.slane %v2810, 2
  %v2812 = vrot.slane %v2365, 7
  %v2813 = vrot.slane %v2812, 2
  %v2814 = vrot.slane %v2367, 7
  %v2815 = vrot.slane %v2814, 2
  %v2816 = vrot.slane %v2376, 7
  %v2817 = vrot.slane %v2816, 2
  %v2818 = vrot.slane %v2384, 7
  %v2819 = vrot.slane %v2818, 2
  %v2820 = vrot.slane %v2383, 7
  %v2821 = vrot.slane %v2820, 2
  %v2822 = vrot.slane %v2385, 7
  %v2823 = vrot.slane %v2822, 2
  %v2824 = vrot.slane %v2394, 7
  %v2825 = vrot.slane %v2824, 2
  %v2826 = vrot.slane %v2402, 7
  %v2827 = vrot.slane %v2826, 2
  %v2828 = vrot.slane %v2401, 7
  %v2829 = vrot.slane %v2828, 2
  %v2830 = vrot.slane %v2403, 7
  %v2831 = vrot.slane %v2830, 2
  %v2832 = vrot.slane %v2412, 7
  %v2833 = vrot.slane %v2832, 2
  %v2834 = vrot.slane %v2420, 7
  %v2835 = vrot.slane %v2834, 2
  %v2836 = vrot.slane %v2419, 7
  %v2837 = vrot.slane %v2836, 2
  %v2838 = vrot.slane %v2421, 7
  %v2839 = vrot.slane %v2838, 2
  %v2840 = vrot.slane %v2430, 7
  %v2841 = vrot.slane %v2840, 2
  %v2842 = vrot.slane %v2438, 7
  %v2843 = vrot.slane %v2842, 2
  %v2844 = vrot.slane %v2437, 7
  %v2845 = vrot.slane %v2844, 2
  %v2846 = vrot.slane %v2439, 7
  %v2847 = vrot.slane %v2846, 2
  %v2848 = vrot.slane %v2448, 7
  %v2849 = vrot.slane %v2848, 2
  %v2850 = vrot.slane %v2456, 7
  %v2851 = vrot.slane %v2850, 2
  %v2852 = vrot.slane %v2455, 7
  %v2853 = vrot.slane %v2852, 2
  %v2854 = vrot.slane %v2457, 7
  %v2855 = vrot.slane %v2854, 2
  %v2856 = vrot.slane %v2466, 7
  %v2857 = vrot.slane %v2856, 2
  %v2858 = vrot.slane %v2474, 7
  %v2859 = vrot.slane %v2858, 2
  %v2860 = vrot.slane %v2473, 7
  %v2861 = vrot.slane %v2860, 2
  %v2862 = vrot.slane %v2475, 7
  %v2863 = vrot.slane %v2862, 2
  %v2864 = vrot.slane %v2484, 7
  %v2865 = vrot.slane %v2864, 2
  %v2866 = vrot.slane %v2492, 7
  %v2867 = vrot.slane %v2866, 2
  %v2868 = vrot.slane %v2491, 7
  %v2869 = vrot.slane %v2868, 2
  %v2870 = vrot.slane %v2493, 7
  %v2871 = vrot.slane %v2870, 2
  %v2872 = vrot.slane %v2502, 7
  %v2873 = vrot.slane %v2872, 2
  %v2874 = vrot.slane %v2510, 7
  %v2875 = vrot.slane %v2874, 2
  %v2876 = vrot.slane %v2509, 7
  %v2877 = vrot.slane %v2876, 2
  %v2878 = vrot.slane %v2511, 7
  %v2879 = vrot.slane %v2878, 2
  %v2880 = vrot.slane %v2520, 7
  %v2881 = vrot.slane %v2880, 2
  %v2882 = vrot.slane %v2528, 7
  %v2883 = vrot.slane %v2882, 2
  %v2884 = vrot.slane %v2527, 7
  %v2885 = vrot.slane %v2884, 2
  %v2886 = vrot.slane %v2529, 7
  %v2887 = vrot.slane %v2886, 2
  %v2888 = vrot.slane %v2538, 7
  %v2889 = vrot.slane %v2888, 2
  %v2890 = vrot.slane %v2546, 7
  %v2891 = vrot.slane %v2890, 2
  %v2892 = vrot.slane %v2545, 7
  %v2893 = vrot.slane %v2892, 2
  %v2894 = vrot.slane %v2547, 7
  %v2895 = vrot.slane %v2894, 2
  %v2896 = vrot.slane %v2556, 7
  %v2897 = vrot.slane %v2896, 2
  %v2898 = vrot.slane %v2564, 7
  %v2899 = vrot.slane %v2898, 2
  %v2900 = vrot.slane %v2563, 7
  %v2901 = vrot.slane %v2900, 2
  %v2902 = vrot.slane %v2565, 7
  %v2903 = vrot.slane %v2902, 2
  %v2904 = vrot.slane %v2574, 7
  %v2905 = vrot.slane %v2904, 2
  %v2906 = vrot.slane %v2582, 7
  %v2907 = vrot.slane %v2906, 2
  %v2908 = vrot.slane %v2581, 7
  %v2909 = vrot.slane %v2908, 2
  %v2910 = vrot.slane %v2583, 7
  %v2911 = vrot.slane %v2910, 2
  %v2912 = vrot.slane %v2592, 7
  %v2913 = vrot.slane %v2912, 2
  %v2914 = vrot.slane %v2600, 7
  %v2915 = vrot.slane %v2914, 2
  %v2916 = vrot.slane %v2599, 7
  %v2917 = vrot.slane %v2916, 2
  %v2918 = vrot.slane %v2601, 7
  %v2919 = vrot.slane %v2918, 2
  %v2920 = vrot.slane %v2610, 7
  %v2921 = vrot.slane %v2920, 2
  %v2922 = vrot.slane %v2618, 7
  %v2923 = vrot.slane %v2922, 2
  %v2924 = vrot.slane %v2617, 7
  %v2925 = vrot.slane %v2924, 2
  %v2926 = vrot.slane %v2619, 7
  %v2927 = vrot.slane %v2926, 2
  %v2928 = vrot.slane %v2628, 7
  %v2929 = vrot.slane %v2928, 2
  %v2930 = vrot.slane %v2636, 7
  %v2931 = vrot.slane %v2930, 2
  %v2932 = vrot.slane %v2635, 7
  %v2933 = vrot.slane %v2932, 2
  %v2934 = vrot.slane %v2637, 7
  %v2935 = vrot.slane %v2934, 2
  %v2936 = vrot.slane %v2646, 7
  %v2937 = vrot.slane %v2936, 2
  %v2938 = vrot.slane %v2654, 7
  %v2939 = vrot.slane %v2938, 2
  %v2940 = vrot.slane %v2653, 7
  %v2941 = vrot.slane %v2940, 2
  %v2942 = vrot.slane %v2655, 7
  %v2943 = vrot.slane %v2942, 2
  %v3040 = vmax.f32 %v2232, %v2753
  %v3041 = vmax.f32 %v2240, %v2755
  %v3042 = vmax.f32 %v2239, %v2757
  %v3043 = vmax.f32 %v2241, %v2759
  %v3044 = vmax.f32 %v2250, %v2761
  %v3045 = vmax.f32 %v2258, %v2763
  %v3046 = vmax.f32 %v2257, %v2765
  %v3047 = vmax.f32 %v2259, %v2767
  %v3048 = vmax.f32 %v2268, %v2769
  %v3049 = vmax.f32 %v2276, %v2771
  %v3050 = vmax.f32 %v2275, %v2773
  %v3051 = vmax.f32 %v2277, %v2775
  %v3052 = vmax.f32 %v2286, %v2777
  %v3053 = vmax.f32 %v2294, %v2779
  %v3054 = vmax.f32 %v2293, %v2781
  %v3055 = vmax.f32 %v2295, %v2783
  %v3056 = vmax.f32 %v2304, %v2785
  %v3057 = vmax.f32 %v2312, %v2787
  %v3058 = vmax.f32 %v2311, %v2789
  %v3059 = vmax.f32 %v2313, %v2791
  %v3060 = vmax.f32 %v2322, %v2793
  %v3061 = vmax.f32 %v2330, %v2795
  %v3062 = vmax.f32 %v2329, %v2797
  %v3063 = vmax.f32 %v2331, %v2799
  %v3064 = vmax.f32 %v2340, %v2801
  %v3065 = vmax.f32 %v2348, %v2803
  %v3066 = vmax.f32 %v2347, %v2805
  %v3067 = vmax.f32 %v2349, %v2807
  %v3068 = vmax.f32 %v2358, %v2809
  %v3069 = vmax.f32 %v2366, %v2811
  %v3070 = vmax.f32 %v2365, %v2813
  %v3071 = vmax.f32 %v2367, %v2815
  %v3072 = vmax.f32 %v2376, %v2817
  %v3073 = vmax.f32 %v2384, %v2819
  %v3074 = vmax.f32 %v2383, %v2821
  %v3075 = vmax.f32 %v2385, %v2823
  %v3076 = vmax.f32 %v2394, %v2825
  %v3077 = vmax.f32 %v2402, %v2827
  %v3078 = vmax.f32 %v2401, %v2829
  %v3079 = vmax.f32 %v2403, %v2831
  %v3080 = vmax.f32 %v2412, %v2833
  %v3081 = vmax.f32 %v2420, %v2835
  %v3082 = vmax.f32 %v2419, %v2837
  %v3083 = vmax.f32 %v2421, %v2839
  %v3084 = vmax.f32 %v2430, %v2841
  %v3085 = vmax.f32 %v2438, %v2843
  %v3086 = vmax.f32 %v2437, %v2845
  %v3087 = vmax.f32 %v2439, %v2847
  %v3088 = vmax.f32 %v2448, %v2849
  %v3089 = vmax.f32 %v2456, %v2851
  %v3090 = vmax.f32 %v2455, %v2853
  %v3091 = vmax.f32 %v2457, %v2855
  %v3092 = vmax.f32 %v2466, %v2857
  %v3093 = vmax.f32 %v2474, %v2859
  %v3094 = vmax.f32 %v2473, %v2861
  %v3095 = vmax.f32 %v2475, %v2863
  %v3096 = vmax.f32 %v2484, %v2865
  %v3097 = vmax.f32 %v2492, %v2867
  %v3098 = vmax.f32 %v2491, %v2869
  %v3099 = vmax.f32 %v2493, %v2871
  %v3100 = vmax.f32 %v2502, %v2873
  %v3101 = vmax.f32 %v2510, %v2875
  %v3102 = vmax.f32 %v2509, %v2877
  %v3103 = vmax.f32 %v2511, %v2879
  %v3104 = vmax.f32 %v2520, %v2881
  %v3105 = vmax.f32 %v2528, %v2883
  %v3106 = vmax.f32 %v2527, %v2885
  %v3107 = vmax.f32 %v2529, %v2887
  %v3108 = vmax.f32 %v2538, %v2889
  %v3109 = vmax.f32 %v2546, %v2891
  %v3110 = vmax.f32 %v2545, %v2893
  %v3111 = vmax.f32 %v2547, %v2895
  %v3112 = vmax.f32 %v2556, %v2897
  %v3113 = vmax.f32 %v2564, %v2899
  %v3114 = vmax.f32 %v2563, %v2901
  %v3115 = vmax.f32 %v2565, %v2903
  %v3116 = vmax.f32 %v2574, %v2905
  %v3117 = vmax.f32 %v2582, %v2907
  %v3118 = vmax.f32 %v2581, %v2909
  %v3119 = vmax.f32 %v2583, %v2911
  %v3120 = vmax.f32 %v2592, %v2913
  %v3121 = vmax.f32 %v2600, %v2915
  %v3122 = vmax.f32 %v2599, %v2917
  %v3123 = vmax.f32 %v2601, %v2919
  %v3124 = vmax.f32 %v2610, %v2921
  %v3125 = vmax.f32 %v2618, %v2923
  %v3126 = vmax.f32 %v2617, %v2925
  %v3127 = vmax.f32 %v2619, %v2927
  %v3128 = vmax.f32 %v2628, %v2929
  %v3129 = vmax.f32 %v2636, %v2931
  %v3130 = vmax.f32 %v2635, %v2933
  %v3131 = vmax.f32 %v2637, %v2935
  %v3132 = vmax.f32 %v2646, %v2937
  %v3133 = vmax.f32 %v2654, %v2939
  %v3134 = vmax.f32 %v2653, %v2941
  %v3135 = vmax.f32 %v2655, %v2943
  %3232 = vrot.lane.b32.xlu0 %v3040, 118
  %v3233 = vpop.permute.xlu0 %3232
  %3234 = vrot.lane.b32.xlu0 %v3041, 118
  %v3235 = vpop.permute.xlu0 %3234
  %3236 = vrot.lane.b32.xlu0 %v3042, 118
  %v3237 = vpop.permute.xlu0 %3236
  %3238 = vrot.lane.b32.xlu0 %v3043, 118
  %v3239 = vpop.permute.xlu0 %3238
  %3240 = vrot.lane.b32.xlu0 %v3044, 118
  %v3241 = vpop.permute.xlu0 %3240
  %3242 = vrot.lane.b32.xlu0 %v3045, 118
  %v3243 = vpop.permute.xlu0 %3242
  %3244 = vrot.lane.b32.xlu0 %v3046, 118
  %v3245 = vpop.permute.xlu0 %3244
  %3246 = vrot.lane.b32.xlu0 %v3047, 118
  %v3247 = vpop.permute.xlu0 %3246
  %3248 = vrot.lane.b32.xlu0 %v3048, 118
  %v3249 = vpop.permute.xlu0 %3248
  %3250 = vrot.lane.b32.xlu0 %v3049, 118
  %v3251 = vpop.permute.xlu0 %3250
  %3252 = vrot.lane.b32.xlu0 %v3050, 118
  %v3253 = vpop.permute.xlu0 %3252
  %3254 = vrot.lane.b32.xlu0 %v3051, 118
  %v3255 = vpop.permute.xlu0 %3254
  %3256 = vrot.lane.b32.xlu0 %v3052, 118
  %v3257 = vpop.permute.xlu0 %3256
  %3258 = vrot.lane.b32.xlu0 %v3053, 118
  %v3259 = vpop.permute.xlu0 %3258
  %3260 = vrot.lane.b32.xlu0 %v3054, 118
  %v3261 = vpop.permute.xlu0 %3260
  %3262 = vrot.lane.b32.xlu0 %v3055, 118
  %v3263 = vpop.permute.xlu0 %3262
  %3264 = vrot.lane.b32.xlu0 %v3056, 118
  %v3265 = vpop.permute.xlu0 %3264
  %3266 = vrot.lane.b32.xlu0 %v3057, 118
  %v3267 = vpop.permute.xlu0 %3266
  %3268 = vrot.lane.b32.xlu0 %v3058, 118
  %v3269 = vpop.permute.xlu0 %3268
  %3270 = vrot.lane.b32.xlu0 %v3059, 118
  %v3271 = vpop.permute.xlu0 %3270
  %3272 = vrot.lane.b32.xlu0 %v3060, 118
  %v3273 = vpop.permute.xlu0 %3272
  %3274 = vrot.lane.b32.xlu0 %v3061, 118
  %v3275 = vpop.permute.xlu0 %3274
  %3276 = vrot.lane.b32.xlu0 %v3062, 118
  %v3277 = vpop.permute.xlu0 %3276
  %3278 = vrot.lane.b32.xlu0 %v3063, 118
  %v3279 = vpop.permute.xlu0 %3278
  %3280 = vrot.lane.b32.xlu0 %v3064, 118
  %v3281 = vpop.permute.xlu0 %3280
  %3282 = vrot.lane.b32.xlu0 %v3065, 118
  %v3283 = vpop.permute.xlu0 %3282
  %3284 = vrot.lane.b32.xlu0 %v3066, 118
  %v3285 = vpop.permute.xlu0 %3284
  %3286 = vrot.lane.b32.xlu0 %v3067, 118
  %v3287 = vpop.permute.xlu0 %3286
  %3288 = vrot.lane.b32.xlu0 %v3068, 118
  %v3289 = vpop.permute.xlu0 %3288
  %3290 = vrot.lane.b32.xlu0 %v3069, 118
  %v3291 = vpop.permute.xlu0 %3290
  %3292 = vrot.lane.b32.xlu0 %v3070, 118
  %v3293 = vpop.permute.xlu0 %3292
  %3294 = vrot.lane.b32.xlu0 %v3071, 118
  %v3295 = vpop.permute.xlu0 %3294
  %3296 = vrot.lane.b32.xlu0 %v3072, 118
  %v3297 = vpop.permute.xlu0 %3296
  %3298 = vrot.lane.b32.xlu0 %v3073, 118
  %v3299 = vpop.permute.xlu0 %3298
  %3300 = vrot.lane.b32.xlu0 %v3074, 118
  %v3301 = vpop.permute.xlu0 %3300
  %3302 = vrot.lane.b32.xlu0 %v3075, 118
  %v3303 = vpop.permute.xlu0 %3302
  %3304 = vrot.lane.b32.xlu0 %v3076, 118
  %v3305 = vpop.permute.xlu0 %3304
  %3306 = vrot.lane.b32.xlu0 %v3077, 118
  %v3307 = vpop.permute.xlu0 %3306
  %3308 = vrot.lane.b32.xlu0 %v3078, 118
  %v3309 = vpop.permute.xlu0 %3308
  %3310 = vrot.lane.b32.xlu0 %v3079, 118
  %v3311 = vpop.permute.xlu0 %3310
  %3312 = vrot.lane.b32.xlu0 %v3080, 118
  %v3313 = vpop.permute.xlu0 %3312
  %3314 = vrot.lane.b32.xlu0 %v3081, 118
  %v3315 = vpop.permute.xlu0 %3314
  %3316 = vrot.lane.b32.xlu0 %v3082, 118
  %v3317 = vpop.permute.xlu0 %3316
  %3318 = vrot.lane.b32.xlu0 %v3083, 118
  %v3319 = vpop.permute.xlu0 %3318
  %3320 = vrot.lane.b32.xlu0 %v3084, 118
  %v3321 = vpop.permute.xlu0 %3320
  %3322 = vrot.lane.b32.xlu0 %v3085, 118
  %v3323 = vpop.permute.xlu0 %3322
  %3324 = vrot.lane.b32.xlu0 %v3086, 118
  %v3325 = vpop.permute.xlu0 %3324
  %3326 = vrot.lane.b32.xlu0 %v3087, 118
  %v3327 = vpop.permute.xlu0 %3326
  %3328 = vrot.lane.b32.xlu0 %v3088, 118
  %v3329 = vpop.permute.xlu0 %3328
  %3330 = vrot.lane.b32.xlu0 %v3089, 118
  %v3331 = vpop.permute.xlu0 %3330
  %3332 = vrot.lane.b32.xlu0 %v3090, 118
  %v3333 = vpop.permute.xlu0 %3332
  %3334 = vrot.lane.b32.xlu0 %v3091, 118
  %v3335 = vpop.permute.xlu0 %3334
  %3336 = vrot.lane.b32.xlu0 %v3092, 118
  %v3337 = vpop.permute.xlu0 %3336
  %3338 = vrot.lane.b32.xlu0 %v3093, 118
  %v3339 = vpop.permute.xlu0 %3338
  %3340 = vrot.lane.b32.xlu0 %v3094, 118
  %v3341 = vpop.permute.xlu0 %3340
  %3342 = vrot.lane.b32.xlu0 %v3095, 118
  %v3343 = vpop.permute.xlu0 %3342
  %3344 = vrot.lane.b32.xlu0 %v3096, 118
  %v3345 = vpop.permute.xlu0 %3344
  %3346 = vrot.lane.b32.xlu0 %v3097, 118
  %v3347 = vpop.permute.xlu0 %3346
  %3348 = vrot.lane.b32.xlu0 %v3098, 118
  %v3349 = vpop.permute.xlu0 %3348
  %3350 = vrot.lane.b32.xlu0 %v3099, 118
  %v3351 = vpop.permute.xlu0 %3350
  %3352 = vrot.lane.b32.xlu0 %v3100, 118
  %v3353 = vpop.permute.xlu0 %3352
  %3354 = vrot.lane.b32.xlu0 %v3101, 118
  %v3355 = vpop.permute.xlu0 %3354
  %3356 = vrot.lane.b32.xlu0 %v3102, 118
  %v3357 = vpop.permute.xlu0 %3356
  %3358 = vrot.lane.b32.xlu0 %v3103, 118
  %v3359 = vpop.permute.xlu0 %3358
  %3360 = vrot.lane.b32.xlu0 %v3104, 118
  %v3361 = vpop.permute.xlu0 %3360
  %3362 = vrot.lane.b32.xlu0 %v3105, 118
  %v3363 = vpop.permute.xlu0 %3362
  %3364 = vrot.lane.b32.xlu0 %v3106, 118
  %v3365 = vpop.permute.xlu0 %3364
  %3366 = vrot.lane.b32.xlu0 %v3107, 118
  %v3367 = vpop.permute.xlu0 %3366
  %3368 = vrot.lane.b32.xlu0 %v3108, 118
  %v3369 = vpop.permute.xlu0 %3368
  %3370 = vrot.lane.b32.xlu0 %v3109, 118
  %v3371 = vpop.permute.xlu0 %3370
  %3372 = vrot.lane.b32.xlu0 %v3110, 118
  %v3373 = vpop.permute.xlu0 %3372
  %3374 = vrot.lane.b32.xlu0 %v3111, 118
  %v3375 = vpop.permute.xlu0 %3374
  %3376 = vrot.lane.b32.xlu0 %v3112, 118
  %v3377 = vpop.permute.xlu0 %3376
  %3378 = vrot.lane.b32.xlu0 %v3113, 118
  %v3379 = vpop.permute.xlu0 %3378
  %3380 = vrot.lane.b32.xlu0 %v3114, 118
  %v3381 = vpop.permute.xlu0 %3380
  %3382 = vrot.lane.b32.xlu0 %v3115, 118
  %v3383 = vpop.permute.xlu0 %3382
  %3384 = vrot.lane.b32.xlu0 %v3116, 118
  %v3385 = vpop.permute.xlu0 %3384
  %3386 = vrot.lane.b32.xlu0 %v3117, 118
  %v3387 = vpop.permute.xlu0 %3386
  %3388 = vrot.lane.b32.xlu0 %v3118, 118
  %v3389 = vpop.permute.xlu0 %3388
  %3390 = vrot.lane.b32.xlu0 %v3119, 118
  %v3391 = vpop.permute.xlu0 %3390
  %3392 = vrot.lane.b32.xlu0 %v3120, 118
  %v3393 = vpop.permute.xlu0 %3392
  %3394 = vrot.lane.b32.xlu0 %v3121, 118
  %v3395 = vpop.permute.xlu0 %3394
  %3396 = vrot.lane.b32.xlu0 %v3122, 118
  %v3397 = vpop.permute.xlu0 %3396
  %3398 = vrot.lane.b32.xlu0 %v3123, 118
  %v3399 = vpop.permute.xlu0 %3398
  %3400 = vrot.lane.b32.xlu0 %v3124, 118
  %v3401 = vpop.permute.xlu0 %3400
  %3402 = vrot.lane.b32.xlu0 %v3125, 118
  %v3403 = vpop.permute.xlu0 %3402
  %3404 = vrot.lane.b32.xlu0 %v3126, 118
  %v3405 = vpop.permute.xlu0 %3404
  %3406 = vrot.lane.b32.xlu0 %v3127, 118
  %v3407 = vpop.permute.xlu0 %3406
  %3408 = vrot.lane.b32.xlu0 %v3128, 118
  %v3409 = vpop.permute.xlu0 %3408
  %3410 = vrot.lane.b32.xlu0 %v3129, 118
  %v3411 = vpop.permute.xlu0 %3410
  %3412 = vrot.lane.b32.xlu0 %v3130, 118
  %v3413 = vpop.permute.xlu0 %3412
  %3414 = vrot.lane.b32.xlu0 %v3131, 118
  %v3415 = vpop.permute.xlu0 %3414
  %3416 = vrot.lane.b32.xlu0 %v3132, 118
  %v3417 = vpop.permute.xlu0 %3416
  %3418 = vrot.lane.b32.xlu0 %v3133, 118
  %v3419 = vpop.permute.xlu0 %3418
  %3420 = vrot.lane.b32.xlu0 %v3134, 118
  %v3421 = vpop.permute.xlu0 %3420
  %3422 = vrot.lane.b32.xlu0 %v3135, 118
  %v3423 = vpop.permute.xlu0 %3422
  %v3424 = vrot.slane %v3233, 2
  %v3425 = vrot.slane %v3235, 2
  %v3426 = vrot.slane %v3237, 2
  %v3427 = vrot.slane %v3239, 2
  %v3428 = vrot.slane %v3241, 2
  %v3429 = vrot.slane %v3243, 2
  %v3430 = vrot.slane %v3245, 2
  %v3431 = vrot.slane %v3247, 2
  %v3432 = vrot.slane %v3249, 2
  %v3433 = vrot.slane %v3251, 2
  %v3434 = vrot.slane %v3253, 2
  %v3435 = vrot.slane %v3255, 2
  %v3436 = vrot.slane %v3257, 2
  %v3437 = vrot.slane %v3259, 2
  %v3438 = vrot.slane %v3261, 2
  %v3439 = vrot.slane %v3263, 2
  %v3440 = vrot.slane %v3265, 2
  %v3441 = vrot.slane %v3267, 2
  %v3442 = vrot.slane %v3269, 2
  %v3443 = vrot.slane %v3271, 2
  %v3444 = vrot.slane %v3273, 2
  %v3445 = vrot.slane %v3275, 2
  %v3446 = vrot.slane %v3277, 2
  %v3447 = vrot.slane %v3279, 2
  %v3448 = vrot.slane %v3281, 2
  %v3449 = vrot.slane %v3283, 2
  %v3450 = vrot.slane %v3285, 2
  %v3451 = vrot.slane %v3287, 2
  %v3452 = vrot.slane %v3289, 2
  %v3453 = vrot.slane %v3291, 2
  %v3454 = vrot.slane %v3293, 2
  %v3455 = vrot.slane %v3295, 2
  %v3456 = vrot.slane %v3297, 2
  %v3457 = vrot.slane %v3299, 2
  %v3458 = vrot.slane %v3301, 2
  %v3459 = vrot.slane %v3303, 2
  %v3460 = vrot.slane %v3305, 2
  %v3461 = vrot.slane %v3307, 2
  %v3462 = vrot.slane %v3309, 2
  %v3463 = vrot.slane %v3311, 2
  %v3464 = vrot.slane %v3313, 2
  %v3465 = vrot.slane %v3315, 2
  %v3466 = vrot.slane %v3317, 2
  %v3467 = vrot.slane %v3319, 2
  %v3468 = vrot.slane %v3321, 2
  %v3469 = vrot.slane %v3323, 2
  %v3470 = vrot.slane %v3325, 2
  %v3471 = vrot.slane %v3327, 2
  %v3472 = vrot.slane %v3329, 2
  %v3473 = vrot.slane %v3331, 2
  %v3474 = vrot.slane %v3333, 2
  %v3475 = vrot.slane %v3335, 2
  %v3476 = vrot.slane %v3337, 2
  %v3477 = vrot.slane %v3339, 2
  %v3478 = vrot.slane %v3341, 2
  %v3479 = vrot.slane %v3343, 2
  %v3480 = vrot.slane %v3345, 2
  %v3481 = vrot.slane %v3347, 2
  %v3482 = vrot.slane %v3349, 2
  %v3483 = vrot.slane %v3351, 2
  %v3484 = vrot.slane %v3353, 2
  %v3485 = vrot.slane %v3355, 2
  %v3486 = vrot.slane %v3357, 2
  %v3487 = vrot.slane %v3359, 2
  %v3488 = vrot.slane %v3361, 2
  %v3489 = vrot.slane %v3363, 2
  %v3490 = vrot.slane %v3365, 2
  %v3491 = vrot.slane %v3367, 2
  %v3492 = vrot.slane %v3369, 2
  %v3493 = vrot.slane %v3371, 2
  %v3494 = vrot.slane %v3373, 2
  %v3495 = vrot.slane %v3375, 2
  %v3496 = vrot.slane %v3377, 2
  %v3497 = vrot.slane %v3379, 2
  %v3498 = vrot.slane %v3381, 2
  %v3499 = vrot.slane %v3383, 2
  %v3500 = vrot.slane %v3385, 2
  %v3501 = vrot.slane %v3387, 2
  %v3502 = vrot.slane %v3389, 2
  %v3503 = vrot.slane %v3391, 2
  %v3504 = vrot.slane %v3393, 2
  %v3505 = vrot.slane %v3395, 2
  %v3506 = vrot.slane %v3397, 2
  %v3507 = vrot.slane %v3399, 2
  %v3508 = vrot.slane %v3401, 2
  %v3509 = vrot.slane %v3403, 2
  %v3510 = vrot.slane %v3405, 2
  %v3511 = vrot.slane %v3407, 2
  %v3512 = vrot.slane %v3409, 2
  %v3513 = vrot.slane %v3411, 2
  %v3514 = vrot.slane %v3413, 2
  %v3515 = vrot.slane %v3415, 2
  %v3516 = vrot.slane %v3417, 2
  %v3517 = vrot.slane %v3419, 2
  %v3518 = vrot.slane %v3421, 2
  %v3519 = vrot.slane %v3423, 2
  %vm3520 = vcmask 965632
  %v3521 = vsel %vm3520, %v3233, %v3424
  %v3522 = vsel %vm3520, %v3235, %v3425
  %v3523 = vsel %vm3520, %v3237, %v3426
  %v3524 = vsel %vm3520, %v3239, %v3427
  %v3525 = vsel %vm3520, %v3241, %v3428
  %v3526 = vsel %vm3520, %v3243, %v3429
  %v3527 = vsel %vm3520, %v3245, %v3430
  %v3528 = vsel %vm3520, %v3247, %v3431
  %v3529 = vsel %vm3520, %v3249, %v3432
  %v3530 = vsel %vm3520, %v3251, %v3433
  %v3531 = vsel %vm3520, %v3253, %v3434
  %v3532 = vsel %vm3520, %v3255, %v3435
  %v3533 = vsel %vm3520, %v3257, %v3436
  %v3534 = vsel %vm3520, %v3259, %v3437
  %v3535 = vsel %vm3520, %v3261, %v3438
  %v3536 = vsel %vm3520, %v3263, %v3439
  %v3537 = vsel %vm3520, %v3265, %v3440
  %v3538 = vsel %vm3520, %v3267, %v3441
  %v3539 = vsel %vm3520, %v3269, %v3442
  %v3540 = vsel %vm3520, %v3271, %v3443
  %v3541 = vsel %vm3520, %v3273, %v3444
  %v3542 = vsel %vm3520, %v3275, %v3445
  %v3543 = vsel %vm3520, %v3277, %v3446
  %v3544 = vsel %vm3520, %v3279, %v3447
  %v3545 = vsel %vm3520, %v3281, %v3448
  %v3546 = vsel %vm3520, %v3283, %v3449
  %v3547 = vsel %vm3520, %v3285, %v3450
  %v3548 = vsel %vm3520, %v3287, %v3451
  %v3549 = vsel %vm3520, %v3289, %v3452
  %v3550 = vsel %vm3520, %v3291, %v3453
  %v3551 = vsel %vm3520, %v3293, %v3454
  %v3552 = vsel %vm3520, %v3295, %v3455
  %v3553 = vsel %vm3520, %v3297, %v3456
  %v3554 = vsel %vm3520, %v3299, %v3457
  %v3555 = vsel %vm3520, %v3301, %v3458
  %v3556 = vsel %vm3520, %v3303, %v3459
  %v3557 = vsel %vm3520, %v3305, %v3460
  %v3558 = vsel %vm3520, %v3307, %v3461
  %v3559 = vsel %vm3520, %v3309, %v3462
  %v3560 = vsel %vm3520, %v3311, %v3463
  %v3561 = vsel %vm3520, %v3313, %v3464
  %v3562 = vsel %vm3520, %v3315, %v3465
  %v3563 = vsel %vm3520, %v3317, %v3466
  %v3564 = vsel %vm3520, %v3319, %v3467
  %v3565 = vsel %vm3520, %v3321, %v3468
  %v3566 = vsel %vm3520, %v3323, %v3469
  %v3567 = vsel %vm3520, %v3325, %v3470
  %v3568 = vsel %vm3520, %v3327, %v3471
  %v3569 = vsel %vm3520, %v3329, %v3472
  %v3570 = vsel %vm3520, %v3331, %v3473
  %v3571 = vsel %vm3520, %v3333, %v3474
  %v3572 = vsel %vm3520, %v3335, %v3475
  %v3573 = vsel %vm3520, %v3337, %v3476
  %v3574 = vsel %vm3520, %v3339, %v3477
  %v3575 = vsel %vm3520, %v3341, %v3478
  %v3576 = vsel %vm3520, %v3343, %v3479
  %v3577 = vsel %vm3520, %v3345, %v3480
  %v3578 = vsel %vm3520, %v3347, %v3481
  %v3579 = vsel %vm3520, %v3349, %v3482
  %v3580 = vsel %vm3520, %v3351, %v3483
  %v3581 = vsel %vm3520, %v3353, %v3484
  %v3582 = vsel %vm3520, %v3355, %v3485
  %v3583 = vsel %vm3520, %v3357, %v3486
  %v3584 = vsel %vm3520, %v3359, %v3487
  %v3585 = vsel %vm3520, %v3361, %v3488
  %v3586 = vsel %vm3520, %v3363, %v3489
  %v3587 = vsel %vm3520, %v3365, %v3490
  %v3588 = vsel %vm3520, %v3367, %v3491
  %v3589 = vsel %vm3520, %v3369, %v3492
  %v3590 = vsel %vm3520, %v3371, %v3493
  %v3591 = vsel %vm3520, %v3373, %v3494
  %v3592 = vsel %vm3520, %v3375, %v3495
  %v3593 = vsel %vm3520, %v3377, %v3496
  %v3594 = vsel %vm3520, %v3379, %v3497
  %v3595 = vsel %vm3520, %v3381, %v3498
  %v3596 = vsel %vm3520, %v3383, %v3499
  %v3597 = vsel %vm3520, %v3385, %v3500
  %v3598 = vsel %vm3520, %v3387, %v3501
  %v3599 = vsel %vm3520, %v3389, %v3502
  %v3600 = vsel %vm3520, %v3391, %v3503
  %v3601 = vsel %vm3520, %v3393, %v3504
  %v3602 = vsel %vm3520, %v3395, %v3505
  %v3603 = vsel %vm3520, %v3397, %v3506
  %v3604 = vsel %vm3520, %v3399, %v3507
  %v3605 = vsel %vm3520, %v3401, %v3508
  %v3606 = vsel %vm3520, %v3403, %v3509
  %v3607 = vsel %vm3520, %v3405, %v3510
  %v3608 = vsel %vm3520, %v3407, %v3511
  %v3609 = vsel %vm3520, %v3409, %v3512
  %v3610 = vsel %vm3520, %v3411, %v3513
  %v3611 = vsel %vm3520, %v3413, %v3514
  %v3612 = vsel %vm3520, %v3415, %v3515
  %v3613 = vsel %vm3520, %v3417, %v3516
  %v3614 = vsel %vm3520, %v3419, %v3517
  %v3615 = vsel %vm3520, %v3421, %v3518
  %v3616 = vsel %vm3520, %v3423, %v3519
  %v3713 = vmax.f32 %v3040, %v3521
  %v3714 = vmax.f32 %v3041, %v3522
  %v3715 = vmax.f32 %v3042, %v3523
  %v3716 = vmax.f32 %v3043, %v3524
  %v3717 = vmax.f32 %v3044, %v3525
  %v3718 = vmax.f32 %v3045, %v3526
  %v3719 = vmax.f32 %v3046, %v3527
  %v3720 = vmax.f32 %v3047, %v3528
  %v3721 = vmax.f32 %v3048, %v3529
  %v3722 = vmax.f32 %v3049, %v3530
  %v3723 = vmax.f32 %v3050, %v3531
  %v3724 = vmax.f32 %v3051, %v3532
  %v3725 = vmax.f32 %v3052, %v3533
  %v3726 = vmax.f32 %v3053, %v3534
  %v3727 = vmax.f32 %v3054, %v3535
  %v3728 = vmax.f32 %v3055, %v3536
  %v3729 = vmax.f32 %v3056, %v3537
  %v3730 = vmax.f32 %v3057, %v3538
  %v3731 = vmax.f32 %v3058, %v3539
  %v3732 = vmax.f32 %v3059, %v3540
  %v3733 = vmax.f32 %v3060, %v3541
  %v3734 = vmax.f32 %v3061, %v3542
  %v3735 = vmax.f32 %v3062, %v3543
  %v3736 = vmax.f32 %v3063, %v3544
  %v3737 = vmax.f32 %v3064, %v3545
  %v3738 = vmax.f32 %v3065, %v3546
  %v3739 = vmax.f32 %v3066, %v3547
  %v3740 = vmax.f32 %v3067, %v3548
  %v3741 = vmax.f32 %v3068, %v3549
  %v3742 = vmax.f32 %v3069, %v3550
  %v3743 = vmax.f32 %v3070, %v3551
  %v3744 = vmax.f32 %v3071, %v3552
  %v3745 = vmax.f32 %v3072, %v3553
  %v3746 = vmax.f32 %v3073, %v3554
  %v3747 = vmax.f32 %v3074, %v3555
  %v3748 = vmax.f32 %v3075, %v3556
  %v3749 = vmax.f32 %v3076, %v3557
  %v3750 = vmax.f32 %v3077, %v3558
  %v3751 = vmax.f32 %v3078, %v3559
  %v3752 = vmax.f32 %v3079, %v3560
  %v3753 = vmax.f32 %v3080, %v3561
  %v3754 = vmax.f32 %v3081, %v3562
  %v3755 = vmax.f32 %v3082, %v3563
  %v3756 = vmax.f32 %v3083, %v3564
  %v3757 = vmax.f32 %v3084, %v3565
  %v3758 = vmax.f32 %v3085, %v3566
  %v3759 = vmax.f32 %v3086, %v3567
  %v3760 = vmax.f32 %v3087, %v3568
  %v3761 = vmax.f32 %v3088, %v3569
  %v3762 = vmax.f32 %v3089, %v3570
  %v3763 = vmax.f32 %v3090, %v3571
  %v3764 = vmax.f32 %v3091, %v3572
  %v3765 = vmax.f32 %v3092, %v3573
  %v3766 = vmax.f32 %v3093, %v3574
  %v3767 = vmax.f32 %v3094, %v3575
  %v3768 = vmax.f32 %v3095, %v3576
  %v3769 = vmax.f32 %v3096, %v3577
  %v3770 = vmax.f32 %v3097, %v3578
  %v3771 = vmax.f32 %v3098, %v3579
  %v3772 = vmax.f32 %v3099, %v3580
  %v3773 = vmax.f32 %v3100, %v3581
  %v3774 = vmax.f32 %v3101, %v3582
  %v3775 = vmax.f32 %v3102, %v3583
  %v3776 = vmax.f32 %v3103, %v3584
  %v3777 = vmax.f32 %v3104, %v3585
  %v3778 = vmax.f32 %v3105, %v3586
  %v3779 = vmax.f32 %v3106, %v3587
  %v3780 = vmax.f32 %v3107, %v3588
  %v3781 = vmax.f32 %v3108, %v3589
  %v3782 = vmax.f32 %v3109, %v3590
  %v3783 = vmax.f32 %v3110, %v3591
  %v3784 = vmax.f32 %v3111, %v3592
  %v3785 = vmax.f32 %v3112, %v3593
  %v3786 = vmax.f32 %v3113, %v3594
  %v3787 = vmax.f32 %v3114, %v3595
  %v3788 = vmax.f32 %v3115, %v3596
  %v3789 = vmax.f32 %v3116, %v3597
  %v3790 = vmax.f32 %v3117, %v3598
  %v3791 = vmax.f32 %v3118, %v3599
  %v3792 = vmax.f32 %v3119, %v3600
  %v3793 = vmax.f32 %v3120, %v3601
  %v3794 = vmax.f32 %v3121, %v3602
  %v3795 = vmax.f32 %v3122, %v3603
  %v3796 = vmax.f32 %v3123, %v3604
  %v3797 = vmax.f32 %v3124, %v3605
  %v3798 = vmax.f32 %v3125, %v3606
  %v3799 = vmax.f32 %v3126, %v3607
  %v3800 = vmax.f32 %v3127, %v3608
  %v3801 = vmax.f32 %v3128, %v3609
  %v3802 = vmax.f32 %v3129, %v3610
  %v3803 = vmax.f32 %v3130, %v3611
  %v3804 = vmax.f32 %v3131, %v3612
  %v3805 = vmax.f32 %v3132, %v3613
  %v3806 = vmax.f32 %v3133, %v3614
  %v3807 = vmax.f32 %v3134, %v3615
  %v3808 = vmax.f32 %v3135, %v3616
  %v3809 = vmax.f32 %v3713, 0.0
  %v3810 = vmax.f32 %v3714, 0.0
  %v3811 = vmax.f32 %v3715, 0.0
  %v3812 = vmax.f32 %v3716, 0.0
  %v3813 = vmax.f32 %v3717, 0.0
  %v3814 = vmax.f32 %v3718, 0.0
  %v3815 = vmax.f32 %v3719, 0.0
  %v3816 = vmax.f32 %v3720, 0.0
  %v3817 = vmax.f32 %v3721, 0.0
  %v3818 = vmax.f32 %v3722, 0.0
  %v3819 = vmax.f32 %v3723, 0.0
  %v3820 = vmax.f32 %v3724, 0.0
  %v3821 = vmax.f32 %v3725, 0.0
  %v3822 = vmax.f32 %v3726, 0.0
  %v3823 = vmax.f32 %v3727, 0.0
  %v3824 = vmax.f32 %v3728, 0.0
  %v3825 = vmax.f32 %v3729, 0.0
  %v3826 = vmax.f32 %v3730, 0.0
  %v3827 = vmax.f32 %v3731, 0.0
  %v3828 = vmax.f32 %v3732, 0.0
  %v3829 = vmax.f32 %v3733, 0.0
  %v3830 = vmax.f32 %v3734, 0.0
  %v3831 = vmax.f32 %v3735, 0.0
  %v3832 = vmax.f32 %v3736, 0.0
  %v3833 = vmax.f32 %v3737, 0.0
  %v3834 = vmax.f32 %v3738, 0.0
  %v3835 = vmax.f32 %v3739, 0.0
  %v3836 = vmax.f32 %v3740, 0.0
  %v3837 = vmax.f32 %v3741, 0.0
  %v3838 = vmax.f32 %v3742, 0.0
  %v3839 = vmax.f32 %v3743, 0.0
  %v3840 = vmax.f32 %v3744, 0.0
  %v3841 = vmax.f32 %v3745, 0.0
  %v3842 = vmax.f32 %v3746, 0.0
  %v3843 = vmax.f32 %v3747, 0.0
  %v3844 = vmax.f32 %v3748, 0.0
  %v3845 = vmax.f32 %v3749, 0.0
  %v3846 = vmax.f32 %v3750, 0.0
  %v3847 = vmax.f32 %v3751, 0.0
  %v3848 = vmax.f32 %v3752, 0.0
  %v3849 = vmax.f32 %v3753, 0.0
  %v3850 = vmax.f32 %v3754, 0.0
  %v3851 = vmax.f32 %v3755, 0.0
  %v3852 = vmax.f32 %v3756, 0.0
  %v3853 = vmax.f32 %v3757, 0.0
  %v3854 = vmax.f32 %v3758, 0.0
  %v3855 = vmax.f32 %v3759, 0.0
  %v3856 = vmax.f32 %v3760, 0.0
  %v3857 = vmax.f32 %v3761, 0.0
  %v3858 = vmax.f32 %v3762, 0.0
  %v3859 = vmax.f32 %v3763, 0.0
  %v3860 = vmax.f32 %v3764, 0.0
  %v3861 = vmax.f32 %v3765, 0.0
  %v3862 = vmax.f32 %v3766, 0.0
  %v3863 = vmax.f32 %v3767, 0.0
  %v3864 = vmax.f32 %v3768, 0.0
  %v3865 = vmax.f32 %v3769, 0.0
  %v3866 = vmax.f32 %v3770, 0.0
  %v3867 = vmax.f32 %v3771, 0.0
  %v3868 = vmax.f32 %v3772, 0.0
  %v3869 = vmax.f32 %v3773, 0.0
  %v3870 = vmax.f32 %v3774, 0.0
  %v3871 = vmax.f32 %v3775, 0.0
  %v3872 = vmax.f32 %v3776, 0.0
  %v3873 = vmax.f32 %v3777, 0.0
  %v3874 = vmax.f32 %v3778, 0.0
  %v3875 = vmax.f32 %v3779, 0.0
  %v3876 = vmax.f32 %v3780, 0.0
  %v3877 = vmax.f32 %v3781, 0.0
  %v3878 = vmax.f32 %v3782, 0.0
  %v3879 = vmax.f32 %v3783, 0.0
  %v3880 = vmax.f32 %v3784, 0.0
  %v3881 = vmax.f32 %v3785, 0.0
  %v3882 = vmax.f32 %v3786, 0.0
  %v3883 = vmax.f32 %v3787, 0.0
  %v3884 = vmax.f32 %v3788, 0.0
  %v3885 = vmax.f32 %v3789, 0.0
  %v3886 = vmax.f32 %v3790, 0.0
  %v3887 = vmax.f32 %v3791, 0.0
  %v3888 = vmax.f32 %v3792, 0.0
  %v3889 = vmax.f32 %v3793, 0.0
  %v3890 = vmax.f32 %v3794, 0.0
  %v3891 = vmax.f32 %v3795, 0.0
  %v3892 = vmax.f32 %v3796, 0.0
  %v3893 = vmax.f32 %v3797, 0.0
  %v3894 = vmax.f32 %v3798, 0.0
  %v3895 = vmax.f32 %v3799, 0.0
  %v3896 = vmax.f32 %v3800, 0.0
  %v3897 = vmax.f32 %v3801, 0.0
  %v3898 = vmax.f32 %v3802, 0.0
  %v3899 = vmax.f32 %v3803, 0.0
  %v3900 = vmax.f32 %v3804, 0.0
  %v3901 = vmax.f32 %v3805, 0.0
  %v3902 = vmax.f32 %v3806, 0.0
  %v3903 = vmax.f32 %v3807, 0.0
  %v3904 = vmax.f32 %v3808, 0.0
  %v4001 = vlaneseq
  %v4002 = vshrl.u32 %v4001, 7
  %v4003 = vsub.s32 0, %v4002
  %v4004 = vrot.slane %v3809, %v4003
  %v4005 = vlaneseq
  %v4006 = vshrl.u32 %v4005, 7
  %v4007 = vsub.s32 2, %v4006
  %v4008 = vrot.slane %v3809, %v4007
  %v4009 = vlaneseq
  %v4010 = vshrl.u32 %v4009, 7
  %v4011 = vsub.s32 0, %v4010
  %v4012 = vrot.slane %v3810, %v4011
  %v4013 = vlaneseq
  %v4014 = vshrl.u32 %v4013, 7
  %v4015 = vsub.s32 2, %v4014
  %v4016 = vrot.slane %v3810, %v4015
  %v4017 = vlaneseq
  %v4018 = vshrl.u32 %v4017, 7
  %v4019 = vsub.s32 0, %v4018
  %v4020 = vrot.slane %v3811, %v4019
  %v4021 = vlaneseq
  %v4022 = vshrl.u32 %v4021, 7
  %v4023 = vsub.s32 2, %v4022
  %v4024 = vrot.slane %v3811, %v4023
  %v4025 = vlaneseq
  %v4026 = vshrl.u32 %v4025, 7
  %v4027 = vsub.s32 0, %v4026
  %v4028 = vrot.slane %v3812, %v4027
  %v4029 = vlaneseq
  %v4030 = vshrl.u32 %v4029, 7
  %v4031 = vsub.s32 2, %v4030
  %v4032 = vrot.slane %v3812, %v4031
  %v4033 = vlaneseq
  %v4034 = vshrl.u32 %v4033, 7
  %v4035 = vsub.s32 0, %v4034
  %v4036 = vrot.slane %v3813, %v4035
  %v4037 = vlaneseq
  %v4038 = vshrl.u32 %v4037, 7
  %v4039 = vsub.s32 2, %v4038
  %v4040 = vrot.slane %v3813, %v4039
  %v4041 = vlaneseq
  %v4042 = vshrl.u32 %v4041, 7
  %v4043 = vsub.s32 0, %v4042
  %v4044 = vrot.slane %v3814, %v4043
  %v4045 = vlaneseq
  %v4046 = vshrl.u32 %v4045, 7
  %v4047 = vsub.s32 2, %v4046
  %v4048 = vrot.slane %v3814, %v4047
  %v4049 = vlaneseq
  %v4050 = vshrl.u32 %v4049, 7
  %v4051 = vsub.s32 0, %v4050
  %v4052 = vrot.slane %v3815, %v4051
  %v4053 = vlaneseq
  %v4054 = vshrl.u32 %v4053, 7
  %v4055 = vsub.s32 2, %v4054
  %v4056 = vrot.slane %v3815, %v4055
  %v4057 = vlaneseq
  %v4058 = vshrl.u32 %v4057, 7
  %v4059 = vsub.s32 0, %v4058
  %v4060 = vrot.slane %v3816, %v4059
  %v4061 = vlaneseq
  %v4062 = vshrl.u32 %v4061, 7
  %v4063 = vsub.s32 2, %v4062
  %v4064 = vrot.slane %v3816, %v4063
  %v4065 = vlaneseq
  %v4066 = vshrl.u32 %v4065, 7
  %v4067 = vsub.s32 0, %v4066
  %v4068 = vrot.slane %v3817, %v4067
  %v4069 = vlaneseq
  %v4070 = vshrl.u32 %v4069, 7
  %v4071 = vsub.s32 2, %v4070
  %v4072 = vrot.slane %v3817, %v4071
  %v4073 = vlaneseq
  %v4074 = vshrl.u32 %v4073, 7
  %v4075 = vsub.s32 0, %v4074
  %v4076 = vrot.slane %v3818, %v4075
  %v4077 = vlaneseq
  %v4078 = vshrl.u32 %v4077, 7
  %v4079 = vsub.s32 2, %v4078
  %v4080 = vrot.slane %v3818, %v4079
  %v4081 = vlaneseq
  %v4082 = vshrl.u32 %v4081, 7
  %v4083 = vsub.s32 0, %v4082
  %v4084 = vrot.slane %v3819, %v4083
  %v4085 = vlaneseq
  %v4086 = vshrl.u32 %v4085, 7
  %v4087 = vsub.s32 2, %v4086
  %v4088 = vrot.slane %v3819, %v4087
  %v4089 = vlaneseq
  %v4090 = vshrl.u32 %v4089, 7
  %v4091 = vsub.s32 0, %v4090
  %v4092 = vrot.slane %v3820, %v4091
  %v4093 = vlaneseq
  %v4094 = vshrl.u32 %v4093, 7
  %v4095 = vsub.s32 2, %v4094
  %v4096 = vrot.slane %v3820, %v4095
  %v4097 = vlaneseq
  %v4098 = vshrl.u32 %v4097, 7
  %v4099 = vsub.s32 0, %v4098
  %v4100 = vrot.slane %v3821, %v4099
  %v4101 = vlaneseq
  %v4102 = vshrl.u32 %v4101, 7
  %v4103 = vsub.s32 2, %v4102
  %v4104 = vrot.slane %v3821, %v4103
  %v4105 = vlaneseq
  %v4106 = vshrl.u32 %v4105, 7
  %v4107 = vsub.s32 0, %v4106
  %v4108 = vrot.slane %v3822, %v4107
  %v4109 = vlaneseq
  %v4110 = vshrl.u32 %v4109, 7
  %v4111 = vsub.s32 2, %v4110
  %v4112 = vrot.slane %v3822, %v4111
  %v4113 = vlaneseq
  %v4114 = vshrl.u32 %v4113, 7
  %v4115 = vsub.s32 0, %v4114
  %v4116 = vrot.slane %v3823, %v4115
  %v4117 = vlaneseq
  %v4118 = vshrl.u32 %v4117, 7
  %v4119 = vsub.s32 2, %v4118
  %v4120 = vrot.slane %v3823, %v4119
  %v4121 = vlaneseq
  %v4122 = vshrl.u32 %v4121, 7
  %v4123 = vsub.s32 0, %v4122
  %v4124 = vrot.slane %v3824, %v4123
  %v4125 = vlaneseq
  %v4126 = vshrl.u32 %v4125, 7
  %v4127 = vsub.s32 2, %v4126
  %v4128 = vrot.slane %v3824, %v4127
  %v4129 = vlaneseq
  %v4130 = vshrl.u32 %v4129, 7
  %v4131 = vsub.s32 0, %v4130
  %v4132 = vrot.slane %v3825, %v4131
  %v4133 = vlaneseq
  %v4134 = vshrl.u32 %v4133, 7
  %v4135 = vsub.s32 2, %v4134
  %v4136 = vrot.slane %v3825, %v4135
  %v4137 = vlaneseq
  %v4138 = vshrl.u32 %v4137, 7
  %v4139 = vsub.s32 0, %v4138
  %v4140 = vrot.slane %v3826, %v4139
  %v4141 = vlaneseq
  %v4142 = vshrl.u32 %v4141, 7
  %v4143 = vsub.s32 2, %v4142
  %v4144 = vrot.slane %v3826, %v4143
  %v4145 = vlaneseq
  %v4146 = vshrl.u32 %v4145, 7
  %v4147 = vsub.s32 0, %v4146
  %v4148 = vrot.slane %v3827, %v4147
  %v4149 = vlaneseq
  %v4150 = vshrl.u32 %v4149, 7
  %v4151 = vsub.s32 2, %v4150
  %v4152 = vrot.slane %v3827, %v4151
  %v4153 = vlaneseq
  %v4154 = vshrl.u32 %v4153, 7
  %v4155 = vsub.s32 0, %v4154
  %v4156 = vrot.slane %v3828, %v4155
  %v4157 = vlaneseq
  %v4158 = vshrl.u32 %v4157, 7
  %v4159 = vsub.s32 2, %v4158
  %v4160 = vrot.slane %v3828, %v4159
  %v4161 = vlaneseq
  %v4162 = vshrl.u32 %v4161, 7
  %v4163 = vsub.s32 0, %v4162
  %v4164 = vrot.slane %v3829, %v4163
  %v4165 = vlaneseq
  %v4166 = vshrl.u32 %v4165, 7
  %v4167 = vsub.s32 2, %v4166
  %v4168 = vrot.slane %v3829, %v4167
  %v4169 = vlaneseq
  %v4170 = vshrl.u32 %v4169, 7
  %v4171 = vsub.s32 0, %v4170
  %v4172 = vrot.slane %v3830, %v4171
  %v4173 = vlaneseq
  %v4174 = vshrl.u32 %v4173, 7
  %v4175 = vsub.s32 2, %v4174
  %v4176 = vrot.slane %v3830, %v4175
  %v4177 = vlaneseq
  %v4178 = vshrl.u32 %v4177, 7
  %v4179 = vsub.s32 0, %v4178
  %v4180 = vrot.slane %v3831, %v4179
  %v4181 = vlaneseq
  %v4182 = vshrl.u32 %v4181, 7
  %v4183 = vsub.s32 2, %v4182
  %v4184 = vrot.slane %v3831, %v4183
  %v4185 = vlaneseq
  %v4186 = vshrl.u32 %v4185, 7
  %v4187 = vsub.s32 0, %v4186
  %v4188 = vrot.slane %v3832, %v4187
  %v4189 = vlaneseq
  %v4190 = vshrl.u32 %v4189, 7
  %v4191 = vsub.s32 2, %v4190
  %v4192 = vrot.slane %v3832, %v4191
  %v4193 = vlaneseq
  %v4194 = vshrl.u32 %v4193, 7
  %v4195 = vsub.s32 0, %v4194
  %v4196 = vrot.slane %v3833, %v4195
  %v4197 = vlaneseq
  %v4198 = vshrl.u32 %v4197, 7
  %v4199 = vsub.s32 2, %v4198
  %v4200 = vrot.slane %v3833, %v4199
  %v4201 = vlaneseq
  %v4202 = vshrl.u32 %v4201, 7
  %v4203 = vsub.s32 0, %v4202
  %v4204 = vrot.slane %v3834, %v4203
  %v4205 = vlaneseq
  %v4206 = vshrl.u32 %v4205, 7
  %v4207 = vsub.s32 2, %v4206
  %v4208 = vrot.slane %v3834, %v4207
  %v4209 = vlaneseq
  %v4210 = vshrl.u32 %v4209, 7
  %v4211 = vsub.s32 0, %v4210
  %v4212 = vrot.slane %v3835, %v4211
  %v4213 = vlaneseq
  %v4214 = vshrl.u32 %v4213, 7
  %v4215 = vsub.s32 2, %v4214
  %v4216 = vrot.slane %v3835, %v4215
  %v4217 = vlaneseq
  %v4218 = vshrl.u32 %v4217, 7
  %v4219 = vsub.s32 0, %v4218
  %v4220 = vrot.slane %v3836, %v4219
  %v4221 = vlaneseq
  %v4222 = vshrl.u32 %v4221, 7
  %v4223 = vsub.s32 2, %v4222
  %v4224 = vrot.slane %v3836, %v4223
  %v4225 = vlaneseq
  %v4226 = vshrl.u32 %v4225, 7
  %v4227 = vsub.s32 0, %v4226
  %v4228 = vrot.slane %v3837, %v4227
  %v4229 = vlaneseq
  %v4230 = vshrl.u32 %v4229, 7
  %v4231 = vsub.s32 2, %v4230
  %v4232 = vrot.slane %v3837, %v4231
  %v4233 = vlaneseq
  %v4234 = vshrl.u32 %v4233, 7
  %v4235 = vsub.s32 0, %v4234
  %v4236 = vrot.slane %v3838, %v4235
  %v4237 = vlaneseq
  %v4238 = vshrl.u32 %v4237, 7
  %v4239 = vsub.s32 2, %v4238
  %v4240 = vrot.slane %v3838, %v4239
  %v4241 = vlaneseq
  %v4242 = vshrl.u32 %v4241, 7
  %v4243 = vsub.s32 0, %v4242
  %v4244 = vrot.slane %v3839, %v4243
  %v4245 = vlaneseq
  %v4246 = vshrl.u32 %v4245, 7
  %v4247 = vsub.s32 2, %v4246
  %v4248 = vrot.slane %v3839, %v4247
  %v4249 = vlaneseq
  %v4250 = vshrl.u32 %v4249, 7
  %v4251 = vsub.s32 0, %v4250
  %v4252 = vrot.slane %v3840, %v4251
  %v4253 = vlaneseq
  %v4254 = vshrl.u32 %v4253, 7
  %v4255 = vsub.s32 2, %v4254
  %v4256 = vrot.slane %v3840, %v4255
  %v4257 = vlaneseq
  %v4258 = vshrl.u32 %v4257, 7
  %v4259 = vsub.s32 0, %v4258
  %v4260 = vrot.slane %v3841, %v4259
  %v4261 = vlaneseq
  %v4262 = vshrl.u32 %v4261, 7
  %v4263 = vsub.s32 2, %v4262
  %v4264 = vrot.slane %v3841, %v4263
  %v4265 = vlaneseq
  %v4266 = vshrl.u32 %v4265, 7
  %v4267 = vsub.s32 0, %v4266
  %v4268 = vrot.slane %v3842, %v4267
  %v4269 = vlaneseq
  %v4270 = vshrl.u32 %v4269, 7
  %v4271 = vsub.s32 2, %v4270
  %v4272 = vrot.slane %v3842, %v4271
  %v4273 = vlaneseq
  %v4274 = vshrl.u32 %v4273, 7
  %v4275 = vsub.s32 0, %v4274
  %v4276 = vrot.slane %v3843, %v4275
  %v4277 = vlaneseq
  %v4278 = vshrl.u32 %v4277, 7
  %v4279 = vsub.s32 2, %v4278
  %v4280 = vrot.slane %v3843, %v4279
  %v4281 = vlaneseq
  %v4282 = vshrl.u32 %v4281, 7
  %v4283 = vsub.s32 0, %v4282
  %v4284 = vrot.slane %v3844, %v4283
  %v4285 = vlaneseq
  %v4286 = vshrl.u32 %v4285, 7
  %v4287 = vsub.s32 2, %v4286
  %v4288 = vrot.slane %v3844, %v4287
  %v4289 = vlaneseq
  %v4290 = vshrl.u32 %v4289, 7
  %v4291 = vsub.s32 0, %v4290
  %v4292 = vrot.slane %v3845, %v4291
  %v4293 = vlaneseq
  %v4294 = vshrl.u32 %v4293, 7
  %v4295 = vsub.s32 2, %v4294
  %v4296 = vrot.slane %v3845, %v4295
  %v4297 = vlaneseq
  %v4298 = vshrl.u32 %v4297, 7
  %v4299 = vsub.s32 0, %v4298
  %v4300 = vrot.slane %v3846, %v4299
  %v4301 = vlaneseq
  %v4302 = vshrl.u32 %v4301, 7
  %v4303 = vsub.s32 2, %v4302
  %v4304 = vrot.slane %v3846, %v4303
  %v4305 = vlaneseq
  %v4306 = vshrl.u32 %v4305, 7
  %v4307 = vsub.s32 0, %v4306
  %v4308 = vrot.slane %v3847, %v4307
  %v4309 = vlaneseq
  %v4310 = vshrl.u32 %v4309, 7
  %v4311 = vsub.s32 2, %v4310
  %v4312 = vrot.slane %v3847, %v4311
  %v4313 = vlaneseq
  %v4314 = vshrl.u32 %v4313, 7
  %v4315 = vsub.s32 0, %v4314
  %v4316 = vrot.slane %v3848, %v4315
  %v4317 = vlaneseq
  %v4318 = vshrl.u32 %v4317, 7
  %v4319 = vsub.s32 2, %v4318
  %v4320 = vrot.slane %v3848, %v4319
  %v4321 = vlaneseq
  %v4322 = vshrl.u32 %v4321, 7
  %v4323 = vsub.s32 0, %v4322
  %v4324 = vrot.slane %v3849, %v4323
  %v4325 = vlaneseq
  %v4326 = vshrl.u32 %v4325, 7
  %v4327 = vsub.s32 2, %v4326
  %v4328 = vrot.slane %v3849, %v4327
  %v4329 = vlaneseq
  %v4330 = vshrl.u32 %v4329, 7
  %v4331 = vsub.s32 0, %v4330
  %v4332 = vrot.slane %v3850, %v4331
  %v4333 = vlaneseq
  %v4334 = vshrl.u32 %v4333, 7
  %v4335 = vsub.s32 2, %v4334
  %v4336 = vrot.slane %v3850, %v4335
  %v4337 = vlaneseq
  %v4338 = vshrl.u32 %v4337, 7
  %v4339 = vsub.s32 0, %v4338
  %v4340 = vrot.slane %v3851, %v4339
  %v4341 = vlaneseq
  %v4342 = vshrl.u32 %v4341, 7
  %v4343 = vsub.s32 2, %v4342
  %v4344 = vrot.slane %v3851, %v4343
  %v4345 = vlaneseq
  %v4346 = vshrl.u32 %v4345, 7
  %v4347 = vsub.s32 0, %v4346
  %v4348 = vrot.slane %v3852, %v4347
  %v4349 = vlaneseq
  %v4350 = vshrl.u32 %v4349, 7
  %v4351 = vsub.s32 2, %v4350
  %v4352 = vrot.slane %v3852, %v4351
  %v4353 = vlaneseq
  %v4354 = vshrl.u32 %v4353, 7
  %v4355 = vsub.s32 0, %v4354
  %v4356 = vrot.slane %v3853, %v4355
  %v4357 = vlaneseq
  %v4358 = vshrl.u32 %v4357, 7
  %v4359 = vsub.s32 2, %v4358
  %v4360 = vrot.slane %v3853, %v4359
  %v4361 = vlaneseq
  %v4362 = vshrl.u32 %v4361, 7
  %v4363 = vsub.s32 0, %v4362
  %v4364 = vrot.slane %v3854, %v4363
  %v4365 = vlaneseq
  %v4366 = vshrl.u32 %v4365, 7
  %v4367 = vsub.s32 2, %v4366
  %v4368 = vrot.slane %v3854, %v4367
  %v4369 = vlaneseq
  %v4370 = vshrl.u32 %v4369, 7
  %v4371 = vsub.s32 0, %v4370
  %v4372 = vrot.slane %v3855, %v4371
  %v4373 = vlaneseq
  %v4374 = vshrl.u32 %v4373, 7
  %v4375 = vsub.s32 2, %v4374
  %v4376 = vrot.slane %v3855, %v4375
  %v4377 = vlaneseq
  %v4378 = vshrl.u32 %v4377, 7
  %v4379 = vsub.s32 0, %v4378
  %v4380 = vrot.slane %v3856, %v4379
  %v4381 = vlaneseq
  %v4382 = vshrl.u32 %v4381, 7
  %v4383 = vsub.s32 2, %v4382
  %v4384 = vrot.slane %v3856, %v4383
  %v4385 = vlaneseq
  %v4386 = vshrl.u32 %v4385, 7
  %v4387 = vsub.s32 0, %v4386
  %v4388 = vrot.slane %v3857, %v4387
  %v4389 = vlaneseq
  %v4390 = vshrl.u32 %v4389, 7
  %v4391 = vsub.s32 2, %v4390
  %v4392 = vrot.slane %v3857, %v4391
  %v4393 = vlaneseq
  %v4394 = vshrl.u32 %v4393, 7
  %v4395 = vsub.s32 0, %v4394
  %v4396 = vrot.slane %v3858, %v4395
  %v4397 = vlaneseq
  %v4398 = vshrl.u32 %v4397, 7
  %v4399 = vsub.s32 2, %v4398
  %v4400 = vrot.slane %v3858, %v4399
  %v4401 = vlaneseq
  %v4402 = vshrl.u32 %v4401, 7
  %v4403 = vsub.s32 0, %v4402
  %v4404 = vrot.slane %v3859, %v4403
  %v4405 = vlaneseq
  %v4406 = vshrl.u32 %v4405, 7
  %v4407 = vsub.s32 2, %v4406
  %v4408 = vrot.slane %v3859, %v4407
  %v4409 = vlaneseq
  %v4410 = vshrl.u32 %v4409, 7
  %v4411 = vsub.s32 0, %v4410
  %v4412 = vrot.slane %v3860, %v4411
  %v4413 = vlaneseq
  %v4414 = vshrl.u32 %v4413, 7
  %v4415 = vsub.s32 2, %v4414
  %v4416 = vrot.slane %v3860, %v4415
  %v4417 = vlaneseq
  %v4418 = vshrl.u32 %v4417, 7
  %v4419 = vsub.s32 0, %v4418
  %v4420 = vrot.slane %v3861, %v4419
  %v4421 = vlaneseq
  %v4422 = vshrl.u32 %v4421, 7
  %v4423 = vsub.s32 2, %v4422
  %v4424 = vrot.slane %v3861, %v4423
  %v4425 = vlaneseq
  %v4426 = vshrl.u32 %v4425, 7
  %v4427 = vsub.s32 0, %v4426
  %v4428 = vrot.slane %v3862, %v4427
  %v4429 = vlaneseq
  %v4430 = vshrl.u32 %v4429, 7
  %v4431 = vsub.s32 2, %v4430
  %v4432 = vrot.slane %v3862, %v4431
  %v4433 = vlaneseq
  %v4434 = vshrl.u32 %v4433, 7
  %v4435 = vsub.s32 0, %v4434
  %v4436 = vrot.slane %v3863, %v4435
  %v4437 = vlaneseq
  %v4438 = vshrl.u32 %v4437, 7
  %v4439 = vsub.s32 2, %v4438
  %v4440 = vrot.slane %v3863, %v4439
  %v4441 = vlaneseq
  %v4442 = vshrl.u32 %v4441, 7
  %v4443 = vsub.s32 0, %v4442
  %v4444 = vrot.slane %v3864, %v4443
  %v4445 = vlaneseq
  %v4446 = vshrl.u32 %v4445, 7
  %v4447 = vsub.s32 2, %v4446
  %v4448 = vrot.slane %v3864, %v4447
  %v4449 = vlaneseq
  %v4450 = vshrl.u32 %v4449, 7
  %v4451 = vsub.s32 0, %v4450
  %v4452 = vrot.slane %v3865, %v4451
  %v4453 = vlaneseq
  %v4454 = vshrl.u32 %v4453, 7
  %v4455 = vsub.s32 2, %v4454
  %v4456 = vrot.slane %v3865, %v4455
  %v4457 = vlaneseq
  %v4458 = vshrl.u32 %v4457, 7
  %v4459 = vsub.s32 0, %v4458
  %v4460 = vrot.slane %v3866, %v4459
  %v4461 = vlaneseq
  %v4462 = vshrl.u32 %v4461, 7
  %v4463 = vsub.s32 2, %v4462
  %v4464 = vrot.slane %v3866, %v4463
  %v4465 = vlaneseq
  %v4466 = vshrl.u32 %v4465, 7
  %v4467 = vsub.s32 0, %v4466
  %v4468 = vrot.slane %v3867, %v4467
  %v4469 = vlaneseq
  %v4470 = vshrl.u32 %v4469, 7
  %v4471 = vsub.s32 2, %v4470
  %v4472 = vrot.slane %v3867, %v4471
  %v4473 = vlaneseq
  %v4474 = vshrl.u32 %v4473, 7
  %v4475 = vsub.s32 0, %v4474
  %v4476 = vrot.slane %v3868, %v4475
  %v4477 = vlaneseq
  %v4478 = vshrl.u32 %v4477, 7
  %v4479 = vsub.s32 2, %v4478
  %v4480 = vrot.slane %v3868, %v4479
  %v4481 = vlaneseq
  %v4482 = vshrl.u32 %v4481, 7
  %v4483 = vsub.s32 0, %v4482
  %v4484 = vrot.slane %v3869, %v4483
  %v4485 = vlaneseq
  %v4486 = vshrl.u32 %v4485, 7
  %v4487 = vsub.s32 2, %v4486
  %v4488 = vrot.slane %v3869, %v4487
  %v4489 = vlaneseq
  %v4490 = vshrl.u32 %v4489, 7
  %v4491 = vsub.s32 0, %v4490
  %v4492 = vrot.slane %v3870, %v4491
  %v4493 = vlaneseq
  %v4494 = vshrl.u32 %v4493, 7
  %v4495 = vsub.s32 2, %v4494
  %v4496 = vrot.slane %v3870, %v4495
  %v4497 = vlaneseq
  %v4498 = vshrl.u32 %v4497, 7
  %v4499 = vsub.s32 0, %v4498
  %v4500 = vrot.slane %v3871, %v4499
  %v4501 = vlaneseq
  %v4502 = vshrl.u32 %v4501, 7
  %v4503 = vsub.s32 2, %v4502
  %v4504 = vrot.slane %v3871, %v4503
  %v4505 = vlaneseq
  %v4506 = vshrl.u32 %v4505, 7
  %v4507 = vsub.s32 0, %v4506
  %v4508 = vrot.slane %v3872, %v4507
  %v4509 = vlaneseq
  %v4510 = vshrl.u32 %v4509, 7
  %v4511 = vsub.s32 2, %v4510
  %v4512 = vrot.slane %v3872, %v4511
  %v4513 = vlaneseq
  %v4514 = vshrl.u32 %v4513, 7
  %v4515 = vsub.s32 0, %v4514
  %v4516 = vrot.slane %v3873, %v4515
  %v4517 = vlaneseq
  %v4518 = vshrl.u32 %v4517, 7
  %v4519 = vsub.s32 2, %v4518
  %v4520 = vrot.slane %v3873, %v4519
  %v4521 = vlaneseq
  %v4522 = vshrl.u32 %v4521, 7
  %v4523 = vsub.s32 0, %v4522
  %v4524 = vrot.slane %v3874, %v4523
  %v4525 = vlaneseq
  %v4526 = vshrl.u32 %v4525, 7
  %v4527 = vsub.s32 2, %v4526
  %v4528 = vrot.slane %v3874, %v4527
  %v4529 = vlaneseq
  %v4530 = vshrl.u32 %v4529, 7
  %v4531 = vsub.s32 0, %v4530
  %v4532 = vrot.slane %v3875, %v4531
  %v4533 = vlaneseq
  %v4534 = vshrl.u32 %v4533, 7
  %v4535 = vsub.s32 2, %v4534
  %v4536 = vrot.slane %v3875, %v4535
  %v4537 = vlaneseq
  %v4538 = vshrl.u32 %v4537, 7
  %v4539 = vsub.s32 0, %v4538
  %v4540 = vrot.slane %v3876, %v4539
  %v4541 = vlaneseq
  %v4542 = vshrl.u32 %v4541, 7
  %v4543 = vsub.s32 2, %v4542
  %v4544 = vrot.slane %v3876, %v4543
  %v4545 = vlaneseq
  %v4546 = vshrl.u32 %v4545, 7
  %v4547 = vsub.s32 0, %v4546
  %v4548 = vrot.slane %v3877, %v4547
  %v4549 = vlaneseq
  %v4550 = vshrl.u32 %v4549, 7
  %v4551 = vsub.s32 2, %v4550
  %v4552 = vrot.slane %v3877, %v4551
  %v4553 = vlaneseq
  %v4554 = vshrl.u32 %v4553, 7
  %v4555 = vsub.s32 0, %v4554
  %v4556 = vrot.slane %v3878, %v4555
  %v4557 = vlaneseq
  %v4558 = vshrl.u32 %v4557, 7
  %v4559 = vsub.s32 2, %v4558
  %v4560 = vrot.slane %v3878, %v4559
  %v4561 = vlaneseq
  %v4562 = vshrl.u32 %v4561, 7
  %v4563 = vsub.s32 0, %v4562
  %v4564 = vrot.slane %v3879, %v4563
  %v4565 = vlaneseq
  %v4566 = vshrl.u32 %v4565, 7
  %v4567 = vsub.s32 2, %v4566
  %v4568 = vrot.slane %v3879, %v4567
  %v4569 = vlaneseq
  %v4570 = vshrl.u32 %v4569, 7
  %v4571 = vsub.s32 0, %v4570
  %v4572 = vrot.slane %v3880, %v4571
  %v4573 = vlaneseq
  %v4574 = vshrl.u32 %v4573, 7
  %v4575 = vsub.s32 2, %v4574
  %v4576 = vrot.slane %v3880, %v4575
  %v4577 = vlaneseq
  %v4578 = vshrl.u32 %v4577, 7
  %v4579 = vsub.s32 0, %v4578
  %v4580 = vrot.slane %v3881, %v4579
  %v4581 = vlaneseq
  %v4582 = vshrl.u32 %v4581, 7
  %v4583 = vsub.s32 2, %v4582
  %v4584 = vrot.slane %v3881, %v4583
  %v4585 = vlaneseq
  %v4586 = vshrl.u32 %v4585, 7
  %v4587 = vsub.s32 0, %v4586
  %v4588 = vrot.slane %v3882, %v4587
  %v4589 = vlaneseq
  %v4590 = vshrl.u32 %v4589, 7
  %v4591 = vsub.s32 2, %v4590
  %v4592 = vrot.slane %v3882, %v4591
  %v4593 = vlaneseq
  %v4594 = vshrl.u32 %v4593, 7
  %v4595 = vsub.s32 0, %v4594
  %v4596 = vrot.slane %v3883, %v4595
  %v4597 = vlaneseq
  %v4598 = vshrl.u32 %v4597, 7
  %v4599 = vsub.s32 2, %v4598
  %v4600 = vrot.slane %v3883, %v4599
  %v4601 = vlaneseq
  %v4602 = vshrl.u32 %v4601, 7
  %v4603 = vsub.s32 0, %v4602
  %v4604 = vrot.slane %v3884, %v4603
  %v4605 = vlaneseq
  %v4606 = vshrl.u32 %v4605, 7
  %v4607 = vsub.s32 2, %v4606
  %v4608 = vrot.slane %v3884, %v4607
  %v4609 = vlaneseq
  %v4610 = vshrl.u32 %v4609, 7
  %v4611 = vsub.s32 0, %v4610
  %v4612 = vrot.slane %v3885, %v4611
  %v4613 = vlaneseq
  %v4614 = vshrl.u32 %v4613, 7
  %v4615 = vsub.s32 2, %v4614
  %v4616 = vrot.slane %v3885, %v4615
  %v4617 = vlaneseq
  %v4618 = vshrl.u32 %v4617, 7
  %v4619 = vsub.s32 0, %v4618
  %v4620 = vrot.slane %v3886, %v4619
  %v4621 = vlaneseq
  %v4622 = vshrl.u32 %v4621, 7
  %v4623 = vsub.s32 2, %v4622
  %v4624 = vrot.slane %v3886, %v4623
  %v4625 = vlaneseq
  %v4626 = vshrl.u32 %v4625, 7
  %v4627 = vsub.s32 0, %v4626
  %v4628 = vrot.slane %v3887, %v4627
  %v4629 = vlaneseq
  %v4630 = vshrl.u32 %v4629, 7
  %v4631 = vsub.s32 2, %v4630
  %v4632 = vrot.slane %v3887, %v4631
  %v4633 = vlaneseq
  %v4634 = vshrl.u32 %v4633, 7
  %v4635 = vsub.s32 0, %v4634
  %v4636 = vrot.slane %v3888, %v4635
  %v4637 = vlaneseq
  %v4638 = vshrl.u32 %v4637, 7
  %v4639 = vsub.s32 2, %v4638
  %v4640 = vrot.slane %v3888, %v4639
  %v4641 = vlaneseq
  %v4642 = vshrl.u32 %v4641, 7
  %v4643 = vsub.s32 0, %v4642
  %v4644 = vrot.slane %v3889, %v4643
  %v4645 = vlaneseq
  %v4646 = vshrl.u32 %v4645, 7
  %v4647 = vsub.s32 2, %v4646
  %v4648 = vrot.slane %v3889, %v4647
  %v4649 = vlaneseq
  %v4650 = vshrl.u32 %v4649, 7
  %v4651 = vsub.s32 0, %v4650
  %v4652 = vrot.slane %v3890, %v4651
  %v4653 = vlaneseq
  %v4654 = vshrl.u32 %v4653, 7
  %v4655 = vsub.s32 2, %v4654
  %v4656 = vrot.slane %v3890, %v4655
  %v4657 = vlaneseq
  %v4658 = vshrl.u32 %v4657, 7
  %v4659 = vsub.s32 0, %v4658
  %v4660 = vrot.slane %v3891, %v4659
  %v4661 = vlaneseq
  %v4662 = vshrl.u32 %v4661, 7
  %v4663 = vsub.s32 2, %v4662
  %v4664 = vrot.slane %v3891, %v4663
  %v4665 = vlaneseq
  %v4666 = vshrl.u32 %v4665, 7
  %v4667 = vsub.s32 0, %v4666
  %v4668 = vrot.slane %v3892, %v4667
  %v4669 = vlaneseq
  %v4670 = vshrl.u32 %v4669, 7
  %v4671 = vsub.s32 2, %v4670
  %v4672 = vrot.slane %v3892, %v4671
  %v4673 = vlaneseq
  %v4674 = vshrl.u32 %v4673, 7
  %v4675 = vsub.s32 0, %v4674
  %v4676 = vrot.slane %v3893, %v4675
  %v4677 = vlaneseq
  %v4678 = vshrl.u32 %v4677, 7
  %v4679 = vsub.s32 2, %v4678
  %v4680 = vrot.slane %v3893, %v4679
  %v4681 = vlaneseq
  %v4682 = vshrl.u32 %v4681, 7
  %v4683 = vsub.s32 0, %v4682
  %v4684 = vrot.slane %v3894, %v4683
  %v4685 = vlaneseq
  %v4686 = vshrl.u32 %v4685, 7
  %v4687 = vsub.s32 2, %v4686
  %v4688 = vrot.slane %v3894, %v4687
  %v4689 = vlaneseq
  %v4690 = vshrl.u32 %v4689, 7
  %v4691 = vsub.s32 0, %v4690
  %v4692 = vrot.slane %v3895, %v4691
  %v4693 = vlaneseq
  %v4694 = vshrl.u32 %v4693, 7
  %v4695 = vsub.s32 2, %v4694
  %v4696 = vrot.slane %v3895, %v4695
  %v4697 = vlaneseq
  %v4698 = vshrl.u32 %v4697, 7
  %v4699 = vsub.s32 0, %v4698
  %v4700 = vrot.slane %v3896, %v4699
  %v4701 = vlaneseq
  %v4702 = vshrl.u32 %v4701, 7
  %v4703 = vsub.s32 2, %v4702
  %v4704 = vrot.slane %v3896, %v4703
  %v4705 = vlaneseq
  %v4706 = vshrl.u32 %v4705, 7
  %v4707 = vsub.s32 0, %v4706
  %v4708 = vrot.slane %v3897, %v4707
  %v4709 = vlaneseq
  %v4710 = vshrl.u32 %v4709, 7
  %v4711 = vsub.s32 2, %v4710
  %v4712 = vrot.slane %v3897, %v4711
  %v4713 = vlaneseq
  %v4714 = vshrl.u32 %v4713, 7
  %v4715 = vsub.s32 0, %v4714
  %v4716 = vrot.slane %v3898, %v4715
  %v4717 = vlaneseq
  %v4718 = vshrl.u32 %v4717, 7
  %v4719 = vsub.s32 2, %v4718
  %v4720 = vrot.slane %v3898, %v4719
  %v4721 = vlaneseq
  %v4722 = vshrl.u32 %v4721, 7
  %v4723 = vsub.s32 0, %v4722
  %v4724 = vrot.slane %v3899, %v4723
  %v4725 = vlaneseq
  %v4726 = vshrl.u32 %v4725, 7
  %v4727 = vsub.s32 2, %v4726
  %v4728 = vrot.slane %v3899, %v4727
  %v4729 = vlaneseq
  %v4730 = vshrl.u32 %v4729, 7
  %v4731 = vsub.s32 0, %v4730
  %v4732 = vrot.slane %v3900, %v4731
  %v4733 = vlaneseq
  %v4734 = vshrl.u32 %v4733, 7
  %v4735 = vsub.s32 2, %v4734
  %v4736 = vrot.slane %v3900, %v4735
  %v4737 = vlaneseq
  %v4738 = vshrl.u32 %v4737, 7
  %v4739 = vsub.s32 0, %v4738
  %v4740 = vrot.slane %v3901, %v4739
  %v4741 = vlaneseq
  %v4742 = vshrl.u32 %v4741, 7
  %v4743 = vsub.s32 2, %v4742
  %v4744 = vrot.slane %v3901, %v4743
  %v4745 = vlaneseq
  %v4746 = vshrl.u32 %v4745, 7
  %v4747 = vsub.s32 0, %v4746
  %v4748 = vrot.slane %v3902, %v4747
  %v4749 = vlaneseq
  %v4750 = vshrl.u32 %v4749, 7
  %v4751 = vsub.s32 2, %v4750
  %v4752 = vrot.slane %v3902, %v4751
  %v4753 = vlaneseq
  %v4754 = vshrl.u32 %v4753, 7
  %v4755 = vsub.s32 0, %v4754
  %v4756 = vrot.slane %v3903, %v4755
  %v4757 = vlaneseq
  %v4758 = vshrl.u32 %v4757, 7
  %v4759 = vsub.s32 2, %v4758
  %v4760 = vrot.slane %v3903, %v4759
  %v4761 = vlaneseq
  %v4762 = vshrl.u32 %v4761, 7
  %v4763 = vsub.s32 0, %v4762
  %v4764 = vrot.slane %v3904, %v4763
  %v4765 = vlaneseq
  %v4766 = vshrl.u32 %v4765, 7
  %v4767 = vsub.s32 2, %v4766
  %v4768 = vrot.slane %v3904, %v4767
  %v4961 = vpack.c.bf16 %v4004, %v4004
  %v4962 = vpack.c.bf16 %v4008, %v4008
  %v4963 = vpack.c.bf16 %v4012, %v4012
  %v4964 = vpack.c.bf16 %v4016, %v4016
  %v4965 = vpack.c.bf16 %v4020, %v4020
  %v4966 = vpack.c.bf16 %v4024, %v4024
  %v4967 = vpack.c.bf16 %v4028, %v4028
  %v4968 = vpack.c.bf16 %v4032, %v4032
  %v4969 = vpack.c.bf16 %v4036, %v4036
  %v4970 = vpack.c.bf16 %v4040, %v4040
  %v4971 = vpack.c.bf16 %v4044, %v4044
  %v4972 = vpack.c.bf16 %v4048, %v4048
  %v4973 = vpack.c.bf16 %v4052, %v4052
  %v4974 = vpack.c.bf16 %v4056, %v4056
  %v4975 = vpack.c.bf16 %v4060, %v4060
  %v4976 = vpack.c.bf16 %v4064, %v4064
  %v4977 = vpack.c.bf16 %v4068, %v4068
  %v4978 = vpack.c.bf16 %v4072, %v4072
  %v4979 = vpack.c.bf16 %v4076, %v4076
  %v4980 = vpack.c.bf16 %v4080, %v4080
  %v4981 = vpack.c.bf16 %v4084, %v4084
  %v4982 = vpack.c.bf16 %v4088, %v4088
  %v4983 = vpack.c.bf16 %v4092, %v4092
  %v4984 = vpack.c.bf16 %v4096, %v4096
  %v4985 = vpack.c.bf16 %v4100, %v4100
  %v4986 = vpack.c.bf16 %v4104, %v4104
  %v4987 = vpack.c.bf16 %v4108, %v4108
  %v4988 = vpack.c.bf16 %v4112, %v4112
  %v4989 = vpack.c.bf16 %v4116, %v4116
  %v4990 = vpack.c.bf16 %v4120, %v4120
  %v4991 = vpack.c.bf16 %v4124, %v4124
  %v4992 = vpack.c.bf16 %v4128, %v4128
  %v4993 = vpack.c.bf16 %v4132, %v4132
  %v4994 = vpack.c.bf16 %v4136, %v4136
  %v4995 = vpack.c.bf16 %v4140, %v4140
  %v4996 = vpack.c.bf16 %v4144, %v4144
  %v4997 = vpack.c.bf16 %v4148, %v4148
  %v4998 = vpack.c.bf16 %v4152, %v4152
  %v4999 = vpack.c.bf16 %v4156, %v4156
  %v5000 = vpack.c.bf16 %v4160, %v4160
  %v5001 = vpack.c.bf16 %v4164, %v4164
  %v5002 = vpack.c.bf16 %v4168, %v4168
  %v5003 = vpack.c.bf16 %v4172, %v4172
  %v5004 = vpack.c.bf16 %v4176, %v4176
  %v5005 = vpack.c.bf16 %v4180, %v4180
  %v5006 = vpack.c.bf16 %v4184, %v4184
  %v5007 = vpack.c.bf16 %v4188, %v4188
  %v5008 = vpack.c.bf16 %v4192, %v4192
  %v5009 = vpack.c.bf16 %v4196, %v4196
  %v5010 = vpack.c.bf16 %v4200, %v4200
  %v5011 = vpack.c.bf16 %v4204, %v4204
  %v5012 = vpack.c.bf16 %v4208, %v4208
  %v5013 = vpack.c.bf16 %v4212, %v4212
  %v5014 = vpack.c.bf16 %v4216, %v4216
  %v5015 = vpack.c.bf16 %v4220, %v4220
  %v5016 = vpack.c.bf16 %v4224, %v4224
  %v5017 = vpack.c.bf16 %v4228, %v4228
  %v5018 = vpack.c.bf16 %v4232, %v4232
  %v5019 = vpack.c.bf16 %v4236, %v4236
  %v5020 = vpack.c.bf16 %v4240, %v4240
  %v5021 = vpack.c.bf16 %v4244, %v4244
  %v5022 = vpack.c.bf16 %v4248, %v4248
  %v5023 = vpack.c.bf16 %v4252, %v4252
  %v5024 = vpack.c.bf16 %v4256, %v4256
  %v5025 = vpack.c.bf16 %v4260, %v4260
  %v5026 = vpack.c.bf16 %v4264, %v4264
  %v5027 = vpack.c.bf16 %v4268, %v4268
  %v5028 = vpack.c.bf16 %v4272, %v4272
  %v5029 = vpack.c.bf16 %v4276, %v4276
  %v5030 = vpack.c.bf16 %v4280, %v4280
  %v5031 = vpack.c.bf16 %v4284, %v4284
  %v5032 = vpack.c.bf16 %v4288, %v4288
  %v5033 = vpack.c.bf16 %v4292, %v4292
  %v5034 = vpack.c.bf16 %v4296, %v4296
  %v5035 = vpack.c.bf16 %v4300, %v4300
  %v5036 = vpack.c.bf16 %v4304, %v4304
  %v5037 = vpack.c.bf16 %v4308, %v4308
  %v5038 = vpack.c.bf16 %v4312, %v4312
  %v5039 = vpack.c.bf16 %v4316, %v4316
  %v5040 = vpack.c.bf16 %v4320, %v4320
  %v5041 = vpack.c.bf16 %v4324, %v4324
  %v5042 = vpack.c.bf16 %v4328, %v4328
  %v5043 = vpack.c.bf16 %v4332, %v4332
  %v5044 = vpack.c.bf16 %v4336, %v4336
  %v5045 = vpack.c.bf16 %v4340, %v4340
  %v5046 = vpack.c.bf16 %v4344, %v4344
  %v5047 = vpack.c.bf16 %v4348, %v4348
  %v5048 = vpack.c.bf16 %v4352, %v4352
  %v5049 = vpack.c.bf16 %v4356, %v4356
  %v5050 = vpack.c.bf16 %v4360, %v4360
  %v5051 = vpack.c.bf16 %v4364, %v4364
  %v5052 = vpack.c.bf16 %v4368, %v4368
  %v5053 = vpack.c.bf16 %v4372, %v4372
  %v5054 = vpack.c.bf16 %v4376, %v4376
  %v5055 = vpack.c.bf16 %v4380, %v4380
  %v5056 = vpack.c.bf16 %v4384, %v4384
  %v5057 = vpack.c.bf16 %v4388, %v4388
  %v5058 = vpack.c.bf16 %v4392, %v4392
  %v5059 = vpack.c.bf16 %v4396, %v4396
  %v5060 = vpack.c.bf16 %v4400, %v4400
  %v5061 = vpack.c.bf16 %v4404, %v4404
  %v5062 = vpack.c.bf16 %v4408, %v4408
  %v5063 = vpack.c.bf16 %v4412, %v4412
  %v5064 = vpack.c.bf16 %v4416, %v4416
  %v5065 = vpack.c.bf16 %v4420, %v4420
  %v5066 = vpack.c.bf16 %v4424, %v4424
  %v5067 = vpack.c.bf16 %v4428, %v4428
  %v5068 = vpack.c.bf16 %v4432, %v4432
  %v5069 = vpack.c.bf16 %v4436, %v4436
  %v5070 = vpack.c.bf16 %v4440, %v4440
  %v5071 = vpack.c.bf16 %v4444, %v4444
  %v5072 = vpack.c.bf16 %v4448, %v4448
  %v5073 = vpack.c.bf16 %v4452, %v4452
  %v5074 = vpack.c.bf16 %v4456, %v4456
  %v5075 = vpack.c.bf16 %v4460, %v4460
  %v5076 = vpack.c.bf16 %v4464, %v4464
  %v5077 = vpack.c.bf16 %v4468, %v4468
  %v5078 = vpack.c.bf16 %v4472, %v4472
  %v5079 = vpack.c.bf16 %v4476, %v4476
  %v5080 = vpack.c.bf16 %v4480, %v4480
  %v5081 = vpack.c.bf16 %v4484, %v4484
  %v5082 = vpack.c.bf16 %v4488, %v4488
  %v5083 = vpack.c.bf16 %v4492, %v4492
  %v5084 = vpack.c.bf16 %v4496, %v4496
  %v5085 = vpack.c.bf16 %v4500, %v4500
  %v5086 = vpack.c.bf16 %v4504, %v4504
  %v5087 = vpack.c.bf16 %v4508, %v4508
  %v5088 = vpack.c.bf16 %v4512, %v4512
  %v5089 = vpack.c.bf16 %v4516, %v4516
  %v5090 = vpack.c.bf16 %v4520, %v4520
  %v5091 = vpack.c.bf16 %v4524, %v4524
  %v5092 = vpack.c.bf16 %v4528, %v4528
  %v5093 = vpack.c.bf16 %v4532, %v4532
  %v5094 = vpack.c.bf16 %v4536, %v4536
  %v5095 = vpack.c.bf16 %v4540, %v4540
  %v5096 = vpack.c.bf16 %v4544, %v4544
  %v5097 = vpack.c.bf16 %v4548, %v4548
  %v5098 = vpack.c.bf16 %v4552, %v4552
  %v5099 = vpack.c.bf16 %v4556, %v4556
  %v5100 = vpack.c.bf16 %v4560, %v4560
  %v5101 = vpack.c.bf16 %v4564, %v4564
  %v5102 = vpack.c.bf16 %v4568, %v4568
  %v5103 = vpack.c.bf16 %v4572, %v4572
  %v5104 = vpack.c.bf16 %v4576, %v4576
  %v5105 = vpack.c.bf16 %v4580, %v4580
  %v5106 = vpack.c.bf16 %v4584, %v4584
  %v5107 = vpack.c.bf16 %v4588, %v4588
  %v5108 = vpack.c.bf16 %v4592, %v4592
  %v5109 = vpack.c.bf16 %v4596, %v4596
  %v5110 = vpack.c.bf16 %v4600, %v4600
  %v5111 = vpack.c.bf16 %v4604, %v4604
  %v5112 = vpack.c.bf16 %v4608, %v4608
  %v5113 = vpack.c.bf16 %v4612, %v4612
  %v5114 = vpack.c.bf16 %v4616, %v4616
  %v5115 = vpack.c.bf16 %v4620, %v4620
  %v5116 = vpack.c.bf16 %v4624, %v4624
  %v5117 = vpack.c.bf16 %v4628, %v4628
  %v5118 = vpack.c.bf16 %v4632, %v4632
  %v5119 = vpack.c.bf16 %v4636, %v4636
  %v5120 = vpack.c.bf16 %v4640, %v4640
  %v5121 = vpack.c.bf16 %v4644, %v4644
  %v5122 = vpack.c.bf16 %v4648, %v4648
  %v5123 = vpack.c.bf16 %v4652, %v4652
  %v5124 = vpack.c.bf16 %v4656, %v4656
  %v5125 = vpack.c.bf16 %v4660, %v4660
  %v5126 = vpack.c.bf16 %v4664, %v4664
  %v5127 = vpack.c.bf16 %v4668, %v4668
  %v5128 = vpack.c.bf16 %v4672, %v4672
  %v5129 = vpack.c.bf16 %v4676, %v4676
  %v5130 = vpack.c.bf16 %v4680, %v4680
  %v5131 = vpack.c.bf16 %v4684, %v4684
  %v5132 = vpack.c.bf16 %v4688, %v4688
  %v5133 = vpack.c.bf16 %v4692, %v4692
  %v5134 = vpack.c.bf16 %v4696, %v4696
  %v5135 = vpack.c.bf16 %v4700, %v4700
  %v5136 = vpack.c.bf16 %v4704, %v4704
  %v5137 = vpack.c.bf16 %v4708, %v4708
  %v5138 = vpack.c.bf16 %v4712, %v4712
  %v5139 = vpack.c.bf16 %v4716, %v4716
  %v5140 = vpack.c.bf16 %v4720, %v4720
  %v5141 = vpack.c.bf16 %v4724, %v4724
  %v5142 = vpack.c.bf16 %v4728, %v4728
  %v5143 = vpack.c.bf16 %v4732, %v4732
  %v5144 = vpack.c.bf16 %v4736, %v4736
  %v5145 = vpack.c.bf16 %v4740, %v4740
  %v5146 = vpack.c.bf16 %v4744, %v4744
  %v5147 = vpack.c.bf16 %v4748, %v4748
  %v5148 = vpack.c.bf16 %v4752, %v4752
  %v5149 = vpack.c.bf16 %v4756, %v4756
  %v5150 = vpack.c.bf16 %v4760, %v4760
  %v5151 = vpack.c.bf16 %v4764, %v4764
  %v5152 = vpack.c.bf16 %v4768, %v4768
  %v5153 = vld [vmem:[%s3] sm:$0xff]
  %v5154 = vld [vmem:[%s3 + $0x8] sm:$0xff]
  %v5155 = vld [vmem:[%s3 + $0x10] sm:$0xff]
  %v5156 = vld [vmem:[%s3 + $0x18] sm:$0xff]
  %v5157 = vld [vmem:[%s3 + $0x20] sm:$0xff]
  %v5158 = vld [vmem:[%s3 + $0x28] sm:$0xff]
  %v5159 = vld [vmem:[%s3 + $0x30] sm:$0xff]
  %v5160 = vld [vmem:[%s3 + $0x38] sm:$0xff]
  %v5161 = vld [vmem:[%s3 + $0x40] sm:$0xff]
  %v5162 = vld [vmem:[%s3 + $0x48] sm:$0xff]
  %v5163 = vld [vmem:[%s3 + $0x50] sm:$0xff]
  %v5164 = vld [vmem:[%s3 + $0x58] sm:$0xff]
  %v5165 = vld [vmem:[%s3 + $0x60] sm:$0xff]
  %v5166 = vld [vmem:[%s3 + $0x68] sm:$0xff]
  %v5167 = vld [vmem:[%s3 + $0x70] sm:$0xff]
  %v5168 = vld [vmem:[%s3 + $0x78] sm:$0xff]
  %v5169 = vld [vmem:[%s3 + $0x80] sm:$0xff]
  %v5170 = vld [vmem:[%s3 + $0x88] sm:$0xff]
  %v5171 = vld [vmem:[%s3 + $0x90] sm:$0xff]
  %v5172 = vld [vmem:[%s3 + $0x98] sm:$0xff]
  %v5173 = vld [vmem:[%s3 + $0xa0] sm:$0xff]
  %v5174 = vld [vmem:[%s3 + $0xa8] sm:$0xff]
  %v5175 = vld [vmem:[%s3 + $0xb0] sm:$0xff]
  %v5176 = vld [vmem:[%s3 + $0xb8] sm:$0xff]
  %v5177 = vld [vmem:[%s3 + $0xc0] sm:$0xff]
  %v5178 = vld [vmem:[%s3 + $0xc8] sm:$0xff]
  %v5179 = vld [vmem:[%s3 + $0xd0] sm:$0xff]
  %v5180 = vld [vmem:[%s3 + $0xd8] sm:$0xff]
  %v5181 = vld [vmem:[%s3 + $0xe0] sm:$0x77]
  %s5182 = scalar_lea.vmem %s3, 232
  %v5183 = vld [vmem:[%s5182] sm:$0xff]
  %v5184 = vld [vmem:[%s5182 + $0x8] sm:$0xff]
  %v5185 = vld [vmem:[%s5182 + $0x10] sm:$0xff]
  %v5186 = vld [vmem:[%s5182 + $0x18] sm:$0xff]
  %v5187 = vld [vmem:[%s5182 + $0x20] sm:$0xff]
  %v5188 = vld [vmem:[%s5182 + $0x28] sm:$0xff]
  %v5189 = vld [vmem:[%s5182 + $0x30] sm:$0xff]
  %v5190 = vld [vmem:[%s5182 + $0x38] sm:$0xff]
  %v5191 = vld [vmem:[%s5182 + $0x40] sm:$0xff]
  %v5192 = vld [vmem:[%s5182 + $0x48] sm:$0xff]
  %v5193 = vld [vmem:[%s5182 + $0x50] sm:$0xff]
  %v5194 = vld [vmem:[%s5182 + $0x58] sm:$0xff]
  %v5195 = vld [vmem:[%s5182 + $0x60] sm:$0xff]
  %v5196 = vld [vmem:[%s5182 + $0x68] sm:$0xff]
  %v5197 = vld [vmem:[%s5182 + $0x70] sm:$0xff]
  %v5198 = vld [vmem:[%s5182 + $0x78] sm:$0xff]
  %v5199 = vld [vmem:[%s5182 + $0x80] sm:$0xff]
  %v5200 = vld [vmem:[%s5182 + $0x88] sm:$0xff]
  %v5201 = vld [vmem:[%s5182 + $0x90] sm:$0xff]
  %v5202 = vld [vmem:[%s5182 + $0x98] sm:$0xff]
  %v5203 = vld [vmem:[%s5182 + $0xa0] sm:$0xff]
  %v5204 = vld [vmem:[%s5182 + $0xa8] sm:$0xff]
  %v5205 = vld [vmem:[%s5182 + $0xb0] sm:$0xff]
  %v5206 = vld [vmem:[%s5182 + $0xb8] sm:$0xff]
  %v5207 = vld [vmem:[%s5182 + $0xc0] sm:$0xff]
  %v5208 = vld [vmem:[%s5182 + $0xc8] sm:$0xff]
  %v5209 = vld [vmem:[%s5182 + $0xd0] sm:$0xff]
  %v5210 = vld [vmem:[%s5182 + $0xd8] sm:$0xff]
  %v5211 = vld [vmem:[%s5182 + $0xe0] sm:$0x77]
  %v5340 = vunpack.c.l.b16 %v4963
  %v5341 = vunpack.c.l.b16 %v4964
  %v5342 = vunpack.c.l.b16 %v4965
  %v5343 = vunpack.c.l.b16 %v4966
  %v5344 = vunpack.c.l.b16 %v4967
  %v5345 = vunpack.c.l.b16 %v4968
  %v5346 = vunpack.c.l.b16 %v4969
  %v5347 = vunpack.c.l.b16 %v4970
  %v5348 = vunpack.c.l.b16 %v4971
  %v5349 = vunpack.c.l.b16 %v4972
  %v5350 = vunpack.c.l.b16 %v4973
  %v5351 = vunpack.c.l.b16 %v4974
  %v5352 = vunpack.c.l.b16 %v4975
  %v5353 = vunpack.c.l.b16 %v4976
  %v5354 = vunpack.c.l.b16 %v4977
  %v5355 = vunpack.c.l.b16 %v4978
  %v5356 = vunpack.c.l.b16 %v4987
  %v5357 = vunpack.c.l.b16 %v4988
  %v5358 = vunpack.c.l.b16 %v4989
  %v5359 = vunpack.c.l.b16 %v4990
  %v5360 = vunpack.c.l.b16 %v4991
  %v5361 = vunpack.c.l.b16 %v4992
  %v5362 = vunpack.c.l.b16 %v4993
  %v5363 = vunpack.c.l.b16 %v4994
  %v5364 = vunpack.c.l.b16 %v4995
  %v5365 = vunpack.c.l.b16 %v4996
  %v5366 = vunpack.c.l.b16 %v4997
  %v5367 = vunpack.c.l.b16 %v4998
  %v5368 = vunpack.c.l.b16 %v4999
  %v5369 = vunpack.c.l.b16 %v5000
  %v5370 = vunpack.c.l.b16 %v5001
  %v5371 = vunpack.c.l.b16 %v5002
  %v5372 = vunpack.c.l.b16 %v5011
  %v5373 = vunpack.c.l.b16 %v5012
  %v5374 = vunpack.c.l.b16 %v5013
  %v5375 = vunpack.c.l.b16 %v5014
  %v5376 = vunpack.c.l.b16 %v5015
  %v5377 = vunpack.c.l.b16 %v5016
  %v5378 = vunpack.c.l.b16 %v5017
  %v5379 = vunpack.c.l.b16 %v5018
  %v5380 = vunpack.c.l.b16 %v5019
  %v5381 = vunpack.c.l.b16 %v5020
  %v5382 = vunpack.c.l.b16 %v5021
  %v5383 = vunpack.c.l.b16 %v5022
  %v5384 = vunpack.c.l.b16 %v5023
  %v5385 = vunpack.c.l.b16 %v5024
  %v5386 = vunpack.c.l.b16 %v5025
  %v5387 = vunpack.c.l.b16 %v5026
  %v5388 = vunpack.c.l.b16 %v5035
  %v5389 = vunpack.c.l.b16 %v5036
  %v5390 = vunpack.c.l.b16 %v5037
  %v5391 = vunpack.c.l.b16 %v5038
  %v5392 = vunpack.c.l.b16 %v5039
  %v5393 = vunpack.c.l.b16 %v5040
  %v5394 = vunpack.c.l.b16 %v5041
  %v5395 = vunpack.c.l.b16 %v5042
  %v5396 = vunpack.c.l.b16 %v5043
  %v5397 = vunpack.c.l.b16 %v5044
  %v5398 = vunpack.c.l.b16 %v5045
  %v5399 = vunpack.c.l.b16 %v5046
  %v5400 = vunpack.c.l.b16 %v5047
  %v5401 = vunpack.c.l.b16 %v5048
  %v5402 = vunpack.c.l.b16 %v5049
  %v5403 = vunpack.c.l.b16 %v5050
  %v5404 = vunpack.c.l.b16 %v5059
  %v5405 = vunpack.c.l.b16 %v5060
  %v5406 = vunpack.c.l.b16 %v5061
  %v5407 = vunpack.c.l.b16 %v5062
  %v5408 = vunpack.c.l.b16 %v5063
  %v5409 = vunpack.c.l.b16 %v5064
  %v5410 = vunpack.c.l.b16 %v5065
  %v5411 = vunpack.c.l.b16 %v5066
  %v5412 = vunpack.c.l.b16 %v5067
  %v5413 = vunpack.c.l.b16 %v5068
  %v5414 = vunpack.c.l.b16 %v5069
  %v5415 = vunpack.c.l.b16 %v5070
  %v5416 = vunpack.c.l.b16 %v5071
  %v5417 = vunpack.c.l.b16 %v5072
  %v5418 = vunpack.c.l.b16 %v5073
  %v5419 = vunpack.c.l.b16 %v5074
  %v5420 = vunpack.c.l.b16 %v5083
  %v5421 = vunpack.c.l.b16 %v5084
  %v5422 = vunpack.c.l.b16 %v5085
  %v5423 = vunpack.c.l.b16 %v5086
  %v5424 = vunpack.c.l.b16 %v5087
  %v5425 = vunpack.c.l.b16 %v5088
  %v5426 = vunpack.c.l.b16 %v5089
  %v5427 = vunpack.c.l.b16 %v5090
  %v5428 = vunpack.c.l.b16 %v5091
  %v5429 = vunpack.c.l.b16 %v5092
  %v5430 = vunpack.c.l.b16 %v5093
  %v5431 = vunpack.c.l.b16 %v5094
  %v5432 = vunpack.c.l.b16 %v5095
  %v5433 = vunpack.c.l.b16 %v5096
  %v5434 = vunpack.c.l.b16 %v5097
  %v5435 = vunpack.c.l.b16 %v5098
  %v5436 = vunpack.c.l.b16 %v5107
  %v5437 = vunpack.c.l.b16 %v5108
  %v5438 = vunpack.c.l.b16 %v5109
  %v5439 = vunpack.c.l.b16 %v5110
  %v5440 = vunpack.c.l.b16 %v5111
  %v5441 = vunpack.c.l.b16 %v5112
  %v5442 = vunpack.c.l.b16 %v5113
  %v5443 = vunpack.c.l.b16 %v5114
  %v5444 = vunpack.c.l.b16 %v5115
  %v5445 = vunpack.c.l.b16 %v5116
  %v5446 = vunpack.c.l.b16 %v5117
  %v5447 = vunpack.c.l.b16 %v5118
  %v5448 = vunpack.c.l.b16 %v5119
  %v5449 = vunpack.c.l.b16 %v5120
  %v5450 = vunpack.c.l.b16 %v5121
  %v5451 = vunpack.c.l.b16 %v5122
  %v5452 = vunpack.c.l.b16 %v5131
  %v5453 = vunpack.c.l.b16 %v5132
  %v5454 = vunpack.c.l.b16 %v5133
  %v5455 = vunpack.c.l.b16 %v5134
  %v5456 = vunpack.c.l.b16 %v5135
  %v5457 = vunpack.c.l.b16 %v5136
  %v5458 = vunpack.c.l.b16 %v5137
  %v5459 = vunpack.c.l.b16 %v5138
  %v5460 = vunpack.c.l.b16 %v5139
  %v5461 = vunpack.c.l.b16 %v5140
  %v5462 = vunpack.c.l.b16 %v5141
  %v5463 = vunpack.c.l.b16 %v5142
  %v5464 = vunpack.c.l.b16 %v5143
  %v5465 = vunpack.c.l.b16 %v5144
  %v5466 = vunpack.c.l.b16 %v5145
  %v5467 = vunpack.c.l.b16 %v5146
  %v5468 = vrot.slane %v5342, 7
  %vm5469 = vcmask 1041409
  %v5470 = vsel %vm5469, %v5468, %v5340
  %v5471 = vrot.slane %v5344, 6
  %vm5472 = vcmask 1042434
  %v5473 = vsel %vm5472, %v5471, %v5470
  %v5474 = vrot.slane %v5346, 5
  %vm5475 = vcmask 1043459
  %v5476 = vsel %vm5475, %v5474, %v5473
  %v5477 = vrot.slane %v5348, 4
  %vm5478 = vcmask 1044484
  %v5479 = vsel %vm5478, %v5477, %v5476
  %v5480 = vrot.slane %v5350, 3
  %vm5481 = vcmask 1045509
  %v5482 = vsel %vm5481, %v5480, %v5479
  %v5483 = vrot.slane %v5352, 2
  %vm5484 = vcmask 1046534
  %v5485 = vsel %vm5484, %v5483, %v5482
  %v5486 = vrot.slane %v5354, 1
  %vm5487 = vcmask 1047559
  %v5488 = vsel %vm5487, %v5486, %v5485
  %v5489 = vrot.slane %v5343, 7
  %v5490 = vsel %vm5469, %v5489, %v5341
  %v5491 = vrot.slane %v5345, 6
  %v5492 = vsel %vm5472, %v5491, %v5490
  %v5493 = vrot.slane %v5347, 5
  %v5494 = vsel %vm5475, %v5493, %v5492
  %v5495 = vrot.slane %v5349, 4
  %v5496 = vsel %vm5478, %v5495, %v5494
  %v5497 = vrot.slane %v5351, 3
  %v5498 = vsel %vm5481, %v5497, %v5496
  %v5499 = vrot.slane %v5353, 2
  %v5500 = vsel %vm5484, %v5499, %v5498
  %v5501 = vrot.slane %v5355, 1
  %v5502 = vsel %vm5487, %v5501, %v5500
  %v5503 = vrot.slane %v5358, 7
  %v5504 = vsel %vm5469, %v5503, %v5356
  %v5505 = vrot.slane %v5360, 6
  %v5506 = vsel %vm5472, %v5505, %v5504
  %v5507 = vrot.slane %v5362, 5
  %v5508 = vsel %vm5475, %v5507, %v5506
  %v5509 = vrot.slane %v5364, 4
  %v5510 = vsel %vm5478, %v5509, %v5508
  %v5511 = vrot.slane %v5366, 3
  %v5512 = vsel %vm5481, %v5511, %v5510
  %v5513 = vrot.slane %v5368, 2
  %v5514 = vsel %vm5484, %v5513, %v5512
  %v5515 = vrot.slane %v5370, 1
  %v5516 = vsel %vm5487, %v5515, %v5514
  %v5517 = vrot.slane %v5359, 7
  %v5518 = vsel %vm5469, %v5517, %v5357
  %v5519 = vrot.slane %v5361, 6
  %v5520 = vsel %vm5472, %v5519, %v5518
  %v5521 = vrot.slane %v5363, 5
  %v5522 = vsel %vm5475, %v5521, %v5520
  %v5523 = vrot.slane %v5365, 4
  %v5524 = vsel %vm5478, %v5523, %v5522
  %v5525 = vrot.slane %v5367, 3
  %v5526 = vsel %vm5481, %v5525, %v5524
  %v5527 = vrot.slane %v5369, 2
  %v5528 = vsel %vm5484, %v5527, %v5526
  %v5529 = vrot.slane %v5371, 1
  %v5530 = vsel %vm5487, %v5529, %v5528
  %v5531 = vrot.slane %v5374, 7
  %v5532 = vsel %vm5469, %v5531, %v5372
  %v5533 = vrot.slane %v5376, 6
  %v5534 = vsel %vm5472, %v5533, %v5532
  %v5535 = vrot.slane %v5378, 5
  %v5536 = vsel %vm5475, %v5535, %v5534
  %v5537 = vrot.slane %v5380, 4
  %v5538 = vsel %vm5478, %v5537, %v5536
  %v5539 = vrot.slane %v5382, 3
  %v5540 = vsel %vm5481, %v5539, %v5538
  %v5541 = vrot.slane %v5384, 2
  %v5542 = vsel %vm5484, %v5541, %v5540
  %v5543 = vrot.slane %v5386, 1
  %v5544 = vsel %vm5487, %v5543, %v5542
  %v5545 = vrot.slane %v5375, 7
  %v5546 = vsel %vm5469, %v5545, %v5373
  %v5547 = vrot.slane %v5377, 6
  %v5548 = vsel %vm5472, %v5547, %v5546
  %v5549 = vrot.slane %v5379, 5
  %v5550 = vsel %vm5475, %v5549, %v5548
  %v5551 = vrot.slane %v5381, 4
  %v5552 = vsel %vm5478, %v5551, %v5550
  %v5553 = vrot.slane %v5383, 3
  %v5554 = vsel %vm5481, %v5553, %v5552
  %v5555 = vrot.slane %v5385, 2
  %v5556 = vsel %vm5484, %v5555, %v5554
  %v5557 = vrot.slane %v5387, 1
  %v5558 = vsel %vm5487, %v5557, %v5556
  %v5559 = vrot.slane %v5390, 7
  %v5560 = vsel %vm5469, %v5559, %v5388
  %v5561 = vrot.slane %v5392, 6
  %v5562 = vsel %vm5472, %v5561, %v5560
  %v5563 = vrot.slane %v5394, 5
  %v5564 = vsel %vm5475, %v5563, %v5562
  %v5565 = vrot.slane %v5396, 4
  %v5566 = vsel %vm5478, %v5565, %v5564
  %v5567 = vrot.slane %v5398, 3
  %v5568 = vsel %vm5481, %v5567, %v5566
  %v5569 = vrot.slane %v5400, 2
  %v5570 = vsel %vm5484, %v5569, %v5568
  %v5571 = vrot.slane %v5402, 1
  %v5572 = vsel %vm5487, %v5571, %v5570
  %v5573 = vrot.slane %v5391, 7
  %v5574 = vsel %vm5469, %v5573, %v5389
  %v5575 = vrot.slane %v5393, 6
  %v5576 = vsel %vm5472, %v5575, %v5574
  %v5577 = vrot.slane %v5395, 5
  %v5578 = vsel %vm5475, %v5577, %v5576
  %v5579 = vrot.slane %v5397, 4
  %v5580 = vsel %vm5478, %v5579, %v5578
  %v5581 = vrot.slane %v5399, 3
  %v5582 = vsel %vm5481, %v5581, %v5580
  %v5583 = vrot.slane %v5401, 2
  %v5584 = vsel %vm5484, %v5583, %v5582
  %v5585 = vrot.slane %v5403, 1
  %v5586 = vsel %vm5487, %v5585, %v5584
  %v5587 = vrot.slane %v5406, 7
  %v5588 = vsel %vm5469, %v5587, %v5404
  %v5589 = vrot.slane %v5408, 6
  %v5590 = vsel %vm5472, %v5589, %v5588
  %v5591 = vrot.slane %v5410, 5
  %v5592 = vsel %vm5475, %v5591, %v5590
  %v5593 = vrot.slane %v5412, 4
  %v5594 = vsel %vm5478, %v5593, %v5592
  %v5595 = vrot.slane %v5414, 3
  %v5596 = vsel %vm5481, %v5595, %v5594
  %v5597 = vrot.slane %v5416, 2
  %v5598 = vsel %vm5484, %v5597, %v5596
  %v5599 = vrot.slane %v5418, 1
  %v5600 = vsel %vm5487, %v5599, %v5598
  %v5601 = vrot.slane %v5407, 7
  %v5602 = vsel %vm5469, %v5601, %v5405
  %v5603 = vrot.slane %v5409, 6
  %v5604 = vsel %vm5472, %v5603, %v5602
  %v5605 = vrot.slane %v5411, 5
  %v5606 = vsel %vm5475, %v5605, %v5604
  %v5607 = vrot.slane %v5413, 4
  %v5608 = vsel %vm5478, %v5607, %v5606
  %v5609 = vrot.slane %v5415, 3
  %v5610 = vsel %vm5481, %v5609, %v5608
  %v5611 = vrot.slane %v5417, 2
  %v5612 = vsel %vm5484, %v5611, %v5610
  %v5613 = vrot.slane %v5419, 1
  %v5614 = vsel %vm5487, %v5613, %v5612
  %v5615 = vrot.slane %v5422, 7
  %v5616 = vsel %vm5469, %v5615, %v5420
  %v5617 = vrot.slane %v5424, 6
  %v5618 = vsel %vm5472, %v5617, %v5616
  %v5619 = vrot.slane %v5426, 5
  %v5620 = vsel %vm5475, %v5619, %v5618
  %v5621 = vrot.slane %v5428, 4
  %v5622 = vsel %vm5478, %v5621, %v5620
  %v5623 = vrot.slane %v5430, 3
  %v5624 = vsel %vm5481, %v5623, %v5622
  %v5625 = vrot.slane %v5432, 2
  %v5626 = vsel %vm5484, %v5625, %v5624
  %v5627 = vrot.slane %v5434, 1
  %v5628 = vsel %vm5487, %v5627, %v5626
  %v5629 = vrot.slane %v5423, 7
  %v5630 = vsel %vm5469, %v5629, %v5421
  %v5631 = vrot.slane %v5425, 6
  %v5632 = vsel %vm5472, %v5631, %v5630
  %v5633 = vrot.slane %v5427, 5
  %v5634 = vsel %vm5475, %v5633, %v5632
  %v5635 = vrot.slane %v5429, 4
  %v5636 = vsel %vm5478, %v5635, %v5634
  %v5637 = vrot.slane %v5431, 3
  %v5638 = vsel %vm5481, %v5637, %v5636
  %v5639 = vrot.slane %v5433, 2
  %v5640 = vsel %vm5484, %v5639, %v5638
  %v5641 = vrot.slane %v5435, 1
  %v5642 = vsel %vm5487, %v5641, %v5640
  %v5643 = vrot.slane %v5438, 7
  %v5644 = vsel %vm5469, %v5643, %v5436
  %v5645 = vrot.slane %v5440, 6
  %v5646 = vsel %vm5472, %v5645, %v5644
  %v5647 = vrot.slane %v5442, 5
  %v5648 = vsel %vm5475, %v5647, %v5646
  %v5649 = vrot.slane %v5444, 4
  %v5650 = vsel %vm5478, %v5649, %v5648
  %v5651 = vrot.slane %v5446, 3
  %v5652 = vsel %vm5481, %v5651, %v5650
  %v5653 = vrot.slane %v5448, 2
  %v5654 = vsel %vm5484, %v5653, %v5652
  %v5655 = vrot.slane %v5450, 1
  %v5656 = vsel %vm5487, %v5655, %v5654
  %v5657 = vrot.slane %v5439, 7
  %v5658 = vsel %vm5469, %v5657, %v5437
  %v5659 = vrot.slane %v5441, 6
  %v5660 = vsel %vm5472, %v5659, %v5658
  %v5661 = vrot.slane %v5443, 5
  %v5662 = vsel %vm5475, %v5661, %v5660
  %v5663 = vrot.slane %v5445, 4
  %v5664 = vsel %vm5478, %v5663, %v5662
  %v5665 = vrot.slane %v5447, 3
  %v5666 = vsel %vm5481, %v5665, %v5664
  %v5667 = vrot.slane %v5449, 2
  %v5668 = vsel %vm5484, %v5667, %v5666
  %v5669 = vrot.slane %v5451, 1
  %v5670 = vsel %vm5487, %v5669, %v5668
  %v5671 = vrot.slane %v5454, 7
  %v5672 = vsel %vm5469, %v5671, %v5452
  %v5673 = vrot.slane %v5456, 6
  %v5674 = vsel %vm5472, %v5673, %v5672
  %v5675 = vrot.slane %v5458, 5
  %v5676 = vsel %vm5475, %v5675, %v5674
  %v5677 = vrot.slane %v5460, 4
  %v5678 = vsel %vm5478, %v5677, %v5676
  %v5679 = vrot.slane %v5462, 3
  %v5680 = vsel %vm5481, %v5679, %v5678
  %v5681 = vrot.slane %v5464, 2
  %v5682 = vsel %vm5484, %v5681, %v5680
  %v5683 = vrot.slane %v5466, 1
  %v5684 = vsel %vm5487, %v5683, %v5682
  %v5685 = vrot.slane %v5455, 7
  %v5686 = vsel %vm5469, %v5685, %v5453
  %v5687 = vrot.slane %v5457, 6
  %v5688 = vsel %vm5472, %v5687, %v5686
  %v5689 = vrot.slane %v5459, 5
  %v5690 = vsel %vm5475, %v5689, %v5688
  %v5691 = vrot.slane %v5461, 4
  %v5692 = vsel %vm5478, %v5691, %v5690
  %v5693 = vrot.slane %v5463, 3
  %v5694 = vsel %vm5481, %v5693, %v5692
  %v5695 = vrot.slane %v5465, 2
  %v5696 = vsel %vm5484, %v5695, %v5694
  %v5697 = vrot.slane %v5467, 1
  %v5698 = vsel %vm5487, %v5697, %v5696
  %v5699 = vpack.c.b16 %v5516, %v5488
  %v5700 = vpack.c.b16 %v5530, %v5502
  %v5701 = vpack.c.b16 %v5572, %v5544
  %v5702 = vpack.c.b16 %v5586, %v5558
  %v5703 = vpack.c.b16 %v5628, %v5600
  %v5704 = vpack.c.b16 %v5642, %v5614
  %v5705 = vpack.c.b16 %v5684, %v5656
  %v5706 = vpack.c.b16 %v5698, %v5670
  %v5740 = vunpack.c.l.b16 %v5183
  %v5741 = vunpack.c.h.b16 %v5183
  %v5742 = vunpack.c.l.b16 %v5184
  %v5743 = vunpack.c.h.b16 %v5184
  %v5744 = vunpack.c.l.b16 %v5185
  %v5745 = vunpack.c.h.b16 %v5185
  %v5746 = vunpack.c.l.b16 %v5186
  %v5747 = vunpack.c.h.b16 %v5186
  %v5748 = vunpack.c.l.b16 %v5187
  %v5749 = vunpack.c.h.b16 %v5187
  %v5750 = vunpack.c.l.b16 %v5188
  %v5751 = vunpack.c.h.b16 %v5188
  %v5752 = vunpack.c.l.b16 %v5189
  %v5753 = vunpack.c.h.b16 %v5189
  %v5754 = vunpack.c.l.b16 %v5190
  %v5755 = vunpack.c.h.b16 %v5190
  %v5756 = vunpack.c.l.b16 %v5191
  %v5757 = vunpack.c.h.b16 %v5191
  %v5758 = vunpack.c.l.b16 %v5192
  %v5759 = vunpack.c.h.b16 %v5192
  %v5760 = vunpack.c.l.b16 %v5193
  %v5761 = vunpack.c.h.b16 %v5193
  %v5762 = vunpack.c.l.b16 %v5194
  %v5763 = vunpack.c.h.b16 %v5194
  %v5764 = vunpack.c.l.b16 %v5195
  %v5765 = vunpack.c.h.b16 %v5195
  %v5766 = vunpack.c.l.b16 %v5196
  %v5767 = vunpack.c.h.b16 %v5196
  %v5768 = vunpack.c.l.b16 %v5197
  %v5769 = vunpack.c.h.b16 %v5197
  %v5770 = vunpack.c.l.b16 %v5198
  %v5771 = vunpack.c.h.b16 %v5198
  %v5772 = vunpack.c.l.b16 %v5199
  %v5773 = vunpack.c.h.b16 %v5199
  %v5774 = vunpack.c.l.b16 %v5200
  %v5775 = vunpack.c.h.b16 %v5200
  %v5776 = vunpack.c.l.b16 %v5201
  %v5777 = vunpack.c.h.b16 %v5201
  %v5778 = vunpack.c.l.b16 %v5202
  %v5779 = vunpack.c.h.b16 %v5202
  %v5780 = vunpack.c.l.b16 %v5203
  %v5781 = vunpack.c.h.b16 %v5203
  %v5782 = vunpack.c.l.b16 %v5204
  %v5783 = vunpack.c.h.b16 %v5204
  %v5784 = vunpack.c.l.b16 %v5205
  %v5785 = vunpack.c.h.b16 %v5205
  %v5786 = vunpack.c.l.b16 %v5206
  %v5787 = vunpack.c.h.b16 %v5206
  %v5788 = vunpack.c.l.b16 %v5207
  %v5789 = vunpack.c.h.b16 %v5207
  %v5790 = vunpack.c.l.b16 %v5208
  %v5791 = vunpack.c.h.b16 %v5208
  %v5792 = vunpack.c.l.b16 %v5209
  %v5793 = vunpack.c.h.b16 %v5209
  %v5794 = vunpack.c.l.b16 %v5210
  %v5795 = vunpack.c.h.b16 %v5210
  %v5796 = vunpack.c.l.b16 %v5211
  %v5797 = vunpack.c.h.b16 %v5211
  %v5798 = vpack.c.b16 %v5742, %v5740
  %v5799 = vpack.c.b16 %v5743, %v5741
  %v5800 = vpack.c.b16 %v5746, %v5744
  %v5801 = vpack.c.b16 %v5747, %v5745
  %v5802 = vpack.c.b16 %v5750, %v5748
  %v5803 = vpack.c.b16 %v5751, %v5749
  %v5804 = vpack.c.b16 %v5754, %v5752
  %v5805 = vpack.c.b16 %v5755, %v5753
  %v5806 = vpack.c.b16 %v5758, %v5756
  %v5807 = vpack.c.b16 %v5759, %v5757
  %v5808 = vpack.c.b16 %v5762, %v5760
  %v5809 = vpack.c.b16 %v5763, %v5761
  %v5810 = vpack.c.b16 %v5766, %v5764
  %v5811 = vpack.c.b16 %v5767, %v5765
  %v5812 = vpack.c.b16 %v5770, %v5768
  %v5813 = vpack.c.b16 %v5771, %v5769
  %v5814 = vpack.c.b16 %v5774, %v5772
  %v5815 = vpack.c.b16 %v5775, %v5773
  %v5816 = vpack.c.b16 %v5778, %v5776
  %v5817 = vpack.c.b16 %v5779, %v5777
  %v5818 = vpack.c.b16 %v5782, %v5780
  %v5819 = vpack.c.b16 %v5783, %v5781
  %v5820 = vpack.c.b16 %v5786, %v5784
  %v5821 = vpack.c.b16 %v5787, %v5785
  %v5822 = vpack.c.b16 %v5790, %v5788
  %v5823 = vpack.c.b16 %v5791, %v5789
  %v5824 = vpack.c.b16 %v5794, %v5792
  %v5825 = vpack.c.b16 %v5795, %v5793
  %v5826 = vpack.c.b16 %v5796, %v5796
  %v5827 = vpack.c.b16 %v5797, %v5797
  %vm5856 = vcmask 834560
  %v5858 = vsel %vm5856, %v5700, 0
  %v5861 = vsel %vm5856, %v5702, 0
  %v5864 = vsel %vm5856, %v5704, 0
  %v5867 = vsel %vm5856, %v5706, 0
  %vm5869 = vcmask 1042432
  %v5871 = vsel %vm5869, %v5826, 0
  %v5874 = vsel %vm5869, %v5827, 0
  %5876 = vmatprep.subr.bf16.mxu0 %v5799
  %5877 = vmatpush1.bf16.msra.mxu0 %v5798
  %5878 = vmatprep.subr.bf16.mxu0 %v5801
  %5879 = vmatpush1.bf16.msra.mxu0 %v5800
  %5880 = vmatprep.subr.bf16.mxu0 %v5803
  %5881 = vmatpush1.bf16.msra.mxu0 %v5802
  %5882 = vmatprep.subr.bf16.mxu0 %v5805
  %5883 = vmatpush1.bf16.msra.mxu0 %v5804
  %5884 = vmatprep.subr.bf16.mxu0 %v5807
  %5885 = vmatpush1.bf16.msra.mxu0 %v5806
  %5886 = vmatprep.subr.bf16.mxu0 %v5809
  %5887 = vmatpush1.bf16.msra.mxu0 %v5808
  %5888 = vmatprep.subr.bf16.mxu0 %v5811
  %5889 = vmatpush1.bf16.msra.mxu0 %v5810
  %5890 = vmatprep.subr.bf16.mxu0 %v5813
  %5891 = vmatpush1.bf16.msra.mxu0 %v5812
  %5892 = vmatprep.subr.bf16.mxu0 %v5815
  %5893 = vmatpush1.bf16.msra.mxu0 %v5814
  %5894 = vmatprep.subr.bf16.mxu0 %v5817
  %5895 = vmatpush1.bf16.msra.mxu0 %v5816
  %5896 = vmatprep.subr.bf16.mxu0 %v5819
  %5897 = vmatpush1.bf16.msra.mxu0 %v5818
  %5898 = vmatprep.subr.bf16.mxu0 %v5821
  %5899 = vmatpush1.bf16.msra.mxu0 %v5820
  %5900 = vmatprep.subr.bf16.mxu0 %v5823
  %5901 = vmatpush1.bf16.msra.mxu0 %v5822
  %5902 = vmatprep.subr.bf16.mxu0 %v5825
  %5903 = vmatpush1.bf16.msra.mxu0 %v5824
  %5904 = vmatprep.subr.bf16.mxu0 %v5874
  %5905 = vmatpush1.bf16.msra.mxu0 %v5871
  %5906 = vmatprep.subr.bf16.mxu0 0
  %5907 = vmatpush1.bf16.msra.mxu0 0
  %5908 = vmatprep.mubr.bf16.mxu0 %v5858
  %5909 = vmatmul.mubr.bf16.gmra.mrb[0].mxu0 %v5699
  %v5910 = vpop.f32.mrb[0].mxu0
  %v5911 = vadd.f32 0.0, %v5910
  %v5912 = vpop.f32.mrb[0].mxu0
  %v5913 = vadd.f32 0.0, %v5912
  %v5914 = vpop.f32.mrb[0].mxu0
  %v5915 = vadd.f32 0.0, %v5914
  %v5916 = vpop.f32.mrb[0].mxu0
  %v5917 = vadd.f32 0.0, %v5916
  %5918 = vmatprep.mubr.bf16.mxu0 %v5861
  %5919 = vmatmul.mubr.bf16.gmra.mrb[0].mxu0 %v5701
  %v5920 = vpop.f32.mrb[0].mxu0
  %v5921 = vadd.f32 0.0, %v5920
  %v5922 = vpop.f32.mrb[0].mxu0
  %v5923 = vadd.f32 0.0, %v5922
  %v5924 = vpop.f32.mrb[0].mxu0
  %v5925 = vadd.f32 0.0, %v5924
  %v5926 = vpop.f32.mrb[0].mxu0
  %v5927 = vadd.f32 0.0, %v5926
  %5928 = vmatprep.mubr.bf16.mxu0 %v5864
  %5929 = vmatmul.mubr.bf16.gmra.mrb[0].mxu0 %v5703
  %v5930 = vpop.f32.mrb[0].mxu0
  %v5931 = vadd.f32 0.0, %v5930
  %v5932 = vpop.f32.mrb[0].mxu0
  %v5933 = vadd.f32 0.0, %v5932
  %v5934 = vpop.f32.mrb[0].mxu0
  %v5935 = vadd.f32 0.0, %v5934
  %v5936 = vpop.f32.mrb[0].mxu0
  %v5937 = vadd.f32 0.0, %v5936
  %5938 = vmatprep.mubr.bf16.mxu0 %v5867
  %5939 = vmatmul.mubr.bf16.gmra.mrb[0].mxu0 %v5705
  %v5940 = vpop.f32.mrb[0].mxu0
  %v5941 = vadd.f32 0.0, %v5940
  %v5942 = vpop.f32.mrb[0].mxu0
  %v5943 = vadd.f32 0.0, %v5942
  %v5944 = vpop.f32.mrb[0].mxu0
  %v5945 = vadd.f32 0.0, %v5944
  %v5946 = vpop.f32.mrb[0].mxu0
  %v5947 = vadd.f32 0.0, %v5946
  %5948 = vdwg.mxu0
  %v5965 = vunpack.c.l.b16 %v4961
  %v5966 = vunpack.c.l.b16 %v4962
  %v5967 = vunpack.c.l.b16 %v4985
  %v5968 = vunpack.c.l.b16 %v4986
  %v5969 = vunpack.c.l.b16 %v5009
  %v5970 = vunpack.c.l.b16 %v5010
  %v5971 = vunpack.c.l.b16 %v5033
  %v5972 = vunpack.c.l.b16 %v5034
  %v5973 = vunpack.c.l.b16 %v5057
  %v5974 = vunpack.c.l.b16 %v5058
  %v5975 = vunpack.c.l.b16 %v5081
  %v5976 = vunpack.c.l.b16 %v5082
  %v5977 = vunpack.c.l.b16 %v5105
  %v5978 = vunpack.c.l.b16 %v5106
  %v5979 = vunpack.c.l.b16 %v5129
  %v5980 = vunpack.c.l.b16 %v5130
  %v5981 = vrot.slane %v5340, 7
  %v5982 = vsel %vm5469, %v5981, %v5965
  %v5983 = vrot.slane %v5342, 6
  %v5984 = vsel %vm5472, %v5983, %v5982
  %v5985 = vrot.slane %v5344, 5
  %v5986 = vsel %vm5475, %v5985, %v5984
  %v5987 = vrot.slane %v5346, 4
  %v5988 = vsel %vm5478, %v5987, %v5986
  %v5989 = vrot.slane %v5348, 3
  %v5990 = vsel %vm5481, %v5989, %v5988
  %v5991 = vrot.slane %v5350, 2
  %v5992 = vsel %vm5484, %v5991, %v5990
  %v5993 = vrot.slane %v5352, 1
  %v5994 = vsel %vm5487, %v5993, %v5992
  %v5995 = vrot.slane %v5341, 7
  %v5996 = vsel %vm5469, %v5995, %v5966
  %v5997 = vrot.slane %v5343, 6
  %v5998 = vsel %vm5472, %v5997, %v5996
  %v5999 = vrot.slane %v5345, 5
  %v6000 = vsel %vm5475, %v5999, %v5998
  %v6001 = vrot.slane %v5347, 4
  %v6002 = vsel %vm5478, %v6001, %v6000
  %v6003 = vrot.slane %v5349, 3
  %v6004 = vsel %vm5481, %v6003, %v6002
  %v6005 = vrot.slane %v5351, 2
  %v6006 = vsel %vm5484, %v6005, %v6004
  %v6007 = vrot.slane %v5353, 1
  %v6008 = vsel %vm5487, %v6007, %v6006
  %v6009 = vrot.slane %v5356, 7
  %v6010 = vsel %vm5469, %v6009, %v5967
  %v6011 = vrot.slane %v5358, 6
  %v6012 = vsel %vm5472, %v6011, %v6010
  %v6013 = vrot.slane %v5360, 5
  %v6014 = vsel %vm5475, %v6013, %v6012
  %v6015 = vrot.slane %v5362, 4
  %v6016 = vsel %vm5478, %v6015, %v6014
  %v6017 = vrot.slane %v5364, 3
  %v6018 = vsel %vm5481, %v6017, %v6016
  %v6019 = vrot.slane %v5366, 2
  %v6020 = vsel %vm5484, %v6019, %v6018
  %v6021 = vrot.slane %v5368, 1
  %v6022 = vsel %vm5487, %v6021, %v6020
  %v6023 = vrot.slane %v5357, 7
  %v6024 = vsel %vm5469, %v6023, %v5968
  %v6025 = vrot.slane %v5359, 6
  %v6026 = vsel %vm5472, %v6025, %v6024
  %v6027 = vrot.slane %v5361, 5
  %v6028 = vsel %vm5475, %v6027, %v6026
  %v6029 = vrot.slane %v5363, 4
  %v6030 = vsel %vm5478, %v6029, %v6028
  %v6031 = vrot.slane %v5365, 3
  %v6032 = vsel %vm5481, %v6031, %v6030
  %v6033 = vrot.slane %v5367, 2
  %v6034 = vsel %vm5484, %v6033, %v6032
  %v6035 = vrot.slane %v5369, 1
  %v6036 = vsel %vm5487, %v6035, %v6034
  %v6037 = vrot.slane %v5372, 7
  %v6038 = vsel %vm5469, %v6037, %v5969
  %v6039 = vrot.slane %v5374, 6
  %v6040 = vsel %vm5472, %v6039, %v6038
  %v6041 = vrot.slane %v5376, 5
  %v6042 = vsel %vm5475, %v6041, %v6040
  %v6043 = vrot.slane %v5378, 4
  %v6044 = vsel %vm5478, %v6043, %v6042
  %v6045 = vrot.slane %v5380, 3
  %v6046 = vsel %vm5481, %v6045, %v6044
  %v6047 = vrot.slane %v5382, 2
  %v6048 = vsel %vm5484, %v6047, %v6046
  %v6049 = vrot.slane %v5384, 1
  %v6050 = vsel %vm5487, %v6049, %v6048
  %v6051 = vrot.slane %v5373, 7
  %v6052 = vsel %vm5469, %v6051, %v5970
  %v6053 = vrot.slane %v5375, 6
  %v6054 = vsel %vm5472, %v6053, %v6052
  %v6055 = vrot.slane %v5377, 5
  %v6056 = vsel %vm5475, %v6055, %v6054
  %v6057 = vrot.slane %v5379, 4
  %v6058 = vsel %vm5478, %v6057, %v6056
  %v6059 = vrot.slane %v5381, 3
  %v6060 = vsel %vm5481, %v6059, %v6058
  %v6061 = vrot.slane %v5383, 2
  %v6062 = vsel %vm5484, %v6061, %v6060
  %v6063 = vrot.slane %v5385, 1
  %v6064 = vsel %vm5487, %v6063, %v6062
  %v6065 = vrot.slane %v5388, 7
  %v6066 = vsel %vm5469, %v6065, %v5971
  %v6067 = vrot.slane %v5390, 6
  %v6068 = vsel %vm5472, %v6067, %v6066
  %v6069 = vrot.slane %v5392, 5
  %v6070 = vsel %vm5475, %v6069, %v6068
  %v6071 = vrot.slane %v5394, 4
  %v6072 = vsel %vm5478, %v6071, %v6070
  %v6073 = vrot.slane %v5396, 3
  %v6074 = vsel %vm5481, %v6073, %v6072
  %v6075 = vrot.slane %v5398, 2
  %v6076 = vsel %vm5484, %v6075, %v6074
  %v6077 = vrot.slane %v5400, 1
  %v6078 = vsel %vm5487, %v6077, %v6076
  %v6079 = vrot.slane %v5389, 7
  %v6080 = vsel %vm5469, %v6079, %v5972
  %v6081 = vrot.slane %v5391, 6
  %v6082 = vsel %vm5472, %v6081, %v6080
  %v6083 = vrot.slane %v5393, 5
  %v6084 = vsel %vm5475, %v6083, %v6082
  %v6085 = vrot.slane %v5395, 4
  %v6086 = vsel %vm5478, %v6085, %v6084
  %v6087 = vrot.slane %v5397, 3
  %v6088 = vsel %vm5481, %v6087, %v6086
  %v6089 = vrot.slane %v5399, 2
  %v6090 = vsel %vm5484, %v6089, %v6088
  %v6091 = vrot.slane %v5401, 1
  %v6092 = vsel %vm5487, %v6091, %v6090
  %v6093 = vrot.slane %v5404, 7
  %v6094 = vsel %vm5469, %v6093, %v5973
  %v6095 = vrot.slane %v5406, 6
  %v6096 = vsel %vm5472, %v6095, %v6094
  %v6097 = vrot.slane %v5408, 5
  %v6098 = vsel %vm5475, %v6097, %v6096
  %v6099 = vrot.slane %v5410, 4
  %v6100 = vsel %vm5478, %v6099, %v6098
  %v6101 = vrot.slane %v5412, 3
  %v6102 = vsel %vm5481, %v6101, %v6100
  %v6103 = vrot.slane %v5414, 2
  %v6104 = vsel %vm5484, %v6103, %v6102
  %v6105 = vrot.slane %v5416, 1
  %v6106 = vsel %vm5487, %v6105, %v6104
  %v6107 = vrot.slane %v5405, 7
  %v6108 = vsel %vm5469, %v6107, %v5974
  %v6109 = vrot.slane %v5407, 6
  %v6110 = vsel %vm5472, %v6109, %v6108
  %v6111 = vrot.slane %v5409, 5
  %v6112 = vsel %vm5475, %v6111, %v6110
  %v6113 = vrot.slane %v5411, 4
  %v6114 = vsel %vm5478, %v6113, %v6112
  %v6115 = vrot.slane %v5413, 3
  %v6116 = vsel %vm5481, %v6115, %v6114
  %v6117 = vrot.slane %v5415, 2
  %v6118 = vsel %vm5484, %v6117, %v6116
  %v6119 = vrot.slane %v5417, 1
  %v6120 = vsel %vm5487, %v6119, %v6118
  %v6121 = vrot.slane %v5420, 7
  %v6122 = vsel %vm5469, %v6121, %v5975
  %v6123 = vrot.slane %v5422, 6
  %v6124 = vsel %vm5472, %v6123, %v6122
  %v6125 = vrot.slane %v5424, 5
  %v6126 = vsel %vm5475, %v6125, %v6124
  %v6127 = vrot.slane %v5426, 4
  %v6128 = vsel %vm5478, %v6127, %v6126
  %v6129 = vrot.slane %v5428, 3
  %v6130 = vsel %vm5481, %v6129, %v6128
  %v6131 = vrot.slane %v5430, 2
  %v6132 = vsel %vm5484, %v6131, %v6130
  %v6133 = vrot.slane %v5432, 1
  %v6134 = vsel %vm5487, %v6133, %v6132
  %v6135 = vrot.slane %v5421, 7
  %v6136 = vsel %vm5469, %v6135, %v5976
  %v6137 = vrot.slane %v5423, 6
  %v6138 = vsel %vm5472, %v6137, %v6136
  %v6139 = vrot.slane %v5425, 5
  %v6140 = vsel %vm5475, %v6139, %v6138
  %v6141 = vrot.slane %v5427, 4
  %v6142 = vsel %vm5478, %v6141, %v6140
  %v6143 = vrot.slane %v5429, 3
  %v6144 = vsel %vm5481, %v6143, %v6142
  %v6145 = vrot.slane %v5431, 2
  %v6146 = vsel %vm5484, %v6145, %v6144
  %v6147 = vrot.slane %v5433, 1
  %v6148 = vsel %vm5487, %v6147, %v6146
  %v6149 = vrot.slane %v5436, 7
  %v6150 = vsel %vm5469, %v6149, %v5977
  %v6151 = vrot.slane %v5438, 6
  %v6152 = vsel %vm5472, %v6151, %v6150
  %v6153 = vrot.slane %v5440, 5
  %v6154 = vsel %vm5475, %v6153, %v6152
  %v6155 = vrot.slane %v5442, 4
  %v6156 = vsel %vm5478, %v6155, %v6154
  %v6157 = vrot.slane %v5444, 3
  %v6158 = vsel %vm5481, %v6157, %v6156
  %v6159 = vrot.slane %v5446, 2
  %v6160 = vsel %vm5484, %v6159, %v6158
  %v6161 = vrot.slane %v5448, 1
  %v6162 = vsel %vm5487, %v6161, %v6160
  %v6163 = vrot.slane %v5437, 7
  %v6164 = vsel %vm5469, %v6163, %v5978
  %v6165 = vrot.slane %v5439, 6
  %v6166 = vsel %vm5472, %v6165, %v6164
  %v6167 = vrot.slane %v5441, 5
  %v6168 = vsel %vm5475, %v6167, %v6166
  %v6169 = vrot.slane %v5443, 4
  %v6170 = vsel %vm5478, %v6169, %v6168
  %v6171 = vrot.slane %v5445, 3
  %v6172 = vsel %vm5481, %v6171, %v6170
  %v6173 = vrot.slane %v5447, 2
  %v6174 = vsel %vm5484, %v6173, %v6172
  %v6175 = vrot.slane %v5449, 1
  %v6176 = vsel %vm5487, %v6175, %v6174
  %v6177 = vrot.slane %v5452, 7
  %v6178 = vsel %vm5469, %v6177, %v5979
  %v6179 = vrot.slane %v5454, 6
  %v6180 = vsel %vm5472, %v6179, %v6178
  %v6181 = vrot.slane %v5456, 5
  %v6182 = vsel %vm5475, %v6181, %v6180
  %v6183 = vrot.slane %v5458, 4
  %v6184 = vsel %vm5478, %v6183, %v6182
  %v6185 = vrot.slane %v5460, 3
  %v6186 = vsel %vm5481, %v6185, %v6184
  %v6187 = vrot.slane %v5462, 2
  %v6188 = vsel %vm5484, %v6187, %v6186
  %v6189 = vrot.slane %v5464, 1
  %v6190 = vsel %vm5487, %v6189, %v6188
  %v6191 = vrot.slane %v5453, 7
  %v6192 = vsel %vm5469, %v6191, %v5980
  %v6193 = vrot.slane %v5455, 6
  %v6194 = vsel %vm5472, %v6193, %v6192
  %v6195 = vrot.slane %v5457, 5
  %v6196 = vsel %vm5475, %v6195, %v6194
  %v6197 = vrot.slane %v5459, 4
  %v6198 = vsel %vm5478, %v6197, %v6196
  %v6199 = vrot.slane %v5461, 3
  %v6200 = vsel %vm5481, %v6199, %v6198
  %v6201 = vrot.slane %v5463, 2
  %v6202 = vsel %vm5484, %v6201, %v6200
  %v6203 = vrot.slane %v5465, 1
  %v6204 = vsel %vm5487, %v6203, %v6202
  %v6205 = vpack.c.b16 %v6022, %v5994
  %v6206 = vpack.c.b16 %v6036, %v6008
  %v6207 = vpack.c.b16 %v6078, %v6050
  %v6208 = vpack.c.b16 %v6092, %v6064
  %v6209 = vpack.c.b16 %v6134, %v6106
  %v6210 = vpack.c.b16 %v6148, %v6120
  %v6211 = vpack.c.b16 %v6190, %v6162
  %v6212 = vpack.c.b16 %v6204, %v6176
  %v6246 = vunpack.c.l.b16 %v5153
  %v6247 = vunpack.c.h.b16 %v5153
  %v6248 = vunpack.c.l.b16 %v5154
  %v6249 = vunpack.c.h.b16 %v5154
  %v6250 = vunpack.c.l.b16 %v5155
  %v6251 = vunpack.c.h.b16 %v5155
  %v6252 = vunpack.c.l.b16 %v5156
  %v6253 = vunpack.c.h.b16 %v5156
  %v6254 = vunpack.c.l.b16 %v5157
  %v6255 = vunpack.c.h.b16 %v5157
  %v6256 = vunpack.c.l.b16 %v5158
  %v6257 = vunpack.c.h.b16 %v5158
  %v6258 = vunpack.c.l.b16 %v5159
  %v6259 = vunpack.c.h.b16 %v5159
  %v6260 = vunpack.c.l.b16 %v5160
  %v6261 = vunpack.c.h.b16 %v5160
  %v6262 = vunpack.c.l.b16 %v5161
  %v6263 = vunpack.c.h.b16 %v5161
  %v6264 = vunpack.c.l.b16 %v5162
  %v6265 = vunpack.c.h.b16 %v5162
  %v6266 = vunpack.c.l.b16 %v5163
  %v6267 = vunpack.c.h.b16 %v5163
  %v6268 = vunpack.c.l.b16 %v5164
  %v6269 = vunpack.c.h.b16 %v5164
  %v6270 = vunpack.c.l.b16 %v5165
  %v6271 = vunpack.c.h.b16 %v5165
  %v6272 = vunpack.c.l.b16 %v5166
  %v6273 = vunpack.c.h.b16 %v5166
  %v6274 = vunpack.c.l.b16 %v5167
  %v6275 = vunpack.c.h.b16 %v5167
  %v6276 = vunpack.c.l.b16 %v5168
  %v6277 = vunpack.c.h.b16 %v5168
  %v6278 = vunpack.c.l.b16 %v5169
  %v6279 = vunpack.c.h.b16 %v5169
  %v6280 = vunpack.c.l.b16 %v5170
  %v6281 = vunpack.c.h.b16 %v5170
  %v6282 = vunpack.c.l.b16 %v5171
  %v6283 = vunpack.c.h.b16 %v5171
  %v6284 = vunpack.c.l.b16 %v5172
  %v6285 = vunpack.c.h.b16 %v5172
  %v6286 = vunpack.c.l.b16 %v5173
  %v6287 = vunpack.c.h.b16 %v5173
  %v6288 = vunpack.c.l.b16 %v5174
  %v6289 = vunpack.c.h.b16 %v5174
  %v6290 = vunpack.c.l.b16 %v5175
  %v6291 = vunpack.c.h.b16 %v5175
  %v6292 = vunpack.c.l.b16 %v5176
  %v6293 = vunpack.c.h.b16 %v5176
  %v6294 = vunpack.c.l.b16 %v5177
  %v6295 = vunpack.c.h.b16 %v5177
  %v6296 = vunpack.c.l.b16 %v5178
  %v6297 = vunpack.c.h.b16 %v5178
  %v6298 = vunpack.c.l.b16 %v5179
  %v6299 = vunpack.c.h.b16 %v5179
  %v6300 = vunpack.c.l.b16 %v5180
  %v6301 = vunpack.c.h.b16 %v5180
  %v6302 = vunpack.c.l.b16 %v5181
  %v6303 = vunpack.c.h.b16 %v5181
  %v6304 = vpack.c.b16 %v6248, %v6246
  %v6305 = vpack.c.b16 %v6249, %v6247
  %v6306 = vpack.c.b16 %v6252, %v6250
  %v6307 = vpack.c.b16 %v6253, %v6251
  %v6308 = vpack.c.b16 %v6256, %v6254
  %v6309 = vpack.c.b16 %v6257, %v6255
  %v6310 = vpack.c.b16 %v6260, %v6258
  %v6311 = vpack.c.b16 %v6261, %v6259
  %v6312 = vpack.c.b16 %v6264, %v6262
  %v6313 = vpack.c.b16 %v6265, %v6263
  %v6314 = vpack.c.b16 %v6268, %v6266
  %v6315 = vpack.c.b16 %v6269, %v6267
  %v6316 = vpack.c.b16 %v6272, %v6270
  %v6317 = vpack.c.b16 %v6273, %v6271
  %v6318 = vpack.c.b16 %v6276, %v6274
  %v6319 = vpack.c.b16 %v6277, %v6275
  %v6320 = vpack.c.b16 %v6280, %v6278
  %v6321 = vpack.c.b16 %v6281, %v6279
  %v6322 = vpack.c.b16 %v6284, %v6282
  %v6323 = vpack.c.b16 %v6285, %v6283
  %v6324 = vpack.c.b16 %v6288, %v6286
  %v6325 = vpack.c.b16 %v6289, %v6287
  %v6326 = vpack.c.b16 %v6292, %v6290
  %v6327 = vpack.c.b16 %v6293, %v6291
  %v6328 = vpack.c.b16 %v6296, %v6294
  %v6329 = vpack.c.b16 %v6297, %v6295
  %v6330 = vpack.c.b16 %v6300, %v6298
  %v6331 = vpack.c.b16 %v6301, %v6299
  %v6332 = vpack.c.b16 %v6302, %v6302
  %v6333 = vpack.c.b16 %v6303, %v6303
  %v6363 = vsel %vm5856, %v6206, 0
  %v6366 = vsel %vm5856, %v6208, 0
  %v6369 = vsel %vm5856, %v6210, 0
  %v6372 = vsel %vm5856, %v6212, 0
  %v6375 = vsel %vm5869, %v6332, 0
  %v6378 = vsel %vm5869, %v6333, 0
  %6380 = vmatprep.subr.bf16.mxu0 %v6305
  %6381 = vmatpush1.bf16.msra.mxu0 %v6304
  %6382 = vmatprep.subr.bf16.mxu0 %v6307
  %6383 = vmatpush1.bf16.msra.mxu0 %v6306
  %6384 = vmatprep.subr.bf16.mxu0 %v6309
  %6385 = vmatpush1.bf16.msra.mxu0 %v6308
  %6386 = vmatprep.subr.bf16.mxu0 %v6311
  %6387 = vmatpush1.bf16.msra.mxu0 %v6310
  %6388 = vmatprep.subr.bf16.mxu0 %v6313
  %6389 = vmatpush1.bf16.msra.mxu0 %v6312
  %6390 = vmatprep.subr.bf16.mxu0 %v6315
  %6391 = vmatpush1.bf16.msra.mxu0 %v6314
  %6392 = vmatprep.subr.bf16.mxu0 %v6317
  %6393 = vmatpush1.bf16.msra.mxu0 %v6316
  %6394 = vmatprep.subr.bf16.mxu0 %v6319
  %6395 = vmatpush1.bf16.msra.mxu0 %v6318
  %6396 = vmatprep.subr.bf16.mxu0 %v6321
  %6397 = vmatpush1.bf16.msra.mxu0 %v6320
  %6398 = vmatprep.subr.bf16.mxu0 %v6323
  %6399 = vmatpush1.bf16.msra.mxu0 %v6322
  %6400 = vmatprep.subr.bf16.mxu0 %v6325
  %6401 = vmatpush1.bf16.msra.mxu0 %v6324
  %6402 = vmatprep.subr.bf16.mxu0 %v6327
  %6403 = vmatpush1.bf16.msra.mxu0 %v6326
  %6404 = vmatprep.subr.bf16.mxu0 %v6329
  %6405 = vmatpush1.bf16.msra.mxu0 %v6328
  %6406 = vmatprep.subr.bf16.mxu0 %v6331
  %6407 = vmatpush1.bf16.msra.mxu0 %v6330
  %6408 = vmatprep.subr.bf16.mxu0 %v6378
  %6409 = vmatpush1.bf16.msra.mxu0 %v6375
  %6410 = vmatprep.subr.bf16.mxu0 0
  %6411 = vmatpush1.bf16.msra.mxu0 0
  %6412 = vmatprep.mubr.bf16.mxu0 %v6363
  %6413 = vmatmul.mubr.bf16.gmra.mrb[0].mxu0 %v6205
  %v6414 = vpop.f32.mrb[0].mxu0
  %v6415 = vadd.f32 %v5911, %v6414
  %v6416 = vpop.f32.mrb[0].mxu0
  %v6417 = vadd.f32 %v5913, %v6416
  %v6418 = vpop.f32.mrb[0].mxu0
  %v6419 = vadd.f32 %v5915, %v6418
  %v6420 = vpop.f32.mrb[0].mxu0
  %v6421 = vadd.f32 %v5917, %v6420
  %6422 = vmatprep.mubr.bf16.mxu0 %v6366
  %6423 = vmatmul.mubr.bf16.gmra.mrb[0].mxu0 %v6207
  %v6424 = vpop.f32.mrb[0].mxu0
  %v6425 = vadd.f32 %v5921, %v6424
  %v6426 = vpop.f32.mrb[0].mxu0
  %v6427 = vadd.f32 %v5923, %v6426
  %v6428 = vpop.f32.mrb[0].mxu0
  %v6429 = vadd.f32 %v5925, %v6428
  %v6430 = vpop.f32.mrb[0].mxu0
  %v6431 = vadd.f32 %v5927, %v6430
  %6432 = vmatprep.mubr.bf16.mxu0 %v6369
  %6433 = vmatmul.mubr.bf16.gmra.mrb[0].mxu0 %v6209
  %v6434 = vpop.f32.mrb[0].mxu0
  %v6435 = vadd.f32 %v5931, %v6434
  %v6436 = vpop.f32.mrb[0].mxu0
  %v6437 = vadd.f32 %v5933, %v6436
  %v6438 = vpop.f32.mrb[0].mxu0
  %v6439 = vadd.f32 %v5935, %v6438
  %v6440 = vpop.f32.mrb[0].mxu0
  %v6441 = vadd.f32 %v5937, %v6440
  %6442 = vmatprep.mubr.bf16.mxu0 %v6372
  %6443 = vmatmul.mubr.bf16.gmra.mrb[0].mxu0 %v6211
  %v6444 = vpop.f32.mrb[0].mxu0
  %v6445 = vadd.f32 %v5941, %v6444
  %v6446 = vpop.f32.mrb[0].mxu0
  %v6447 = vadd.f32 %v5943, %v6446
  %v6448 = vpop.f32.mrb[0].mxu0
  %v6449 = vadd.f32 %v5945, %v6448
  %v6450 = vpop.f32.mrb[0].mxu0
  %v6451 = vadd.f32 %v5947, %v6450
  %6452 = vdwg.mxu0
  %s6453 = scalar_lea.vmem %s3, 464
  %v6454 = vld [vmem:[%s6453] sm:$0xff]
  %v6455 = vld [vmem:[%s6453 + $0x8] sm:$0xff]
  %v6456 = vld [vmem:[%s6453 + $0x10] sm:$0xff]
  %v6457 = vld [vmem:[%s6453 + $0x18] sm:$0xff]
  %v6458 = vld [vmem:[%s6453 + $0x20] sm:$0xff]
  %v6459 = vld [vmem:[%s6453 + $0x28] sm:$0xff]
  %v6460 = vld [vmem:[%s6453 + $0x30] sm:$0xff]
  %v6461 = vld [vmem:[%s6453 + $0x38] sm:$0xff]
  %v6462 = vld [vmem:[%s6453 + $0x40] sm:$0xff]
  %v6463 = vld [vmem:[%s6453 + $0x48] sm:$0xff]
  %v6464 = vld [vmem:[%s6453 + $0x50] sm:$0xff]
  %v6465 = vld [vmem:[%s6453 + $0x58] sm:$0xff]
  %v6466 = vld [vmem:[%s6453 + $0x60] sm:$0xff]
  %v6467 = vld [vmem:[%s6453 + $0x68] sm:$0xff]
  %v6468 = vld [vmem:[%s6453 + $0x70] sm:$0xff]
  %v6469 = vld [vmem:[%s6453 + $0x78] sm:$0xff]
  %v6470 = vld [vmem:[%s6453 + $0x80] sm:$0xff]
  %v6471 = vld [vmem:[%s6453 + $0x88] sm:$0xff]
  %v6472 = vld [vmem:[%s6453 + $0x90] sm:$0xff]
  %v6473 = vld [vmem:[%s6453 + $0x98] sm:$0xff]
  %v6474 = vld [vmem:[%s6453 + $0xa0] sm:$0xff]
  %v6475 = vld [vmem:[%s6453 + $0xa8] sm:$0xff]
  %v6476 = vld [vmem:[%s6453 + $0xb0] sm:$0xff]
  %v6477 = vld [vmem:[%s6453 + $0xb8] sm:$0xff]
  %v6478 = vld [vmem:[%s6453 + $0xc0] sm:$0xff]
  %v6479 = vld [vmem:[%s6453 + $0xc8] sm:$0xff]
  %v6480 = vld [vmem:[%s6453 + $0xd0] sm:$0xff]
  %v6481 = vld [vmem:[%s6453 + $0xd8] sm:$0xff]
  %v6482 = vld [vmem:[%s6453 + $0xe0] sm:$0x77]
  %v6499 = vunpack.c.l.b16 %v4979
  %v6500 = vunpack.c.l.b16 %v4980
  %v6501 = vunpack.c.l.b16 %v5003
  %v6502 = vunpack.c.l.b16 %v5004
  %v6503 = vunpack.c.l.b16 %v5027
  %v6504 = vunpack.c.l.b16 %v5028
  %v6505 = vunpack.c.l.b16 %v5051
  %v6506 = vunpack.c.l.b16 %v5052
  %v6507 = vunpack.c.l.b16 %v5075
  %v6508 = vunpack.c.l.b16 %v5076
  %v6509 = vunpack.c.l.b16 %v5099
  %v6510 = vunpack.c.l.b16 %v5100
  %v6511 = vunpack.c.l.b16 %v5123
  %v6512 = vunpack.c.l.b16 %v5124
  %v6513 = vunpack.c.l.b16 %v5147
  %v6514 = vunpack.c.l.b16 %v5148
  %v6515 = vrot.slane %v5344, 7
  %v6516 = vsel %vm5469, %v6515, %v5342
  %v6517 = vrot.slane %v5346, 6
  %v6518 = vsel %vm5472, %v6517, %v6516
  %v6519 = vrot.slane %v5348, 5
  %v6520 = vsel %vm5475, %v6519, %v6518
  %v6521 = vrot.slane %v5350, 4
  %v6522 = vsel %vm5478, %v6521, %v6520
  %v6523 = vrot.slane %v5352, 3
  %v6524 = vsel %vm5481, %v6523, %v6522
  %v6525 = vrot.slane %v5354, 2
  %v6526 = vsel %vm5484, %v6525, %v6524
  %v6527 = vrot.slane %v6499, 1
  %v6528 = vsel %vm5487, %v6527, %v6526
  %v6529 = vrot.slane %v5345, 7
  %v6530 = vsel %vm5469, %v6529, %v5343
  %v6531 = vrot.slane %v5347, 6
  %v6532 = vsel %vm5472, %v6531, %v6530
  %v6533 = vrot.slane %v5349, 5
  %v6534 = vsel %vm5475, %v6533, %v6532
  %v6535 = vrot.slane %v5351, 4
  %v6536 = vsel %vm5478, %v6535, %v6534
  %v6537 = vrot.slane %v5353, 3
  %v6538 = vsel %vm5481, %v6537, %v6536
  %v6539 = vrot.slane %v5355, 2
  %v6540 = vsel %vm5484, %v6539, %v6538
  %v6541 = vrot.slane %v6500, 1
  %v6542 = vsel %vm5487, %v6541, %v6540
  %v6543 = vrot.slane %v5360, 7
  %v6544 = vsel %vm5469, %v6543, %v5358
  %v6545 = vrot.slane %v5362, 6
  %v6546 = vsel %vm5472, %v6545, %v6544
  %v6547 = vrot.slane %v5364, 5
  %v6548 = vsel %vm5475, %v6547, %v6546
  %v6549 = vrot.slane %v5366, 4
  %v6550 = vsel %vm5478, %v6549, %v6548
  %v6551 = vrot.slane %v5368, 3
  %v6552 = vsel %vm5481, %v6551, %v6550
  %v6553 = vrot.slane %v5370, 2
  %v6554 = vsel %vm5484, %v6553, %v6552
  %v6555 = vrot.slane %v6501, 1
  %v6556 = vsel %vm5487, %v6555, %v6554
  %v6557 = vrot.slane %v5361, 7
  %v6558 = vsel %vm5469, %v6557, %v5359
  %v6559 = vrot.slane %v5363, 6
  %v6560 = vsel %vm5472, %v6559, %v6558
  %v6561 = vrot.slane %v5365, 5
  %v6562 = vsel %vm5475, %v6561, %v6560
  %v6563 = vrot.slane %v5367, 4
  %v6564 = vsel %vm5478, %v6563, %v6562
  %v6565 = vrot.slane %v5369, 3
  %v6566 = vsel %vm5481, %v6565, %v6564
  %v6567 = vrot.slane %v5371, 2
  %v6568 = vsel %vm5484, %v6567, %v6566
  %v6569 = vrot.slane %v6502, 1
  %v6570 = vsel %vm5487, %v6569, %v6568
  %v6571 = vrot.slane %v5376, 7
  %v6572 = vsel %vm5469, %v6571, %v5374
  %v6573 = vrot.slane %v5378, 6
  %v6574 = vsel %vm5472, %v6573, %v6572
  %v6575 = vrot.slane %v5380, 5
  %v6576 = vsel %vm5475, %v6575, %v6574
  %v6577 = vrot.slane %v5382, 4
  %v6578 = vsel %vm5478, %v6577, %v6576
  %v6579 = vrot.slane %v5384, 3
  %v6580 = vsel %vm5481, %v6579, %v6578
  %v6581 = vrot.slane %v5386, 2
  %v6582 = vsel %vm5484, %v6581, %v6580
  %v6583 = vrot.slane %v6503, 1
  %v6584 = vsel %vm5487, %v6583, %v6582
  %v6585 = vrot.slane %v5377, 7
  %v6586 = vsel %vm5469, %v6585, %v5375
  %v6587 = vrot.slane %v5379, 6
  %v6588 = vsel %vm5472, %v6587, %v6586
  %v6589 = vrot.slane %v5381, 5
  %v6590 = vsel %vm5475, %v6589, %v6588
  %v6591 = vrot.slane %v5383, 4
  %v6592 = vsel %vm5478, %v6591, %v6590
  %v6593 = vrot.slane %v5385, 3
  %v6594 = vsel %vm5481, %v6593, %v6592
  %v6595 = vrot.slane %v5387, 2
  %v6596 = vsel %vm5484, %v6595, %v6594
  %v6597 = vrot.slane %v6504, 1
  %v6598 = vsel %vm5487, %v6597, %v6596
  %v6599 = vrot.slane %v5392, 7
  %v6600 = vsel %vm5469, %v6599, %v5390
  %v6601 = vrot.slane %v5394, 6
  %v6602 = vsel %vm5472, %v6601, %v6600
  %v6603 = vrot.slane %v5396, 5
  %v6604 = vsel %vm5475, %v6603, %v6602
  %v6605 = vrot.slane %v5398, 4
  %v6606 = vsel %vm5478, %v6605, %v6604
  %v6607 = vrot.slane %v5400, 3
  %v6608 = vsel %vm5481, %v6607, %v6606
  %v6609 = vrot.slane %v5402, 2
  %v6610 = vsel %vm5484, %v6609, %v6608
  %v6611 = vrot.slane %v6505, 1
  %v6612 = vsel %vm5487, %v6611, %v6610
  %v6613 = vrot.slane %v5393, 7
  %v6614 = vsel %vm5469, %v6613, %v5391
  %v6615 = vrot.slane %v5395, 6
  %v6616 = vsel %vm5472, %v6615, %v6614
  %v6617 = vrot.slane %v5397, 5
  %v6618 = vsel %vm5475, %v6617, %v6616
  %v6619 = vrot.slane %v5399, 4
  %v6620 = vsel %vm5478, %v6619, %v6618
  %v6621 = vrot.slane %v5401, 3
  %v6622 = vsel %vm5481, %v6621, %v6620
  %v6623 = vrot.slane %v5403, 2
  %v6624 = vsel %vm5484, %v6623, %v6622
  %v6625 = vrot.slane %v6506, 1
  %v6626 = vsel %vm5487, %v6625, %v6624
  %v6627 = vrot.slane %v5408, 7
  %v6628 = vsel %vm5469, %v6627, %v5406
  %v6629 = vrot.slane %v5410, 6
  %v6630 = vsel %vm5472, %v6629, %v6628
  %v6631 = vrot.slane %v5412, 5
  %v6632 = vsel %vm5475, %v6631, %v6630
  %v6633 = vrot.slane %v5414, 4
  %v6634 = vsel %vm5478, %v6633, %v6632
  %v6635 = vrot.slane %v5416, 3
  %v6636 = vsel %vm5481, %v6635, %v6634
  %v6637 = vrot.slane %v5418, 2
  %v6638 = vsel %vm5484, %v6637, %v6636
  %v6639 = vrot.slane %v6507, 1
  %v6640 = vsel %vm5487, %v6639, %v6638
  %v6641 = vrot.slane %v5409, 7
  %v6642 = vsel %vm5469, %v6641, %v5407
  %v6643 = vrot.slane %v5411, 6
  %v6644 = vsel %vm5472, %v6643, %v6642
  %v6645 = vrot.slane %v5413, 5
  %v6646 = vsel %vm5475, %v6645, %v6644
  %v6647 = vrot.slane %v5415, 4
  %v6648 = vsel %vm5478, %v6647, %v6646
  %v6649 = vrot.slane %v5417, 3
  %v6650 = vsel %vm5481, %v6649, %v6648
  %v6651 = vrot.slane %v5419, 2
  %v6652 = vsel %vm5484, %v6651, %v6650
  %v6653 = vrot.slane %v6508, 1
  %v6654 = vsel %vm5487, %v6653, %v6652
  %v6655 = vrot.slane %v5424, 7
  %v6656 = vsel %vm5469, %v6655, %v5422
  %v6657 = vrot.slane %v5426, 6
  %v6658 = vsel %vm5472, %v6657, %v6656
  %v6659 = vrot.slane %v5428, 5
  %v6660 = vsel %vm5475, %v6659, %v6658
  %v6661 = vrot.slane %v5430, 4
  %v6662 = vsel %vm5478, %v6661, %v6660
  %v6663 = vrot.slane %v5432, 3
  %v6664 = vsel %vm5481, %v6663, %v6662
  %v6665 = vrot.slane %v5434, 2
  %v6666 = vsel %vm5484, %v6665, %v6664
  %v6667 = vrot.slane %v6509, 1
  %v6668 = vsel %vm5487, %v6667, %v6666
  %v6669 = vrot.slane %v5425, 7
  %v6670 = vsel %vm5469, %v6669, %v5423
  %v6671 = vrot.slane %v5427, 6
  %v6672 = vsel %vm5472, %v6671, %v6670
  %v6673 = vrot.slane %v5429, 5
  %v6674 = vsel %vm5475, %v6673, %v6672
  %v6675 = vrot.slane %v5431, 4
  %v6676 = vsel %vm5478, %v6675, %v6674
  %v6677 = vrot.slane %v5433, 3
  %v6678 = vsel %vm5481, %v6677, %v6676
  %v6679 = vrot.slane %v5435, 2
  %v6680 = vsel %vm5484, %v6679, %v6678
  %v6681 = vrot.slane %v6510, 1
  %v6682 = vsel %vm5487, %v6681, %v6680
  %v6683 = vrot.slane %v5440, 7
  %v6684 = vsel %vm5469, %v6683, %v5438
  %v6685 = vrot.slane %v5442, 6
  %v6686 = vsel %vm5472, %v6685, %v6684
  %v6687 = vrot.slane %v5444, 5
  %v6688 = vsel %vm5475, %v6687, %v6686
  %v6689 = vrot.slane %v5446, 4
  %v6690 = vsel %vm5478, %v6689, %v6688
  %v6691 = vrot.slane %v5448, 3
  %v6692 = vsel %vm5481, %v6691, %v6690
  %v6693 = vrot.slane %v5450, 2
  %v6694 = vsel %vm5484, %v6693, %v6692
  %v6695 = vrot.slane %v6511, 1
  %v6696 = vsel %vm5487, %v6695, %v6694
  %v6697 = vrot.slane %v5441, 7
  %v6698 = vsel %vm5469, %v6697, %v5439
  %v6699 = vrot.slane %v5443, 6
  %v6700 = vsel %vm5472, %v6699, %v6698
  %v6701 = vrot.slane %v5445, 5
  %v6702 = vsel %vm5475, %v6701, %v6700
  %v6703 = vrot.slane %v5447, 4
  %v6704 = vsel %vm5478, %v6703, %v6702
  %v6705 = vrot.slane %v5449, 3
  %v6706 = vsel %vm5481, %v6705, %v6704
  %v6707 = vrot.slane %v5451, 2
  %v6708 = vsel %vm5484, %v6707, %v6706
  %v6709 = vrot.slane %v6512, 1
  %v6710 = vsel %vm5487, %v6709, %v6708
  %v6711 = vrot.slane %v5456, 7
  %v6712 = vsel %vm5469, %v6711, %v5454
  %v6713 = vrot.slane %v5458, 6
  %v6714 = vsel %vm5472, %v6713, %v6712
  %v6715 = vrot.slane %v5460, 5
  %v6716 = vsel %vm5475, %v6715, %v6714
  %v6717 = vrot.slane %v5462, 4
  %v6718 = vsel %vm5478, %v6717, %v6716
  %v6719 = vrot.slane %v5464, 3
  %v6720 = vsel %vm5481, %v6719, %v6718
  %v6721 = vrot.slane %v5466, 2
  %v6722 = vsel %vm5484, %v6721, %v6720
  %v6723 = vrot.slane %v6513, 1
  %v6724 = vsel %vm5487, %v6723, %v6722
  %v6725 = vrot.slane %v5457, 7
  %v6726 = vsel %vm5469, %v6725, %v5455
  %v6727 = vrot.slane %v5459, 6
  %v6728 = vsel %vm5472, %v6727, %v6726
  %v6729 = vrot.slane %v5461, 5
  %v6730 = vsel %vm5475, %v6729, %v6728
  %v6731 = vrot.slane %v5463, 4
  %v6732 = vsel %vm5478, %v6731, %v6730
  %v6733 = vrot.slane %v5465, 3
  %v6734 = vsel %vm5481, %v6733, %v6732
  %v6735 = vrot.slane %v5467, 2
  %v6736 = vsel %vm5484, %v6735, %v6734
  %v6737 = vrot.slane %v6514, 1
  %v6738 = vsel %vm5487, %v6737, %v6736
  %v6739 = vpack.c.b16 %v6556, %v6528
  %v6740 = vpack.c.b16 %v6570, %v6542
  %v6741 = vpack.c.b16 %v6612, %v6584
  %v6742 = vpack.c.b16 %v6626, %v6598
  %v6743 = vpack.c.b16 %v6668, %v6640
  %v6744 = vpack.c.b16 %v6682, %v6654
  %v6745 = vpack.c.b16 %v6724, %v6696
  %v6746 = vpack.c.b16 %v6738, %v6710
  %v6780 = vunpack.c.l.b16 %v6454
  %v6781 = vunpack.c.h.b16 %v6454
  %v6782 = vunpack.c.l.b16 %v6455
  %v6783 = vunpack.c.h.b16 %v6455
  %v6784 = vunpack.c.l.b16 %v6456
  %v6785 = vunpack.c.h.b16 %v6456
  %v6786 = vunpack.c.l.b16 %v6457
  %v6787 = vunpack.c.h.b16 %v6457
  %v6788 = vunpack.c.l.b16 %v6458
  %v6789 = vunpack.c.h.b16 %v6458
  %v6790 = vunpack.c.l.b16 %v6459
  %v6791 = vunpack.c.h.b16 %v6459
  %v6792 = vunpack.c.l.b16 %v6460
  %v6793 = vunpack.c.h.b16 %v6460
  %v6794 = vunpack.c.l.b16 %v6461
  %v6795 = vunpack.c.h.b16 %v6461
  %v6796 = vunpack.c.l.b16 %v6462
  %v6797 = vunpack.c.h.b16 %v6462
  %v6798 = vunpack.c.l.b16 %v6463
  %v6799 = vunpack.c.h.b16 %v6463
  %v6800 = vunpack.c.l.b16 %v6464
  %v6801 = vunpack.c.h.b16 %v6464
  %v6802 = vunpack.c.l.b16 %v6465
  %v6803 = vunpack.c.h.b16 %v6465
  %v6804 = vunpack.c.l.b16 %v6466
  %v6805 = vunpack.c.h.b16 %v6466
  %v6806 = vunpack.c.l.b16 %v6467
  %v6807 = vunpack.c.h.b16 %v6467
  %v6808 = vunpack.c.l.b16 %v6468
  %v6809 = vunpack.c.h.b16 %v6468
  %v6810 = vunpack.c.l.b16 %v6469
  %v6811 = vunpack.c.h.b16 %v6469
  %v6812 = vunpack.c.l.b16 %v6470
  %v6813 = vunpack.c.h.b16 %v6470
  %v6814 = vunpack.c.l.b16 %v6471
  %v6815 = vunpack.c.h.b16 %v6471
  %v6816 = vunpack.c.l.b16 %v6472
  %v6817 = vunpack.c.h.b16 %v6472
  %v6818 = vunpack.c.l.b16 %v6473
  %v6819 = vunpack.c.h.b16 %v6473
  %v6820 = vunpack.c.l.b16 %v6474
  %v6821 = vunpack.c.h.b16 %v6474
  %v6822 = vunpack.c.l.b16 %v6475
  %v6823 = vunpack.c.h.b16 %v6475
  %v6824 = vunpack.c.l.b16 %v6476
  %v6825 = vunpack.c.h.b16 %v6476
  %v6826 = vunpack.c.l.b16 %v6477
  %v6827 = vunpack.c.h.b16 %v6477
  %v6828 = vunpack.c.l.b16 %v6478
  %v6829 = vunpack.c.h.b16 %v6478
  %v6830 = vunpack.c.l.b16 %v6479
  %v6831 = vunpack.c.h.b16 %v6479
  %v6832 = vunpack.c.l.b16 %v6480
  %v6833 = vunpack.c.h.b16 %v6480
  %v6834 = vunpack.c.l.b16 %v6481
  %v6835 = vunpack.c.h.b16 %v6481
  %v6836 = vunpack.c.l.b16 %v6482
  %v6837 = vunpack.c.h.b16 %v6482
  %v6838 = vpack.c.b16 %v6782, %v6780
  %v6839 = vpack.c.b16 %v6783, %v6781
  %v6840 = vpack.c.b16 %v6786, %v6784
  %v6841 = vpack.c.b16 %v6787, %v6785
  %v6842 = vpack.c.b16 %v6790, %v6788
  %v6843 = vpack.c.b16 %v6791, %v6789
  %v6844 = vpack.c.b16 %v6794, %v6792
  %v6845 = vpack.c.b16 %v6795, %v6793
  %v6846 = vpack.c.b16 %v6798, %v6796
  %v6847 = vpack.c.b16 %v6799, %v6797
  %v6848 = vpack.c.b16 %v6802, %v6800
  %v6849 = vpack.c.b16 %v6803, %v6801
  %v6850 = vpack.c.b16 %v6806, %v6804
  %v6851 = vpack.c.b16 %v6807, %v6805
  %v6852 = vpack.c.b16 %v6810, %v6808
  %v6853 = vpack.c.b16 %v6811, %v6809
  %v6854 = vpack.c.b16 %v6814, %v6812
  %v6855 = vpack.c.b16 %v6815, %v6813
  %v6856 = vpack.c.b16 %v6818, %v6816
  %v6857 = vpack.c.b16 %v6819, %v6817
  %v6858 = vpack.c.b16 %v6822, %v6820
  %v6859 = vpack.c.b16 %v6823, %v6821
  %v6860 = vpack.c.b16 %v6826, %v6824
  %v6861 = vpack.c.b16 %v6827, %v6825
  %v6862 = vpack.c.b16 %v6830, %v6828
  %v6863 = vpack.c.b16 %v6831, %v6829
  %v6864 = vpack.c.b16 %v6834, %v6832
  %v6865 = vpack.c.b16 %v6835, %v6833
  %v6866 = vpack.c.b16 %v6836, %v6836
  %v6867 = vpack.c.b16 %v6837, %v6837
  %v6897 = vsel %vm5856, %v6740, 0
  %v6900 = vsel %vm5856, %v6742, 0
  %v6903 = vsel %vm5856, %v6744, 0
  %v6906 = vsel %vm5856, %v6746, 0
  %v6909 = vsel %vm5869, %v6866, 0
  %v6912 = vsel %vm5869, %v6867, 0
  %6914 = vmatprep.subr.bf16.mxu0 %v6839
  %6915 = vmatpush1.bf16.msra.mxu0 %v6838
  %6916 = vmatprep.subr.bf16.mxu0 %v6841
  %6917 = vmatpush1.bf16.msra.mxu0 %v6840
  %6918 = vmatprep.subr.bf16.mxu0 %v6843
  %6919 = vmatpush1.bf16.msra.mxu0 %v6842
  %6920 = vmatprep.subr.bf16.mxu0 %v6845
  %6921 = vmatpush1.bf16.msra.mxu0 %v6844
  %6922 = vmatprep.subr.bf16.mxu0 %v6847
  %6923 = vmatpush1.bf16.msra.mxu0 %v6846
  %6924 = vmatprep.subr.bf16.mxu0 %v6849
  %6925 = vmatpush1.bf16.msra.mxu0 %v6848
  %6926 = vmatprep.subr.bf16.mxu0 %v6851
  %6927 = vmatpush1.bf16.msra.mxu0 %v6850
  %6928 = vmatprep.subr.bf16.mxu0 %v6853
  %6929 = vmatpush1.bf16.msra.mxu0 %v6852
  %6930 = vmatprep.subr.bf16.mxu0 %v6855
  %6931 = vmatpush1.bf16.msra.mxu0 %v6854
  %6932 = vmatprep.subr.bf16.mxu0 %v6857
  %6933 = vmatpush1.bf16.msra.mxu0 %v6856
  %6934 = vmatprep.subr.bf16.mxu0 %v6859
  %6935 = vmatpush1.bf16.msra.mxu0 %v6858
  %6936 = vmatprep.subr.bf16.mxu0 %v6861
  %6937 = vmatpush1.bf16.msra.mxu0 %v6860
  %6938 = vmatprep.subr.bf16.mxu0 %v6863
  %6939 = vmatpush1.bf16.msra.mxu0 %v6862
  %6940 = vmatprep.subr.bf16.mxu0 %v6865
  %6941 = vmatpush1.bf16.msra.mxu0 %v6864
  %6942 = vmatprep.subr.bf16.mxu0 %v6912
  %6943 = vmatpush1.bf16.msra.mxu0 %v6909
  %6944 = vmatprep.subr.bf16.mxu0 0
  %6945 = vmatpush1.bf16.msra.mxu0 0
  %6946 = vmatprep.mubr.bf16.mxu0 %v6897
  %6947 = vmatmul.mubr.bf16.gmra.mrb[0].mxu0 %v6739
  %v6948 = vpop.f32.mrb[0].mxu0
  %v6949 = vadd.f32 0.0, %v6948
  %v6950 = vpop.f32.mrb[0].mxu0
  %v6951 = vadd.f32 0.0, %v6950
  %v6952 = vpop.f32.mrb[0].mxu0
  %v6953 = vadd.f32 0.0, %v6952
  %v6954 = vpop.f32.mrb[0].mxu0
  %v6955 = vadd.f32 0.0, %v6954
  %6956 = vmatprep.mubr.bf16.mxu0 %v6900
  %6957 = vmatmul.mubr.bf16.gmra.mrb[0].mxu0 %v6741
  %v6958 = vpop.f32.mrb[0].mxu0
  %v6959 = vadd.f32 0.0, %v6958
  %v6960 = vpop.f32.mrb[0].mxu0
  %v6961 = vadd.f32 0.0, %v6960
  %v6962 = vpop.f32.mrb[0].mxu0
  %v6963 = vadd.f32 0.0, %v6962
  %v6964 = vpop.f32.mrb[0].mxu0
  %v6965 = vadd.f32 0.0, %v6964
  %6966 = vmatprep.mubr.bf16.mxu0 %v6903
  %6967 = vmatmul.mubr.bf16.gmra.mrb[0].mxu0 %v6743
  %v6968 = vpop.f32.mrb[0].mxu0
  %v6969 = vadd.f32 0.0, %v6968
  %v6970 = vpop.f32.mrb[0].mxu0
  %v6971 = vadd.f32 0.0, %v6970
  %v6972 = vpop.f32.mrb[0].mxu0
  %v6973 = vadd.f32 0.0, %v6972
  %v6974 = vpop.f32.mrb[0].mxu0
  %v6975 = vadd.f32 0.0, %v6974
  %6976 = vmatprep.mubr.bf16.mxu0 %v6906
  %6977 = vmatmul.mubr.bf16.gmra.mrb[0].mxu0 %v6745
  %v6978 = vpop.f32.mrb[0].mxu0
  %v6979 = vadd.f32 0.0, %v6978
  %v6980 = vpop.f32.mrb[0].mxu0
  %v6981 = vadd.f32 0.0, %v6980
  %v6982 = vpop.f32.mrb[0].mxu0
  %v6983 = vadd.f32 0.0, %v6982
  %v6984 = vpop.f32.mrb[0].mxu0
  %v6985 = vadd.f32 0.0, %v6984
  %6986 = vdwg.mxu0
  %v6987 = vadd.f32 %v6415, %v6949
  %v6988 = vadd.f32 %v6417, %v6951
  %v6989 = vadd.f32 %v6419, %v6953
  %v6990 = vadd.f32 %v6421, %v6955
  %v6991 = vadd.f32 %v6425, %v6959
  %v6992 = vadd.f32 %v6427, %v6961
  %v6993 = vadd.f32 %v6429, %v6963
  %v6994 = vadd.f32 %v6431, %v6965
  %v6995 = vadd.f32 %v6435, %v6969
  %v6996 = vadd.f32 %v6437, %v6971
  %v6997 = vadd.f32 %v6439, %v6973
  %v6998 = vadd.f32 %v6441, %v6975
  %v6999 = vadd.f32 %v6445, %v6979
  %v7000 = vadd.f32 %v6447, %v6981
  %v7001 = vadd.f32 %v6449, %v6983
  %v7002 = vadd.f32 %v6451, %v6985
  %s7003 = scalar_lea.vmem %s3, 696
  %v7004 = vld [vmem:[%s7003] sm:$0xff]
  %v7005 = vld [vmem:[%s7003 + $0x8] sm:$0xff]
  %v7006 = vld [vmem:[%s7003 + $0x10] sm:$0xff]
  %v7007 = vld [vmem:[%s7003 + $0x18] sm:$0xff]
  %v7008 = vld [vmem:[%s7003 + $0x20] sm:$0xff]
  %v7009 = vld [vmem:[%s7003 + $0x28] sm:$0xff]
  %v7010 = vld [vmem:[%s7003 + $0x30] sm:$0xff]
  %v7011 = vld [vmem:[%s7003 + $0x38] sm:$0xff]
  %v7012 = vld [vmem:[%s7003 + $0x40] sm:$0xff]
  %v7013 = vld [vmem:[%s7003 + $0x48] sm:$0xff]
  %v7014 = vld [vmem:[%s7003 + $0x50] sm:$0xff]
  %v7015 = vld [vmem:[%s7003 + $0x58] sm:$0xff]
  %v7016 = vld [vmem:[%s7003 + $0x60] sm:$0xff]
  %v7017 = vld [vmem:[%s7003 + $0x68] sm:$0xff]
  %v7018 = vld [vmem:[%s7003 + $0x70] sm:$0xff]
  %v7019 = vld [vmem:[%s7003 + $0x78] sm:$0xff]
  %v7020 = vld [vmem:[%s7003 + $0x80] sm:$0xff]
  %v7021 = vld [vmem:[%s7003 + $0x88] sm:$0xff]
  %v7022 = vld [vmem:[%s7003 + $0x90] sm:$0xff]
  %v7023 = vld [vmem:[%s7003 + $0x98] sm:$0xff]
  %v7024 = vld [vmem:[%s7003 + $0xa0] sm:$0xff]
  %v7025 = vld [vmem:[%s7003 + $0xa8] sm:$0xff]
  %v7026 = vld [vmem:[%s7003 + $0xb0] sm:$0xff]
  %v7027 = vld [vmem:[%s7003 + $0xb8] sm:$0xff]
  %v7028 = vld [vmem:[%s7003 + $0xc0] sm:$0xff]
  %v7029 = vld [vmem:[%s7003 + $0xc8] sm:$0xff]
  %v7030 = vld [vmem:[%s7003 + $0xd0] sm:$0xff]
  %v7031 = vld [vmem:[%s7003 + $0xd8] sm:$0xff]
  %v7032 = vld [vmem:[%s7003 + $0xe0] sm:$0x77]
  %v7049 = vunpack.c.l.b16 %v4981
  %v7050 = vunpack.c.l.b16 %v4982
  %v7051 = vunpack.c.l.b16 %v5005
  %v7052 = vunpack.c.l.b16 %v5006
  %v7053 = vunpack.c.l.b16 %v5029
  %v7054 = vunpack.c.l.b16 %v5030
  %v7055 = vunpack.c.l.b16 %v5053
  %v7056 = vunpack.c.l.b16 %v5054
  %v7057 = vunpack.c.l.b16 %v5077
  %v7058 = vunpack.c.l.b16 %v5078
  %v7059 = vunpack.c.l.b16 %v5101
  %v7060 = vunpack.c.l.b16 %v5102
  %v7061 = vunpack.c.l.b16 %v5125
  %v7062 = vunpack.c.l.b16 %v5126
  %v7063 = vunpack.c.l.b16 %v5149
  %v7064 = vunpack.c.l.b16 %v5150
  %v7065 = vrot.slane %v5346, 7
  %v7066 = vsel %vm5469, %v7065, %v5344
  %v7067 = vrot.slane %v5348, 6
  %v7068 = vsel %vm5472, %v7067, %v7066
  %v7069 = vrot.slane %v5350, 5
  %v7070 = vsel %vm5475, %v7069, %v7068
  %v7071 = vrot.slane %v5352, 4
  %v7072 = vsel %vm5478, %v7071, %v7070
  %v7073 = vrot.slane %v5354, 3
  %v7074 = vsel %vm5481, %v7073, %v7072
  %v7075 = vrot.slane %v6499, 2
  %v7076 = vsel %vm5484, %v7075, %v7074
  %v7077 = vrot.slane %v7049, 1
  %v7078 = vsel %vm5487, %v7077, %v7076
  %v7079 = vrot.slane %v5347, 7
  %v7080 = vsel %vm5469, %v7079, %v5345
  %v7081 = vrot.slane %v5349, 6
  %v7082 = vsel %vm5472, %v7081, %v7080
  %v7083 = vrot.slane %v5351, 5
  %v7084 = vsel %vm5475, %v7083, %v7082
  %v7085 = vrot.slane %v5353, 4
  %v7086 = vsel %vm5478, %v7085, %v7084
  %v7087 = vrot.slane %v5355, 3
  %v7088 = vsel %vm5481, %v7087, %v7086
  %v7089 = vrot.slane %v6500, 2
  %v7090 = vsel %vm5484, %v7089, %v7088
  %v7091 = vrot.slane %v7050, 1
  %v7092 = vsel %vm5487, %v7091, %v7090
  %v7093 = vrot.slane %v5362, 7
  %v7094 = vsel %vm5469, %v7093, %v5360
  %v7095 = vrot.slane %v5364, 6
  %v7096 = vsel %vm5472, %v7095, %v7094
  %v7097 = vrot.slane %v5366, 5
  %v7098 = vsel %vm5475, %v7097, %v7096
  %v7099 = vrot.slane %v5368, 4
  %v7100 = vsel %vm5478, %v7099, %v7098
  %v7101 = vrot.slane %v5370, 3
  %v7102 = vsel %vm5481, %v7101, %v7100
  %v7103 = vrot.slane %v6501, 2
  %v7104 = vsel %vm5484, %v7103, %v7102
  %v7105 = vrot.slane %v7051, 1
  %v7106 = vsel %vm5487, %v7105, %v7104
  %v7107 = vrot.slane %v5363, 7
  %v7108 = vsel %vm5469, %v7107, %v5361
  %v7109 = vrot.slane %v5365, 6
  %v7110 = vsel %vm5472, %v7109, %v7108
  %v7111 = vrot.slane %v5367, 5
  %v7112 = vsel %vm5475, %v7111, %v7110
  %v7113 = vrot.slane %v5369, 4
  %v7114 = vsel %vm5478, %v7113, %v7112
  %v7115 = vrot.slane %v5371, 3
  %v7116 = vsel %vm5481, %v7115, %v7114
  %v7117 = vrot.slane %v6502, 2
  %v7118 = vsel %vm5484, %v7117, %v7116
  %v7119 = vrot.slane %v7052, 1
  %v7120 = vsel %vm5487, %v7119, %v7118
  %v7121 = vrot.slane %v5378, 7
  %v7122 = vsel %vm5469, %v7121, %v5376
  %v7123 = vrot.slane %v5380, 6
  %v7124 = vsel %vm5472, %v7123, %v7122
  %v7125 = vrot.slane %v5382, 5
  %v7126 = vsel %vm5475, %v7125, %v7124
  %v7127 = vrot.slane %v5384, 4
  %v7128 = vsel %vm5478, %v7127, %v7126
  %v7129 = vrot.slane %v5386, 3
  %v7130 = vsel %vm5481, %v7129, %v7128
  %v7131 = vrot.slane %v6503, 2
  %v7132 = vsel %vm5484, %v7131, %v7130
  %v7133 = vrot.slane %v7053, 1
  %v7134 = vsel %vm5487, %v7133, %v7132
  %v7135 = vrot.slane %v5379, 7
  %v7136 = vsel %vm5469, %v7135, %v5377
  %v7137 = vrot.slane %v5381, 6
  %v7138 = vsel %vm5472, %v7137, %v7136
  %v7139 = vrot.slane %v5383, 5
  %v7140 = vsel %vm5475, %v7139, %v7138
  %v7141 = vrot.slane %v5385, 4
  %v7142 = vsel %vm5478, %v7141, %v7140
  %v7143 = vrot.slane %v5387, 3
  %v7144 = vsel %vm5481, %v7143, %v7142
  %v7145 = vrot.slane %v6504, 2
  %v7146 = vsel %vm5484, %v7145, %v7144
  %v7147 = vrot.slane %v7054, 1
  %v7148 = vsel %vm5487, %v7147, %v7146
  %v7149 = vrot.slane %v5394, 7
  %v7150 = vsel %vm5469, %v7149, %v5392
  %v7151 = vrot.slane %v5396, 6
  %v7152 = vsel %vm5472, %v7151, %v7150
  %v7153 = vrot.slane %v5398, 5
  %v7154 = vsel %vm5475, %v7153, %v7152
  %v7155 = vrot.slane %v5400, 4
  %v7156 = vsel %vm5478, %v7155, %v7154
  %v7157 = vrot.slane %v5402, 3
  %v7158 = vsel %vm5481, %v7157, %v7156
  %v7159 = vrot.slane %v6505, 2
  %v7160 = vsel %vm5484, %v7159, %v7158
  %v7161 = vrot.slane %v7055, 1
  %v7162 = vsel %vm5487, %v7161, %v7160
  %v7163 = vrot.slane %v5395, 7
  %v7164 = vsel %vm5469, %v7163, %v5393
  %v7165 = vrot.slane %v5397, 6
  %v7166 = vsel %vm5472, %v7165, %v7164
  %v7167 = vrot.slane %v5399, 5
  %v7168 = vsel %vm5475, %v7167, %v7166
  %v7169 = vrot.slane %v5401, 4
  %v7170 = vsel %vm5478, %v7169, %v7168
  %v7171 = vrot.slane %v5403, 3
  %v7172 = vsel %vm5481, %v7171, %v7170
  %v7173 = vrot.slane %v6506, 2
  %v7174 = vsel %vm5484, %v7173, %v7172
  %v7175 = vrot.slane %v7056, 1
  %v7176 = vsel %vm5487, %v7175, %v7174
  %v7177 = vrot.slane %v5410, 7
  %v7178 = vsel %vm5469, %v7177, %v5408
  %v7179 = vrot.slane %v5412, 6
  %v7180 = vsel %vm5472, %v7179, %v7178
  %v7181 = vrot.slane %v5414, 5
  %v7182 = vsel %vm5475, %v7181, %v7180
  %v7183 = vrot.slane %v5416, 4
  %v7184 = vsel %vm5478, %v7183, %v7182
  %v7185 = vrot.slane %v5418, 3
  %v7186 = vsel %vm5481, %v7185, %v7184
  %v7187 = vrot.slane %v6507, 2
  %v7188 = vsel %vm5484, %v7187, %v7186
  %v7189 = vrot.slane %v7057, 1
  %v7190 = vsel %vm5487, %v7189, %v7188
  %v7191 = vrot.slane %v5411, 7
  %v7192 = vsel %vm5469, %v7191, %v5409
  %v7193 = vrot.slane %v5413, 6
  %v7194 = vsel %vm5472, %v7193, %v7192
  %v7195 = vrot.slane %v5415, 5
  %v7196 = vsel %vm5475, %v7195, %v7194
  %v7197 = vrot.slane %v5417, 4
  %v7198 = vsel %vm5478, %v7197, %v7196
  %v7199 = vrot.slane %v5419, 3
  %v7200 = vsel %vm5481, %v7199, %v7198
  %v7201 = vrot.slane %v6508, 2
  %v7202 = vsel %vm5484, %v7201, %v7200
  %v7203 = vrot.slane %v7058, 1
  %v7204 = vsel %vm5487, %v7203, %v7202
  %v7205 = vrot.slane %v5426, 7
  %v7206 = vsel %vm5469, %v7205, %v5424
  %v7207 = vrot.slane %v5428, 6
  %v7208 = vsel %vm5472, %v7207, %v7206
  %v7209 = vrot.slane %v5430, 5
  %v7210 = vsel %vm5475, %v7209, %v7208
  %v7211 = vrot.slane %v5432, 4
  %v7212 = vsel %vm5478, %v7211, %v7210
  %v7213 = vrot.slane %v5434, 3
  %v7214 = vsel %vm5481, %v7213, %v7212
  %v7215 = vrot.slane %v6509, 2
  %v7216 = vsel %vm5484, %v7215, %v7214
  %v7217 = vrot.slane %v7059, 1
  %v7218 = vsel %vm5487, %v7217, %v7216
  %v7219 = vrot.slane %v5427, 7
  %v7220 = vsel %vm5469, %v7219, %v5425
  %v7221 = vrot.slane %v5429, 6
  %v7222 = vsel %vm5472, %v7221, %v7220
  %v7223 = vrot.slane %v5431, 5
  %v7224 = vsel %vm5475, %v7223, %v7222
  %v7225 = vrot.slane %v5433, 4
  %v7226 = vsel %vm5478, %v7225, %v7224
  %v7227 = vrot.slane %v5435, 3
  %v7228 = vsel %vm5481, %v7227, %v7226
  %v7229 = vrot.slane %v6510, 2
  %v7230 = vsel %vm5484, %v7229, %v7228
  %v7231 = vrot.slane %v7060, 1
  %v7232 = vsel %vm5487, %v7231, %v7230
  %v7233 = vrot.slane %v5442, 7
  %v7234 = vsel %vm5469, %v7233, %v5440
  %v7235 = vrot.slane %v5444, 6
  %v7236 = vsel %vm5472, %v7235, %v7234
  %v7237 = vrot.slane %v5446, 5
  %v7238 = vsel %vm5475, %v7237, %v7236
  %v7239 = vrot.slane %v5448, 4
  %v7240 = vsel %vm5478, %v7239, %v7238
  %v7241 = vrot.slane %v5450, 3
  %v7242 = vsel %vm5481, %v7241, %v7240
  %v7243 = vrot.slane %v6511, 2
  %v7244 = vsel %vm5484, %v7243, %v7242
  %v7245 = vrot.slane %v7061, 1
  %v7246 = vsel %vm5487, %v7245, %v7244
  %v7247 = vrot.slane %v5443, 7
  %v7248 = vsel %vm5469, %v7247, %v5441
  %v7249 = vrot.slane %v5445, 6
  %v7250 = vsel %vm5472, %v7249, %v7248
  %v7251 = vrot.slane %v5447, 5
  %v7252 = vsel %vm5475, %v7251, %v7250
  %v7253 = vrot.slane %v5449, 4
  %v7254 = vsel %vm5478, %v7253, %v7252
  %v7255 = vrot.slane %v5451, 3
  %v7256 = vsel %vm5481, %v7255, %v7254
  %v7257 = vrot.slane %v6512, 2
  %v7258 = vsel %vm5484, %v7257, %v7256
  %v7259 = vrot.slane %v7062, 1
  %v7260 = vsel %vm5487, %v7259, %v7258
  %v7261 = vrot.slane %v5458, 7
  %v7262 = vsel %vm5469, %v7261, %v5456
  %v7263 = vrot.slane %v5460, 6
  %v7264 = vsel %vm5472, %v7263, %v7262
  %v7265 = vrot.slane %v5462, 5
  %v7266 = vsel %vm5475, %v7265, %v7264
  %v7267 = vrot.slane %v5464, 4
  %v7268 = vsel %vm5478, %v7267, %v7266
  %v7269 = vrot.slane %v5466, 3
  %v7270 = vsel %vm5481, %v7269, %v7268
  %v7271 = vrot.slane %v6513, 2
  %v7272 = vsel %vm5484, %v7271, %v7270
  %v7273 = vrot.slane %v7063, 1
  %v7274 = vsel %vm5487, %v7273, %v7272
  %v7275 = vrot.slane %v5459, 7
  %v7276 = vsel %vm5469, %v7275, %v5457
  %v7277 = vrot.slane %v5461, 6
  %v7278 = vsel %vm5472, %v7277, %v7276
  %v7279 = vrot.slane %v5463, 5
  %v7280 = vsel %vm5475, %v7279, %v7278
  %v7281 = vrot.slane %v5465, 4
  %v7282 = vsel %vm5478, %v7281, %v7280
  %v7283 = vrot.slane %v5467, 3
  %v7284 = vsel %vm5481, %v7283, %v7282
  %v7285 = vrot.slane %v6514, 2
  %v7286 = vsel %vm5484, %v7285, %v7284
  %v7287 = vrot.slane %v7064, 1
  %v7288 = vsel %vm5487, %v7287, %v7286
  %v7289 = vpack.c.b16 %v7106, %v7078
  %v7290 = vpack.c.b16 %v7120, %v7092
  %v7291 = vpack.c.b16 %v7162, %v7134
  %v7292 = vpack.c.b16 %v7176, %v7148
  %v7293 = vpack.c.b16 %v7218, %v7190
  %v7294 = vpack.c.b16 %v7232, %v7204
  %v7295 = vpack.c.b16 %v7274, %v7246
  %v7296 = vpack.c.b16 %v7288, %v7260
  %v7330 = vunpack.c.l.b16 %v7004
  %v7331 = vunpack.c.h.b16 %v7004
  %v7332 = vunpack.c.l.b16 %v7005
  %v7333 = vunpack.c.h.b16 %v7005
  %v7334 = vunpack.c.l.b16 %v7006
  %v7335 = vunpack.c.h.b16 %v7006
  %v7336 = vunpack.c.l.b16 %v7007
  %v7337 = vunpack.c.h.b16 %v7007
  %v7338 = vunpack.c.l.b16 %v7008
  %v7339 = vunpack.c.h.b16 %v7008
  %v7340 = vunpack.c.l.b16 %v7009
  %v7341 = vunpack.c.h.b16 %v7009
  %v7342 = vunpack.c.l.b16 %v7010
  %v7343 = vunpack.c.h.b16 %v7010
  %v7344 = vunpack.c.l.b16 %v7011
  %v7345 = vunpack.c.h.b16 %v7011
  %v7346 = vunpack.c.l.b16 %v7012
  %v7347 = vunpack.c.h.b16 %v7012
  %v7348 = vunpack.c.l.b16 %v7013
  %v7349 = vunpack.c.h.b16 %v7013
  %v7350 = vunpack.c.l.b16 %v7014
  %v7351 = vunpack.c.h.b16 %v7014
  %v7352 = vunpack.c.l.b16 %v7015
  %v7353 = vunpack.c.h.b16 %v7015
  %v7354 = vunpack.c.l.b16 %v7016
  %v7355 = vunpack.c.h.b16 %v7016
  %v7356 = vunpack.c.l.b16 %v7017
  %v7357 = vunpack.c.h.b16 %v7017
  %v7358 = vunpack.c.l.b16 %v7018
  %v7359 = vunpack.c.h.b16 %v7018
  %v7360 = vunpack.c.l.b16 %v7019
  %v7361 = vunpack.c.h.b16 %v7019
  %v7362 = vunpack.c.l.b16 %v7020
  %v7363 = vunpack.c.h.b16 %v7020
  %v7364 = vunpack.c.l.b16 %v7021
  %v7365 = vunpack.c.h.b16 %v7021
  %v7366 = vunpack.c.l.b16 %v7022
  %v7367 = vunpack.c.h.b16 %v7022
  %v7368 = vunpack.c.l.b16 %v7023
  %v7369 = vunpack.c.h.b16 %v7023
  %v7370 = vunpack.c.l.b16 %v7024
  %v7371 = vunpack.c.h.b16 %v7024
  %v7372 = vunpack.c.l.b16 %v7025
  %v7373 = vunpack.c.h.b16 %v7025
  %v7374 = vunpack.c.l.b16 %v7026
  %v7375 = vunpack.c.h.b16 %v7026
  %v7376 = vunpack.c.l.b16 %v7027
  %v7377 = vunpack.c.h.b16 %v7027
  %v7378 = vunpack.c.l.b16 %v7028
  %v7379 = vunpack.c.h.b16 %v7028
  %v7380 = vunpack.c.l.b16 %v7029
  %v7381 = vunpack.c.h.b16 %v7029
  %v7382 = vunpack.c.l.b16 %v7030
  %v7383 = vunpack.c.h.b16 %v7030
  %v7384 = vunpack.c.l.b16 %v7031
  %v7385 = vunpack.c.h.b16 %v7031
  %v7386 = vunpack.c.l.b16 %v7032
  %v7387 = vunpack.c.h.b16 %v7032
  %v7388 = vpack.c.b16 %v7332, %v7330
  %v7389 = vpack.c.b16 %v7333, %v7331
  %v7390 = vpack.c.b16 %v7336, %v7334
  %v7391 = vpack.c.b16 %v7337, %v7335
  %v7392 = vpack.c.b16 %v7340, %v7338
  %v7393 = vpack.c.b16 %v7341, %v7339
  %v7394 = vpack.c.b16 %v7344, %v7342
  %v7395 = vpack.c.b16 %v7345, %v7343
  %v7396 = vpack.c.b16 %v7348, %v7346
  %v7397 = vpack.c.b16 %v7349, %v7347
  %v7398 = vpack.c.b16 %v7352, %v7350
  %v7399 = vpack.c.b16 %v7353, %v7351
  %v7400 = vpack.c.b16 %v7356, %v7354
  %v7401 = vpack.c.b16 %v7357, %v7355
  %v7402 = vpack.c.b16 %v7360, %v7358
  %v7403 = vpack.c.b16 %v7361, %v7359
  %v7404 = vpack.c.b16 %v7364, %v7362
  %v7405 = vpack.c.b16 %v7365, %v7363
  %v7406 = vpack.c.b16 %v7368, %v7366
  %v7407 = vpack.c.b16 %v7369, %v7367
  %v7408 = vpack.c.b16 %v7372, %v7370
  %v7409 = vpack.c.b16 %v7373, %v7371
  %v7410 = vpack.c.b16 %v7376, %v7374
  %v7411 = vpack.c.b16 %v7377, %v7375
  %v7412 = vpack.c.b16 %v7380, %v7378
  %v7413 = vpack.c.b16 %v7381, %v7379
  %v7414 = vpack.c.b16 %v7384, %v7382
  %v7415 = vpack.c.b16 %v7385, %v7383
  %v7416 = vpack.c.b16 %v7386, %v7386
  %v7417 = vpack.c.b16 %v7387, %v7387
  %v7447 = vsel %vm5856, %v7290, 0
  %v7450 = vsel %vm5856, %v7292, 0
  %v7453 = vsel %vm5856, %v7294, 0
  %v7456 = vsel %vm5856, %v7296, 0
  %v7459 = vsel %vm5869, %v7416, 0
  %v7462 = vsel %vm5869, %v7417, 0
  %7464 = vmatprep.subr.bf16.mxu0 %v7389
  %7465 = vmatpush1.bf16.msra.mxu0 %v7388
  %7466 = vmatprep.subr.bf16.mxu0 %v7391
  %7467 = vmatpush1.bf16.msra.mxu0 %v7390
  %7468 = vmatprep.subr.bf16.mxu0 %v7393
  %7469 = vmatpush1.bf16.msra.mxu0 %v7392
  %7470 = vmatprep.subr.bf16.mxu0 %v7395
  %7471 = vmatpush1.bf16.msra.mxu0 %v7394
  %7472 = vmatprep.subr.bf16.mxu0 %v7397
  %7473 = vmatpush1.bf16.msra.mxu0 %v7396
  %7474 = vmatprep.subr.bf16.mxu0 %v7399
  %7475 = vmatpush1.bf16.msra.mxu0 %v7398
  %7476 = vmatprep.subr.bf16.mxu0 %v7401
  %7477 = vmatpush1.bf16.msra.mxu0 %v7400
  %7478 = vmatprep.subr.bf16.mxu0 %v7403
  %7479 = vmatpush1.bf16.msra.mxu0 %v7402
  %7480 = vmatprep.subr.bf16.mxu0 %v7405
  %7481 = vmatpush1.bf16.msra.mxu0 %v7404
  %7482 = vmatprep.subr.bf16.mxu0 %v7407
  %7483 = vmatpush1.bf16.msra.mxu0 %v7406
  %7484 = vmatprep.subr.bf16.mxu0 %v7409
  %7485 = vmatpush1.bf16.msra.mxu0 %v7408
  %7486 = vmatprep.subr.bf16.mxu0 %v7411
  %7487 = vmatpush1.bf16.msra.mxu0 %v7410
  %7488 = vmatprep.subr.bf16.mxu0 %v7413
  %7489 = vmatpush1.bf16.msra.mxu0 %v7412
  %7490 = vmatprep.subr.bf16.mxu0 %v7415
  %7491 = vmatpush1.bf16.msra.mxu0 %v7414
  %7492 = vmatprep.subr.bf16.mxu0 %v7462
  %7493 = vmatpush1.bf16.msra.mxu0 %v7459
  %7494 = vmatprep.subr.bf16.mxu0 0
  %7495 = vmatpush1.bf16.msra.mxu0 0
  %7496 = vmatprep.mubr.bf16.mxu0 %v7447
  %7497 = vmatmul.mubr.bf16.gmra.mrb[0].mxu0 %v7289
  %v7498 = vpop.f32.mrb[0].mxu0
  %v7499 = vadd.f32 0.0, %v7498
  %v7500 = vpop.f32.mrb[0].mxu0
  %v7501 = vadd.f32 0.0, %v7500
  %v7502 = vpop.f32.mrb[0].mxu0
  %v7503 = vadd.f32 0.0, %v7502
  %v7504 = vpop.f32.mrb[0].mxu0
  %v7505 = vadd.f32 0.0, %v7504
  %7506 = vmatprep.mubr.bf16.mxu0 %v7450
  %7507 = vmatmul.mubr.bf16.gmra.mrb[0].mxu0 %v7291
  %v7508 = vpop.f32.mrb[0].mxu0
  %v7509 = vadd.f32 0.0, %v7508
  %v7510 = vpop.f32.mrb[0].mxu0
  %v7511 = vadd.f32 0.0, %v7510
  %v7512 = vpop.f32.mrb[0].mxu0
  %v7513 = vadd.f32 0.0, %v7512
  %v7514 = vpop.f32.mrb[0].mxu0
  %v7515 = vadd.f32 0.0, %v7514
  %7516 = vmatprep.mubr.bf16.mxu0 %v7453
  %7517 = vmatmul.mubr.bf16.gmra.mrb[0].mxu0 %v7293
  %v7518 = vpop.f32.mrb[0].mxu0
  %v7519 = vadd.f32 0.0, %v7518
  %v7520 = vpop.f32.mrb[0].mxu0
  %v7521 = vadd.f32 0.0, %v7520
  %v7522 = vpop.f32.mrb[0].mxu0
  %v7523 = vadd.f32 0.0, %v7522
  %v7524 = vpop.f32.mrb[0].mxu0
  %v7525 = vadd.f32 0.0, %v7524
  %7526 = vmatprep.mubr.bf16.mxu0 %v7456
  %7527 = vmatmul.mubr.bf16.gmra.mrb[0].mxu0 %v7295
  %v7528 = vpop.f32.mrb[0].mxu0
  %v7529 = vadd.f32 0.0, %v7528
  %v7530 = vpop.f32.mrb[0].mxu0
  %v7531 = vadd.f32 0.0, %v7530
  %v7532 = vpop.f32.mrb[0].mxu0
  %v7533 = vadd.f32 0.0, %v7532
  %v7534 = vpop.f32.mrb[0].mxu0
  %v7535 = vadd.f32 0.0, %v7534
  %7536 = vdwg.mxu0
  %v7537 = vadd.f32 %v6987, %v7499
  %v7538 = vadd.f32 %v6988, %v7501
  %v7539 = vadd.f32 %v6989, %v7503
  %v7540 = vadd.f32 %v6990, %v7505
  %v7541 = vadd.f32 %v6991, %v7509
  %v7542 = vadd.f32 %v6992, %v7511
  %v7543 = vadd.f32 %v6993, %v7513
  %v7544 = vadd.f32 %v6994, %v7515
  %v7545 = vadd.f32 %v6995, %v7519
  %v7546 = vadd.f32 %v6996, %v7521
  %v7547 = vadd.f32 %v6997, %v7523
  %v7548 = vadd.f32 %v6998, %v7525
  %v7549 = vadd.f32 %v6999, %v7529
  %v7550 = vadd.f32 %v7000, %v7531
  %v7551 = vadd.f32 %v7001, %v7533
  %v7552 = vadd.f32 %v7002, %v7535
  %s7553 = scalar_lea.vmem %s3, 928
  %v7554 = vld [vmem:[%s7553] sm:$0xff]
  %v7555 = vld [vmem:[%s7553 + $0x8] sm:$0xff]
  %v7556 = vld [vmem:[%s7553 + $0x10] sm:$0xff]
  %v7557 = vld [vmem:[%s7553 + $0x18] sm:$0xff]
  %v7558 = vld [vmem:[%s7553 + $0x20] sm:$0xff]
  %v7559 = vld [vmem:[%s7553 + $0x28] sm:$0xff]
  %v7560 = vld [vmem:[%s7553 + $0x30] sm:$0xff]
  %v7561 = vld [vmem:[%s7553 + $0x38] sm:$0xff]
  %v7562 = vld [vmem:[%s7553 + $0x40] sm:$0xff]
  %v7563 = vld [vmem:[%s7553 + $0x48] sm:$0xff]
  %v7564 = vld [vmem:[%s7553 + $0x50] sm:$0xff]
  %v7565 = vld [vmem:[%s7553 + $0x58] sm:$0xff]
  %v7566 = vld [vmem:[%s7553 + $0x60] sm:$0xff]
  %v7567 = vld [vmem:[%s7553 + $0x68] sm:$0xff]
  %v7568 = vld [vmem:[%s7553 + $0x70] sm:$0xff]
  %v7569 = vld [vmem:[%s7553 + $0x78] sm:$0xff]
  %v7570 = vld [vmem:[%s7553 + $0x80] sm:$0xff]
  %v7571 = vld [vmem:[%s7553 + $0x88] sm:$0xff]
  %v7572 = vld [vmem:[%s7553 + $0x90] sm:$0xff]
  %v7573 = vld [vmem:[%s7553 + $0x98] sm:$0xff]
  %v7574 = vld [vmem:[%s7553 + $0xa0] sm:$0xff]
  %v7575 = vld [vmem:[%s7553 + $0xa8] sm:$0xff]
  %v7576 = vld [vmem:[%s7553 + $0xb0] sm:$0xff]
  %v7577 = vld [vmem:[%s7553 + $0xb8] sm:$0xff]
  %v7578 = vld [vmem:[%s7553 + $0xc0] sm:$0xff]
  %v7579 = vld [vmem:[%s7553 + $0xc8] sm:$0xff]
  %v7580 = vld [vmem:[%s7553 + $0xd0] sm:$0xff]
  %v7581 = vld [vmem:[%s7553 + $0xd8] sm:$0xff]
  %v7582 = vld [vmem:[%s7553 + $0xe0] sm:$0x77]
  %v7599 = vunpack.c.l.b16 %v4983
  %v7600 = vunpack.c.l.b16 %v4984
  %v7601 = vunpack.c.l.b16 %v5007
  %v7602 = vunpack.c.l.b16 %v5008
  %v7603 = vunpack.c.l.b16 %v5031
  %v7604 = vunpack.c.l.b16 %v5032
  %v7605 = vunpack.c.l.b16 %v5055
  %v7606 = vunpack.c.l.b16 %v5056
  %v7607 = vunpack.c.l.b16 %v5079
  %v7608 = vunpack.c.l.b16 %v5080
  %v7609 = vunpack.c.l.b16 %v5103
  %v7610 = vunpack.c.l.b16 %v5104
  %v7611 = vunpack.c.l.b16 %v5127
  %v7612 = vunpack.c.l.b16 %v5128
  %v7613 = vunpack.c.l.b16 %v5151
  %v7614 = vunpack.c.l.b16 %v5152
  %v7615 = vrot.slane %v5348, 7
  %v7616 = vsel %vm5469, %v7615, %v5346
  %v7617 = vrot.slane %v5350, 6
  %v7618 = vsel %vm5472, %v7617, %v7616
  %v7619 = vrot.slane %v5352, 5
  %v7620 = vsel %vm5475, %v7619, %v7618
  %v7621 = vrot.slane %v5354, 4
  %v7622 = vsel %vm5478, %v7621, %v7620
  %v7623 = vrot.slane %v6499, 3
  %v7624 = vsel %vm5481, %v7623, %v7622
  %v7625 = vrot.slane %v7049, 2
  %v7626 = vsel %vm5484, %v7625, %v7624
  %v7627 = vrot.slane %v7599, 1
  %v7628 = vsel %vm5487, %v7627, %v7626
  %v7629 = vrot.slane %v5349, 7
  %v7630 = vsel %vm5469, %v7629, %v5347
  %v7631 = vrot.slane %v5351, 6
  %v7632 = vsel %vm5472, %v7631, %v7630
  %v7633 = vrot.slane %v5353, 5
  %v7634 = vsel %vm5475, %v7633, %v7632
  %v7635 = vrot.slane %v5355, 4
  %v7636 = vsel %vm5478, %v7635, %v7634
  %v7637 = vrot.slane %v6500, 3
  %v7638 = vsel %vm5481, %v7637, %v7636
  %v7639 = vrot.slane %v7050, 2
  %v7640 = vsel %vm5484, %v7639, %v7638
  %v7641 = vrot.slane %v7600, 1
  %v7642 = vsel %vm5487, %v7641, %v7640
  %v7643 = vrot.slane %v5364, 7
  %v7644 = vsel %vm5469, %v7643, %v5362
  %v7645 = vrot.slane %v5366, 6
  %v7646 = vsel %vm5472, %v7645, %v7644
  %v7647 = vrot.slane %v5368, 5
  %v7648 = vsel %vm5475, %v7647, %v7646
  %v7649 = vrot.slane %v5370, 4
  %v7650 = vsel %vm5478, %v7649, %v7648
  %v7651 = vrot.slane %v6501, 3
  %v7652 = vsel %vm5481, %v7651, %v7650
  %v7653 = vrot.slane %v7051, 2
  %v7654 = vsel %vm5484, %v7653, %v7652
  %v7655 = vrot.slane %v7601, 1
  %v7656 = vsel %vm5487, %v7655, %v7654
  %v7657 = vrot.slane %v5365, 7
  %v7658 = vsel %vm5469, %v7657, %v5363
  %v7659 = vrot.slane %v5367, 6
  %v7660 = vsel %vm5472, %v7659, %v7658
  %v7661 = vrot.slane %v5369, 5
  %v7662 = vsel %vm5475, %v7661, %v7660
  %v7663 = vrot.slane %v5371, 4
  %v7664 = vsel %vm5478, %v7663, %v7662
  %v7665 = vrot.slane %v6502, 3
  %v7666 = vsel %vm5481, %v7665, %v7664
  %v7667 = vrot.slane %v7052, 2
  %v7668 = vsel %vm5484, %v7667, %v7666
  %v7669 = vrot.slane %v7602, 1
  %v7670 = vsel %vm5487, %v7669, %v7668
  %v7671 = vrot.slane %v5380, 7
  %v7672 = vsel %vm5469, %v7671, %v5378
  %v7673 = vrot.slane %v5382, 6
  %v7674 = vsel %vm5472, %v7673, %v7672
  %v7675 = vrot.slane %v5384, 5
  %v7676 = vsel %vm5475, %v7675, %v7674
  %v7677 = vrot.slane %v5386, 4
  %v7678 = vsel %vm5478, %v7677, %v7676
  %v7679 = vrot.slane %v6503, 3
  %v7680 = vsel %vm5481, %v7679, %v7678
  %v7681 = vrot.slane %v7053, 2
  %v7682 = vsel %vm5484, %v7681, %v7680
  %v7683 = vrot.slane %v7603, 1
  %v7684 = vsel %vm5487, %v7683, %v7682
  %v7685 = vrot.slane %v5381, 7
  %v7686 = vsel %vm5469, %v7685, %v5379
  %v7687 = vrot.slane %v5383, 6
  %v7688 = vsel %vm5472, %v7687, %v7686
  %v7689 = vrot.slane %v5385, 5
  %v7690 = vsel %vm5475, %v7689, %v7688
  %v7691 = vrot.slane %v5387, 4
  %v7692 = vsel %vm5478, %v7691, %v7690
  %v7693 = vrot.slane %v6504, 3
  %v7694 = vsel %vm5481, %v7693, %v7692
  %v7695 = vrot.slane %v7054, 2
  %v7696 = vsel %vm5484, %v7695, %v7694
  %v7697 = vrot.slane %v7604, 1
  %v7698 = vsel %vm5487, %v7697, %v7696
  %v7699 = vrot.slane %v5396, 7
  %v7700 = vsel %vm5469, %v7699, %v5394
  %v7701 = vrot.slane %v5398, 6
  %v7702 = vsel %vm5472, %v7701, %v7700
  %v7703 = vrot.slane %v5400, 5
  %v7704 = vsel %vm5475, %v7703, %v7702
  %v7705 = vrot.slane %v5402, 4
  %v7706 = vsel %vm5478, %v7705, %v7704
  %v7707 = vrot.slane %v6505, 3
  %v7708 = vsel %vm5481, %v7707, %v7706
  %v7709 = vrot.slane %v7055, 2
  %v7710 = vsel %vm5484, %v7709, %v7708
  %v7711 = vrot.slane %v7605, 1
  %v7712 = vsel %vm5487, %v7711, %v7710
  %v7713 = vrot.slane %v5397, 7
  %v7714 = vsel %vm5469, %v7713, %v5395
  %v7715 = vrot.slane %v5399, 6
  %v7716 = vsel %vm5472, %v7715, %v7714
  %v7717 = vrot.slane %v5401, 5
  %v7718 = vsel %vm5475, %v7717, %v7716
  %v7719 = vrot.slane %v5403, 4
  %v7720 = vsel %vm5478, %v7719, %v7718
  %v7721 = vrot.slane %v6506, 3
  %v7722 = vsel %vm5481, %v7721, %v7720
  %v7723 = vrot.slane %v7056, 2
  %v7724 = vsel %vm5484, %v7723, %v7722
  %v7725 = vrot.slane %v7606, 1
  %v7726 = vsel %vm5487, %v7725, %v7724
  %v7727 = vrot.slane %v5412, 7
  %v7728 = vsel %vm5469, %v7727, %v5410
  %v7729 = vrot.slane %v5414, 6
  %v7730 = vsel %vm5472, %v7729, %v7728
  %v7731 = vrot.slane %v5416, 5
  %v7732 = vsel %vm5475, %v7731, %v7730
  %v7733 = vrot.slane %v5418, 4
  %v7734 = vsel %vm5478, %v7733, %v7732
  %v7735 = vrot.slane %v6507, 3
  %v7736 = vsel %vm5481, %v7735, %v7734
  %v7737 = vrot.slane %v7057, 2
  %v7738 = vsel %vm5484, %v7737, %v7736
  %v7739 = vrot.slane %v7607, 1
  %v7740 = vsel %vm5487, %v7739, %v7738
  %v7741 = vrot.slane %v5413, 7
  %v7742 = vsel %vm5469, %v7741, %v5411
  %v7743 = vrot.slane %v5415, 6
  %v7744 = vsel %vm5472, %v7743, %v7742
  %v7745 = vrot.slane %v5417, 5
  %v7746 = vsel %vm5475, %v7745, %v7744
  %v7747 = vrot.slane %v5419, 4
  %v7748 = vsel %vm5478, %v7747, %v7746
  %v7749 = vrot.slane %v6508, 3
  %v7750 = vsel %vm5481, %v7749, %v7748
  %v7751 = vrot.slane %v7058, 2
  %v7752 = vsel %vm5484, %v7751, %v7750
  %v7753 = vrot.slane %v7608, 1
  %v7754 = vsel %vm5487, %v7753, %v7752
  %v7755 = vrot.slane %v5428, 7
  %v7756 = vsel %vm5469, %v7755, %v5426
  %v7757 = vrot.slane %v5430, 6
  %v7758 = vsel %vm5472, %v7757, %v7756
  %v7759 = vrot.slane %v5432, 5
  %v7760 = vsel %vm5475, %v7759, %v7758
  %v7761 = vrot.slane %v5434, 4
  %v7762 = vsel %vm5478, %v7761, %v7760
  %v7763 = vrot.slane %v6509, 3
  %v7764 = vsel %vm5481, %v7763, %v7762
  %v7765 = vrot.slane %v7059, 2
  %v7766 = vsel %vm5484, %v7765, %v7764
  %v7767 = vrot.slane %v7609, 1
  %v7768 = vsel %vm5487, %v7767, %v7766
  %v7769 = vrot.slane %v5429, 7
  %v7770 = vsel %vm5469, %v7769, %v5427
  %v7771 = vrot.slane %v5431, 6
  %v7772 = vsel %vm5472, %v7771, %v7770
  %v7773 = vrot.slane %v5433, 5
  %v7774 = vsel %vm5475, %v7773, %v7772
  %v7775 = vrot.slane %v5435, 4
  %v7776 = vsel %vm5478, %v7775, %v7774
  %v7777 = vrot.slane %v6510, 3
  %v7778 = vsel %vm5481, %v7777, %v7776
  %v7779 = vrot.slane %v7060, 2
  %v7780 = vsel %vm5484, %v7779, %v7778
  %v7781 = vrot.slane %v7610, 1
  %v7782 = vsel %vm5487, %v7781, %v7780
  %v7783 = vrot.slane %v5444, 7
  %v7784 = vsel %vm5469, %v7783, %v5442
  %v7785 = vrot.slane %v5446, 6
  %v7786 = vsel %vm5472, %v7785, %v7784
  %v7787 = vrot.slane %v5448, 5
  %v7788 = vsel %vm5475, %v7787, %v7786
  %v7789 = vrot.slane %v5450, 4
  %v7790 = vsel %vm5478, %v7789, %v7788
  %v7791 = vrot.slane %v6511, 3
  %v7792 = vsel %vm5481, %v7791, %v7790
  %v7793 = vrot.slane %v7061, 2
  %v7794 = vsel %vm5484, %v7793, %v7792
  %v7795 = vrot.slane %v7611, 1
  %v7796 = vsel %vm5487, %v7795, %v7794
  %v7797 = vrot.slane %v5445, 7
  %v7798 = vsel %vm5469, %v7797, %v5443
  %v7799 = vrot.slane %v5447, 6
  %v7800 = vsel %vm5472, %v7799, %v7798
  %v7801 = vrot.slane %v5449, 5
  %v7802 = vsel %vm5475, %v7801, %v7800
  %v7803 = vrot.slane %v5451, 4
  %v7804 = vsel %vm5478, %v7803, %v7802
  %v7805 = vrot.slane %v6512, 3
  %v7806 = vsel %vm5481, %v7805, %v7804
  %v7807 = vrot.slane %v7062, 2
  %v7808 = vsel %vm5484, %v7807, %v7806
  %v7809 = vrot.slane %v7612, 1
  %v7810 = vsel %vm5487, %v7809, %v7808
  %v7811 = vrot.slane %v5460, 7
  %v7812 = vsel %vm5469, %v7811, %v5458
  %v7813 = vrot.slane %v5462, 6
  %v7814 = vsel %vm5472, %v7813, %v7812
  %v7815 = vrot.slane %v5464, 5
  %v7816 = vsel %vm5475, %v7815, %v7814
  %v7817 = vrot.slane %v5466, 4
  %v7818 = vsel %vm5478, %v7817, %v7816
  %v7819 = vrot.slane %v6513, 3
  %v7820 = vsel %vm5481, %v7819, %v7818
  %v7821 = vrot.slane %v7063, 2
  %v7822 = vsel %vm5484, %v7821, %v7820
  %v7823 = vrot.slane %v7613, 1
  %v7824 = vsel %vm5487, %v7823, %v7822
  %v7825 = vrot.slane %v5461, 7
  %v7826 = vsel %vm5469, %v7825, %v5459
  %v7827 = vrot.slane %v5463, 6
  %v7828 = vsel %vm5472, %v7827, %v7826
  %v7829 = vrot.slane %v5465, 5
  %v7830 = vsel %vm5475, %v7829, %v7828
  %v7831 = vrot.slane %v5467, 4
  %v7832 = vsel %vm5478, %v7831, %v7830
  %v7833 = vrot.slane %v6514, 3
  %v7834 = vsel %vm5481, %v7833, %v7832
  %v7835 = vrot.slane %v7064, 2
  %v7836 = vsel %vm5484, %v7835, %v7834
  %v7837 = vrot.slane %v7614, 1
  %v7838 = vsel %vm5487, %v7837, %v7836
  %v7839 = vpack.c.b16 %v7656, %v7628
  %v7840 = vpack.c.b16 %v7670, %v7642
  %v7841 = vpack.c.b16 %v7712, %v7684
  %v7842 = vpack.c.b16 %v7726, %v7698
  %v7843 = vpack.c.b16 %v7768, %v7740
  %v7844 = vpack.c.b16 %v7782, %v7754
  %v7845 = vpack.c.b16 %v7824, %v7796
  %v7846 = vpack.c.b16 %v7838, %v7810
  %v7880 = vunpack.c.l.b16 %v7554
  %v7881 = vunpack.c.h.b16 %v7554
  %v7882 = vunpack.c.l.b16 %v7555
  %v7883 = vunpack.c.h.b16 %v7555
  %v7884 = vunpack.c.l.b16 %v7556
  %v7885 = vunpack.c.h.b16 %v7556
  %v7886 = vunpack.c.l.b16 %v7557
  %v7887 = vunpack.c.h.b16 %v7557
  %v7888 = vunpack.c.l.b16 %v7558
  %v7889 = vunpack.c.h.b16 %v7558
  %v7890 = vunpack.c.l.b16 %v7559
  %v7891 = vunpack.c.h.b16 %v7559
  %v7892 = vunpack.c.l.b16 %v7560
  %v7893 = vunpack.c.h.b16 %v7560
  %v7894 = vunpack.c.l.b16 %v7561
  %v7895 = vunpack.c.h.b16 %v7561
  %v7896 = vunpack.c.l.b16 %v7562
  %v7897 = vunpack.c.h.b16 %v7562
  %v7898 = vunpack.c.l.b16 %v7563
  %v7899 = vunpack.c.h.b16 %v7563
  %v7900 = vunpack.c.l.b16 %v7564
  %v7901 = vunpack.c.h.b16 %v7564
  %v7902 = vunpack.c.l.b16 %v7565
  %v7903 = vunpack.c.h.b16 %v7565
  %v7904 = vunpack.c.l.b16 %v7566
  %v7905 = vunpack.c.h.b16 %v7566
  %v7906 = vunpack.c.l.b16 %v7567
  %v7907 = vunpack.c.h.b16 %v7567
  %v7908 = vunpack.c.l.b16 %v7568
  %v7909 = vunpack.c.h.b16 %v7568
  %v7910 = vunpack.c.l.b16 %v7569
  %v7911 = vunpack.c.h.b16 %v7569
  %v7912 = vunpack.c.l.b16 %v7570
  %v7913 = vunpack.c.h.b16 %v7570
  %v7914 = vunpack.c.l.b16 %v7571
  %v7915 = vunpack.c.h.b16 %v7571
  %v7916 = vunpack.c.l.b16 %v7572
  %v7917 = vunpack.c.h.b16 %v7572
  %v7918 = vunpack.c.l.b16 %v7573
  %v7919 = vunpack.c.h.b16 %v7573
  %v7920 = vunpack.c.l.b16 %v7574
  %v7921 = vunpack.c.h.b16 %v7574
  %v7922 = vunpack.c.l.b16 %v7575
  %v7923 = vunpack.c.h.b16 %v7575
  %v7924 = vunpack.c.l.b16 %v7576
  %v7925 = vunpack.c.h.b16 %v7576
  %v7926 = vunpack.c.l.b16 %v7577
  %v7927 = vunpack.c.h.b16 %v7577
  %v7928 = vunpack.c.l.b16 %v7578
  %v7929 = vunpack.c.h.b16 %v7578
  %v7930 = vunpack.c.l.b16 %v7579
  %v7931 = vunpack.c.h.b16 %v7579
  %v7932 = vunpack.c.l.b16 %v7580
  %v7933 = vunpack.c.h.b16 %v7580
  %v7934 = vunpack.c.l.b16 %v7581
  %v7935 = vunpack.c.h.b16 %v7581
  %v7936 = vunpack.c.l.b16 %v7582
  %v7937 = vunpack.c.h.b16 %v7582
  %v7938 = vpack.c.b16 %v7882, %v7880
  %v7939 = vpack.c.b16 %v7883, %v7881
  %v7940 = vpack.c.b16 %v7886, %v7884
  %v7941 = vpack.c.b16 %v7887, %v7885
  %v7942 = vpack.c.b16 %v7890, %v7888
  %v7943 = vpack.c.b16 %v7891, %v7889
  %v7944 = vpack.c.b16 %v7894, %v7892
  %v7945 = vpack.c.b16 %v7895, %v7893
  %v7946 = vpack.c.b16 %v7898, %v7896
  %v7947 = vpack.c.b16 %v7899, %v7897
  %v7948 = vpack.c.b16 %v7902, %v7900
  %v7949 = vpack.c.b16 %v7903, %v7901
  %v7950 = vpack.c.b16 %v7906, %v7904
  %v7951 = vpack.c.b16 %v7907, %v7905
  %v7952 = vpack.c.b16 %v7910, %v7908
  %v7953 = vpack.c.b16 %v7911, %v7909
  %v7954 = vpack.c.b16 %v7914, %v7912
  %v7955 = vpack.c.b16 %v7915, %v7913
  %v7956 = vpack.c.b16 %v7918, %v7916
  %v7957 = vpack.c.b16 %v7919, %v7917
  %v7958 = vpack.c.b16 %v7922, %v7920
  %v7959 = vpack.c.b16 %v7923, %v7921
  %v7960 = vpack.c.b16 %v7926, %v7924
  %v7961 = vpack.c.b16 %v7927, %v7925
  %v7962 = vpack.c.b16 %v7930, %v7928
  %v7963 = vpack.c.b16 %v7931, %v7929
  %v7964 = vpack.c.b16 %v7934, %v7932
  %v7965 = vpack.c.b16 %v7935, %v7933
  %v7966 = vpack.c.b16 %v7936, %v7936
  %v7967 = vpack.c.b16 %v7937, %v7937
  %v7997 = vsel %vm5856, %v7840, 0
  %v8000 = vsel %vm5856, %v7842, 0
  %v8003 = vsel %vm5856, %v7844, 0
  %v8006 = vsel %vm5856, %v7846, 0
  %v8009 = vsel %vm5869, %v7966, 0
  %v8012 = vsel %vm5869, %v7967, 0
  %8014 = vmatprep.subr.bf16.mxu0 %v7939
  %8015 = vmatpush1.bf16.msra.mxu0 %v7938
  %8016 = vmatprep.subr.bf16.mxu0 %v7941
  %8017 = vmatpush1.bf16.msra.mxu0 %v7940
  %8018 = vmatprep.subr.bf16.mxu0 %v7943
  %8019 = vmatpush1.bf16.msra.mxu0 %v7942
  %8020 = vmatprep.subr.bf16.mxu0 %v7945
  %8021 = vmatpush1.bf16.msra.mxu0 %v7944
  %8022 = vmatprep.subr.bf16.mxu0 %v7947
  %8023 = vmatpush1.bf16.msra.mxu0 %v7946
  %8024 = vmatprep.subr.bf16.mxu0 %v7949
  %8025 = vmatpush1.bf16.msra.mxu0 %v7948
  %8026 = vmatprep.subr.bf16.mxu0 %v7951
  %8027 = vmatpush1.bf16.msra.mxu0 %v7950
  %8028 = vmatprep.subr.bf16.mxu0 %v7953
  %8029 = vmatpush1.bf16.msra.mxu0 %v7952
  %8030 = vmatprep.subr.bf16.mxu0 %v7955
  %8031 = vmatpush1.bf16.msra.mxu0 %v7954
  %8032 = vmatprep.subr.bf16.mxu0 %v7957
  %8033 = vmatpush1.bf16.msra.mxu0 %v7956
  %8034 = vmatprep.subr.bf16.mxu0 %v7959
  %8035 = vmatpush1.bf16.msra.mxu0 %v7958
  %8036 = vmatprep.subr.bf16.mxu0 %v7961
  %8037 = vmatpush1.bf16.msra.mxu0 %v7960
  %8038 = vmatprep.subr.bf16.mxu0 %v7963
  %8039 = vmatpush1.bf16.msra.mxu0 %v7962
  %8040 = vmatprep.subr.bf16.mxu0 %v7965
  %8041 = vmatpush1.bf16.msra.mxu0 %v7964
  %8042 = vmatprep.subr.bf16.mxu0 %v8012
  %8043 = vmatpush1.bf16.msra.mxu0 %v8009
  %8044 = vmatprep.subr.bf16.mxu0 0
  %8045 = vmatpush1.bf16.msra.mxu0 0
  %8046 = vmatprep.mubr.bf16.mxu0 %v7997
  %8047 = vmatmul.mubr.bf16.gmra.mrb[0].mxu0 %v7839
  %v8048 = vpop.f32.mrb[0].mxu0
  %v8049 = vadd.f32 0.0, %v8048
  %v8050 = vpop.f32.mrb[0].mxu0
  %v8051 = vadd.f32 0.0, %v8050
  %v8052 = vpop.f32.mrb[0].mxu0
  %v8053 = vadd.f32 0.0, %v8052
  %v8054 = vpop.f32.mrb[0].mxu0
  %v8055 = vadd.f32 0.0, %v8054
  %8056 = vmatprep.mubr.bf16.mxu0 %v8000
  %8057 = vmatmul.mubr.bf16.gmra.mrb[0].mxu0 %v7841
  %v8058 = vpop.f32.mrb[0].mxu0
  %v8059 = vadd.f32 0.0, %v8058
  %v8060 = vpop.f32.mrb[0].mxu0
  %v8061 = vadd.f32 0.0, %v8060
  %v8062 = vpop.f32.mrb[0].mxu0
  %v8063 = vadd.f32 0.0, %v8062
  %v8064 = vpop.f32.mrb[0].mxu0
  %v8065 = vadd.f32 0.0, %v8064
  %8066 = vmatprep.mubr.bf16.mxu0 %v8003
  %8067 = vmatmul.mubr.bf16.gmra.mrb[0].mxu0 %v7843
  %v8068 = vpop.f32.mrb[0].mxu0
  %v8069 = vadd.f32 0.0, %v8068
  %v8070 = vpop.f32.mrb[0].mxu0
  %v8071 = vadd.f32 0.0, %v8070
  %v8072 = vpop.f32.mrb[0].mxu0
  %v8073 = vadd.f32 0.0, %v8072
  %v8074 = vpop.f32.mrb[0].mxu0
  %v8075 = vadd.f32 0.0, %v8074
  %8076 = vmatprep.mubr.bf16.mxu0 %v8006
  %8077 = vmatmul.mubr.bf16.gmra.mrb[0].mxu0 %v7845
  %v8078 = vpop.f32.mrb[0].mxu0
  %v8079 = vadd.f32 0.0, %v8078
  %v8080 = vpop.f32.mrb[0].mxu0
  %v8081 = vadd.f32 0.0, %v8080
  %v8082 = vpop.f32.mrb[0].mxu0
  %v8083 = vadd.f32 0.0, %v8082
  %v8084 = vpop.f32.mrb[0].mxu0
  %v8085 = vadd.f32 0.0, %v8084
  %8086 = vdwg.mxu0
  %v8087 = vadd.f32 %v7537, %v8049
  %v8088 = vadd.f32 %v7538, %v8051
  %v8089 = vadd.f32 %v7539, %v8053
  %v8090 = vadd.f32 %v7540, %v8055
  %v8091 = vadd.f32 %v7541, %v8059
  %v8092 = vadd.f32 %v7542, %v8061
  %v8093 = vadd.f32 %v7543, %v8063
  %v8094 = vadd.f32 %v7544, %v8065
  %v8095 = vadd.f32 %v7545, %v8069
  %v8096 = vadd.f32 %v7546, %v8071
  %v8097 = vadd.f32 %v7547, %v8073
  %v8098 = vadd.f32 %v7548, %v8075
  %v8099 = vadd.f32 %v7549, %v8079
  %v8100 = vadd.f32 %v7550, %v8081
  %v8101 = vadd.f32 %v7551, %v8083
  %v8102 = vadd.f32 %v7552, %v8085
  %v8103 = vld [vmem:[%s4] sm:$0x3]
  %v8105 = vlaneseq
  %v8106 = vshrl.u32 %v8105, 7
  %v8107 = vsub.s32 0, %v8106
  %v8108 = vrot.slane %v8103, %v8107
  %v8109 = vlaneseq
  %v8110 = vshrl.u32 %v8109, 7
  %v8111 = vsub.s32 1, %v8110
  %v8112 = vrot.slane %v8103, %v8111
  %v8115 = vadd.f32 %v8087, %v8108
  %v8116 = vadd.f32 %v8088, %v8112
  %v8117 = vadd.f32 %v8089, %v8108
  %v8118 = vadd.f32 %v8090, %v8112
  %v8119 = vadd.f32 %v8091, %v8108
  %v8120 = vadd.f32 %v8092, %v8112
  %v8121 = vadd.f32 %v8093, %v8108
  %v8122 = vadd.f32 %v8094, %v8112
  %v8123 = vadd.f32 %v8095, %v8108
  %v8124 = vadd.f32 %v8096, %v8112
  %v8125 = vadd.f32 %v8097, %v8108
  %v8126 = vadd.f32 %v8098, %v8112
  %v8127 = vadd.f32 %v8099, %v8108
  %v8128 = vadd.f32 %v8100, %v8112
  %v8129 = vadd.f32 %v8101, %v8108
  %v8130 = vadd.f32 %v8102, %v8112
  %v8147 = vcombine.low %v8115, %v8116
  %v8148 = vcombine.high %v8115, %v8116
  %v8150 = vunpack.c.l.s4 1983009808
  %v8151 = vunpack.c.0.s8 %v8150
  %v8152 = vlaneseq
  %v8153 = vshrl.u32 %v8152, 7
  %v8154 = vsub.s32 %v8151, %v8153
  %v8155 = vrot.slane %v8147, %v8154
  %v8157 = vunpack.c.l.s4 1983009808
  %v8158 = vunpack.c.0.s8 %v8157
  %v8159 = vlaneseq
  %v8160 = vshrl.u32 %v8159, 7
  %v8161 = vsub.s32 %v8158, %v8160
  %v8162 = vrot.slane %v8148, %v8161
  %v8163 = vcombine.high %v8155, %v8155
  %v8164 = vcombine.high %v8162, %v8162
  %v8165 = vcombine.low %v8117, %v8118
  %v8166 = vcombine.high %v8117, %v8118
  %v8168 = vunpack.c.l.s4 1983009808
  %v8169 = vunpack.c.0.s8 %v8168
  %v8170 = vlaneseq
  %v8171 = vshrl.u32 %v8170, 7
  %v8172 = vsub.s32 %v8169, %v8171
  %v8173 = vrot.slane %v8165, %v8172
  %v8175 = vunpack.c.l.s4 1983009808
  %v8176 = vunpack.c.0.s8 %v8175
  %v8177 = vlaneseq
  %v8178 = vshrl.u32 %v8177, 7
  %v8179 = vsub.s32 %v8176, %v8178
  %v8180 = vrot.slane %v8166, %v8179
  %v8181 = vcombine.high %v8173, %v8173
  %v8182 = vcombine.high %v8180, %v8180
  %v8183 = vcombine.low %v8119, %v8120
  %v8184 = vcombine.high %v8119, %v8120
  %v8186 = vunpack.c.l.s4 1983009808
  %v8187 = vunpack.c.0.s8 %v8186
  %v8188 = vlaneseq
  %v8189 = vshrl.u32 %v8188, 7
  %v8190 = vsub.s32 %v8187, %v8189
  %v8191 = vrot.slane %v8183, %v8190
  %v8193 = vunpack.c.l.s4 1983009808
  %v8194 = vunpack.c.0.s8 %v8193
  %v8195 = vlaneseq
  %v8196 = vshrl.u32 %v8195, 7
  %v8197 = vsub.s32 %v8194, %v8196
  %v8198 = vrot.slane %v8184, %v8197
  %v8199 = vcombine.high %v8191, %v8191
  %v8200 = vcombine.high %v8198, %v8198
  %v8201 = vcombine.low %v8121, %v8122
  %v8202 = vcombine.high %v8121, %v8122
  %v8204 = vunpack.c.l.s4 1983009808
  %v8205 = vunpack.c.0.s8 %v8204
  %v8206 = vlaneseq
  %v8207 = vshrl.u32 %v8206, 7
  %v8208 = vsub.s32 %v8205, %v8207
  %v8209 = vrot.slane %v8201, %v8208
  %v8211 = vunpack.c.l.s4 1983009808
  %v8212 = vunpack.c.0.s8 %v8211
  %v8213 = vlaneseq
  %v8214 = vshrl.u32 %v8213, 7
  %v8215 = vsub.s32 %v8212, %v8214
  %v8216 = vrot.slane %v8202, %v8215
  %v8217 = vcombine.high %v8209, %v8209
  %v8218 = vcombine.high %v8216, %v8216
  %v8219 = vcombine.low %v8123, %v8124
  %v8220 = vcombine.high %v8123, %v8124
  %v8222 = vunpack.c.l.s4 1983009808
  %v8223 = vunpack.c.0.s8 %v8222
  %v8224 = vlaneseq
  %v8225 = vshrl.u32 %v8224, 7
  %v8226 = vsub.s32 %v8223, %v8225
  %v8227 = vrot.slane %v8219, %v8226
  %v8229 = vunpack.c.l.s4 1983009808
  %v8230 = vunpack.c.0.s8 %v8229
  %v8231 = vlaneseq
  %v8232 = vshrl.u32 %v8231, 7
  %v8233 = vsub.s32 %v8230, %v8232
  %v8234 = vrot.slane %v8220, %v8233
  %v8235 = vcombine.high %v8227, %v8227
  %v8236 = vcombine.high %v8234, %v8234
  %v8237 = vcombine.low %v8125, %v8126
  %v8238 = vcombine.high %v8125, %v8126
  %v8240 = vunpack.c.l.s4 1983009808
  %v8241 = vunpack.c.0.s8 %v8240
  %v8242 = vlaneseq
  %v8243 = vshrl.u32 %v8242, 7
  %v8244 = vsub.s32 %v8241, %v8243
  %v8245 = vrot.slane %v8237, %v8244
  %v8247 = vunpack.c.l.s4 1983009808
  %v8248 = vunpack.c.0.s8 %v8247
  %v8249 = vlaneseq
  %v8250 = vshrl.u32 %v8249, 7
  %v8251 = vsub.s32 %v8248, %v8250
  %v8252 = vrot.slane %v8238, %v8251
  %v8253 = vcombine.high %v8245, %v8245
  %v8254 = vcombine.high %v8252, %v8252
  %v8255 = vcombine.low %v8127, %v8128
  %v8256 = vcombine.high %v8127, %v8128
  %v8258 = vunpack.c.l.s4 1983009808
  %v8259 = vunpack.c.0.s8 %v8258
  %v8260 = vlaneseq
  %v8261 = vshrl.u32 %v8260, 7
  %v8262 = vsub.s32 %v8259, %v8261
  %v8263 = vrot.slane %v8255, %v8262
  %v8265 = vunpack.c.l.s4 1983009808
  %v8266 = vunpack.c.0.s8 %v8265
  %v8267 = vlaneseq
  %v8268 = vshrl.u32 %v8267, 7
  %v8269 = vsub.s32 %v8266, %v8268
  %v8270 = vrot.slane %v8256, %v8269
  %v8271 = vcombine.high %v8263, %v8263
  %v8272 = vcombine.high %v8270, %v8270
  %v8273 = vcombine.low %v8129, %v8130
  %v8274 = vcombine.high %v8129, %v8130
  %v8276 = vunpack.c.l.s4 1983009808
  %v8277 = vunpack.c.0.s8 %v8276
  %v8278 = vlaneseq
  %v8279 = vshrl.u32 %v8278, 7
  %v8280 = vsub.s32 %v8277, %v8279
  %v8281 = vrot.slane %v8273, %v8280
  %v8283 = vunpack.c.l.s4 1983009808
  %v8284 = vunpack.c.0.s8 %v8283
  %v8285 = vlaneseq
  %v8286 = vshrl.u32 %v8285, 7
  %v8287 = vsub.s32 %v8284, %v8286
  %v8288 = vrot.slane %v8274, %v8287
  %v8289 = vcombine.high %v8281, %v8281
  %v8290 = vcombine.high %v8288, %v8288
  %v8323 = vrot.slane %v8155, 7
  %v8324 = vrot.slane %v8323, 2
  %v8325 = vrot.slane %v8163, 7
  %v8326 = vrot.slane %v8325, 2
  %v8327 = vrot.slane %v8162, 7
  %v8328 = vrot.slane %v8327, 2
  %v8329 = vrot.slane %v8164, 7
  %v8330 = vrot.slane %v8329, 2
  %v8331 = vrot.slane %v8173, 7
  %v8332 = vrot.slane %v8331, 2
  %v8333 = vrot.slane %v8181, 7
  %v8334 = vrot.slane %v8333, 2
  %v8335 = vrot.slane %v8180, 7
  %v8336 = vrot.slane %v8335, 2
  %v8337 = vrot.slane %v8182, 7
  %v8338 = vrot.slane %v8337, 2
  %v8339 = vrot.slane %v8191, 7
  %v8340 = vrot.slane %v8339, 2
  %v8341 = vrot.slane %v8199, 7
  %v8342 = vrot.slane %v8341, 2
  %v8343 = vrot.slane %v8198, 7
  %v8344 = vrot.slane %v8343, 2
  %v8345 = vrot.slane %v8200, 7
  %v8346 = vrot.slane %v8345, 2
  %v8347 = vrot.slane %v8209, 7
  %v8348 = vrot.slane %v8347, 2
  %v8349 = vrot.slane %v8217, 7
  %v8350 = vrot.slane %v8349, 2
  %v8351 = vrot.slane %v8216, 7
  %v8352 = vrot.slane %v8351, 2
  %v8353 = vrot.slane %v8218, 7
  %v8354 = vrot.slane %v8353, 2
  %v8355 = vrot.slane %v8227, 7
  %v8356 = vrot.slane %v8355, 2
  %v8357 = vrot.slane %v8235, 7
  %v8358 = vrot.slane %v8357, 2
  %v8359 = vrot.slane %v8234, 7
  %v8360 = vrot.slane %v8359, 2
  %v8361 = vrot.slane %v8236, 7
  %v8362 = vrot.slane %v8361, 2
  %v8363 = vrot.slane %v8245, 7
  %v8364 = vrot.slane %v8363, 2
  %v8365 = vrot.slane %v8253, 7
  %v8366 = vrot.slane %v8365, 2
  %v8367 = vrot.slane %v8252, 7
  %v8368 = vrot.slane %v8367, 2
  %v8369 = vrot.slane %v8254, 7
  %v8370 = vrot.slane %v8369, 2
  %v8371 = vrot.slane %v8263, 7
  %v8372 = vrot.slane %v8371, 2
  %v8373 = vrot.slane %v8271, 7
  %v8374 = vrot.slane %v8373, 2
  %v8375 = vrot.slane %v8270, 7
  %v8376 = vrot.slane %v8375, 2
  %v8377 = vrot.slane %v8272, 7
  %v8378 = vrot.slane %v8377, 2
  %v8379 = vrot.slane %v8281, 7
  %v8380 = vrot.slane %v8379, 2
  %v8381 = vrot.slane %v8289, 7
  %v8382 = vrot.slane %v8381, 2
  %v8383 = vrot.slane %v8288, 7
  %v8384 = vrot.slane %v8383, 2
  %v8385 = vrot.slane %v8290, 7
  %v8386 = vrot.slane %v8385, 2
  %v8419 = vmax.f32 %v8155, %v8324
  %v8420 = vmax.f32 %v8163, %v8326
  %v8421 = vmax.f32 %v8162, %v8328
  %v8422 = vmax.f32 %v8164, %v8330
  %v8423 = vmax.f32 %v8173, %v8332
  %v8424 = vmax.f32 %v8181, %v8334
  %v8425 = vmax.f32 %v8180, %v8336
  %v8426 = vmax.f32 %v8182, %v8338
  %v8427 = vmax.f32 %v8191, %v8340
  %v8428 = vmax.f32 %v8199, %v8342
  %v8429 = vmax.f32 %v8198, %v8344
  %v8430 = vmax.f32 %v8200, %v8346
  %v8431 = vmax.f32 %v8209, %v8348
  %v8432 = vmax.f32 %v8217, %v8350
  %v8433 = vmax.f32 %v8216, %v8352
  %v8434 = vmax.f32 %v8218, %v8354
  %v8435 = vmax.f32 %v8227, %v8356
  %v8436 = vmax.f32 %v8235, %v8358
  %v8437 = vmax.f32 %v8234, %v8360
  %v8438 = vmax.f32 %v8236, %v8362
  %v8439 = vmax.f32 %v8245, %v8364
  %v8440 = vmax.f32 %v8253, %v8366
  %v8441 = vmax.f32 %v8252, %v8368
  %v8442 = vmax.f32 %v8254, %v8370
  %v8443 = vmax.f32 %v8263, %v8372
  %v8444 = vmax.f32 %v8271, %v8374
  %v8445 = vmax.f32 %v8270, %v8376
  %v8446 = vmax.f32 %v8272, %v8378
  %v8447 = vmax.f32 %v8281, %v8380
  %v8448 = vmax.f32 %v8289, %v8382
  %v8449 = vmax.f32 %v8288, %v8384
  %v8450 = vmax.f32 %v8290, %v8386
  %8483 = vrot.lane.b32.xlu0 %v8419, 108
  %v8484 = vpop.permute.xlu0 %8483
  %8485 = vrot.lane.b32.xlu0 %v8420, 108
  %v8486 = vpop.permute.xlu0 %8485
  %8487 = vrot.lane.b32.xlu0 %v8421, 108
  %v8488 = vpop.permute.xlu0 %8487
  %8489 = vrot.lane.b32.xlu0 %v8422, 108
  %v8490 = vpop.permute.xlu0 %8489
  %8491 = vrot.lane.b32.xlu0 %v8423, 108
  %v8492 = vpop.permute.xlu0 %8491
  %8493 = vrot.lane.b32.xlu0 %v8424, 108
  %v8494 = vpop.permute.xlu0 %8493
  %8495 = vrot.lane.b32.xlu0 %v8425, 108
  %v8496 = vpop.permute.xlu0 %8495
  %8497 = vrot.lane.b32.xlu0 %v8426, 108
  %v8498 = vpop.permute.xlu0 %8497
  %8499 = vrot.lane.b32.xlu0 %v8427, 108
  %v8500 = vpop.permute.xlu0 %8499
  %8501 = vrot.lane.b32.xlu0 %v8428, 108
  %v8502 = vpop.permute.xlu0 %8501
  %8503 = vrot.lane.b32.xlu0 %v8429, 108
  %v8504 = vpop.permute.xlu0 %8503
  %8505 = vrot.lane.b32.xlu0 %v8430, 108
  %v8506 = vpop.permute.xlu0 %8505
  %8507 = vrot.lane.b32.xlu0 %v8431, 108
  %v8508 = vpop.permute.xlu0 %8507
  %8509 = vrot.lane.b32.xlu0 %v8432, 108
  %v8510 = vpop.permute.xlu0 %8509
  %8511 = vrot.lane.b32.xlu0 %v8433, 108
  %v8512 = vpop.permute.xlu0 %8511
  %8513 = vrot.lane.b32.xlu0 %v8434, 108
  %v8514 = vpop.permute.xlu0 %8513
  %8515 = vrot.lane.b32.xlu0 %v8435, 108
  %v8516 = vpop.permute.xlu0 %8515
  %8517 = vrot.lane.b32.xlu0 %v8436, 108
  %v8518 = vpop.permute.xlu0 %8517
  %8519 = vrot.lane.b32.xlu0 %v8437, 108
  %v8520 = vpop.permute.xlu0 %8519
  %8521 = vrot.lane.b32.xlu0 %v8438, 108
  %v8522 = vpop.permute.xlu0 %8521
  %8523 = vrot.lane.b32.xlu0 %v8439, 108
  %v8524 = vpop.permute.xlu0 %8523
  %8525 = vrot.lane.b32.xlu0 %v8440, 108
  %v8526 = vpop.permute.xlu0 %8525
  %8527 = vrot.lane.b32.xlu0 %v8441, 108
  %v8528 = vpop.permute.xlu0 %8527
  %8529 = vrot.lane.b32.xlu0 %v8442, 108
  %v8530 = vpop.permute.xlu0 %8529
  %8531 = vrot.lane.b32.xlu0 %v8443, 108
  %v8532 = vpop.permute.xlu0 %8531
  %8533 = vrot.lane.b32.xlu0 %v8444, 108
  %v8534 = vpop.permute.xlu0 %8533
  %8535 = vrot.lane.b32.xlu0 %v8445, 108
  %v8536 = vpop.permute.xlu0 %8535
  %8537 = vrot.lane.b32.xlu0 %v8446, 108
  %v8538 = vpop.permute.xlu0 %8537
  %8539 = vrot.lane.b32.xlu0 %v8447, 108
  %v8540 = vpop.permute.xlu0 %8539
  %8541 = vrot.lane.b32.xlu0 %v8448, 108
  %v8542 = vpop.permute.xlu0 %8541
  %8543 = vrot.lane.b32.xlu0 %v8449, 108
  %v8544 = vpop.permute.xlu0 %8543
  %8545 = vrot.lane.b32.xlu0 %v8450, 108
  %v8546 = vpop.permute.xlu0 %8545
  %v8547 = vrot.slane %v8484, 2
  %v8548 = vrot.slane %v8486, 2
  %v8549 = vrot.slane %v8488, 2
  %v8550 = vrot.slane %v8490, 2
  %v8551 = vrot.slane %v8492, 2
  %v8552 = vrot.slane %v8494, 2
  %v8553 = vrot.slane %v8496, 2
  %v8554 = vrot.slane %v8498, 2
  %v8555 = vrot.slane %v8500, 2
  %v8556 = vrot.slane %v8502, 2
  %v8557 = vrot.slane %v8504, 2
  %v8558 = vrot.slane %v8506, 2
  %v8559 = vrot.slane %v8508, 2
  %v8560 = vrot.slane %v8510, 2
  %v8561 = vrot.slane %v8512, 2
  %v8562 = vrot.slane %v8514, 2
  %v8563 = vrot.slane %v8516, 2
  %v8564 = vrot.slane %v8518, 2
  %v8565 = vrot.slane %v8520, 2
  %v8566 = vrot.slane %v8522, 2
  %v8567 = vrot.slane %v8524, 2
  %v8568 = vrot.slane %v8526, 2
  %v8569 = vrot.slane %v8528, 2
  %v8570 = vrot.slane %v8530, 2
  %v8571 = vrot.slane %v8532, 2
  %v8572 = vrot.slane %v8534, 2
  %v8573 = vrot.slane %v8536, 2
  %v8574 = vrot.slane %v8538, 2
  %v8575 = vrot.slane %v8540, 2
  %v8576 = vrot.slane %v8542, 2
  %v8577 = vrot.slane %v8544, 2
  %v8578 = vrot.slane %v8546, 2
  %vm8579 = vcmask 883712
  %v8580 = vsel %vm8579, %v8484, %v8547
  %v8581 = vsel %vm8579, %v8486, %v8548
  %v8582 = vsel %vm8579, %v8488, %v8549
  %v8583 = vsel %vm8579, %v8490, %v8550
  %v8584 = vsel %vm8579, %v8492, %v8551
  %v8585 = vsel %vm8579, %v8494, %v8552
  %v8586 = vsel %vm8579, %v8496, %v8553
  %v8587 = vsel %vm8579, %v8498, %v8554
  %v8588 = vsel %vm8579, %v8500, %v8555
  %v8589 = vsel %vm8579, %v8502, %v8556
  %v8590 = vsel %vm8579, %v8504, %v8557
  %v8591 = vsel %vm8579, %v8506, %v8558
  %v8592 = vsel %vm8579, %v8508, %v8559
  %v8593 = vsel %vm8579, %v8510, %v8560
  %v8594 = vsel %vm8579, %v8512, %v8561
  %v8595 = vsel %vm8579, %v8514, %v8562
  %v8596 = vsel %vm8579, %v8516, %v8563
  %v8597 = vsel %vm8579, %v8518, %v8564
  %v8598 = vsel %vm8579, %v8520, %v8565
  %v8599 = vsel %vm8579, %v8522, %v8566
  %v8600 = vsel %vm8579, %v8524, %v8567
  %v8601 = vsel %vm8579, %v8526, %v8568
  %v8602 = vsel %vm8579, %v8528, %v8569
  %v8603 = vsel %vm8579, %v8530, %v8570
  %v8604 = vsel %vm8579, %v8532, %v8571
  %v8605 = vsel %vm8579, %v8534, %v8572
  %v8606 = vsel %vm8579, %v8536, %v8573
  %v8607 = vsel %vm8579, %v8538, %v8574
  %v8608 = vsel %vm8579, %v8540, %v8575
  %v8609 = vsel %vm8579, %v8542, %v8576
  %v8610 = vsel %vm8579, %v8544, %v8577
  %v8611 = vsel %vm8579, %v8546, %v8578
  %v8644 = vmax.f32 %v8419, %v8580
  %v8645 = vmax.f32 %v8420, %v8581
  %v8646 = vmax.f32 %v8421, %v8582
  %v8647 = vmax.f32 %v8422, %v8583
  %v8648 = vmax.f32 %v8423, %v8584
  %v8649 = vmax.f32 %v8424, %v8585
  %v8650 = vmax.f32 %v8425, %v8586
  %v8651 = vmax.f32 %v8426, %v8587
  %v8652 = vmax.f32 %v8427, %v8588
  %v8653 = vmax.f32 %v8428, %v8589
  %v8654 = vmax.f32 %v8429, %v8590
  %v8655 = vmax.f32 %v8430, %v8591
  %v8656 = vmax.f32 %v8431, %v8592
  %v8657 = vmax.f32 %v8432, %v8593
  %v8658 = vmax.f32 %v8433, %v8594
  %v8659 = vmax.f32 %v8434, %v8595
  %v8660 = vmax.f32 %v8435, %v8596
  %v8661 = vmax.f32 %v8436, %v8597
  %v8662 = vmax.f32 %v8437, %v8598
  %v8663 = vmax.f32 %v8438, %v8599
  %v8664 = vmax.f32 %v8439, %v8600
  %v8665 = vmax.f32 %v8440, %v8601
  %v8666 = vmax.f32 %v8441, %v8602
  %v8667 = vmax.f32 %v8442, %v8603
  %v8668 = vmax.f32 %v8443, %v8604
  %v8669 = vmax.f32 %v8444, %v8605
  %v8670 = vmax.f32 %v8445, %v8606
  %v8671 = vmax.f32 %v8446, %v8607
  %v8672 = vmax.f32 %v8447, %v8608
  %v8673 = vmax.f32 %v8448, %v8609
  %v8674 = vmax.f32 %v8449, %v8610
  %v8675 = vmax.f32 %v8450, %v8611
  %v8676 = vmax.f32 %v8644, 0.0
  %v8677 = vmax.f32 %v8645, 0.0
  %v8678 = vmax.f32 %v8646, 0.0
  %v8679 = vmax.f32 %v8647, 0.0
  %v8680 = vmax.f32 %v8648, 0.0
  %v8681 = vmax.f32 %v8649, 0.0
  %v8682 = vmax.f32 %v8650, 0.0
  %v8683 = vmax.f32 %v8651, 0.0
  %v8684 = vmax.f32 %v8652, 0.0
  %v8685 = vmax.f32 %v8653, 0.0
  %v8686 = vmax.f32 %v8654, 0.0
  %v8687 = vmax.f32 %v8655, 0.0
  %v8688 = vmax.f32 %v8656, 0.0
  %v8689 = vmax.f32 %v8657, 0.0
  %v8690 = vmax.f32 %v8658, 0.0
  %v8691 = vmax.f32 %v8659, 0.0
  %v8692 = vmax.f32 %v8660, 0.0
  %v8693 = vmax.f32 %v8661, 0.0
  %v8694 = vmax.f32 %v8662, 0.0
  %v8695 = vmax.f32 %v8663, 0.0
  %v8696 = vmax.f32 %v8664, 0.0
  %v8697 = vmax.f32 %v8665, 0.0
  %v8698 = vmax.f32 %v8666, 0.0
  %v8699 = vmax.f32 %v8667, 0.0
  %v8700 = vmax.f32 %v8668, 0.0
  %v8701 = vmax.f32 %v8669, 0.0
  %v8702 = vmax.f32 %v8670, 0.0
  %v8703 = vmax.f32 %v8671, 0.0
  %v8704 = vmax.f32 %v8672, 0.0
  %v8705 = vmax.f32 %v8673, 0.0
  %v8706 = vmax.f32 %v8674, 0.0
  %v8707 = vmax.f32 %v8675, 0.0
  %v8740 = vlaneseq
  %v8741 = vshrl.u32 %v8740, 7
  %v8742 = vsub.s32 0, %v8741
  %v8743 = vrot.slane %v8676, %v8742
  %v8744 = vlaneseq
  %v8745 = vshrl.u32 %v8744, 7
  %v8746 = vsub.s32 2, %v8745
  %v8747 = vrot.slane %v8676, %v8746
  %v8748 = vlaneseq
  %v8749 = vshrl.u32 %v8748, 7
  %v8750 = vsub.s32 0, %v8749
  %v8751 = vrot.slane %v8677, %v8750
  %v8752 = vlaneseq
  %v8753 = vshrl.u32 %v8752, 7
  %v8754 = vsub.s32 2, %v8753
  %v8755 = vrot.slane %v8677, %v8754
  %v8756 = vlaneseq
  %v8757 = vshrl.u32 %v8756, 7
  %v8758 = vsub.s32 0, %v8757
  %v8759 = vrot.slane %v8678, %v8758
  %v8760 = vlaneseq
  %v8761 = vshrl.u32 %v8760, 7
  %v8762 = vsub.s32 2, %v8761
  %v8763 = vrot.slane %v8678, %v8762
  %v8764 = vlaneseq
  %v8765 = vshrl.u32 %v8764, 7
  %v8766 = vsub.s32 0, %v8765
  %v8767 = vrot.slane %v8679, %v8766
  %v8768 = vlaneseq
  %v8769 = vshrl.u32 %v8768, 7
  %v8770 = vsub.s32 2, %v8769
  %v8771 = vrot.slane %v8679, %v8770
  %v8772 = vlaneseq
  %v8773 = vshrl.u32 %v8772, 7
  %v8774 = vsub.s32 0, %v8773
  %v8775 = vrot.slane %v8680, %v8774
  %v8776 = vlaneseq
  %v8777 = vshrl.u32 %v8776, 7
  %v8778 = vsub.s32 2, %v8777
  %v8779 = vrot.slane %v8680, %v8778
  %v8780 = vlaneseq
  %v8781 = vshrl.u32 %v8780, 7
  %v8782 = vsub.s32 0, %v8781
  %v8783 = vrot.slane %v8681, %v8782
  %v8784 = vlaneseq
  %v8785 = vshrl.u32 %v8784, 7
  %v8786 = vsub.s32 2, %v8785
  %v8787 = vrot.slane %v8681, %v8786
  %v8788 = vlaneseq
  %v8789 = vshrl.u32 %v8788, 7
  %v8790 = vsub.s32 0, %v8789
  %v8791 = vrot.slane %v8682, %v8790
  %v8792 = vlaneseq
  %v8793 = vshrl.u32 %v8792, 7
  %v8794 = vsub.s32 2, %v8793
  %v8795 = vrot.slane %v8682, %v8794
  %v8796 = vlaneseq
  %v8797 = vshrl.u32 %v8796, 7
  %v8798 = vsub.s32 0, %v8797
  %v8799 = vrot.slane %v8683, %v8798
  %v8800 = vlaneseq
  %v8801 = vshrl.u32 %v8800, 7
  %v8802 = vsub.s32 2, %v8801
  %v8803 = vrot.slane %v8683, %v8802
  %v8804 = vlaneseq
  %v8805 = vshrl.u32 %v8804, 7
  %v8806 = vsub.s32 0, %v8805
  %v8807 = vrot.slane %v8684, %v8806
  %v8808 = vlaneseq
  %v8809 = vshrl.u32 %v8808, 7
  %v8810 = vsub.s32 2, %v8809
  %v8811 = vrot.slane %v8684, %v8810
  %v8812 = vlaneseq
  %v8813 = vshrl.u32 %v8812, 7
  %v8814 = vsub.s32 0, %v8813
  %v8815 = vrot.slane %v8685, %v8814
  %v8816 = vlaneseq
  %v8817 = vshrl.u32 %v8816, 7
  %v8818 = vsub.s32 2, %v8817
  %v8819 = vrot.slane %v8685, %v8818
  %v8820 = vlaneseq
  %v8821 = vshrl.u32 %v8820, 7
  %v8822 = vsub.s32 0, %v8821
  %v8823 = vrot.slane %v8686, %v8822
  %v8824 = vlaneseq
  %v8825 = vshrl.u32 %v8824, 7
  %v8826 = vsub.s32 2, %v8825
  %v8827 = vrot.slane %v8686, %v8826
  %v8828 = vlaneseq
  %v8829 = vshrl.u32 %v8828, 7
  %v8830 = vsub.s32 0, %v8829
  %v8831 = vrot.slane %v8687, %v8830
  %v8832 = vlaneseq
  %v8833 = vshrl.u32 %v8832, 7
  %v8834 = vsub.s32 2, %v8833
  %v8835 = vrot.slane %v8687, %v8834
  %v8836 = vlaneseq
  %v8837 = vshrl.u32 %v8836, 7
  %v8838 = vsub.s32 0, %v8837
  %v8839 = vrot.slane %v8688, %v8838
  %v8840 = vlaneseq
  %v8841 = vshrl.u32 %v8840, 7
  %v8842 = vsub.s32 2, %v8841
  %v8843 = vrot.slane %v8688, %v8842
  %v8844 = vlaneseq
  %v8845 = vshrl.u32 %v8844, 7
  %v8846 = vsub.s32 0, %v8845
  %v8847 = vrot.slane %v8689, %v8846
  %v8848 = vlaneseq
  %v8849 = vshrl.u32 %v8848, 7
  %v8850 = vsub.s32 2, %v8849
  %v8851 = vrot.slane %v8689, %v8850
  %v8852 = vlaneseq
  %v8853 = vshrl.u32 %v8852, 7
  %v8854 = vsub.s32 0, %v8853
  %v8855 = vrot.slane %v8690, %v8854
  %v8856 = vlaneseq
  %v8857 = vshrl.u32 %v8856, 7
  %v8858 = vsub.s32 2, %v8857
  %v8859 = vrot.slane %v8690, %v8858
  %v8860 = vlaneseq
  %v8861 = vshrl.u32 %v8860, 7
  %v8862 = vsub.s32 0, %v8861
  %v8863 = vrot.slane %v8691, %v8862
  %v8864 = vlaneseq
  %v8865 = vshrl.u32 %v8864, 7
  %v8866 = vsub.s32 2, %v8865
  %v8867 = vrot.slane %v8691, %v8866
  %v8868 = vlaneseq
  %v8869 = vshrl.u32 %v8868, 7
  %v8870 = vsub.s32 0, %v8869
  %v8871 = vrot.slane %v8692, %v8870
  %v8872 = vlaneseq
  %v8873 = vshrl.u32 %v8872, 7
  %v8874 = vsub.s32 2, %v8873
  %v8875 = vrot.slane %v8692, %v8874
  %v8876 = vlaneseq
  %v8877 = vshrl.u32 %v8876, 7
  %v8878 = vsub.s32 0, %v8877
  %v8879 = vrot.slane %v8693, %v8878
  %v8880 = vlaneseq
  %v8881 = vshrl.u32 %v8880, 7
  %v8882 = vsub.s32 2, %v8881
  %v8883 = vrot.slane %v8693, %v8882
  %v8884 = vlaneseq
  %v8885 = vshrl.u32 %v8884, 7
  %v8886 = vsub.s32 0, %v8885
  %v8887 = vrot.slane %v8694, %v8886
  %v8888 = vlaneseq
  %v8889 = vshrl.u32 %v8888, 7
  %v8890 = vsub.s32 2, %v8889
  %v8891 = vrot.slane %v8694, %v8890
  %v8892 = vlaneseq
  %v8893 = vshrl.u32 %v8892, 7
  %v8894 = vsub.s32 0, %v8893
  %v8895 = vrot.slane %v8695, %v8894
  %v8896 = vlaneseq
  %v8897 = vshrl.u32 %v8896, 7
  %v8898 = vsub.s32 2, %v8897
  %v8899 = vrot.slane %v8695, %v8898
  %v8900 = vlaneseq
  %v8901 = vshrl.u32 %v8900, 7
  %v8902 = vsub.s32 0, %v8901
  %v8903 = vrot.slane %v8696, %v8902
  %v8904 = vlaneseq
  %v8905 = vshrl.u32 %v8904, 7
  %v8906 = vsub.s32 2, %v8905
  %v8907 = vrot.slane %v8696, %v8906
  %v8908 = vlaneseq
  %v8909 = vshrl.u32 %v8908, 7
  %v8910 = vsub.s32 0, %v8909
  %v8911 = vrot.slane %v8697, %v8910
  %v8912 = vlaneseq
  %v8913 = vshrl.u32 %v8912, 7
  %v8914 = vsub.s32 2, %v8913
  %v8915 = vrot.slane %v8697, %v8914
  %v8916 = vlaneseq
  %v8917 = vshrl.u32 %v8916, 7
  %v8918 = vsub.s32 0, %v8917
  %v8919 = vrot.slane %v8698, %v8918
  %v8920 = vlaneseq
  %v8921 = vshrl.u32 %v8920, 7
  %v8922 = vsub.s32 2, %v8921
  %v8923 = vrot.slane %v8698, %v8922
  %v8924 = vlaneseq
  %v8925 = vshrl.u32 %v8924, 7
  %v8926 = vsub.s32 0, %v8925
  %v8927 = vrot.slane %v8699, %v8926
  %v8928 = vlaneseq
  %v8929 = vshrl.u32 %v8928, 7
  %v8930 = vsub.s32 2, %v8929
  %v8931 = vrot.slane %v8699, %v8930
  %v8932 = vlaneseq
  %v8933 = vshrl.u32 %v8932, 7
  %v8934 = vsub.s32 0, %v8933
  %v8935 = vrot.slane %v8700, %v8934
  %v8936 = vlaneseq
  %v8937 = vshrl.u32 %v8936, 7
  %v8938 = vsub.s32 2, %v8937
  %v8939 = vrot.slane %v8700, %v8938
  %v8940 = vlaneseq
  %v8941 = vshrl.u32 %v8940, 7
  %v8942 = vsub.s32 0, %v8941
  %v8943 = vrot.slane %v8701, %v8942
  %v8944 = vlaneseq
  %v8945 = vshrl.u32 %v8944, 7
  %v8946 = vsub.s32 2, %v8945
  %v8947 = vrot.slane %v8701, %v8946
  %v8948 = vlaneseq
  %v8949 = vshrl.u32 %v8948, 7
  %v8950 = vsub.s32 0, %v8949
  %v8951 = vrot.slane %v8702, %v8950
  %v8952 = vlaneseq
  %v8953 = vshrl.u32 %v8952, 7
  %v8954 = vsub.s32 2, %v8953
  %v8955 = vrot.slane %v8702, %v8954
  %v8956 = vlaneseq
  %v8957 = vshrl.u32 %v8956, 7
  %v8958 = vsub.s32 0, %v8957
  %v8959 = vrot.slane %v8703, %v8958
  %v8960 = vlaneseq
  %v8961 = vshrl.u32 %v8960, 7
  %v8962 = vsub.s32 2, %v8961
  %v8963 = vrot.slane %v8703, %v8962
  %v8964 = vlaneseq
  %v8965 = vshrl.u32 %v8964, 7
  %v8966 = vsub.s32 0, %v8965
  %v8967 = vrot.slane %v8704, %v8966
  %v8968 = vlaneseq
  %v8969 = vshrl.u32 %v8968, 7
  %v8970 = vsub.s32 2, %v8969
  %v8971 = vrot.slane %v8704, %v8970
  %v8972 = vlaneseq
  %v8973 = vshrl.u32 %v8972, 7
  %v8974 = vsub.s32 0, %v8973
  %v8975 = vrot.slane %v8705, %v8974
  %v8976 = vlaneseq
  %v8977 = vshrl.u32 %v8976, 7
  %v8978 = vsub.s32 2, %v8977
  %v8979 = vrot.slane %v8705, %v8978
  %v8980 = vlaneseq
  %v8981 = vshrl.u32 %v8980, 7
  %v8982 = vsub.s32 0, %v8981
  %v8983 = vrot.slane %v8706, %v8982
  %v8984 = vlaneseq
  %v8985 = vshrl.u32 %v8984, 7
  %v8986 = vsub.s32 2, %v8985
  %v8987 = vrot.slane %v8706, %v8986
  %v8988 = vlaneseq
  %v8989 = vshrl.u32 %v8988, 7
  %v8990 = vsub.s32 0, %v8989
  %v8991 = vrot.slane %v8707, %v8990
  %v8992 = vlaneseq
  %v8993 = vshrl.u32 %v8992, 7
  %v8994 = vsub.s32 2, %v8993
  %v8995 = vrot.slane %v8707, %v8994
  %v9060 = vpack.c.bf16 %v8743, %v8743
  %v9061 = vpack.c.bf16 %v8747, %v8747
  %v9062 = vpack.c.bf16 %v8751, %v8751
  %v9063 = vpack.c.bf16 %v8755, %v8755
  %v9064 = vpack.c.bf16 %v8759, %v8759
  %v9065 = vpack.c.bf16 %v8763, %v8763
  %v9066 = vpack.c.bf16 %v8767, %v8767
  %v9067 = vpack.c.bf16 %v8771, %v8771
  %v9068 = vpack.c.bf16 %v8775, %v8775
  %v9069 = vpack.c.bf16 %v8779, %v8779
  %v9070 = vpack.c.bf16 %v8783, %v8783
  %v9071 = vpack.c.bf16 %v8787, %v8787
  %v9072 = vpack.c.bf16 %v8791, %v8791
  %v9073 = vpack.c.bf16 %v8795, %v8795
  %v9074 = vpack.c.bf16 %v8799, %v8799
  %v9075 = vpack.c.bf16 %v8803, %v8803
  %v9076 = vpack.c.bf16 %v8807, %v8807
  %v9077 = vpack.c.bf16 %v8811, %v8811
  %v9078 = vpack.c.bf16 %v8815, %v8815
  %v9079 = vpack.c.bf16 %v8819, %v8819
  %v9080 = vpack.c.bf16 %v8823, %v8823
  %v9081 = vpack.c.bf16 %v8827, %v8827
  %v9082 = vpack.c.bf16 %v8831, %v8831
  %v9083 = vpack.c.bf16 %v8835, %v8835
  %v9084 = vpack.c.bf16 %v8839, %v8839
  %v9085 = vpack.c.bf16 %v8843, %v8843
  %v9086 = vpack.c.bf16 %v8847, %v8847
  %v9087 = vpack.c.bf16 %v8851, %v8851
  %v9088 = vpack.c.bf16 %v8855, %v8855
  %v9089 = vpack.c.bf16 %v8859, %v8859
  %v9090 = vpack.c.bf16 %v8863, %v8863
  %v9091 = vpack.c.bf16 %v8867, %v8867
  %v9092 = vpack.c.bf16 %v8871, %v8871
  %v9093 = vpack.c.bf16 %v8875, %v8875
  %v9094 = vpack.c.bf16 %v8879, %v8879
  %v9095 = vpack.c.bf16 %v8883, %v8883
  %v9096 = vpack.c.bf16 %v8887, %v8887
  %v9097 = vpack.c.bf16 %v8891, %v8891
  %v9098 = vpack.c.bf16 %v8895, %v8895
  %v9099 = vpack.c.bf16 %v8899, %v8899
  %v9100 = vpack.c.bf16 %v8903, %v8903
  %v9101 = vpack.c.bf16 %v8907, %v8907
  %v9102 = vpack.c.bf16 %v8911, %v8911
  %v9103 = vpack.c.bf16 %v8915, %v8915
  %v9104 = vpack.c.bf16 %v8919, %v8919
  %v9105 = vpack.c.bf16 %v8923, %v8923
  %v9106 = vpack.c.bf16 %v8927, %v8927
  %v9107 = vpack.c.bf16 %v8931, %v8931
  %v9108 = vpack.c.bf16 %v8935, %v8935
  %v9109 = vpack.c.bf16 %v8939, %v8939
  %v9110 = vpack.c.bf16 %v8943, %v8943
  %v9111 = vpack.c.bf16 %v8947, %v8947
  %v9112 = vpack.c.bf16 %v8951, %v8951
  %v9113 = vpack.c.bf16 %v8955, %v8955
  %v9114 = vpack.c.bf16 %v8959, %v8959
  %v9115 = vpack.c.bf16 %v8963, %v8963
  %v9116 = vpack.c.bf16 %v8967, %v8967
  %v9117 = vpack.c.bf16 %v8971, %v8971
  %v9118 = vpack.c.bf16 %v8975, %v8975
  %v9119 = vpack.c.bf16 %v8979, %v8979
  %v9120 = vpack.c.bf16 %v8983, %v8983
  %v9121 = vpack.c.bf16 %v8987, %v8987
  %v9122 = vpack.c.bf16 %v8991, %v8991
  %v9123 = vpack.c.bf16 %v8995, %v8995
  %v9124 = vld [vmem:[%s5] sm:$0xf]
  %v9125 = vld [vmem:[%s5 + $0x4] sm:$0xf]
  %v9126 = vld [vmem:[%s5 + $0x8] sm:$0xf]
  %v9127 = vld [vmem:[%s5 + $0xc] sm:$0xf]
  %v9128 = vld [vmem:[%s5 + $0x10] sm:$0xf]
  %v9129 = vld [vmem:[%s5 + $0x14] sm:$0xf]
  %v9130 = vld [vmem:[%s5 + $0x18] sm:$0xf]
  %v9131 = vld [vmem:[%s5 + $0x1c] sm:$0xf]
  %v9132 = vld [vmem:[%s5 + $0x20] sm:$0xf]
  %v9133 = vld [vmem:[%s5 + $0x24] sm:$0xf]
  %v9134 = vld [vmem:[%s5 + $0x28] sm:$0xf]
  %v9135 = vld [vmem:[%s5 + $0x2c] sm:$0xf]
  %v9136 = vld [vmem:[%s5 + $0x30] sm:$0xf]
  %v9137 = vld [vmem:[%s5 + $0x34] sm:$0xf]
  %v9138 = vld [vmem:[%s5 + $0x38] sm:$0xf]
  %v9139 = vld [vmem:[%s5 + $0x3c] sm:$0xf]
  %v9140 = vld [vmem:[%s5 + $0x40] sm:$0xf]
  %v9141 = vld [vmem:[%s5 + $0x44] sm:$0x3]
  %s9142 = scalar_lea.vmem %s5, 72
  %v9143 = vld [vmem:[%s9142] sm:$0xf]
  %v9144 = vld [vmem:[%s9142 + $0x4] sm:$0xf]
  %v9145 = vld [vmem:[%s9142 + $0x8] sm:$0xf]
  %v9146 = vld [vmem:[%s9142 + $0xc] sm:$0xf]
  %v9147 = vld [vmem:[%s9142 + $0x10] sm:$0xf]
  %v9148 = vld [vmem:[%s9142 + $0x14] sm:$0xf]
  %v9149 = vld [vmem:[%s9142 + $0x18] sm:$0xf]
  %v9150 = vld [vmem:[%s9142 + $0x1c] sm:$0xf]
  %v9151 = vld [vmem:[%s9142 + $0x20] sm:$0xf]
  %v9152 = vld [vmem:[%s9142 + $0x24] sm:$0xf]
  %v9153 = vld [vmem:[%s9142 + $0x28] sm:$0xf]
  %v9154 = vld [vmem:[%s9142 + $0x2c] sm:$0xf]
  %v9155 = vld [vmem:[%s9142 + $0x30] sm:$0xf]
  %v9156 = vld [vmem:[%s9142 + $0x34] sm:$0xf]
  %v9157 = vld [vmem:[%s9142 + $0x38] sm:$0xf]
  %v9158 = vld [vmem:[%s9142 + $0x3c] sm:$0xf]
  %v9159 = vld [vmem:[%s9142 + $0x40] sm:$0xf]
  %v9160 = vld [vmem:[%s9142 + $0x44] sm:$0x3]
  %v9177 = vunpack.c.l.b16 %v9062
  %v9178 = vunpack.c.l.b16 %v9063
  %v9179 = vunpack.c.l.b16 %v9070
  %v9180 = vunpack.c.l.b16 %v9071
  %v9181 = vunpack.c.l.b16 %v9078
  %v9182 = vunpack.c.l.b16 %v9079
  %v9183 = vunpack.c.l.b16 %v9086
  %v9184 = vunpack.c.l.b16 %v9087
  %v9185 = vunpack.c.l.b16 %v9094
  %v9186 = vunpack.c.l.b16 %v9095
  %v9187 = vunpack.c.l.b16 %v9102
  %v9188 = vunpack.c.l.b16 %v9103
  %v9189 = vunpack.c.l.b16 %v9110
  %v9190 = vunpack.c.l.b16 %v9111
  %v9191 = vunpack.c.l.b16 %v9118
  %v9192 = vunpack.c.l.b16 %v9119
  %v9193 = vrot.slane %v9179, 7
  %v9194 = vsel %vm5469, %v9193, %v9177
  %v9195 = vrot.slane %v9181, 6
  %v9196 = vsel %vm5472, %v9195, %v9194
  %v9197 = vrot.slane %v9183, 5
  %v9198 = vsel %vm5475, %v9197, %v9196
  %v9199 = vrot.slane %v9185, 4
  %v9200 = vsel %vm5478, %v9199, %v9198
  %v9201 = vrot.slane %v9187, 3
  %v9202 = vsel %vm5481, %v9201, %v9200
  %v9203 = vrot.slane %v9189, 2
  %v9204 = vsel %vm5484, %v9203, %v9202
  %v9205 = vrot.slane %v9191, 1
  %v9206 = vsel %vm5487, %v9205, %v9204
  %v9207 = vrot.slane %v9180, 7
  %v9208 = vsel %vm5469, %v9207, %v9178
  %v9209 = vrot.slane %v9182, 6
  %v9210 = vsel %vm5472, %v9209, %v9208
  %v9211 = vrot.slane %v9184, 5
  %v9212 = vsel %vm5475, %v9211, %v9210
  %v9213 = vrot.slane %v9186, 4
  %v9214 = vsel %vm5478, %v9213, %v9212
  %v9215 = vrot.slane %v9188, 3
  %v9216 = vsel %vm5481, %v9215, %v9214
  %v9217 = vrot.slane %v9190, 2
  %v9218 = vsel %vm5484, %v9217, %v9216
  %v9219 = vrot.slane %v9192, 1
  %v9220 = vsel %vm5487, %v9219, %v9218
  %v9221 = vpack.c.b16 %v9206, %v9206
  %v9222 = vpack.c.b16 %v9220, %v9220
  %v9242 = vunpack.c.l.b16 %v9143
  %v9243 = vunpack.c.l.b16 %v9144
  %v9244 = vunpack.c.l.b16 %v9145
  %v9245 = vunpack.c.l.b16 %v9146
  %v9246 = vunpack.c.l.b16 %v9147
  %v9247 = vunpack.c.l.b16 %v9148
  %v9248 = vunpack.c.l.b16 %v9149
  %v9249 = vunpack.c.l.b16 %v9150
  %v9250 = vunpack.c.l.b16 %v9151
  %v9251 = vunpack.c.l.b16 %v9152
  %v9252 = vunpack.c.l.b16 %v9153
  %v9253 = vunpack.c.l.b16 %v9154
  %v9254 = vunpack.c.l.b16 %v9155
  %v9255 = vunpack.c.l.b16 %v9156
  %v9256 = vunpack.c.l.b16 %v9157
  %v9257 = vunpack.c.l.b16 %v9158
  %v9258 = vunpack.c.l.b16 %v9159
  %v9259 = vunpack.c.l.b16 %v9160
  %v9260 = vpack.c.b16 %v9243, %v9242
  %v9261 = vpack.c.b16 %v9245, %v9244
  %v9262 = vpack.c.b16 %v9247, %v9246
  %v9263 = vpack.c.b16 %v9249, %v9248
  %v9264 = vpack.c.b16 %v9251, %v9250
  %v9265 = vpack.c.b16 %v9253, %v9252
  %v9266 = vpack.c.b16 %v9255, %v9254
  %v9267 = vpack.c.b16 %v9257, %v9256
  %v9268 = vpack.c.b16 %v9259, %v9258
  %vm9277 = vcmask 97280
  %v9279 = vsel %vm9277, %v9222, 0
  %v9282 = vsel %vm440, %v9268, 0
  %9284 = vmatprep.subr.bf16.mxu0 0
  %9285 = vmatpush1.bf16.msra.mxu0 %v9260
  %9286 = vmatprep.subr.bf16.mxu0 0
  %9287 = vmatpush1.bf16.msra.mxu0 %v9261
  %9288 = vmatprep.subr.bf16.mxu0 0
  %9289 = vmatpush1.bf16.msra.mxu0 %v9262
  %9290 = vmatprep.subr.bf16.mxu0 0
  %9291 = vmatpush1.bf16.msra.mxu0 %v9263
  %9292 = vmatprep.subr.bf16.mxu0 0
  %9293 = vmatpush1.bf16.msra.mxu0 %v9264
  %9294 = vmatprep.subr.bf16.mxu0 0
  %9295 = vmatpush1.bf16.msra.mxu0 %v9265
  %9296 = vmatprep.subr.bf16.mxu0 0
  %9297 = vmatpush1.bf16.msra.mxu0 %v9266
  %9298 = vmatprep.subr.bf16.mxu0 0
  %9299 = vmatpush1.bf16.msra.mxu0 %v9267
  %9300 = vmatprep.subr.bf16.mxu0 0
  %9301 = vmatpush1.bf16.msra.mxu0 %v9282
  %9302 = vmatprep.subr.bf16.mxu0 0
  %9303 = vmatpush1.bf16.msra.mxu0 0
  %9304 = vmatprep.subr.bf16.mxu0 0
  %9305 = vmatpush1.bf16.msra.mxu0 0
  %9306 = vmatprep.subr.bf16.mxu0 0
  %9307 = vmatpush1.bf16.msra.mxu0 0
  %9308 = vmatprep.subr.bf16.mxu0 0
  %9309 = vmatpush1.bf16.msra.mxu0 0
  %9310 = vmatprep.subr.bf16.mxu0 0
  %9311 = vmatpush1.bf16.msra.mxu0 0
  %9312 = vmatprep.subr.bf16.mxu0 0
  %9313 = vmatpush1.bf16.msra.mxu0 0
  %9314 = vmatprep.subr.bf16.mxu0 0
  %9315 = vmatpush1.bf16.msra.mxu0 0
  %9316 = vmatprep.mubr.bf16.mxu0 %v9279
  %9317 = vmatmul.mubr.bf16.gmra.mrb[0].mxu0 %v9221
  %v9318 = vpop.f32.mrb[0].mxu0
  %v9319 = vadd.f32 0.0, %v9318
  %v9320 = vpop.f32.mrb[0].mxu0
  %v9321 = vpop.f32.mrb[0].mxu0
  %v9322 = vpop.f32.mrb[0].mxu0
  %9323 = vdwg.mxu0
  %v9340 = vunpack.c.l.b16 %v9060
  %v9341 = vunpack.c.l.b16 %v9061
  %v9342 = vunpack.c.l.b16 %v9068
  %v9343 = vunpack.c.l.b16 %v9069
  %v9344 = vunpack.c.l.b16 %v9076
  %v9345 = vunpack.c.l.b16 %v9077
  %v9346 = vunpack.c.l.b16 %v9084
  %v9347 = vunpack.c.l.b16 %v9085
  %v9348 = vunpack.c.l.b16 %v9092
  %v9349 = vunpack.c.l.b16 %v9093
  %v9350 = vunpack.c.l.b16 %v9100
  %v9351 = vunpack.c.l.b16 %v9101
  %v9352 = vunpack.c.l.b16 %v9108
  %v9353 = vunpack.c.l.b16 %v9109
  %v9354 = vunpack.c.l.b16 %v9116
  %v9355 = vunpack.c.l.b16 %v9117
  %v9356 = vrot.slane %v9342, 7
  %v9357 = vsel %vm5469, %v9356, %v9340
  %v9358 = vrot.slane %v9344, 6
  %v9359 = vsel %vm5472, %v9358, %v9357
  %v9360 = vrot.slane %v9346, 5
  %v9361 = vsel %vm5475, %v9360, %v9359
  %v9362 = vrot.slane %v9348, 4
  %v9363 = vsel %vm5478, %v9362, %v9361
  %v9364 = vrot.slane %v9350, 3
  %v9365 = vsel %vm5481, %v9364, %v9363
  %v9366 = vrot.slane %v9352, 2
  %v9367 = vsel %vm5484, %v9366, %v9365
  %v9368 = vrot.slane %v9354, 1
  %v9369 = vsel %vm5487, %v9368, %v9367
  %v9370 = vrot.slane %v9343, 7
  %v9371 = vsel %vm5469, %v9370, %v9341
  %v9372 = vrot.slane %v9345, 6
  %v9373 = vsel %vm5472, %v9372, %v9371
  %v9374 = vrot.slane %v9347, 5
  %v9375 = vsel %vm5475, %v9374, %v9373
  %v9376 = vrot.slane %v9349, 4
  %v9377 = vsel %vm5478, %v9376, %v9375
  %v9378 = vrot.slane %v9351, 3
  %v9379 = vsel %vm5481, %v9378, %v9377
  %v9380 = vrot.slane %v9353, 2
  %v9381 = vsel %vm5484, %v9380, %v9379
  %v9382 = vrot.slane %v9355, 1
  %v9383 = vsel %vm5487, %v9382, %v9381
  %v9384 = vpack.c.b16 %v9369, %v9369
  %v9385 = vpack.c.b16 %v9383, %v9383
  %v9405 = vunpack.c.l.b16 %v9124
  %v9406 = vunpack.c.l.b16 %v9125
  %v9407 = vunpack.c.l.b16 %v9126
  %v9408 = vunpack.c.l.b16 %v9127
  %v9409 = vunpack.c.l.b16 %v9128
  %v9410 = vunpack.c.l.b16 %v9129
  %v9411 = vunpack.c.l.b16 %v9130
  %v9412 = vunpack.c.l.b16 %v9131
  %v9413 = vunpack.c.l.b16 %v9132
  %v9414 = vunpack.c.l.b16 %v9133
  %v9415 = vunpack.c.l.b16 %v9134
  %v9416 = vunpack.c.l.b16 %v9135
  %v9417 = vunpack.c.l.b16 %v9136
  %v9418 = vunpack.c.l.b16 %v9137
  %v9419 = vunpack.c.l.b16 %v9138
  %v9420 = vunpack.c.l.b16 %v9139
  %v9421 = vunpack.c.l.b16 %v9140
  %v9422 = vunpack.c.l.b16 %v9141
  %v9423 = vpack.c.b16 %v9406, %v9405
  %v9424 = vpack.c.b16 %v9408, %v9407
  %v9425 = vpack.c.b16 %v9410, %v9409
  %v9426 = vpack.c.b16 %v9412, %v9411
  %v9427 = vpack.c.b16 %v9414, %v9413
  %v9428 = vpack.c.b16 %v9416, %v9415
  %v9429 = vpack.c.b16 %v9418, %v9417
  %v9430 = vpack.c.b16 %v9420, %v9419
  %v9431 = vpack.c.b16 %v9422, %v9421
  %v9441 = vsel %vm9277, %v9385, 0
  %v9444 = vsel %vm440, %v9431, 0
  %9446 = vmatprep.subr.bf16.mxu0 0
  %9447 = vmatpush1.bf16.msra.mxu0 %v9423
  %9448 = vmatprep.subr.bf16.mxu0 0
  %9449 = vmatpush1.bf16.msra.mxu0 %v9424
  %9450 = vmatprep.subr.bf16.mxu0 0
  %9451 = vmatpush1.bf16.msra.mxu0 %v9425
  %9452 = vmatprep.subr.bf16.mxu0 0
  %9453 = vmatpush1.bf16.msra.mxu0 %v9426
  %9454 = vmatprep.subr.bf16.mxu0 0
  %9455 = vmatpush1.bf16.msra.mxu0 %v9427
  %9456 = vmatprep.subr.bf16.mxu0 0
  %9457 = vmatpush1.bf16.msra.mxu0 %v9428
  %9458 = vmatprep.subr.bf16.mxu0 0
  %9459 = vmatpush1.bf16.msra.mxu0 %v9429
  %9460 = vmatprep.subr.bf16.mxu0 0
  %9461 = vmatpush1.bf16.msra.mxu0 %v9430
  %9462 = vmatprep.subr.bf16.mxu0 0
  %9463 = vmatpush1.bf16.msra.mxu0 %v9444
  %9464 = vmatprep.subr.bf16.mxu0 0
  %9465 = vmatpush1.bf16.msra.mxu0 0
  %9466 = vmatprep.subr.bf16.mxu0 0
  %9467 = vmatpush1.bf16.msra.mxu0 0
  %9468 = vmatprep.subr.bf16.mxu0 0
  %9469 = vmatpush1.bf16.msra.mxu0 0
  %9470 = vmatprep.subr.bf16.mxu0 0
  %9471 = vmatpush1.bf16.msra.mxu0 0
  %9472 = vmatprep.subr.bf16.mxu0 0
  %9473 = vmatpush1.bf16.msra.mxu0 0
  %9474 = vmatprep.subr.bf16.mxu0 0
  %9475 = vmatpush1.bf16.msra.mxu0 0
  %9476 = vmatprep.subr.bf16.mxu0 0
  %9477 = vmatpush1.bf16.msra.mxu0 0
  %9478 = vmatprep.mubr.bf16.mxu0 %v9441
  %9479 = vmatmul.mubr.bf16.gmra.mrb[0].mxu0 %v9384
  %v9480 = vpop.f32.mrb[0].mxu0
  %v9481 = vadd.f32 %v9319, %v9480
  %v9482 = vpop.f32.mrb[0].mxu0
  %v9483 = vpop.f32.mrb[0].mxu0
  %v9484 = vpop.f32.mrb[0].mxu0
  %9485 = vdwg.mxu0
  %s9486 = scalar_lea.vmem %s5, 144
  %v9487 = vld [vmem:[%s9486] sm:$0xf]
  %v9488 = vld [vmem:[%s9486 + $0x4] sm:$0xf]
  %v9489 = vld [vmem:[%s9486 + $0x8] sm:$0xf]
  %v9490 = vld [vmem:[%s9486 + $0xc] sm:$0xf]
  %v9491 = vld [vmem:[%s9486 + $0x10] sm:$0xf]
  %v9492 = vld [vmem:[%s9486 + $0x14] sm:$0xf]
  %v9493 = vld [vmem:[%s9486 + $0x18] sm:$0xf]
  %v9494 = vld [vmem:[%s9486 + $0x1c] sm:$0xf]
  %v9495 = vld [vmem:[%s9486 + $0x20] sm:$0xf]
  %v9496 = vld [vmem:[%s9486 + $0x24] sm:$0xf]
  %v9497 = vld [vmem:[%s9486 + $0x28] sm:$0xf]
  %v9498 = vld [vmem:[%s9486 + $0x2c] sm:$0xf]
  %v9499 = vld [vmem:[%s9486 + $0x30] sm:$0xf]
  %v9500 = vld [vmem:[%s9486 + $0x34] sm:$0xf]
  %v9501 = vld [vmem:[%s9486 + $0x38] sm:$0xf]
  %v9502 = vld [vmem:[%s9486 + $0x3c] sm:$0xf]
  %v9503 = vld [vmem:[%s9486 + $0x40] sm:$0xf]
  %v9504 = vld [vmem:[%s9486 + $0x44] sm:$0x3]
  %v9521 = vunpack.c.l.b16 %v9064
  %v9522 = vunpack.c.l.b16 %v9065
  %v9523 = vunpack.c.l.b16 %v9072
  %v9524 = vunpack.c.l.b16 %v9073
  %v9525 = vunpack.c.l.b16 %v9080
  %v9526 = vunpack.c.l.b16 %v9081
  %v9527 = vunpack.c.l.b16 %v9088
  %v9528 = vunpack.c.l.b16 %v9089
  %v9529 = vunpack.c.l.b16 %v9096
  %v9530 = vunpack.c.l.b16 %v9097
  %v9531 = vunpack.c.l.b16 %v9104
  %v9532 = vunpack.c.l.b16 %v9105
  %v9533 = vunpack.c.l.b16 %v9112
  %v9534 = vunpack.c.l.b16 %v9113
  %v9535 = vunpack.c.l.b16 %v9120
  %v9536 = vunpack.c.l.b16 %v9121
  %v9537 = vrot.slane %v9523, 7
  %v9538 = vsel %vm5469, %v9537, %v9521
  %v9539 = vrot.slane %v9525, 6
  %v9540 = vsel %vm5472, %v9539, %v9538
  %v9541 = vrot.slane %v9527, 5
  %v9542 = vsel %vm5475, %v9541, %v9540
  %v9543 = vrot.slane %v9529, 4
  %v9544 = vsel %vm5478, %v9543, %v9542
  %v9545 = vrot.slane %v9531, 3
  %v9546 = vsel %vm5481, %v9545, %v9544
  %v9547 = vrot.slane %v9533, 2
  %v9548 = vsel %vm5484, %v9547, %v9546
  %v9549 = vrot.slane %v9535, 1
  %v9550 = vsel %vm5487, %v9549, %v9548
  %v9551 = vrot.slane %v9524, 7
  %v9552 = vsel %vm5469, %v9551, %v9522
  %v9553 = vrot.slane %v9526, 6
  %v9554 = vsel %vm5472, %v9553, %v9552
  %v9555 = vrot.slane %v9528, 5
  %v9556 = vsel %vm5475, %v9555, %v9554
  %v9557 = vrot.slane %v9530, 4
  %v9558 = vsel %vm5478, %v9557, %v9556
  %v9559 = vrot.slane %v9532, 3
  %v9560 = vsel %vm5481, %v9559, %v9558
  %v9561 = vrot.slane %v9534, 2
  %v9562 = vsel %vm5484, %v9561, %v9560
  %v9563 = vrot.slane %v9536, 1
  %v9564 = vsel %vm5487, %v9563, %v9562
  %v9565 = vpack.c.b16 %v9550, %v9550
  %v9566 = vpack.c.b16 %v9564, %v9564
  %v9586 = vunpack.c.l.b16 %v9487
  %v9587 = vunpack.c.l.b16 %v9488
  %v9588 = vunpack.c.l.b16 %v9489
  %v9589 = vunpack.c.l.b16 %v9490
  %v9590 = vunpack.c.l.b16 %v9491
  %v9591 = vunpack.c.l.b16 %v9492
  %v9592 = vunpack.c.l.b16 %v9493
  %v9593 = vunpack.c.l.b16 %v9494
  %v9594 = vunpack.c.l.b16 %v9495
  %v9595 = vunpack.c.l.b16 %v9496
  %v9596 = vunpack.c.l.b16 %v9497
  %v9597 = vunpack.c.l.b16 %v9498
  %v9598 = vunpack.c.l.b16 %v9499
  %v9599 = vunpack.c.l.b16 %v9500
  %v9600 = vunpack.c.l.b16 %v9501
  %v9601 = vunpack.c.l.b16 %v9502
  %v9602 = vunpack.c.l.b16 %v9503
  %v9603 = vunpack.c.l.b16 %v9504
  %v9604 = vpack.c.b16 %v9587, %v9586
  %v9605 = vpack.c.b16 %v9589, %v9588
  %v9606 = vpack.c.b16 %v9591, %v9590
  %v9607 = vpack.c.b16 %v9593, %v9592
  %v9608 = vpack.c.b16 %v9595, %v9594
  %v9609 = vpack.c.b16 %v9597, %v9596
  %v9610 = vpack.c.b16 %v9599, %v9598
  %v9611 = vpack.c.b16 %v9601, %v9600
  %v9612 = vpack.c.b16 %v9603, %v9602
  %v9622 = vsel %vm9277, %v9566, 0
  %v9625 = vsel %vm440, %v9612, 0
  %9627 = vmatprep.subr.bf16.mxu0 0
  %9628 = vmatpush1.bf16.msra.mxu0 %v9604
  %9629 = vmatprep.subr.bf16.mxu0 0
  %9630 = vmatpush1.bf16.msra.mxu0 %v9605
  %9631 = vmatprep.subr.bf16.mxu0 0
  %9632 = vmatpush1.bf16.msra.mxu0 %v9606
  %9633 = vmatprep.subr.bf16.mxu0 0
  %9634 = vmatpush1.bf16.msra.mxu0 %v9607
  %9635 = vmatprep.subr.bf16.mxu0 0
  %9636 = vmatpush1.bf16.msra.mxu0 %v9608
  %9637 = vmatprep.subr.bf16.mxu0 0
  %9638 = vmatpush1.bf16.msra.mxu0 %v9609
  %9639 = vmatprep.subr.bf16.mxu0 0
  %9640 = vmatpush1.bf16.msra.mxu0 %v9610
  %9641 = vmatprep.subr.bf16.mxu0 0
  %9642 = vmatpush1.bf16.msra.mxu0 %v9611
  %9643 = vmatprep.subr.bf16.mxu0 0
  %9644 = vmatpush1.bf16.msra.mxu0 %v9625
  %9645 = vmatprep.subr.bf16.mxu0 0
  %9646 = vmatpush1.bf16.msra.mxu0 0
  %9647 = vmatprep.subr.bf16.mxu0 0
  %9648 = vmatpush1.bf16.msra.mxu0 0
  %9649 = vmatprep.subr.bf16.mxu0 0
  %9650 = vmatpush1.bf16.msra.mxu0 0
  %9651 = vmatprep.subr.bf16.mxu0 0
  %9652 = vmatpush1.bf16.msra.mxu0 0
  %9653 = vmatprep.subr.bf16.mxu0 0
  %9654 = vmatpush1.bf16.msra.mxu0 0
  %9655 = vmatprep.subr.bf16.mxu0 0
  %9656 = vmatpush1.bf16.msra.mxu0 0
  %9657 = vmatprep.subr.bf16.mxu0 0
  %9658 = vmatpush1.bf16.msra.mxu0 0
  %9659 = vmatprep.mubr.bf16.mxu0 %v9622
  %9660 = vmatmul.mubr.bf16.gmra.mrb[0].mxu0 %v9565
  %v9661 = vpop.f32.mrb[0].mxu0
  %v9662 = vadd.f32 0.0, %v9661
  %v9663 = vpop.f32.mrb[0].mxu0
  %v9664 = vpop.f32.mrb[0].mxu0
  %v9665 = vpop.f32.mrb[0].mxu0
  %9666 = vdwg.mxu0
  %v9667 = vadd.f32 %v9481, %v9662
  %s9668 = scalar_lea.vmem %s5, 216
  %v9669 = vld [vmem:[%s9668] sm:$0xf]
  %v9670 = vld [vmem:[%s9668 + $0x4] sm:$0xf]
  %v9671 = vld [vmem:[%s9668 + $0x8] sm:$0xf]
  %v9672 = vld [vmem:[%s9668 + $0xc] sm:$0xf]
  %v9673 = vld [vmem:[%s9668 + $0x10] sm:$0xf]
  %v9674 = vld [vmem:[%s9668 + $0x14] sm:$0xf]
  %v9675 = vld [vmem:[%s9668 + $0x18] sm:$0xf]
  %v9676 = vld [vmem:[%s9668 + $0x1c] sm:$0xf]
  %v9677 = vld [vmem:[%s9668 + $0x20] sm:$0xf]
  %v9678 = vld [vmem:[%s9668 + $0x24] sm:$0xf]
  %v9679 = vld [vmem:[%s9668 + $0x28] sm:$0xf]
  %v9680 = vld [vmem:[%s9668 + $0x2c] sm:$0xf]
  %v9681 = vld [vmem:[%s9668 + $0x30] sm:$0xf]
  %v9682 = vld [vmem:[%s9668 + $0x34] sm:$0xf]
  %v9683 = vld [vmem:[%s9668 + $0x38] sm:$0xf]
  %v9684 = vld [vmem:[%s9668 + $0x3c] sm:$0xf]
  %v9685 = vld [vmem:[%s9668 + $0x40] sm:$0xf]
  %v9686 = vld [vmem:[%s9668 + $0x44] sm:$0x3]
  %v9703 = vunpack.c.l.b16 %v9066
  %v9704 = vunpack.c.l.b16 %v9067
  %v9705 = vunpack.c.l.b16 %v9074
  %v9706 = vunpack.c.l.b16 %v9075
  %v9707 = vunpack.c.l.b16 %v9082
  %v9708 = vunpack.c.l.b16 %v9083
  %v9709 = vunpack.c.l.b16 %v9090
  %v9710 = vunpack.c.l.b16 %v9091
  %v9711 = vunpack.c.l.b16 %v9098
  %v9712 = vunpack.c.l.b16 %v9099
  %v9713 = vunpack.c.l.b16 %v9106
  %v9714 = vunpack.c.l.b16 %v9107
  %v9715 = vunpack.c.l.b16 %v9114
  %v9716 = vunpack.c.l.b16 %v9115
  %v9717 = vunpack.c.l.b16 %v9122
  %v9718 = vunpack.c.l.b16 %v9123
  %v9719 = vrot.slane %v9705, 7
  %v9720 = vsel %vm5469, %v9719, %v9703
  %v9721 = vrot.slane %v9707, 6
  %v9722 = vsel %vm5472, %v9721, %v9720
  %v9723 = vrot.slane %v9709, 5
  %v9724 = vsel %vm5475, %v9723, %v9722
  %v9725 = vrot.slane %v9711, 4
  %v9726 = vsel %vm5478, %v9725, %v9724
  %v9727 = vrot.slane %v9713, 3
  %v9728 = vsel %vm5481, %v9727, %v9726
  %v9729 = vrot.slane %v9715, 2
  %v9730 = vsel %vm5484, %v9729, %v9728
  %v9731 = vrot.slane %v9717, 1
  %v9732 = vsel %vm5487, %v9731, %v9730
  %v9733 = vrot.slane %v9706, 7
  %v9734 = vsel %vm5469, %v9733, %v9704
  %v9735 = vrot.slane %v9708, 6
  %v9736 = vsel %vm5472, %v9735, %v9734
  %v9737 = vrot.slane %v9710, 5
  %v9738 = vsel %vm5475, %v9737, %v9736
  %v9739 = vrot.slane %v9712, 4
  %v9740 = vsel %vm5478, %v9739, %v9738
  %v9741 = vrot.slane %v9714, 3
  %v9742 = vsel %vm5481, %v9741, %v9740
  %v9743 = vrot.slane %v9716, 2
  %v9744 = vsel %vm5484, %v9743, %v9742
  %v9745 = vrot.slane %v9718, 1
  %v9746 = vsel %vm5487, %v9745, %v9744
  %v9747 = vpack.c.b16 %v9732, %v9732
  %v9748 = vpack.c.b16 %v9746, %v9746
  %v9768 = vunpack.c.l.b16 %v9669
  %v9769 = vunpack.c.l.b16 %v9670
  %v9770 = vunpack.c.l.b16 %v9671
  %v9771 = vunpack.c.l.b16 %v9672
  %v9772 = vunpack.c.l.b16 %v9673
  %v9773 = vunpack.c.l.b16 %v9674
  %v9774 = vunpack.c.l.b16 %v9675
  %v9775 = vunpack.c.l.b16 %v9676
  %v9776 = vunpack.c.l.b16 %v9677
  %v9777 = vunpack.c.l.b16 %v9678
  %v9778 = vunpack.c.l.b16 %v9679
  %v9779 = vunpack.c.l.b16 %v9680
  %v9780 = vunpack.c.l.b16 %v9681
  %v9781 = vunpack.c.l.b16 %v9682
  %v9782 = vunpack.c.l.b16 %v9683
  %v9783 = vunpack.c.l.b16 %v9684
  %v9784 = vunpack.c.l.b16 %v9685
  %v9785 = vunpack.c.l.b16 %v9686
  %v9786 = vpack.c.b16 %v9769, %v9768
  %v9787 = vpack.c.b16 %v9771, %v9770
  %v9788 = vpack.c.b16 %v9773, %v9772
  %v9789 = vpack.c.b16 %v9775, %v9774
  %v9790 = vpack.c.b16 %v9777, %v9776
  %v9791 = vpack.c.b16 %v9779, %v9778
  %v9792 = vpack.c.b16 %v9781, %v9780
  %v9793 = vpack.c.b16 %v9783, %v9782
  %v9794 = vpack.c.b16 %v9785, %v9784
  %v9804 = vsel %vm9277, %v9748, 0
  %v9807 = vsel %vm440, %v9794, 0
  %9809 = vmatprep.subr.bf16.mxu0 0
  %9810 = vmatpush1.bf16.msra.mxu0 %v9786
  %9811 = vmatprep.subr.bf16.mxu0 0
  %9812 = vmatpush1.bf16.msra.mxu0 %v9787
  %9813 = vmatprep.subr.bf16.mxu0 0
  %9814 = vmatpush1.bf16.msra.mxu0 %v9788
  %9815 = vmatprep.subr.bf16.mxu0 0
  %9816 = vmatpush1.bf16.msra.mxu0 %v9789
  %9817 = vmatprep.subr.bf16.mxu0 0
  %9818 = vmatpush1.bf16.msra.mxu0 %v9790
  %9819 = vmatprep.subr.bf16.mxu0 0
  %9820 = vmatpush1.bf16.msra.mxu0 %v9791
  %9821 = vmatprep.subr.bf16.mxu0 0
  %9822 = vmatpush1.bf16.msra.mxu0 %v9792
  %9823 = vmatprep.subr.bf16.mxu0 0
  %9824 = vmatpush1.bf16.msra.mxu0 %v9793
  %9825 = vmatprep.subr.bf16.mxu0 0
  %9826 = vmatpush1.bf16.msra.mxu0 %v9807
  %9827 = vmatprep.subr.bf16.mxu0 0
  %9828 = vmatpush1.bf16.msra.mxu0 0
  %9829 = vmatprep.subr.bf16.mxu0 0
  %9830 = vmatpush1.bf16.msra.mxu0 0
  %9831 = vmatprep.subr.bf16.mxu0 0
  %9832 = vmatpush1.bf16.msra.mxu0 0
  %9833 = vmatprep.subr.bf16.mxu0 0
  %9834 = vmatpush1.bf16.msra.mxu0 0
  %9835 = vmatprep.subr.bf16.mxu0 0
  %9836 = vmatpush1.bf16.msra.mxu0 0
  %9837 = vmatprep.subr.bf16.mxu0 0
  %9838 = vmatpush1.bf16.msra.mxu0 0
  %9839 = vmatprep.subr.bf16.mxu0 0
  %9840 = vmatpush1.bf16.msra.mxu0 0
  %9841 = vmatprep.mubr.bf16.mxu0 %v9804
  %9842 = vmatmul.mubr.bf16.gmra.mrb[0].mxu0 %v9747
  %v9843 = vpop.f32.mrb[0].mxu0
  %v9844 = vadd.f32 0.0, %v9843
  %v9845 = vpop.f32.mrb[0].mxu0
  %v9846 = vpop.f32.mrb[0].mxu0
  %v9847 = vpop.f32.mrb[0].mxu0
  %9848 = vdwg.mxu0
  %v9849 = vadd.f32 %v9667, %v9844
  %v9850 = vld [vmem:[%s6] sm:$0x1]
  %v9852 = vlaneseq
  %v9853 = vshrl.u32 %v9852, 7
  %v9854 = vsub.s32 0, %v9853
  %v9855 = vrot.slane %v9850, %v9854
  %v9857 = vadd.f32 %v9849, %v9855
  %v9858 = vmax.f32 %v9857, 0.0
  %v9859 = vpack.c.bf16 %v9858, %v9858
  %v9860 = vld [vmem:[%s7] sm:$0xf]
  %v9861 = vld [vmem:[%s7 + $0x4] sm:$0xf]
  %v9862 = vld [vmem:[%s7 + $0x8] sm:$0xf]
  %v9863 = vld [vmem:[%s7 + $0xc] sm:$0xf]
  %v9864 = vld [vmem:[%s7 + $0x10] sm:$0xf]
  %v9865 = vld [vmem:[%s7 + $0x14] sm:$0xf]
  %v9866 = vld [vmem:[%s7 + $0x18] sm:$0xf]
  %v9867 = vld [vmem:[%s7 + $0x1c] sm:$0xf]
  %v9868 = vld [vmem:[%s8] sm:$0x1]
  %v9870 = vlaneseq
  %v9871 = vshrl.u32 %v9870, 7
  %v9872 = vsub.s32 0, %v9871
  %v9873 = vrot.slane %v9868, %v9872
  %v9883 = vunpack.c.l.b16 %v9860
  %v9884 = vunpack.c.l.b16 %v9861
  %v9885 = vunpack.c.l.b16 %v9862
  %v9886 = vunpack.c.l.b16 %v9863
  %v9887 = vunpack.c.l.b16 %v9864
  %v9888 = vunpack.c.l.b16 %v9865
  %v9889 = vunpack.c.l.b16 %v9866
  %v9890 = vunpack.c.l.b16 %v9867
  %v9891 = vpack.c.b16 %v9884, %v9883
  %v9892 = vpack.c.b16 %v9886, %v9885
  %v9893 = vpack.c.b16 %v9888, %v9887
  %v9894 = vpack.c.b16 %v9890, %v9889
  %vm9899 = vcmask 523264
  %v9901 = vsel %vm9899, %v9859, 0
  %9903 = vmatprep.subr.bf16.mxu0 0
  %9904 = vmatpush1.bf16.msra.mxu0 %v9891
  %9905 = vmatprep.subr.bf16.mxu0 0
  %9906 = vmatpush1.bf16.msra.mxu0 %v9892
  %9907 = vmatprep.subr.bf16.mxu0 0
  %9908 = vmatpush1.bf16.msra.mxu0 %v9893
  %9909 = vmatprep.subr.bf16.mxu0 0
  %9910 = vmatpush1.bf16.msra.mxu0 %v9894
  %9911 = vmatprep.subr.bf16.mxu0 0
  %9912 = vmatpush1.bf16.msra.mxu0 0
  %9913 = vmatprep.subr.bf16.mxu0 0
  %9914 = vmatpush1.bf16.msra.mxu0 0
  %9915 = vmatprep.subr.bf16.mxu0 0
  %9916 = vmatpush1.bf16.msra.mxu0 0
  %9917 = vmatprep.subr.bf16.mxu0 0
  %9918 = vmatpush1.bf16.msra.mxu0 0
  %9919 = vmatprep.subr.bf16.mxu0 0
  %9920 = vmatpush1.bf16.msra.mxu0 0
  %9921 = vmatprep.subr.bf16.mxu0 0
  %9922 = vmatpush1.bf16.msra.mxu0 0
  %9923 = vmatprep.subr.bf16.mxu0 0
  %9924 = vmatpush1.bf16.msra.mxu0 0
  %9925 = vmatprep.subr.bf16.mxu0 0
  %9926 = vmatpush1.bf16.msra.mxu0 0
  %9927 = vmatprep.subr.bf16.mxu0 0
  %9928 = vmatpush1.bf16.msra.mxu0 0
  %9929 = vmatprep.subr.bf16.mxu0 0
  %9930 = vmatpush1.bf16.msra.mxu0 0
  %9931 = vmatprep.subr.bf16.mxu0 0
  %9932 = vmatpush1.bf16.msra.mxu0 0
  %9933 = vmatprep.subr.bf16.mxu0 0
  %9934 = vmatpush1.bf16.msra.mxu0 0
  %9935 = vmatprep.mubr.bf16.mxu0 0
  %9936 = vmatmul.mubr.bf16.gmra.mrb[0].mxu0 %v9901
  %v9937 = vpop.f32.mrb[0].mxu0
  %v9938 = vadd.f32 %v9873, %v9937
  %v9939 = vpop.f32.mrb[0].mxu0
  %v9940 = vpop.f32.mrb[0].mxu0
  %v9941 = vpop.f32.mrb[0].mxu0
  %9942 = vdwg.mxu0
  %vm9943 = vcmask 80896
  %v9944 = vsel %vm9943, %v9938, -inf
  %9945 = vmax.xlane.f32.xlu0 %v9944
  %v9946 = vpop.xlane.xlu0 %9945
  %v9947 = vsub.f32 %v9938, %v9946
  %v9948 = vmul.f32 %v9947, 1.442695
  %v9949 = vpow.pop %v9948
  %v9950 = vsel %vm9943, %v9949, 0.0
  %9951 = vadd.xlane.f32.xlu0 %v9950
  %v9952 = vpop.xlane.xlu0 %9951
  %v9953 = vlog2.pop %v9952
  %v9954 = vmul.f32 %v9953, 0.6931472
  %v9955 = vsub.f32 %v9947, %v9954
  %9956 = vst.msk [vmem:[%s9] sm:$0xff] %vm9943, %v9955
  // Predicated region
  $region38: #{lenet_forward.1} parent=0 // pred_check
    _
  $region39: #{lenet_forward.1} parent=0 // pred_check_branch
    %9958 = sbr.rel (0) target = $region41
  $region40: #{lenet_forward.1} parent=0 // pred_region
    _
  $region41: #{lenet_forward.1} parent=0 // pred_fallthru
    _
  // Predicated region
  $region42: #{lenet_forward.1} parent=0 // pred_check
    _
  $region43: #{lenet_forward.1} parent=0 // pred_check_branch
    %9960 = sbr.rel (0) target = $region45
  $region44: #{lenet_forward.1} parent=0 // pred_region
    _
  $region45: #{lenet_forward.1} parent=0 // pred_fallthru
    _

</llo_original>
